<compile_context>
chip_gen: v7x
topology: tpu7x:2x2x1
jax: 0.10.0
libtpu: 0.0.40
codegen_flags: <defaults>
</compile_context>

<pallas_src>
import jax
import jax.numpy as jnp
from jax.experimental import pallas as pl
from jax.experimental.pallas import tpu as pltpu

BETA = 0.75
NUM_SAMPLES = 5
WS = 5                  # window half-size used in forward (ws=5)
WINDOW = WS * 2         # 10


def _softplus(x):
    # numerically stable softplus == BCEWithLogits building block:
    #   max(x, 0) + log(1 + exp(-|x|))   (log1p refinement is below f32 noise here)
    return jnp.maximum(x, 0.0) + jnp.log(1.0 + jnp.exp(-jnp.abs(x)))


def _segment_matrix(n_seg, d, dtype):
    """(n_seg*d, n_seg) 0/1 matrix whose column w sums the d-wide segment w."""
    j = jax.lax.broadcasted_iota(jnp.int32, (n_seg * d, n_seg), 0)
    w = jax.lax.broadcasted_iota(jnp.int32, (n_seg * d, n_seg), 1)
    return ((j >= w * d) & (j < (w + 1) * d)).astype(dtype)


def _vmem_budgets():
    """(input+temp VMEM budget, scoped vmem limit) picked per TPU generation."""
    cap = 64 * 1024 * 1024
    try:
        cap = int(getattr(pltpu.get_tpu_info(), "vmem_capacity_bytes", cap))
    except Exception:
        pass
    if cap >= 100 * 1024 * 1024:          # v5e / v6e: 128 MiB physical VMEM
        budget, limit = 64 << 20, 100 << 20
    else:                                 # v7x-class: 64 MiB physical VMEM
        budget, limit = 28 << 20, 48 << 20
    limit = min(limit, int(cap * 0.85))
    budget = min(budget, max(limit - (8 << 20), limit // 2))
    return budget, limit


def _round_up(x, m):
    return ((x + m - 1) // m) * m


def _make_kernel(B, W, N, D, bt, bpc, nb, flat):
    """Kernel closure over static sizes. Inputs arrive in native dtype."""

    def kernel(center_ref, ctx_ref, samp_ref, pos_ref, neg_ref):
        i = pl.program_id(1)

        @pl.when(i == 0)
        def _init():
            pos_ref[...] = jnp.zeros_like(pos_ref)
            neg_ref[...] = jnp.zeros_like(neg_ref)

        # Un-clamped global block index -> the row mask handles both the ragged
        # tail block and the (index-map-clamped, redundant) blocks of core 1.
        g = pl.program_id(0) * bpc + i
        row_ids = g * bt + jax.lax.broadcasted_iota(jnp.int32, (bt, 1), 0)
        valid = row_ids < B                                      # (bt, 1)

        center = center_ref[...]                                 # (bt, D) native dtype

        if flat:
            ctx = ctx_ref[...]                                   # (bt, W*D)
            samp = samp_ref[...]                                 # (bt, N*D)
            # Tile center across windows/samples along lanes (native dtype),
            # multiply, then reduce each D-segment with one MXU dot against a
            # constant 0/1 segment matrix (f32 accumulation on the MXU).
            prod_pos = jnp.concatenate([center] * W, axis=1) * ctx
            prod_neg = jnp.concatenate([center] * N, axis=1) * samp
            prec = (jax.lax.Precision.HIGHEST
                    if prod_pos.dtype == jnp.float32 else None)
            true_scores = jnp.dot(prod_pos, _segment_matrix(W, D, prod_pos.dtype),
                                  precision=prec,
                                  preferred_element_type=jnp.float32)   # (bt, W)
            samp_scores = jnp.dot(prod_neg, _segment_matrix(N, D, prod_neg.dtype),
                                  precision=prec,
                                  preferred_element_type=jnp.float32)   # (bt, N)
        else:
            c = center[:, None, :]
            # multiply in native dtype, accumulate the lane reduce in f32
            true_scores = jnp.sum(c * ctx_ref[...], axis=-1, dtype=jnp.float32)
            samp_scores = jnp.sum(c * samp_ref[...], axis=-1, dtype=jnp.float32)

        # BCEWithLogits(target=1) == softplus(-x); (target=0) == softplus(+x).
        pos_part = jnp.sum(jnp.where(valid, _softplus(-true_scores), 0.0))
        neg_part = jnp.sum(jnp.where(valid, _softplus(samp_scores), 0.0))
        pos_ref[...] = pos_ref[...] + pos_part
        neg_ref[...] = neg_ref[...] + neg_part

    return kernel


def sgns_loss(center, context, samples, *, block_b=None):
    """center (B,D), context (B,W,D), samples (B,W,NS,D) -> scalar SGNS loss."""
    B, W, NS, D = samples.shape
    N = W * NS
    assert center.shape == (B, D) and context.shape == (B, W, D)

    itemsize = jnp.dtype(center.dtype).itemsize
    sub = {4: 8, 2: 16, 1: 32}.get(itemsize, 8)      # sublane packing per dtype
    flat = D < 128

    if flat:
        # Lane-dense 2D blocks; contiguous reshapes are free (no HBM pass).
        ctx_in = context.reshape(B, W * D)
        samp_in = samples.reshape(B, N * D)
        in_row = (_round_up(D, 128) + _round_up(W * D, 128)
                  + _round_up(N * D, 128)) * itemsize
        tmp_row = 2 * (_round_up(W * D, 128) + _round_up(N * D, 128)) * itemsize
    else:
        ctx_in = context
        samp_in = samples.reshape(B, N, D)
        in_row = (_round_up(D, 128)
                  + (_round_up(W, sub) + _round_up(N, sub)) * _round_up(D, 128)
                  ) * itemsize
        tmp_row = (_round_up(W, sub) + _round_up(N, sub)) * _round_up(D, 128) * itemsize

    budget, vmem_limit = _vmem_budgets()
    # double-buffered input tiles + one tile's worth of in-kernel temporaries,
    # accounted against the PADDED (sublane/lane) VMEM layout.
    max_rows = max(sub, budget // (2 * in_row + tmp_row))
    bt = min(B if block_b is None else int(block_b), max_rows)
    if bt >= B:
        bt, nb = B, 1
    else:
        bt = max(sub, (bt // sub) * sub)
        nb = pl.cdiv(B, bt)

    ncores = 2 if nb >= 2 else 1          # one batch shard per TensorCore (v7x)
    bpc = pl.cdiv(nb, ncores)             # blocks per core

    def in_map2(c, i):
        return (jnp.minimum(c * bpc + i, nb - 1), 0)

    def in_map3(c, i):
        return (jnp.minimum(c * bpc + i, nb - 1), 0, 0)

    if flat:
        in_specs = [pl.BlockSpec((bt, D), in_map2),
                    pl.BlockSpec((bt, W * D), in_map2),
                    pl.BlockSpec((bt, N * D), in_map2)]
    else:
        in_specs = [pl.BlockSpec((bt, D), in_map2),
                    pl.BlockSpec((bt, W, D), in_map3),
                    pl.BlockSpec((bt, N, D), in_map3)]

    out_map = lambda c, i: (c, 0, 0)      # per-core resident accumulator row

    pos, neg = pl.pallas_call(
        _make_kernel(B, W, N, D, bt, bpc, nb, flat),
        out_shape=(jax.ShapeDtypeStruct((ncores, 1, 1), jnp.float32),
                   jax.ShapeDtypeStruct((ncores, 1, 1), jnp.float32)),
        grid_spec=pltpu.PrefetchScalarGridSpec(
            num_scalar_prefetch=0,
            grid=(ncores, bpc),
            in_specs=in_specs,
            out_specs=[pl.BlockSpec((1, 1, 1), out_map),
                       pl.BlockSpec((1, 1, 1), out_map)],
        ),
        compiler_params=pltpu.CompilerParams(
            # core axis parallel (uses both v7x TensorCores); batch-block axis
            # serial because the accumulator block is resident across it.
            dimension_semantics=("parallel", "arbitrary"),
            vmem_limit_bytes=vmem_limit,
        ),
    )(center, ctx_in, samp_in)

    # Normalize ONCE by the GLOBAL element counts (mean reduction of
    # BCEWithLogitsLoss) -> result independent of tiling / core split.
    return jnp.sum(pos) / float(B * W) + jnp.sum(neg) / float(B * N)


if __name__ == "__main__":
    key = jax.random.PRNGKey(0)
    vocab_len = 50
    embed_dim = 32
    bs = 20      # not a multiple of 8-row tile * 2 cores -> exercises tail masking

    k_emb, k_cen, k_ctx, k_neg = jax.random.split(key, 4)

    # deterministic embedding table (stands in for nn.Embedding weights)
    embed_w = jax.random.normal(k_emb, (vocab_len, embed_dim), jnp.float32) * 0.1

    # synthetic document frequencies dfs[i] = i + 1, unigram^0.75 distribution
    dfs = jnp.arange(1, vocab_len + 1, dtype=jnp.float32)
    transformed = dfs ** BETA
    probs = transformed / jnp.sum(transformed)

    # center / context embeddings (the torch forward receives embedded tensors)
    center_idx = jax.random.randint(k_cen, (bs,), 0, vocab_len)
    context_idx = jax.random.randint(k_ctx, (bs, WINDOW), 0, vocab_len)
    center = embed_w[center_idx]          # (B, D)
    context = embed_w[context_idx]        # (B, W, D)

    # TODO(synk): AliasMultinomial alias-table draw has no in-kernel equivalent;
    # equivalent unigram sampling is done host-side with jax.random.choice.
    n = bs * NUM_SAMPLES * WINDOW
    neg_idx = jax.random.choice(k_neg, vocab_len, (n,), p=probs)
    neg_idx = neg_idx.reshape(bs, WINDOW, NUM_SAMPLES)
    samples = embed_w[neg_idx]            # (B, W, NS, D)

    # block_b=8 -> 3 real blocks, 2 cores * 2 steps: exercises init/accumulate,
    # the ragged tail mask, and the clamped redundant block on core 1.
    loss = sgns_loss(center, context, samples, block_b=8)
    jax.block_until_ready(loss)

    # plain-JAX reference check (same math as the PyTorch forward)
    ts = jnp.sum(center[:, None, :] * context, -1)
    sd = jnp.sum(center[:, None, None, :] * samples, -1)
    ref = jnp.mean(jax.nn.softplus(-ts)) + jnp.mean(jax.nn.softplus(sd))
    assert jnp.allclose(loss, ref, atol=1e-4, rtol=1e-4), (loss, ref)

    print("KERNEL_OK")
</pallas_src>

<mosaic_0001>
module attributes {stable_mosaic.version = 11 : i64} {
  func.func @kernel(%arg0: i32, %arg1: i32, %arg2: memref<8x32xf32, #tpu.memory_space<vmem>>, %arg3: memref<8x320xf32, #tpu.memory_space<vmem>>, %arg4: memref<8x1600xf32, #tpu.memory_space<vmem>>, %arg5: memref<1x1x1xf32, #tpu.memory_space<vmem>>, %arg6: memref<1x1x1xf32, #tpu.memory_space<vmem>>) attributes {dimension_semantics = [#tpu.dimension_semantics<parallel>, #tpu.dimension_semantics<arbitrary>], iteration_bounds = array<i64: 2, 2>, scalar_prefetch = 0 : i64, scratch_operands = 0 : i64, tpu.core_type = #tpu.core_type<tc>, window_params = [{transform_indices = @transform_0, window_bounds = array<i64: 8, 32>}, {transform_indices = @transform_1, window_bounds = array<i64: 8, 320>}, {transform_indices = @transform_2, window_bounds = array<i64: 8, 1600>}, {transform_indices = @transform_3, window_bounds = array<i64: 1, 1, 1>}, {transform_indices = @transform_4, window_bounds = array<i64: 1, 1, 1>}]} {
    %c0_i32 = arith.constant 0 : i32
    %0 = arith.cmpi eq, %arg1, %c0_i32 : i32
    %1 = arith.extui %0 : i1 to i32
    %c0_i32_0 = arith.constant 0 : i32
    %2 = arith.cmpi ne, %1, %c0_i32_0 : i32
    scf.if %2 {
      %cst_34 = arith.constant 0.000000e+00 : f32
      %96 = vector.broadcast %cst_34 : f32 to vector<1x1x1xf32>
      %c0_35 = arith.constant 0 : index
      %c0_36 = arith.constant 0 : index
      %c0_37 = arith.constant 0 : index
      %97 = vector.load %arg5[%c0_35, %c0_36, %c0_37] : memref<1x1x1xf32, #tpu.memory_space<vmem>>, vector<1x1x1xf32>
      tpu.vector_store %arg5[%c0_35, %c0_36, %c0_37], %96 {strides = array<i32>} : memref<1x1x1xf32, #tpu.memory_space<vmem>>, vector<1x1x1xf32>,
      %cst_38 = arith.constant 0.000000e+00 : f32
      %98 = vector.broadcast %cst_38 : f32 to vector<1x1x1xf32>
      %c0_39 = arith.constant 0 : index
      %c0_40 = arith.constant 0 : index
      %c0_41 = arith.constant 0 : index
      %99 = vector.load %arg6[%c0_39, %c0_40, %c0_41] : memref<1x1x1xf32, #tpu.memory_space<vmem>>, vector<1x1x1xf32>
      tpu.vector_store %arg6[%c0_39, %c0_40, %c0_41], %98 {strides = array<i32>} : memref<1x1x1xf32, #tpu.memory_space<vmem>>, vector<1x1x1xf32>,
    } else {
    }
    %c2_i32 = arith.constant 2 : i32
    %3 = arith.muli %arg0, %c2_i32 : i32
    %4 = arith.addi %3, %arg1 : i32
    %c8_i32 = arith.constant 8 : i32
    %5 = arith.muli %4, %c8_i32 : i32
    %6 = tpu.iota {dimensions = array<i32: 0>} : vector<8x1xi32>
    %7 = vector.broadcast %5 : i32 to vector<8x1xi32>
    %8 = arith.addi %7, %6 : vector<8x1xi32>
    %c20_i32 = arith.constant 20 : i32
    %9 = vector.broadcast %c20_i32 : i32 to vector<8x1xi32>
    %10 = arith.cmpi slt, %8, %9 : vector<8x1xi32>
    %c0 = arith.constant 0 : index
    %c0_1 = arith.constant 0 : index
    %11 = vector.load %arg2[%c0, %c0_1] : memref<8x32xf32, #tpu.memory_space<vmem>>, vector<8x32xf32>
    %c0_2 = arith.constant 0 : index
    %c0_3 = arith.constant 0 : index
    %12 = vector.load %arg3[%c0_2, %c0_3] : memref<8x320xf32, #tpu.memory_space<vmem>>, vector<8x320xf32>
    %c0_4 = arith.constant 0 : index
    %c0_5 = arith.constant 0 : index
    %13 = vector.load %arg4[%c0_4, %c0_5] : memref<8x1600xf32, #tpu.memory_space<vmem>>, vector<8x1600xf32>
    %14 = tpu.concatenate %11, %11, %11, %11, %11, %11, %11, %11, %11, %11 in 1 : vector<8x32xf32>, vector<8x32xf32>, vector<8x32xf32>, vector<8x32xf32>, vector<8x32xf32>, vector<8x32xf32>, vector<8x32xf32>, vector<8x32xf32>, vector<8x32xf32>, vector<8x32xf32> -> vector<8x320xf32>
    %15 = arith.mulf %14, %12 : vector<8x320xf32>
    %16 = tpu.concatenate %11, %11, %11, %11, %11, %11, %11, %11, %11, %11, %11, %11, %11, %11, %11, %11 in 1 : vector<8x32xf32>, vector<8x32xf32>, vector<8x32xf32>, vector<8x32xf32>, vector<8x32xf32>, vector<8x32xf32>, vector<8x32xf32>, vector<8x32xf32>, vector<8x32xf32>, vector<8x32xf32>, vector<8x32xf32>, vector<8x32xf32>, vector<8x32xf32>, vector<8x32xf32>, vector<8x32xf32>, vector<8x32xf32> -> vector<8x512xf32>
    %17 = tpu.concatenate %11, %11, %11, %11, %11, %11, %11, %11, %11, %11, %11, %11, %11, %11, %11, %11 in 1 : vector<8x32xf32>, vector<8x32xf32>, vector<8x32xf32>, vector<8x32xf32>, vector<8x32xf32>, vector<8x32xf32>, vector<8x32xf32>, vector<8x32xf32>, vector<8x32xf32>, vector<8x32xf32>, vector<8x32xf32>, vector<8x32xf32>, vector<8x32xf32>, vector<8x32xf32>, vector<8x32xf32>, vector<8x32xf32> -> vector<8x512xf32>
    %18 = tpu.concatenate %11, %11, %11, %11, %11, %11, %11, %11, %11, %11, %11, %11, %11, %11, %11, %11 in 1 : vector<8x32xf32>, vector<8x32xf32>, vector<8x32xf32>, vector<8x32xf32>, vector<8x32xf32>, vector<8x32xf32>, vector<8x32xf32>, vector<8x32xf32>, vector<8x32xf32>, vector<8x32xf32>, vector<8x32xf32>, vector<8x32xf32>, vector<8x32xf32>, vector<8x32xf32>, vector<8x32xf32>, vector<8x32xf32> -> vector<8x512xf32>
    %19 = tpu.concatenate %11, %11 in 1 : vector<8x32xf32>, vector<8x32xf32> -> vector<8x64xf32>
    %20 = tpu.concatenate %16, %17, %18, %19 in 1 : vector<8x512xf32>, vector<8x512xf32>, vector<8x512xf32>, vector<8x64xf32> -> vector<8x1600xf32>
    %21 = arith.mulf %20, %13 : vector<8x1600xf32>
    %22 = tpu.iota {dimensions = array<i32: 0>} : vector<320x10xi32>
    %23 = tpu.iota {dimensions = array<i32: 1>} : vector<320x10xi32>
    %c32_i32 = arith.constant 32 : i32
    %24 = vector.broadcast %c32_i32 : i32 to vector<320x10xi32>
    %25 = arith.muli %23, %24 : vector<320x10xi32>
    %26 = arith.cmpi sge, %22, %25 : vector<320x10xi32>
    %c1_i32 = arith.constant 1 : i32
    %27 = vector.broadcast %c1_i32 : i32 to vector<320x10xi32>
    %28 = arith.addi %23, %27 : vector<320x10xi32>
    %c32_i32_6 = arith.constant 32 : i32
    %29 = vector.broadcast %c32_i32_6 : i32 to vector<320x10xi32>
    %30 = arith.muli %28, %29 : vector<320x10xi32>
    %31 = arith.cmpi slt, %22, %30 : vector<320x10xi32>
    %32 = arith.andi %26, %31 : vector<320x10xi1>
    %33 = arith.extui %32 : vector<320x10xi1> to vector<320x10xi32>
    %34 = arith.sitofp %33 : vector<320x10xi32> to vector<320x10xf32>
    %cst = arith.constant dense<0.000000e+00> : vector<8x10xf32>
    %35 = tpu.matmul %15, %34, %cst {dimension_numbers = #tpu.dot_dimension_numbers<[1], [0], [0], [1], [0, 0, 1, 1], [], []>, precision = #tpu.contract_precision<fp32>} : vector<8x320xf32>, vector<320x10xf32>, vector<8x10xf32> -> vector<8x10xf32>
    %36 = tpu.iota {dimensions = array<i32: 0>} : vector<1600x50xi32>
    %37 = tpu.iota {dimensions = array<i32: 1>} : vector<1600x50xi32>
    %c32_i32_7 = arith.constant 32 : i32
    %38 = vector.broadcast %c32_i32_7 : i32 to vector<1600x50xi32>
    %39 = arith.muli %37, %38 : vector<1600x50xi32>
    %40 = arith.cmpi sge, %36, %39 : vector<1600x50xi32>
    %c1_i32_8 = arith.constant 1 : i32
    %41 = vector.broadcast %c1_i32_8 : i32 to vector<1600x50xi32>
    %42 = arith.addi %37, %41 : vector<1600x50xi32>
    %c32_i32_9 = arith.constant 32 : i32
    %43 = vector.broadcast %c32_i32_9 : i32 to vector<1600x50xi32>
    %44 = arith.muli %42, %43 : vector<1600x50xi32>
    %45 = arith.cmpi slt, %36, %44 : vector<1600x50xi32>
    %46 = arith.andi %40, %45 : vector<1600x50xi1>
    %47 = arith.extui %46 : vector<1600x50xi1> to vector<1600x50xi32>
    %48 = arith.sitofp %47 : vector<1600x50xi32> to vector<1600x50xf32>
    %cst_10 = arith.constant dense<0.000000e+00> : vector<8x50xf32>
    %49 = tpu.matmul %21, %48, %cst_10 {dimension_numbers = #tpu.dot_dimension_numbers<[1], [0], [0], [1], [0, 0, 1, 1], [], []>, precision = #tpu.contract_precision<fp32>} : vector<8x1600xf32>, vector<1600x50xf32>, vector<8x50xf32> -> vector<8x50xf32>
    %cst_11 = arith.constant 0.000000e+00 : f32
    %50 = vector.broadcast %cst_11 : f32 to vector<8x10xf32>
    %51 = arith.subf %50, %35 : vector<8x10xf32>
    %cst_12 = arith.constant 0.000000e+00 : f32
    %52 = vector.broadcast %cst_12 : f32 to vector<8x10xf32>
    %53 = arith.maximumf %51, %52 : vector<8x10xf32>
    %54 = math.absf %51 : vector<8x10xf32>
    %cst_13 = arith.constant 0.000000e+00 : f32
    %55 = vector.broadcast %cst_13 : f32 to vector<8x10xf32>
    %56 = arith.subf %55, %54 : vector<8x10xf32>
    %57 = math.exp %56 : vector<8x10xf32>
    %cst_14 = arith.constant 1.000000e+00 : f32
    %58 = vector.broadcast %cst_14 : f32 to vector<8x10xf32>
    %59 = arith.addf %58, %57 : vector<8x10xf32>
    %60 = math.log %59 : vector<8x10xf32>
    %61 = arith.addf %53, %60 : vector<8x10xf32>
    %cst_15 = arith.constant 0.000000e+00 : f32
    %62 = vector.shape_cast %10 : vector<8x1xi1> to vector<8x1xi1>
    %63 = vector.broadcast %62 : vector<8x1xi1> to vector<8x10xi1>
    %64 = vector.broadcast %cst_15 : f32 to vector<8x10xf32>
    %65 = arith.select %63, %61, %64 : vector<8x10xi1>, vector<8x10xf32>
    %66 = vector.shape_cast %65 : vector<8x10xf32> to vector<1x8x10xf32>
    %cst_16 = arith.constant dense<0.000000e+00> : vector<1xf32>
    %67 = vector.multi_reduction <add>, %66, %cst_16 [1, 2] : vector<1x8x10xf32> to vector<1xf32>
    %68 = vector.shape_cast %67 : vector<1xf32> to vector<1x1x1xf32>
    %69 = vector.extract %68[0, 0, 0] : f32 from vector<1x1x1xf32>
    %cst_17 = arith.constant 0.000000e+00 : f32
    %70 = vector.broadcast %cst_17 : f32 to vector<8x50xf32>
    %71 = arith.maximumf %49, %70 : vector<8x50xf32>
    %72 = math.absf %49 : vector<8x50xf32>
    %cst_18 = arith.constant 0.000000e+00 : f32
    %73 = vector.broadcast %cst_18 : f32 to vector<8x50xf32>
    %74 = arith.subf %73, %72 : vector<8x50xf32>
    %75 = math.exp %74 : vector<8x50xf32>
    %cst_19 = arith.constant 1.000000e+00 : f32
    %76 = vector.broadcast %cst_19 : f32 to vector<8x50xf32>
    %77 = arith.addf %76, %75 : vector<8x50xf32>
    %78 = math.log %77 : vector<8x50xf32>
    %79 = arith.addf %71, %78 : vector<8x50xf32>
    %cst_20 = arith.constant 0.000000e+00 : f32
    %80 = vector.shape_cast %10 : vector<8x1xi1> to vector<8x1xi1>
    %81 = vector.broadcast %80 : vector<8x1xi1> to vector<8x50xi1>
    %82 = vector.broadcast %cst_20 : f32 to vector<8x50xf32>
    %83 = arith.select %81, %79, %82 : vector<8x50xi1>, vector<8x50xf32>
    %84 = vector.shape_cast %83 : vector<8x50xf32> to vector<1x8x50xf32>
    %cst_21 = arith.constant dense<0.000000e+00> : vector<1xf32>
    %85 = vector.multi_reduction <add>, %84, %cst_21 [1, 2] : vector<1x8x50xf32> to vector<1xf32>
    %86 = vector.shape_cast %85 : vector<1xf32> to vector<1x1x1xf32>
    %87 = vector.extract %86[0, 0, 0] : f32 from vector<1x1x1xf32>
    %c0_22 = arith.constant 0 : index
    %c0_23 = arith.constant 0 : index
    %c0_24 = arith.constant 0 : index
    %88 = vector.load %arg5[%c0_22, %c0_23, %c0_24] : memref<1x1x1xf32, #tpu.memory_space<vmem>>, vector<1x1x1xf32>
    %89 = vector.broadcast %69 : f32 to vector<1x1x1xf32>
    %90 = arith.addf %88, %89 : vector<1x1x1xf32>
    %c0_25 = arith.constant 0 : index
    %c0_26 = arith.constant 0 : index
    %c0_27 = arith.constant 0 : index
    %91 = vector.load %arg5[%c0_25, %c0_26, %c0_27] : memref<1x1x1xf32, #tpu.memory_space<vmem>>, vector<1x1x1xf32>
    tpu.vector_store %arg5[%c0_25, %c0_26, %c0_27], %90 {strides = array<i32>} : memref<1x1x1xf32, #tpu.memory_space<vmem>>, vector<1x1x1xf32>,
    %c0_28 = arith.constant 0 : index
    %c0_29 = arith.constant 0 : index
    %c0_30 = arith.constant 0 : index
    %92 = vector.load %arg6[%c0_28, %c0_29, %c0_30] : memref<1x1x1xf32, #tpu.memory_space<vmem>>, vector<1x1x1xf32>
    %93 = vector.broadcast %87 : f32 to vector<1x1x1xf32>
    %94 = arith.addf %92, %93 : vector<1x1x1xf32>
    %c0_31 = arith.constant 0 : index
    %c0_32 = arith.constant 0 : index
    %c0_33 = arith.constant 0 : index
    %95 = vector.load %arg6[%c0_31, %c0_32, %c0_33] : memref<1x1x1xf32, #tpu.memory_space<vmem>>, vector<1x1x1xf32>
    tpu.vector_store %arg6[%c0_31, %c0_32, %c0_33], %94 {strides = array<i32>} : memref<1x1x1xf32, #tpu.memory_space<vmem>>, vector<1x1x1xf32>,
    return
  }
  func.func @transform_0(%arg0: i32, %arg1: i32) -> (i32, i32) {
    %c2_i32 = arith.constant 2 : i32
    %0 = arith.muli %arg0, %c2_i32 : i32
    %1 = arith.addi %0, %arg1 : i32
    %c2_i32_0 = arith.constant 2 : i32
    %2 = arith.minsi %1, %c2_i32_0 : i32
    %c0_i32 = arith.constant 0 : i32
    %c0_i32_1 = arith.constant 0 : i32
    return %2, %c0_i32 : i32, i32
  }
  func.func @transform_1(%arg0: i32, %arg1: i32) -> (i32, i32) {
    %c2_i32 = arith.constant 2 : i32
    %0 = arith.muli %arg0, %c2_i32 : i32
    %1 = arith.addi %0, %arg1 : i32
    %c2_i32_0 = arith.constant 2 : i32
    %2 = arith.minsi %1, %c2_i32_0 : i32
    %c0_i32 = arith.constant 0 : i32
    %c0_i32_1 = arith.constant 0 : i32
    return %2, %c0_i32 : i32, i32
  }
  func.func @transform_2(%arg0: i32, %arg1: i32) -> (i32, i32) {
    %c2_i32 = arith.constant 2 : i32
    %0 = arith.muli %arg0, %c2_i32 : i32
    %1 = arith.addi %0, %arg1 : i32
    %c2_i32_0 = arith.constant 2 : i32
    %2 = arith.minsi %1, %c2_i32_0 : i32
    %c0_i32 = arith.constant 0 : i32
    %c0_i32_1 = arith.constant 0 : i32
    return %2, %c0_i32 : i32, i32
  }
  func.func @transform_3(%arg0: i32, %arg1: i32) -> (i32, i32, i32) {
    %c0_i32 = arith.constant 0 : i32
    %c0_i32_0 = arith.constant 0 : i32
    %c0_i32_1 = arith.constant 0 : i32
    return %arg0, %c0_i32, %c0_i32_0 : i32, i32, i32
  }
  func.func @transform_4(%arg0: i32, %arg1: i32) -> (i32, i32, i32) {
    %c0_i32 = arith.constant 0 : i32
    %c0_i32_0 = arith.constant 0 : i32
    %c0_i32_1 = arith.constant 0 : i32
    return %arg0, %c0_i32, %c0_i32_0 : i32, i32, i32
  }
}

</mosaic_0001>

<llo_original>
// kernel: tpu_custom_call.1
$region0: #{tpu_custom_call.1}
  #allocation0 [shape = 'u32[]', space=smem, size = 0x4, offset = 0x4, fixed_abs, tag = 'smem constant byte address 0x4 - core index']
  #allocation1 [shape = 'u32[144,128]{1,0:T(1,128)}', space=vmem, size = 0x12000, scoped, tag = 'internal scratch']
  %s0 = inlined_call_operand.hbm [shape: f32[20,32], index: 0, kind: input, shape index: {}]
  %s1 = inlined_call_operand.hbm [shape: f32[20,320], index: 1, kind: input, shape index: {}]
  %s2 = inlined_call_operand.hbm [shape: f32[20,1600], index: 2, kind: input, shape index: {}]
  %s3 = inlined_call_operand.vmem [shape: f32[2,1,1], index: 3, kind: output, shape index: {0}]
  %s4 = inlined_call_operand.vmem [shape: f32[2,1,1], index: 4, kind: output, shape index: {1}]
  %5 = xla_tuple %s3, %s4
  %s6 = sld [smem:[#allocation0]]
  $region69: #{tpu_custom_call.1} parent=0
    _
  %s8 = ssub.s32 1, %s6
  %s9 = scalar_select 0, %s8, %s6
  $region1: #{tpu_custom_call.1} parent=0
    #allocation2 [shape = 'u8[8192]{0}', space=vmem, size = 0x2000, scoped, tag = 'input window, operand 0']
    #allocation3 [shape = 's32[2]{0}', space=sflag, size = 0x8, scoped, tag = 'scoped memory for tpu_custom_call.1']
    #allocation4 [shape = 'u8[24576]{0}', space=vmem, size = 0x6000, scoped, tag = 'input window, operand 1']
    #allocation5 [shape = 's32[2]{0}', space=sflag, size = 0x8, scoped, tag = 'scoped memory for tpu_custom_call.1']
    #allocation6 [shape = 'u8[106496]{0}', space=vmem, size = 0x1a000, scoped, tag = 'input window, operand 2']
    %10 = vsyncpa [#allocation3], 0
    %s11 = scalar_lea.sflag [#allocation3], 1
    %12 = vsyncpa %s11, 0
    %13 = vsyncpa [#allocation5], 0
    %s14 = scalar_lea.sflag [#allocation5], 1
    %15 = vsyncpa %s14, 0
    loop: start=0, step=1, limit=6
    $region2: #{tpu_custom_call.1} parent=1 // loop_pre_header
      _
    $region3: #{tpu_custom_call.1} parent=1 // loop_header
      %s17 = sphi 0, %s21
      %p18 = scmp.ge.s32.totalorder %s17, 6
      %s24 = sphi 0, %s36
      %s25 = sphi 0, %s32
      %s26 = sphi 0, %s24
      %s27 = sphi 0, %s25
      %s28 = sphi 0, %s26
      %s29 = sphi 0, %s27
      %s47 = sphi 0, %s49
      %s50 = sphi 0, %s47
      %s51 = sphi 0, %s50
      %s67 = sphi 0, %s51
      %s81 = sphi 0, %s83
      %s84 = sphi 0, %s81
      %s85 = sphi 0, %s84
      %s101 = sphi 0, %s85
      %s115 = sphi 0, %s117
      %s118 = sphi 0, %s115
      %s119 = sphi 0, %s118
      %s135 = sphi 0, %s119
      %s141 = sphi 0, %s143
      %s144 = sphi 0, %s141
      %s145 = sphi 0, %s144
      %s161 = sphi 0, %s145
      %s167 = sphi 0, %s169
      %s170 = sphi 0, %s167
      %s171 = sphi 0, %s170
      %s187 = sphi 0, %s171
    $region4: #{tpu_custom_call.1} parent=1 // loop_header_branch
      %20 = sbr.rel (%p18) target = $region8
    $region5: #{tpu_custom_call.1} parent=1 // loop_body
      %s22 = ssub.s32 %s17, 1
      %s23 = ssub.s32 %s17, 2
      %s30 = sadd.s32 1, %s25
      %p31 = scmp.ge.s32.totalorder %s30, 2
      %s32 = scalar_select %p31, 0, %s30
      %s33 = sadd.s32 1, %s24
      %s34 = scalar_select %p31, %s33, %s24
      %p35 = scmp.ge.s32.totalorder %s34, 2
      %s36 = scalar_select %p35, 0, %s34
      %s37 = smul.u32 %s24, 2
      %s38 = sadd.s32 %s37, %s25
      %p39 = scmp.lt.s32.totalorder %s38, 2
      %s40 = scalar_select %p39, %s38, 2
      %s41 = smul.u32 %s36, 2
      %s42 = sadd.s32 %s41, %s32
      %p43 = scmp.lt.s32.totalorder %s42, 2
      %s44 = scalar_select %p43, %s42, 2
      %s45 = ssub.s32 %s40, %s44
      %p46 = scmp.eq.s32.totalorder %s45, 0
      %s48 = sadd.s32 %s47, 1
      %s49 = scalar_select %p46, %s47, %s48
      %p52 = pneg %p46
      %p53 = scmp.eq.s32.totalorder %s17, 3
      %p54 = por %p52, %p53
      %p55 = scmp.ne.s32.totalorder %s47, %s50
      %p56 = scmp.eq.s32.totalorder %s17, 0
      %p57 = por %p55, %p56
      %p58 = scmp.ne.s32.totalorder %s47, %s50
      %p59 = scmp.eq.s32.totalorder %s22, 3
      %p60 = por %p58, %p59
      %p61 = scmp.ne.s32.totalorder %s50, %s51
      %p62 = scmp.eq.s32.totalorder %s22, 0
      %p63 = por %p61, %p62
      %p64 = scmp.ne.s32.totalorder %s50, %s51
      %p65 = scmp.eq.s32.totalorder %s23, 3
      %p66 = por %p64, %p65
      %p68 = scmp.ne.s32.totalorder %s51, %s67
      %p69 = scmp.eq.s32.totalorder %s23, 0
      %p70 = por %p68, %p69
      %s71 = smul.u32 %s24, 2
      %s72 = sadd.s32 %s71, %s25
      %p73 = scmp.lt.s32.totalorder %s72, 2
      %s74 = scalar_select %p73, %s72, 2
      %s75 = smul.u32 %s36, 2
      %s76 = sadd.s32 %s75, %s32
      %p77 = scmp.lt.s32.totalorder %s76, 2
      %s78 = scalar_select %p77, %s76, 2
      %s79 = ssub.s32 %s74, %s78
      %p80 = scmp.eq.s32.totalorder %s79, 0
      %s82 = sadd.s32 %s81, 1
      %s83 = scalar_select %p80, %s81, %s82
      %p86 = pneg %p80
      %p87 = scmp.eq.s32.totalorder %s17, 3
      %p88 = por %p86, %p87
      %p89 = scmp.ne.s32.totalorder %s81, %s84
      %p90 = scmp.eq.s32.totalorder %s17, 0
      %p91 = por %p89, %p90
      %p92 = scmp.ne.s32.totalorder %s81, %s84
      %p93 = scmp.eq.s32.totalorder %s22, 3
      %p94 = por %p92, %p93
      %p95 = scmp.ne.s32.totalorder %s84, %s85
      %p96 = scmp.eq.s32.totalorder %s22, 0
      %p97 = por %p95, %p96
      %p98 = scmp.ne.s32.totalorder %s84, %s85
      %p99 = scmp.eq.s32.totalorder %s23, 3
      %p100 = por %p98, %p99
      %p102 = scmp.ne.s32.totalorder %s85, %s101
      %p103 = scmp.eq.s32.totalorder %s23, 0
      %p104 = por %p102, %p103
      %s105 = smul.u32 %s24, 2
      %s106 = sadd.s32 %s105, %s25
      %p107 = scmp.lt.s32.totalorder %s106, 2
      %s108 = scalar_select %p107, %s106, 2
      %s109 = smul.u32 %s36, 2
      %s110 = sadd.s32 %s109, %s32
      %p111 = scmp.lt.s32.totalorder %s110, 2
      %s112 = scalar_select %p111, %s110, 2
      %s113 = ssub.s32 %s108, %s112
      %p114 = scmp.eq.s32.totalorder %s113, 0
      %s116 = sadd.s32 %s115, 1
      %s117 = scalar_select %p114, %s115, %s116
      %p120 = pneg %p114
      %p121 = scmp.eq.s32.totalorder %s17, 3
      %p122 = por %p120, %p121
      %p123 = scmp.ne.s32.totalorder %s115, %s118
      %p124 = scmp.eq.s32.totalorder %s17, 0
      %p125 = por %p123, %p124
      %p126 = scmp.ne.s32.totalorder %s115, %s118
      %p127 = scmp.eq.s32.totalorder %s22, 3
      %p128 = por %p126, %p127
      %p129 = scmp.ne.s32.totalorder %s118, %s119
      %p130 = scmp.eq.s32.totalorder %s22, 0
      %p131 = por %p129, %p130
      %p132 = scmp.ne.s32.totalorder %s118, %s119
      %p133 = scmp.eq.s32.totalorder %s23, 3
      %p134 = por %p132, %p133
      %p136 = scmp.ne.s32.totalorder %s119, %s135
      %p137 = scmp.eq.s32.totalorder %s23, 0
      %p138 = por %p136, %p137
      %s139 = ssub.s32 %s24, %s36
      %p140 = scmp.eq.s32.totalorder %s139, 0
      %s142 = sadd.s32 %s141, 1
      %s143 = scalar_select %p140, %s141, %s142
      %p146 = pneg %p140
      %p147 = scmp.eq.s32.totalorder %s17, 3
      %p148 = por %p146, %p147
      %p149 = scmp.ne.s32.totalorder %s141, %s144
      %p150 = scmp.eq.s32.totalorder %s17, 0
      %p151 = por %p149, %p150
      %p152 = scmp.ne.s32.totalorder %s141, %s144
      %p153 = scmp.eq.s32.totalorder %s22, 3
      %p154 = por %p152, %p153
      %p155 = scmp.ne.s32.totalorder %s144, %s145
      %p156 = scmp.eq.s32.totalorder %s22, 0
      %p157 = por %p155, %p156
      %p158 = scmp.ne.s32.totalorder %s144, %s145
      %p159 = scmp.eq.s32.totalorder %s23, 3
      %p160 = por %p158, %p159
      %p162 = scmp.ne.s32.totalorder %s145, %s161
      %p163 = scmp.eq.s32.totalorder %s23, 0
      %p164 = por %p162, %p163
      %s165 = ssub.s32 %s24, %s36
      %p166 = scmp.eq.s32.totalorder %s165, 0
      %s168 = sadd.s32 %s167, 1
      %s169 = scalar_select %p166, %s167, %s168
      %p172 = pneg %p166
      %p173 = scmp.eq.s32.totalorder %s17, 3
      %p174 = por %p172, %p173
      %p175 = scmp.ne.s32.totalorder %s167, %s170
      %p176 = scmp.eq.s32.totalorder %s17, 0
      %p177 = por %p175, %p176
      %p178 = scmp.ne.s32.totalorder %s167, %s170
      %p179 = scmp.eq.s32.totalorder %s22, 3
      %p180 = por %p178, %p179
      %p181 = scmp.ne.s32.totalorder %s170, %s171
      %p182 = scmp.eq.s32.totalorder %s22, 0
      %p183 = por %p181, %p182
      %p184 = scmp.ne.s32.totalorder %s170, %s171
      %p185 = scmp.eq.s32.totalorder %s23, 3
      %p186 = por %p184, %p185
      %p188 = scmp.ne.s32.totalorder %s171, %s187
      %p189 = scmp.eq.s32.totalorder %s23, 0
      %p190 = por %p188, %p189
      %p191 = scmp.le.s32.totalorder 1, %s17
      %p192 = scmp.lt.s32.totalorder %s17, 5
      %p193 = pnand %p191, %p192
      %p194 = pneg %p193
      // Predicated region
      $region9: #{tpu_custom_call.1} parent=5 // pred_check
        _
      $region10: #{tpu_custom_call.1} parent=5 // pred_check_branch
        %196 = sbr.rel (%p193) target = $region12
      $region11: #{tpu_custom_call.1} parent=5 // pred_region
        %s197 = ssub.s32 %s17, 1
      $region12: #{tpu_custom_call.1} parent=5 // pred_fallthru
        _
      %p198 = scmp.lt.s32.totalorder %s17, 4
      // Predicated region
      $region13: #{tpu_custom_call.1} parent=5 // pred_check
        %p199 = pneg %p198
      $region14: #{tpu_custom_call.1} parent=5 // pred_check_branch
        %201 = sbr.rel (%p199) target = $region16
      $region15: #{tpu_custom_call.1} parent=5 // pred_region
        // Predicated region
        $region17: #{tpu_custom_call.1} parent=15 // pred_check
          %p202 = pneg %p57
        $region18: #{tpu_custom_call.1} parent=15 // pred_check_branch
          %204 = sbr.rel (%p202) target = $region20
        $region19: #{tpu_custom_call.1} parent=15 // pred_region
          %s205 = sand.u32 %s47, 1
          %s206 = scalar_lea.sflag [#allocation3], %s205
          %s207 = sand.u32 %s47, 1
          %s208 = smul.addr %s207, 8
          %s209 = scalar_lea.vmem [#allocation2], %s208
          %s210 = smul.u32 %s24, 2
          %s211 = sadd.s32 %s210, %s25
          %p212 = scmp.lt.s32.totalorder %s211, 2
          %s213 = scalar_select %p212, %s211, 2
          %s215 = ssub.s32 128, 128
          %216 = vsyncadd %s206, %s215
          %s217 = smul.addr %s213, 128
          %s218 = scalar_lea.hbm %s0, %s217
          %s220 = sshll.u32 %s209, 4
          %s221 = int_to_ptr.vmem [resolvable:$true] %s220
          %223 = dma.hbm_to_vmem [thread:$0]  %s218, 128, %s221, %s206
        $region20: #{tpu_custom_call.1} parent=15 // pred_fallthru
          _
        // Predicated region
        $region21: #{tpu_custom_call.1} parent=15 // pred_check
          %p224 = pneg %p91
        $region22: #{tpu_custom_call.1} parent=15 // pred_check_branch
          %226 = sbr.rel (%p224) target = $region24
        $region23: #{tpu_custom_call.1} parent=15 // pred_region
          %s227 = sand.u32 %s17, 1
          %s228 = scalar_lea.sflag [#allocation5], %s227
          %s229 = sand.u32 %s81, 1
          %s230 = smul.addr %s229, 24
          %s231 = scalar_lea.vmem [#allocation4], %s230
          %s232 = smul.u32 %s24, 2
          %s233 = sadd.s32 %s232, %s25
          %p234 = scmp.lt.s32.totalorder %s233, 2
          %s235 = scalar_select %p234, %s233, 2
          %s237 = ssub.s32 384, 384
          %238 = vsyncadd %s228, %s237
          %s239 = smul.addr %s235, 3
          %s240 = smul.addr %s239, 128
          %s241 = scalar_lea.hbm %s1, %s240
          %s243 = sshll.u32 %s231, 4
          %s244 = int_to_ptr.vmem [resolvable:$true] %s243
          %246 = dma.hbm_to_vmem [thread:$0]  %s241, 384, %s244, %s228
        $region24: #{tpu_custom_call.1} parent=15 // pred_fallthru
          _
        // Predicated region
        $region25: #{tpu_custom_call.1} parent=15 // pred_check
          %p247 = pneg %p125
        $region26: #{tpu_custom_call.1} parent=15 // pred_check_branch
          %249 = sbr.rel (%p247) target = $region28
        $region27: #{tpu_custom_call.1} parent=15 // pred_region
          %s250 = sand.u32 %s17, 1
          %s251 = scalar_lea.sflag [#allocation5], %s250
          %s252 = sand.u32 %s115, 1
          %s253 = smul.addr %s252, 104
          %s254 = scalar_lea.vmem [#allocation6], %s253
          %s255 = smul.u32 %s24, 2
          %s256 = sadd.s32 %s255, %s25
          %p257 = scmp.lt.s32.totalorder %s256, 2
          %s258 = scalar_select %p257, %s256, 2
          %s260 = ssub.s32 1664, 1664
          %261 = vsyncadd %s251, %s260
          %s262 = smul.addr %s258, 13
          %s263 = smul.addr %s262, 128
          %s264 = scalar_lea.hbm %s2, %s263
          %s266 = sshll.u32 %s254, 4
          %s267 = int_to_ptr.vmem [resolvable:$true] %s266
          %269 = dma.hbm_to_vmem [thread:$0]  %s264, 1664, %s267, %s251
        $region28: #{tpu_custom_call.1} parent=15 // pred_fallthru
          _
      $region16: #{tpu_custom_call.1} parent=5 // pred_fallthru
        _
      %p270 = scmp.le.s32.totalorder 1, %s17
      %p271 = scmp.lt.s32.totalorder %s17, 5
      %p272 = pnand %p270, %p271
      %p273 = pneg %p272
      // Predicated region
      $region29: #{tpu_custom_call.1} parent=5 // pred_check
        _
      $region30: #{tpu_custom_call.1} parent=5 // pred_check_branch
        %275 = sbr.rel (%p272) target = $region32
      $region31: #{tpu_custom_call.1} parent=5 // pred_region
        %s276 = ssub.s32 %s17, 1
        %s277 = sand.u32 %s50, 1
        %s278 = scalar_lea.sflag [#allocation3], %s277
        %s279 = sand.u32 %s50, 1
        %s280 = smul.addr %s279, 8
        %s281 = scalar_lea.vmem [#allocation2], %s280
        // Predicated region
        $region33: #{tpu_custom_call.1} parent=31 // pred_check
          %p282 = pneg %p63
        $region34: #{tpu_custom_call.1} parent=31 // pred_check_branch
          %284 = sbr.rel (%p282) target = $region36
        $region35: #{tpu_custom_call.1} parent=31 // pred_region
          %285 = dma.done %s278, 128
        $region36: #{tpu_custom_call.1} parent=31 // pred_fallthru
          _
        %s286 = sand.u32 %s22, 1
        %s287 = scalar_lea.sflag [#allocation5], %s286
        %s288 = sand.u32 %s84, 1
        %s289 = smul.addr %s288, 24
        %s290 = scalar_lea.vmem [#allocation4], %s289
        // Predicated region
        $region37: #{tpu_custom_call.1} parent=31 // pred_check
          %p291 = pneg %p97
        $region38: #{tpu_custom_call.1} parent=31 // pred_check_branch
          %293 = sbr.rel (%p291) target = $region40
        $region39: #{tpu_custom_call.1} parent=31 // pred_region
          %294 = dma.done %s287, 384
        $region40: #{tpu_custom_call.1} parent=31 // pred_fallthru
          _
        %s295 = sand.u32 %s22, 1
        %s296 = scalar_lea.sflag [#allocation5], %s295
        %s297 = sand.u32 %s118, 1
        %s298 = smul.addr %s297, 104
        %s299 = scalar_lea.vmem [#allocation6], %s298
        // Predicated region
        $region41: #{tpu_custom_call.1} parent=31 // pred_check
          %p300 = pneg %p131
        $region42: #{tpu_custom_call.1} parent=31 // pred_check_branch
          %302 = sbr.rel (%p300) target = $region44
        $region43: #{tpu_custom_call.1} parent=31 // pred_region
          %303 = dma.done %s296, 1664
        $region44: #{tpu_custom_call.1} parent=31 // pred_fallthru
          _
        %s304 = sand.u32 %s50, 1
        %s305 = scalar_lea.sflag [#allocation3], %s304
        %s306 = sand.u32 %s50, 1
        %s307 = smul.addr %s306, 8
        %s308 = scalar_lea.vmem [#allocation2], %s307
        %p309 = pneg %p63
        %p310 = pneg %p60
        %s311 = sand.u32 %s22, 1
        %s312 = scalar_lea.sflag [#allocation5], %s311
        %s313 = sand.u32 %s84, 1
        %s314 = smul.addr %s313, 24
        %s315 = scalar_lea.vmem [#allocation4], %s314
        %p316 = pneg %p97
        %p317 = pneg %p94
        %s318 = sand.u32 %s22, 1
        %s319 = scalar_lea.sflag [#allocation5], %s318
        %s320 = sand.u32 %s118, 1
        %s321 = smul.addr %s320, 104
        %s322 = scalar_lea.vmem [#allocation6], %s321
        %p323 = pneg %p131
        %p324 = pneg %p128
        %p325 = pneg %p157
        %p326 = pneg %p154
        %p327 = scmp.lt.s32.totalorder %s26, 1
        %s328 = scalar_select %p327, %s26, 1
        %s329 = scalar_lea.vmem %s3, %s328
        %p330 = pneg %p183
        %p331 = pneg %p180
        %p332 = scmp.lt.s32.totalorder %s26, 1
        %s333 = scalar_select %p332, %s26, 1
        %s334 = scalar_lea.vmem %s4, %s333
        %s335 = smul.u32 %s26, 2
        %s336 = sadd.s32 %s335, %s27
        %p337 = scmp.lt.s32.totalorder %s336, 2
        %s338 = scalar_select %p337, %s336, 2
        %s339 = smul.u32 %s26, 2
        %s340 = sadd.s32 %s339, %s27
        %p341 = scmp.lt.s32.totalorder %s340, 2
        %s342 = scalar_select %p341, %s340, 2
        %s343 = smul.u32 %s26, 2
        %s344 = sadd.s32 %s343, %s27
        %p345 = scmp.lt.s32.totalorder %s344, 2
        %s346 = scalar_select %p345, %s344, 2
        %p347 = scmp.lt.s32.totalorder %s26, 1
        %s348 = scalar_select %p347, %s26, 1
        %s349 = scalar_lea.vmem %s3, %s348
        %p350 = scmp.lt.s32.totalorder %s26, 1
        %s351 = scalar_select %p350, %s26, 1
        %s352 = scalar_lea.vmem %s4, %s351
        %p353 = scmp.eq.s32.totalorder %s27, 0
        // Predicated region
        $region45: #{tpu_custom_call.1} parent=31 // pred_check
          %p354 = pneg %p353
        $region46: #{tpu_custom_call.1} parent=31 // pred_check_branch
          %356 = sbr.rel (%p354) target = $region48
        $region47: #{tpu_custom_call.1} parent=31 // pred_region
          %vm357 = vcmask 0
          %358 = vst.msk [vmem:[%s349] sm:$0x1] %vm357, 0.0
          %359 = vst.msk [vmem:[%s352] sm:$0x1] %vm357, 0.0
        $region48: #{tpu_custom_call.1} parent=31 // pred_fallthru
          _
        %s360 = smul.u32 %s26, 2
        %s361 = sadd.s32 %s360, %s27
        %s362 = smul.u32 %s361, 8
        %v363 = vlaneseq
        %v364 = vshrl.u32 %v363, 7
        %v365 = vstv %s362
        %v366 = vadd.s32 %v365, %v364
        %vm367 = vcmp.lt.s32.totalorder %v366, 20
        %v368 = vld [vmem:[%s281] sm:$0xff]
        %v369 = vld [vmem:[%s290] sm:$0xff]
        %v370 = vld [vmem:[%s290 + $0x8] sm:$0xff]
        %v371 = vld [vmem:[%s290 + $0x10] sm:$0xff]
        %v372 = vld [vmem:[%s299] sm:$0xff]
        %v373 = vld [vmem:[%s299 + $0x8] sm:$0xff]
        %v374 = vld [vmem:[%s299 + $0x10] sm:$0xff]
        %v375 = vld [vmem:[%s299 + $0x18] sm:$0xff]
        %v376 = vld [vmem:[%s299 + $0x20] sm:$0xff]
        %v377 = vld [vmem:[%s299 + $0x28] sm:$0xff]
        %v378 = vld [vmem:[%s299 + $0x30] sm:$0xff]
        %v379 = vld [vmem:[%s299 + $0x38] sm:$0xff]
        %v380 = vld [vmem:[%s299 + $0x40] sm:$0xff]
        %v381 = vld [vmem:[%s299 + $0x48] sm:$0xff]
        %v382 = vld [vmem:[%s299 + $0x50] sm:$0xff]
        %v383 = vld [vmem:[%s299 + $0x58] sm:$0xff]
        %v384 = vld [vmem:[%s299 + $0x60] sm:$0xff]
        %386 = vrot.lane.b32.xlu0 %v368, 32
        %v387 = vpop.permute.xlu0 %386
        %389 = vrot.lane.b32.xlu0 %v368, 64
        %v390 = vpop.permute.xlu0 %389
        %392 = vrot.lane.b32.xlu0 %v368, 96
        %v393 = vpop.permute.xlu0 %392
        %vm395 = vcmask 261120
        %v396 = vsel %vm395, %v368, %v387
        %vm397 = vcmask 523264
        %v398 = vsel %vm397, %v396, %v390
        %vm399 = vcmask 785408
        %v400 = vsel %vm399, %v398, %v393
        %v401 = vmul.f32 %v400, %v369
        %v402 = vmul.f32 %v400, %v370
        %v403 = vmul.f32 %v396, %v371
        %v404 = vmul.f32 %v400, %v372
        %v405 = vmul.f32 %v400, %v373
        %v406 = vmul.f32 %v400, %v374
        %v407 = vmul.f32 %v400, %v375
        %v408 = vmul.f32 %v400, %v376
        %v409 = vmul.f32 %v400, %v377
        %v410 = vmul.f32 %v400, %v378
        %v411 = vmul.f32 %v400, %v379
        %v412 = vmul.f32 %v400, %v380
        %v413 = vmul.f32 %v400, %v381
        %v414 = vmul.f32 %v400, %v382
        %v415 = vmul.f32 %v400, %v383
        %v416 = vmul.f32 %v396, %v384
        %v417 = vadd.s32 %v364, 8
        %v418 = vadd.s32 %v364, 16
        %v419 = vadd.s32 %v364, 24
        %v420 = vadd.s32 %v364, 32
        %v421 = vadd.s32 %v364, 40
        %v422 = vadd.s32 %v364, 48
        %v423 = vadd.s32 %v364, 56
        %v424 = vadd.s32 %v364, 64
        %v425 = vadd.s32 %v364, 72
        %v426 = vadd.s32 %v364, 80
        %v427 = vadd.s32 %v364, 88
        %v428 = vadd.s32 %v364, 96
        %v429 = vadd.s32 %v364, 104
        %v430 = vadd.s32 %v364, 112
        %v431 = vadd.s32 %v364, 120
        %v432 = vadd.s32 %v364, 128
        %v433 = vadd.s32 %v364, 136
        %v434 = vadd.s32 %v364, 144
        %v435 = vadd.s32 %v364, 152
        %v436 = vadd.s32 %v364, 160
        %v437 = vadd.s32 %v364, 168
        %v438 = vadd.s32 %v364, 176
        %v439 = vadd.s32 %v364, 184
        %v440 = vadd.s32 %v364, 192
        %v441 = vadd.s32 %v364, 200
        %v442 = vadd.s32 %v364, 208
        %v443 = vadd.s32 %v364, 216
        %v444 = vadd.s32 %v364, 224
        %v445 = vadd.s32 %v364, 232
        %v446 = vadd.s32 %v364, 240
        %v447 = vadd.s32 %v364, 248
        %v448 = vadd.s32 %v364, 256
        %v449 = vadd.s32 %v364, 264
        %v450 = vadd.s32 %v364, 272
        %v451 = vadd.s32 %v364, 280
        %v452 = vadd.s32 %v364, 288
        %v453 = vadd.s32 %v364, 296
        %v454 = vadd.s32 %v364, 304
        %v455 = vadd.s32 %v364, 312
        %v456 = vlaneseq
        %v457 = vand.u32 %v456, 127
        %v458 = vmul.u32 %v457, 32
        %vm459 = vcmp.ge.s32.totalorder %v364, %v458
        %vm460 = vcmp.ge.s32.totalorder %v417, %v458
        %vm461 = vcmp.ge.s32.totalorder %v418, %v458
        %vm462 = vcmp.ge.s32.totalorder %v419, %v458
        %vm463 = vcmp.ge.s32.totalorder %v420, %v458
        %vm464 = vcmp.ge.s32.totalorder %v421, %v458
        %vm465 = vcmp.ge.s32.totalorder %v422, %v458
        %vm466 = vcmp.ge.s32.totalorder %v423, %v458
        %vm467 = vcmp.ge.s32.totalorder %v424, %v458
        %vm468 = vcmp.ge.s32.totalorder %v425, %v458
        %vm469 = vcmp.ge.s32.totalorder %v426, %v458
        %vm470 = vcmp.ge.s32.totalorder %v427, %v458
        %vm471 = vcmp.ge.s32.totalorder %v428, %v458
        %vm472 = vcmp.ge.s32.totalorder %v429, %v458
        %vm473 = vcmp.ge.s32.totalorder %v430, %v458
        %vm474 = vcmp.ge.s32.totalorder %v431, %v458
        %vm475 = vcmp.ge.s32.totalorder %v432, %v458
        %vm476 = vcmp.ge.s32.totalorder %v433, %v458
        %vm477 = vcmp.ge.s32.totalorder %v434, %v458
        %vm478 = vcmp.ge.s32.totalorder %v435, %v458
        %vm479 = vcmp.ge.s32.totalorder %v436, %v458
        %vm480 = vcmp.ge.s32.totalorder %v437, %v458
        %vm481 = vcmp.ge.s32.totalorder %v438, %v458
        %vm482 = vcmp.ge.s32.totalorder %v439, %v458
        %vm483 = vcmp.ge.s32.totalorder %v440, %v458
        %vm484 = vcmp.ge.s32.totalorder %v441, %v458
        %vm485 = vcmp.ge.s32.totalorder %v442, %v458
        %vm486 = vcmp.ge.s32.totalorder %v443, %v458
        %vm487 = vcmp.ge.s32.totalorder %v444, %v458
        %vm488 = vcmp.ge.s32.totalorder %v445, %v458
        %vm489 = vcmp.ge.s32.totalorder %v446, %v458
        %vm490 = vcmp.ge.s32.totalorder %v447, %v458
        %vm491 = vcmp.ge.s32.totalorder %v448, %v458
        %vm492 = vcmp.ge.s32.totalorder %v449, %v458
        %vm493 = vcmp.ge.s32.totalorder %v450, %v458
        %vm494 = vcmp.ge.s32.totalorder %v451, %v458
        %vm495 = vcmp.ge.s32.totalorder %v452, %v458
        %vm496 = vcmp.ge.s32.totalorder %v453, %v458
        %vm497 = vcmp.ge.s32.totalorder %v454, %v458
        %vm498 = vcmp.ge.s32.totalorder %v455, %v458
        %v499 = vadd.s32 %v457, 1
        %v500 = vmul.u32 %v499, 32
        %vm501 = vcmp.lt.s32.totalorder %v364, %v500
        %vm502 = vcmp.lt.s32.totalorder %v417, %v500
        %vm503 = vcmp.lt.s32.totalorder %v418, %v500
        %vm504 = vcmp.lt.s32.totalorder %v419, %v500
        %vm505 = vcmp.lt.s32.totalorder %v420, %v500
        %vm506 = vcmp.lt.s32.totalorder %v421, %v500
        %vm507 = vcmp.lt.s32.totalorder %v422, %v500
        %vm508 = vcmp.lt.s32.totalorder %v423, %v500
        %vm509 = vcmp.lt.s32.totalorder %v424, %v500
        %vm510 = vcmp.lt.s32.totalorder %v425, %v500
        %vm511 = vcmp.lt.s32.totalorder %v426, %v500
        %vm512 = vcmp.lt.s32.totalorder %v427, %v500
        %vm513 = vcmp.lt.s32.totalorder %v428, %v500
        %vm514 = vcmp.lt.s32.totalorder %v429, %v500
        %vm515 = vcmp.lt.s32.totalorder %v430, %v500
        %vm516 = vcmp.lt.s32.totalorder %v431, %v500
        %vm517 = vcmp.lt.s32.totalorder %v432, %v500
        %vm518 = vcmp.lt.s32.totalorder %v433, %v500
        %vm519 = vcmp.lt.s32.totalorder %v434, %v500
        %vm520 = vcmp.lt.s32.totalorder %v435, %v500
        %vm521 = vcmp.lt.s32.totalorder %v436, %v500
        %vm522 = vcmp.lt.s32.totalorder %v437, %v500
        %vm523 = vcmp.lt.s32.totalorder %v438, %v500
        %vm524 = vcmp.lt.s32.totalorder %v439, %v500
        %vm525 = vcmp.lt.s32.totalorder %v440, %v500
        %vm526 = vcmp.lt.s32.totalorder %v441, %v500
        %vm527 = vcmp.lt.s32.totalorder %v442, %v500
        %vm528 = vcmp.lt.s32.totalorder %v443, %v500
        %vm529 = vcmp.lt.s32.totalorder %v444, %v500
        %vm530 = vcmp.lt.s32.totalorder %v445, %v500
        %vm531 = vcmp.lt.s32.totalorder %v446, %v500
        %vm532 = vcmp.lt.s32.totalorder %v447, %v500
        %vm533 = vcmp.lt.s32.totalorder %v448, %v500
        %vm534 = vcmp.lt.s32.totalorder %v449, %v500
        %vm535 = vcmp.lt.s32.totalorder %v450, %v500
        %vm536 = vcmp.lt.s32.totalorder %v451, %v500
        %vm537 = vcmp.lt.s32.totalorder %v452, %v500
        %vm538 = vcmp.lt.s32.totalorder %v453, %v500
        %vm539 = vcmp.lt.s32.totalorder %v454, %v500
        %vm540 = vcmp.lt.s32.totalorder %v455, %v500
        %vm541 = vmand %vm459, %vm501
        %vm542 = vmand %vm460, %vm502
        %vm543 = vmand %vm461, %vm503
        %vm544 = vmand %vm462, %vm504
        %vm545 = vmand %vm463, %vm505
        %vm546 = vmand %vm464, %vm506
        %vm547 = vmand %vm465, %vm507
        %vm548 = vmand %vm466, %vm508
        %vm549 = vmand %vm467, %vm509
        %vm550 = vmand %vm468, %vm510
        %vm551 = vmand %vm469, %vm511
        %vm552 = vmand %vm470, %vm512
        %vm553 = vmand %vm471, %vm513
        %vm554 = vmand %vm472, %vm514
        %vm555 = vmand %vm473, %vm515
        %vm556 = vmand %vm474, %vm516
        %vm557 = vmand %vm475, %vm517
        %vm558 = vmand %vm476, %vm518
        %vm559 = vmand %vm477, %vm519
        %vm560 = vmand %vm478, %vm520
        %vm561 = vmand %vm479, %vm521
        %vm562 = vmand %vm480, %vm522
        %vm563 = vmand %vm481, %vm523
        %vm564 = vmand %vm482, %vm524
        %vm565 = vmand %vm483, %vm525
        %vm566 = vmand %vm484, %vm526
        %vm567 = vmand %vm485, %vm527
        %vm568 = vmand %vm486, %vm528
        %vm569 = vmand %vm487, %vm529
        %vm570 = vmand %vm488, %vm530
        %vm571 = vmand %vm489, %vm531
        %vm572 = vmand %vm490, %vm532
        %vm573 = vmand %vm491, %vm533
        %vm574 = vmand %vm492, %vm534
        %vm575 = vmand %vm493, %vm535
        %vm576 = vmand %vm494, %vm536
        %vm577 = vmand %vm495, %vm537
        %vm578 = vmand %vm496, %vm538
        %vm579 = vmand %vm497, %vm539
        %vm580 = vmand %vm498, %vm540
        %v581 = vsel %vm541, 1, 0
        %v582 = vsel %vm542, 1, 0
        %v583 = vsel %vm543, 1, 0
        %v584 = vsel %vm544, 1, 0
        %v585 = vsel %vm545, 1, 0
        %v586 = vsel %vm546, 1, 0
        %v587 = vsel %vm547, 1, 0
        %v588 = vsel %vm548, 1, 0
        %v589 = vsel %vm549, 1, 0
        %v590 = vsel %vm550, 1, 0
        %v591 = vsel %vm551, 1, 0
        %v592 = vsel %vm552, 1, 0
        %v593 = vsel %vm553, 1, 0
        %v594 = vsel %vm554, 1, 0
        %v595 = vsel %vm555, 1, 0
        %v596 = vsel %vm556, 1, 0
        %v597 = vsel %vm557, 1, 0
        %v598 = vsel %vm558, 1, 0
        %v599 = vsel %vm559, 1, 0
        %v600 = vsel %vm560, 1, 0
        %v601 = vsel %vm561, 1, 0
        %v602 = vsel %vm562, 1, 0
        %v603 = vsel %vm563, 1, 0
        %v604 = vsel %vm564, 1, 0
        %v605 = vsel %vm565, 1, 0
        %v606 = vsel %vm566, 1, 0
        %v607 = vsel %vm567, 1, 0
        %v608 = vsel %vm568, 1, 0
        %v609 = vsel %vm569, 1, 0
        %v610 = vsel %vm570, 1, 0
        %v611 = vsel %vm571, 1, 0
        %v612 = vsel %vm572, 1, 0
        %v613 = vsel %vm573, 1, 0
        %v614 = vsel %vm574, 1, 0
        %v615 = vsel %vm575, 1, 0
        %v616 = vsel %vm576, 1, 0
        %v617 = vsel %vm577, 1, 0
        %v618 = vsel %vm578, 1, 0
        %v619 = vsel %vm579, 1, 0
        %v620 = vsel %vm580, 1, 0
        %v621 = vcvt.s32.f32 %v581
        %v622 = vcvt.s32.f32 %v582
        %v623 = vcvt.s32.f32 %v583
        %v624 = vcvt.s32.f32 %v584
        %v625 = vcvt.s32.f32 %v585
        %v626 = vcvt.s32.f32 %v586
        %v627 = vcvt.s32.f32 %v587
        %v628 = vcvt.s32.f32 %v588
        %v629 = vcvt.s32.f32 %v589
        %v630 = vcvt.s32.f32 %v590
        %v631 = vcvt.s32.f32 %v591
        %v632 = vcvt.s32.f32 %v592
        %v633 = vcvt.s32.f32 %v593
        %v634 = vcvt.s32.f32 %v594
        %v635 = vcvt.s32.f32 %v595
        %v636 = vcvt.s32.f32 %v596
        %v637 = vcvt.s32.f32 %v597
        %v638 = vcvt.s32.f32 %v598
        %v639 = vcvt.s32.f32 %v599
        %v640 = vcvt.s32.f32 %v600
        %v641 = vcvt.s32.f32 %v601
        %v642 = vcvt.s32.f32 %v602
        %v643 = vcvt.s32.f32 %v603
        %v644 = vcvt.s32.f32 %v604
        %v645 = vcvt.s32.f32 %v605
        %v646 = vcvt.s32.f32 %v606
        %v647 = vcvt.s32.f32 %v607
        %v648 = vcvt.s32.f32 %v608
        %v649 = vcvt.s32.f32 %v609
        %v650 = vcvt.s32.f32 %v610
        %v651 = vcvt.s32.f32 %v611
        %v652 = vcvt.s32.f32 %v612
        %v653 = vcvt.s32.f32 %v613
        %v654 = vcvt.s32.f32 %v614
        %v655 = vcvt.s32.f32 %v615
        %v656 = vcvt.s32.f32 %v616
        %v657 = vcvt.s32.f32 %v617
        %v658 = vcvt.s32.f32 %v618
        %v659 = vcvt.s32.f32 %v619
        %v660 = vcvt.s32.f32 %v620
        %v662 = vsel %vm397, %v403, 0
        %664 = vmatprep.subr.mxu0 0.0
        %v665 = vand.u32 %v621, 4294901760
        %666 = vmatpush1.msra.mxu0 %v665
        %667 = vmatprep.subr.mxu0 0.0
        %v668 = vand.u32 %v622, 4294901760
        %669 = vmatpush1.msra.mxu0 %v668
        %670 = vmatprep.subr.mxu0 0.0
        %v671 = vand.u32 %v623, 4294901760
        %672 = vmatpush1.msra.mxu0 %v671
        %673 = vmatprep.subr.mxu0 0.0
        %v674 = vand.u32 %v624, 4294901760
        %675 = vmatpush1.msra.mxu0 %v674
        %676 = vmatprep.subr.mxu0 0.0
        %v677 = vand.u32 %v625, 4294901760
        %678 = vmatpush1.msra.mxu0 %v677
        %679 = vmatprep.subr.mxu0 0.0
        %v680 = vand.u32 %v626, 4294901760
        %681 = vmatpush1.msra.mxu0 %v680
        %682 = vmatprep.subr.mxu0 0.0
        %v683 = vand.u32 %v627, 4294901760
        %684 = vmatpush1.msra.mxu0 %v683
        %685 = vmatprep.subr.mxu0 0.0
        %v686 = vand.u32 %v628, 4294901760
        %687 = vmatpush1.msra.mxu0 %v686
        %688 = vmatprep.subr.mxu0 0.0
        %v689 = vand.u32 %v629, 4294901760
        %690 = vmatpush1.msra.mxu0 %v689
        %691 = vmatprep.subr.mxu0 0.0
        %v692 = vand.u32 %v630, 4294901760
        %693 = vmatpush1.msra.mxu0 %v692
        %694 = vmatprep.subr.mxu0 0.0
        %v695 = vand.u32 %v631, 4294901760
        %696 = vmatpush1.msra.mxu0 %v695
        %697 = vmatprep.subr.mxu0 0.0
        %v698 = vand.u32 %v632, 4294901760
        %699 = vmatpush1.msra.mxu0 %v698
        %700 = vmatprep.subr.mxu0 0.0
        %v701 = vand.u32 %v633, 4294901760
        %702 = vmatpush1.msra.mxu0 %v701
        %703 = vmatprep.subr.mxu0 0.0
        %v704 = vand.u32 %v634, 4294901760
        %705 = vmatpush1.msra.mxu0 %v704
        %706 = vmatprep.subr.mxu0 0.0
        %v707 = vand.u32 %v635, 4294901760
        %708 = vmatpush1.msra.mxu0 %v707
        %709 = vmatprep.subr.mxu0 0.0
        %v710 = vand.u32 %v636, 4294901760
        %711 = vmatpush1.msra.mxu0 %v710
        %712 = vmatprep.subr.mxu0 0.0
        %v713 = vand.u32 %v637, 4294901760
        %714 = vmatpush1.msra.mxu0 %v713
        %715 = vmatprep.subr.mxu0 0.0
        %v716 = vand.u32 %v638, 4294901760
        %717 = vmatpush1.msra.mxu0 %v716
        %718 = vmatprep.subr.mxu0 0.0
        %v719 = vand.u32 %v639, 4294901760
        %720 = vmatpush1.msra.mxu0 %v719
        %721 = vmatprep.subr.mxu0 0.0
        %v722 = vand.u32 %v640, 4294901760
        %723 = vmatpush1.msra.mxu0 %v722
        %724 = vmatprep.subr.mxu0 0.0
        %v725 = vand.u32 %v641, 4294901760
        %726 = vmatpush1.msra.mxu0 %v725
        %727 = vmatprep.subr.mxu0 0.0
        %v728 = vand.u32 %v642, 4294901760
        %729 = vmatpush1.msra.mxu0 %v728
        %730 = vmatprep.subr.mxu0 0.0
        %v731 = vand.u32 %v643, 4294901760
        %732 = vmatpush1.msra.mxu0 %v731
        %733 = vmatprep.subr.mxu0 0.0
        %v734 = vand.u32 %v644, 4294901760
        %735 = vmatpush1.msra.mxu0 %v734
        %736 = vmatprep.subr.mxu0 0.0
        %v737 = vand.u32 %v645, 4294901760
        %738 = vmatpush1.msra.mxu0 %v737
        %739 = vmatprep.subr.mxu0 0.0
        %v740 = vand.u32 %v646, 4294901760
        %741 = vmatpush1.msra.mxu0 %v740
        %742 = vmatprep.subr.mxu0 0.0
        %v743 = vand.u32 %v647, 4294901760
        %744 = vmatpush1.msra.mxu0 %v743
        %745 = vmatprep.subr.mxu0 0.0
        %v746 = vand.u32 %v648, 4294901760
        %747 = vmatpush1.msra.mxu0 %v746
        %748 = vmatprep.subr.mxu0 0.0
        %v749 = vand.u32 %v649, 4294901760
        %750 = vmatpush1.msra.mxu0 %v749
        %751 = vmatprep.subr.mxu0 0.0
        %v752 = vand.u32 %v650, 4294901760
        %753 = vmatpush1.msra.mxu0 %v752
        %754 = vmatprep.subr.mxu0 0.0
        %v755 = vand.u32 %v651, 4294901760
        %756 = vmatpush1.msra.mxu0 %v755
        %757 = vmatprep.subr.mxu0 0.0
        %v758 = vand.u32 %v652, 4294901760
        %759 = vmatpush1.msra.mxu0 %v758
        %v760 = vand.u32 %v402, 4294901760
        %v761 = vsub.f32 %v402, %v760
        %v762 = vand.u32 %v761, 4294901760
        %v763 = vsub.f32 %v761, %v762
        %v764 = vand.u32 %v763, 4294901760
        %765 = vmatprep.mubr.f32.mxu0 %v764
        %v766 = vand.u32 %v401, 4294901760
        %v767 = vsub.f32 %v401, %v766
        %v768 = vand.u32 %v767, 4294901760
        %v769 = vsub.f32 %v767, %v768
        %v770 = vand.u32 %v769, 4294901760
        %771 = vmatmul.mubr.f32.gmra.mrb[0].mxu0 %v770
        %v772 = vpop.f32.mrb[0].mxu0
        %v773 = vadd.f32 0.0, %v772
        %v774 = vpop.f32.mrb[0].mxu0
        %775 = vdwg.mxu0
        %776 = vmatprep.subr.mxu0 0.0
        %v777 = vand.u32 %v621, 4294901760
        %v778 = vsub.f32 %v621, %v777
        %v779 = vand.u32 %v778, 4294901760
        %v780 = vsub.f32 %v778, %v779
        %v781 = vand.u32 %v780, 4294901760
        %782 = vmatpush1.msra.mxu0 %v781
        %783 = vmatprep.subr.mxu0 0.0
        %v784 = vand.u32 %v622, 4294901760
        %v785 = vsub.f32 %v622, %v784
        %v786 = vand.u32 %v785, 4294901760
        %v787 = vsub.f32 %v785, %v786
        %v788 = vand.u32 %v787, 4294901760
        %789 = vmatpush1.msra.mxu0 %v788
        %790 = vmatprep.subr.mxu0 0.0
        %v791 = vand.u32 %v623, 4294901760
        %v792 = vsub.f32 %v623, %v791
        %v793 = vand.u32 %v792, 4294901760
        %v794 = vsub.f32 %v792, %v793
        %v795 = vand.u32 %v794, 4294901760
        %796 = vmatpush1.msra.mxu0 %v795
        %797 = vmatprep.subr.mxu0 0.0
        %v798 = vand.u32 %v624, 4294901760
        %v799 = vsub.f32 %v624, %v798
        %v800 = vand.u32 %v799, 4294901760
        %v801 = vsub.f32 %v799, %v800
        %v802 = vand.u32 %v801, 4294901760
        %803 = vmatpush1.msra.mxu0 %v802
        %804 = vmatprep.subr.mxu0 0.0
        %v805 = vand.u32 %v625, 4294901760
        %v806 = vsub.f32 %v625, %v805
        %v807 = vand.u32 %v806, 4294901760
        %v808 = vsub.f32 %v806, %v807
        %v809 = vand.u32 %v808, 4294901760
        %810 = vmatpush1.msra.mxu0 %v809
        %811 = vmatprep.subr.mxu0 0.0
        %v812 = vand.u32 %v626, 4294901760
        %v813 = vsub.f32 %v626, %v812
        %v814 = vand.u32 %v813, 4294901760
        %v815 = vsub.f32 %v813, %v814
        %v816 = vand.u32 %v815, 4294901760
        %817 = vmatpush1.msra.mxu0 %v816
        %818 = vmatprep.subr.mxu0 0.0
        %v819 = vand.u32 %v627, 4294901760
        %v820 = vsub.f32 %v627, %v819
        %v821 = vand.u32 %v820, 4294901760
        %v822 = vsub.f32 %v820, %v821
        %v823 = vand.u32 %v822, 4294901760
        %824 = vmatpush1.msra.mxu0 %v823
        %825 = vmatprep.subr.mxu0 0.0
        %v826 = vand.u32 %v628, 4294901760
        %v827 = vsub.f32 %v628, %v826
        %v828 = vand.u32 %v827, 4294901760
        %v829 = vsub.f32 %v827, %v828
        %v830 = vand.u32 %v829, 4294901760
        %831 = vmatpush1.msra.mxu0 %v830
        %832 = vmatprep.subr.mxu0 0.0
        %v833 = vand.u32 %v629, 4294901760
        %v834 = vsub.f32 %v629, %v833
        %v835 = vand.u32 %v834, 4294901760
        %v836 = vsub.f32 %v834, %v835
        %v837 = vand.u32 %v836, 4294901760
        %838 = vmatpush1.msra.mxu0 %v837
        %839 = vmatprep.subr.mxu0 0.0
        %v840 = vand.u32 %v630, 4294901760
        %v841 = vsub.f32 %v630, %v840
        %v842 = vand.u32 %v841, 4294901760
        %v843 = vsub.f32 %v841, %v842
        %v844 = vand.u32 %v843, 4294901760
        %845 = vmatpush1.msra.mxu0 %v844
        %846 = vmatprep.subr.mxu0 0.0
        %v847 = vand.u32 %v631, 4294901760
        %v848 = vsub.f32 %v631, %v847
        %v849 = vand.u32 %v848, 4294901760
        %v850 = vsub.f32 %v848, %v849
        %v851 = vand.u32 %v850, 4294901760
        %852 = vmatpush1.msra.mxu0 %v851
        %853 = vmatprep.subr.mxu0 0.0
        %v854 = vand.u32 %v632, 4294901760
        %v855 = vsub.f32 %v632, %v854
        %v856 = vand.u32 %v855, 4294901760
        %v857 = vsub.f32 %v855, %v856
        %v858 = vand.u32 %v857, 4294901760
        %859 = vmatpush1.msra.mxu0 %v858
        %860 = vmatprep.subr.mxu0 0.0
        %v861 = vand.u32 %v633, 4294901760
        %v862 = vsub.f32 %v633, %v861
        %v863 = vand.u32 %v862, 4294901760
        %v864 = vsub.f32 %v862, %v863
        %v865 = vand.u32 %v864, 4294901760
        %866 = vmatpush1.msra.mxu0 %v865
        %867 = vmatprep.subr.mxu0 0.0
        %v868 = vand.u32 %v634, 4294901760
        %v869 = vsub.f32 %v634, %v868
        %v870 = vand.u32 %v869, 4294901760
        %v871 = vsub.f32 %v869, %v870
        %v872 = vand.u32 %v871, 4294901760
        %873 = vmatpush1.msra.mxu0 %v872
        %874 = vmatprep.subr.mxu0 0.0
        %v875 = vand.u32 %v635, 4294901760
        %v876 = vsub.f32 %v635, %v875
        %v877 = vand.u32 %v876, 4294901760
        %v878 = vsub.f32 %v876, %v877
        %v879 = vand.u32 %v878, 4294901760
        %880 = vmatpush1.msra.mxu0 %v879
        %881 = vmatprep.subr.mxu0 0.0
        %v882 = vand.u32 %v636, 4294901760
        %v883 = vsub.f32 %v636, %v882
        %v884 = vand.u32 %v883, 4294901760
        %v885 = vsub.f32 %v883, %v884
        %v886 = vand.u32 %v885, 4294901760
        %887 = vmatpush1.msra.mxu0 %v886
        %888 = vmatprep.subr.mxu0 0.0
        %v889 = vand.u32 %v637, 4294901760
        %v890 = vsub.f32 %v637, %v889
        %v891 = vand.u32 %v890, 4294901760
        %v892 = vsub.f32 %v890, %v891
        %v893 = vand.u32 %v892, 4294901760
        %894 = vmatpush1.msra.mxu0 %v893
        %895 = vmatprep.subr.mxu0 0.0
        %v896 = vand.u32 %v638, 4294901760
        %v897 = vsub.f32 %v638, %v896
        %v898 = vand.u32 %v897, 4294901760
        %v899 = vsub.f32 %v897, %v898
        %v900 = vand.u32 %v899, 4294901760
        %901 = vmatpush1.msra.mxu0 %v900
        %902 = vmatprep.subr.mxu0 0.0
        %v903 = vand.u32 %v639, 4294901760
        %v904 = vsub.f32 %v639, %v903
        %v905 = vand.u32 %v904, 4294901760
        %v906 = vsub.f32 %v904, %v905
        %v907 = vand.u32 %v906, 4294901760
        %908 = vmatpush1.msra.mxu0 %v907
        %909 = vmatprep.subr.mxu0 0.0
        %v910 = vand.u32 %v640, 4294901760
        %v911 = vsub.f32 %v640, %v910
        %v912 = vand.u32 %v911, 4294901760
        %v913 = vsub.f32 %v911, %v912
        %v914 = vand.u32 %v913, 4294901760
        %915 = vmatpush1.msra.mxu0 %v914
        %916 = vmatprep.subr.mxu0 0.0
        %v917 = vand.u32 %v641, 4294901760
        %v918 = vsub.f32 %v641, %v917
        %v919 = vand.u32 %v918, 4294901760
        %v920 = vsub.f32 %v918, %v919
        %v921 = vand.u32 %v920, 4294901760
        %922 = vmatpush1.msra.mxu0 %v921
        %923 = vmatprep.subr.mxu0 0.0
        %v924 = vand.u32 %v642, 4294901760
        %v925 = vsub.f32 %v642, %v924
        %v926 = vand.u32 %v925, 4294901760
        %v927 = vsub.f32 %v925, %v926
        %v928 = vand.u32 %v927, 4294901760
        %929 = vmatpush1.msra.mxu0 %v928
        %930 = vmatprep.subr.mxu0 0.0
        %v931 = vand.u32 %v643, 4294901760
        %v932 = vsub.f32 %v643, %v931
        %v933 = vand.u32 %v932, 4294901760
        %v934 = vsub.f32 %v932, %v933
        %v935 = vand.u32 %v934, 4294901760
        %936 = vmatpush1.msra.mxu0 %v935
        %937 = vmatprep.subr.mxu0 0.0
        %v938 = vand.u32 %v644, 4294901760
        %v939 = vsub.f32 %v644, %v938
        %v940 = vand.u32 %v939, 4294901760
        %v941 = vsub.f32 %v939, %v940
        %v942 = vand.u32 %v941, 4294901760
        %943 = vmatpush1.msra.mxu0 %v942
        %944 = vmatprep.subr.mxu0 0.0
        %v945 = vand.u32 %v645, 4294901760
        %v946 = vsub.f32 %v645, %v945
        %v947 = vand.u32 %v946, 4294901760
        %v948 = vsub.f32 %v946, %v947
        %v949 = vand.u32 %v948, 4294901760
        %950 = vmatpush1.msra.mxu0 %v949
        %951 = vmatprep.subr.mxu0 0.0
        %v952 = vand.u32 %v646, 4294901760
        %v953 = vsub.f32 %v646, %v952
        %v954 = vand.u32 %v953, 4294901760
        %v955 = vsub.f32 %v953, %v954
        %v956 = vand.u32 %v955, 4294901760
        %957 = vmatpush1.msra.mxu0 %v956
        %958 = vmatprep.subr.mxu0 0.0
        %v959 = vand.u32 %v647, 4294901760
        %v960 = vsub.f32 %v647, %v959
        %v961 = vand.u32 %v960, 4294901760
        %v962 = vsub.f32 %v960, %v961
        %v963 = vand.u32 %v962, 4294901760
        %964 = vmatpush1.msra.mxu0 %v963
        %965 = vmatprep.subr.mxu0 0.0
        %v966 = vand.u32 %v648, 4294901760
        %v967 = vsub.f32 %v648, %v966
        %v968 = vand.u32 %v967, 4294901760
        %v969 = vsub.f32 %v967, %v968
        %v970 = vand.u32 %v969, 4294901760
        %971 = vmatpush1.msra.mxu0 %v970
        %972 = vmatprep.subr.mxu0 0.0
        %v973 = vand.u32 %v649, 4294901760
        %v974 = vsub.f32 %v649, %v973
        %v975 = vand.u32 %v974, 4294901760
        %v976 = vsub.f32 %v974, %v975
        %v977 = vand.u32 %v976, 4294901760
        %978 = vmatpush1.msra.mxu0 %v977
        %979 = vmatprep.subr.mxu0 0.0
        %v980 = vand.u32 %v650, 4294901760
        %v981 = vsub.f32 %v650, %v980
        %v982 = vand.u32 %v981, 4294901760
        %v983 = vsub.f32 %v981, %v982
        %v984 = vand.u32 %v983, 4294901760
        %985 = vmatpush1.msra.mxu0 %v984
        %986 = vmatprep.subr.mxu0 0.0
        %v987 = vand.u32 %v651, 4294901760
        %v988 = vsub.f32 %v651, %v987
        %v989 = vand.u32 %v988, 4294901760
        %v990 = vsub.f32 %v988, %v989
        %v991 = vand.u32 %v990, 4294901760
        %992 = vmatpush1.msra.mxu0 %v991
        %993 = vmatprep.subr.mxu0 0.0
        %v994 = vand.u32 %v652, 4294901760
        %v995 = vsub.f32 %v652, %v994
        %v996 = vand.u32 %v995, 4294901760
        %v997 = vsub.f32 %v995, %v996
        %v998 = vand.u32 %v997, 4294901760
        %999 = vmatpush1.msra.mxu0 %v998
        %v1000 = vand.u32 %v402, 4294901760
        %1001 = vmatprep.mubr.f32.mxu0 %v1000
        %v1002 = vand.u32 %v401, 4294901760
        %1003 = vmatmul.mubr.f32.gmra.mrb[0].mxu0 %v1002
        %v1004 = vpop.f32.mrb[0].mxu0
        %v1005 = vadd.f32 %v773, %v1004
        %v1006 = vpop.f32.mrb[0].mxu0
        %1007 = vdwg.mxu0
        %1008 = vmatprep.subr.mxu0 0.0
        %v1009 = vand.u32 %v621, 4294901760
        %v1010 = vsub.f32 %v621, %v1009
        %1011 = vmatpush1.msra.mxu0 %v1010
        %1012 = vmatprep.subr.mxu0 0.0
        %v1013 = vand.u32 %v622, 4294901760
        %v1014 = vsub.f32 %v622, %v1013
        %1015 = vmatpush1.msra.mxu0 %v1014
        %1016 = vmatprep.subr.mxu0 0.0
        %v1017 = vand.u32 %v623, 4294901760
        %v1018 = vsub.f32 %v623, %v1017
        %1019 = vmatpush1.msra.mxu0 %v1018
        %1020 = vmatprep.subr.mxu0 0.0
        %v1021 = vand.u32 %v624, 4294901760
        %v1022 = vsub.f32 %v624, %v1021
        %1023 = vmatpush1.msra.mxu0 %v1022
        %1024 = vmatprep.subr.mxu0 0.0
        %v1025 = vand.u32 %v625, 4294901760
        %v1026 = vsub.f32 %v625, %v1025
        %1027 = vmatpush1.msra.mxu0 %v1026
        %1028 = vmatprep.subr.mxu0 0.0
        %v1029 = vand.u32 %v626, 4294901760
        %v1030 = vsub.f32 %v626, %v1029
        %1031 = vmatpush1.msra.mxu0 %v1030
        %1032 = vmatprep.subr.mxu0 0.0
        %v1033 = vand.u32 %v627, 4294901760
        %v1034 = vsub.f32 %v627, %v1033
        %1035 = vmatpush1.msra.mxu0 %v1034
        %1036 = vmatprep.subr.mxu0 0.0
        %v1037 = vand.u32 %v628, 4294901760
        %v1038 = vsub.f32 %v628, %v1037
        %1039 = vmatpush1.msra.mxu0 %v1038
        %1040 = vmatprep.subr.mxu0 0.0
        %v1041 = vand.u32 %v629, 4294901760
        %v1042 = vsub.f32 %v629, %v1041
        %1043 = vmatpush1.msra.mxu0 %v1042
        %1044 = vmatprep.subr.mxu0 0.0
        %v1045 = vand.u32 %v630, 4294901760
        %v1046 = vsub.f32 %v630, %v1045
        %1047 = vmatpush1.msra.mxu0 %v1046
        %1048 = vmatprep.subr.mxu0 0.0
        %v1049 = vand.u32 %v631, 4294901760
        %v1050 = vsub.f32 %v631, %v1049
        %1051 = vmatpush1.msra.mxu0 %v1050
        %1052 = vmatprep.subr.mxu0 0.0
        %v1053 = vand.u32 %v632, 4294901760
        %v1054 = vsub.f32 %v632, %v1053
        %1055 = vmatpush1.msra.mxu0 %v1054
        %1056 = vmatprep.subr.mxu0 0.0
        %v1057 = vand.u32 %v633, 4294901760
        %v1058 = vsub.f32 %v633, %v1057
        %1059 = vmatpush1.msra.mxu0 %v1058
        %1060 = vmatprep.subr.mxu0 0.0
        %v1061 = vand.u32 %v634, 4294901760
        %v1062 = vsub.f32 %v634, %v1061
        %1063 = vmatpush1.msra.mxu0 %v1062
        %1064 = vmatprep.subr.mxu0 0.0
        %v1065 = vand.u32 %v635, 4294901760
        %v1066 = vsub.f32 %v635, %v1065
        %1067 = vmatpush1.msra.mxu0 %v1066
        %1068 = vmatprep.subr.mxu0 0.0
        %v1069 = vand.u32 %v636, 4294901760
        %v1070 = vsub.f32 %v636, %v1069
        %1071 = vmatpush1.msra.mxu0 %v1070
        %1072 = vmatprep.subr.mxu0 0.0
        %v1073 = vand.u32 %v637, 4294901760
        %v1074 = vsub.f32 %v637, %v1073
        %1075 = vmatpush1.msra.mxu0 %v1074
        %1076 = vmatprep.subr.mxu0 0.0
        %v1077 = vand.u32 %v638, 4294901760
        %v1078 = vsub.f32 %v638, %v1077
        %1079 = vmatpush1.msra.mxu0 %v1078
        %1080 = vmatprep.subr.mxu0 0.0
        %v1081 = vand.u32 %v639, 4294901760
        %v1082 = vsub.f32 %v639, %v1081
        %1083 = vmatpush1.msra.mxu0 %v1082
        %1084 = vmatprep.subr.mxu0 0.0
        %v1085 = vand.u32 %v640, 4294901760
        %v1086 = vsub.f32 %v640, %v1085
        %1087 = vmatpush1.msra.mxu0 %v1086
        %1088 = vmatprep.subr.mxu0 0.0
        %v1089 = vand.u32 %v641, 4294901760
        %v1090 = vsub.f32 %v641, %v1089
        %1091 = vmatpush1.msra.mxu0 %v1090
        %1092 = vmatprep.subr.mxu0 0.0
        %v1093 = vand.u32 %v642, 4294901760
        %v1094 = vsub.f32 %v642, %v1093
        %1095 = vmatpush1.msra.mxu0 %v1094
        %1096 = vmatprep.subr.mxu0 0.0
        %v1097 = vand.u32 %v643, 4294901760
        %v1098 = vsub.f32 %v643, %v1097
        %1099 = vmatpush1.msra.mxu0 %v1098
        %1100 = vmatprep.subr.mxu0 0.0
        %v1101 = vand.u32 %v644, 4294901760
        %v1102 = vsub.f32 %v644, %v1101
        %1103 = vmatpush1.msra.mxu0 %v1102
        %1104 = vmatprep.subr.mxu0 0.0
        %v1105 = vand.u32 %v645, 4294901760
        %v1106 = vsub.f32 %v645, %v1105
        %1107 = vmatpush1.msra.mxu0 %v1106
        %1108 = vmatprep.subr.mxu0 0.0
        %v1109 = vand.u32 %v646, 4294901760
        %v1110 = vsub.f32 %v646, %v1109
        %1111 = vmatpush1.msra.mxu0 %v1110
        %1112 = vmatprep.subr.mxu0 0.0
        %v1113 = vand.u32 %v647, 4294901760
        %v1114 = vsub.f32 %v647, %v1113
        %1115 = vmatpush1.msra.mxu0 %v1114
        %1116 = vmatprep.subr.mxu0 0.0
        %v1117 = vand.u32 %v648, 4294901760
        %v1118 = vsub.f32 %v648, %v1117
        %1119 = vmatpush1.msra.mxu0 %v1118
        %1120 = vmatprep.subr.mxu0 0.0
        %v1121 = vand.u32 %v649, 4294901760
        %v1122 = vsub.f32 %v649, %v1121
        %1123 = vmatpush1.msra.mxu0 %v1122
        %1124 = vmatprep.subr.mxu0 0.0
        %v1125 = vand.u32 %v650, 4294901760
        %v1126 = vsub.f32 %v650, %v1125
        %1127 = vmatpush1.msra.mxu0 %v1126
        %1128 = vmatprep.subr.mxu0 0.0
        %v1129 = vand.u32 %v651, 4294901760
        %v1130 = vsub.f32 %v651, %v1129
        %1131 = vmatpush1.msra.mxu0 %v1130
        %1132 = vmatprep.subr.mxu0 0.0
        %v1133 = vand.u32 %v652, 4294901760
        %v1134 = vsub.f32 %v652, %v1133
        %1135 = vmatpush1.msra.mxu0 %v1134
        %v1136 = vand.u32 %v402, 4294901760
        %v1137 = vsub.f32 %v402, %v1136
        %1138 = vmatprep.mubr.f32.mxu0 %v1137
        %v1139 = vand.u32 %v401, 4294901760
        %v1140 = vsub.f32 %v401, %v1139
        %1141 = vmatmul.mubr.f32.gmra.mrb[0].mxu0 %v1140
        %v1142 = vpop.f32.mrb[0].mxu0
        %v1143 = vadd.f32 %v1005, %v1142
        %v1144 = vpop.f32.mrb[0].mxu0
        %1145 = vdwg.mxu0
        %1146 = vmatprep.subr.mxu0 0.0
        %v1147 = vand.u32 %v621, 4294901760
        %1148 = vmatpush1.msra.mxu0 %v1147
        %1149 = vmatprep.subr.mxu0 0.0
        %v1150 = vand.u32 %v622, 4294901760
        %1151 = vmatpush1.msra.mxu0 %v1150
        %1152 = vmatprep.subr.mxu0 0.0
        %v1153 = vand.u32 %v623, 4294901760
        %1154 = vmatpush1.msra.mxu0 %v1153
        %1155 = vmatprep.subr.mxu0 0.0
        %v1156 = vand.u32 %v624, 4294901760
        %1157 = vmatpush1.msra.mxu0 %v1156
        %1158 = vmatprep.subr.mxu0 0.0
        %v1159 = vand.u32 %v625, 4294901760
        %1160 = vmatpush1.msra.mxu0 %v1159
        %1161 = vmatprep.subr.mxu0 0.0
        %v1162 = vand.u32 %v626, 4294901760
        %1163 = vmatpush1.msra.mxu0 %v1162
        %1164 = vmatprep.subr.mxu0 0.0
        %v1165 = vand.u32 %v627, 4294901760
        %1166 = vmatpush1.msra.mxu0 %v1165
        %1167 = vmatprep.subr.mxu0 0.0
        %v1168 = vand.u32 %v628, 4294901760
        %1169 = vmatpush1.msra.mxu0 %v1168
        %1170 = vmatprep.subr.mxu0 0.0
        %v1171 = vand.u32 %v629, 4294901760
        %1172 = vmatpush1.msra.mxu0 %v1171
        %1173 = vmatprep.subr.mxu0 0.0
        %v1174 = vand.u32 %v630, 4294901760
        %1175 = vmatpush1.msra.mxu0 %v1174
        %1176 = vmatprep.subr.mxu0 0.0
        %v1177 = vand.u32 %v631, 4294901760
        %1178 = vmatpush1.msra.mxu0 %v1177
        %1179 = vmatprep.subr.mxu0 0.0
        %v1180 = vand.u32 %v632, 4294901760
        %1181 = vmatpush1.msra.mxu0 %v1180
        %1182 = vmatprep.subr.mxu0 0.0
        %v1183 = vand.u32 %v633, 4294901760
        %1184 = vmatpush1.msra.mxu0 %v1183
        %1185 = vmatprep.subr.mxu0 0.0
        %v1186 = vand.u32 %v634, 4294901760
        %1187 = vmatpush1.msra.mxu0 %v1186
        %1188 = vmatprep.subr.mxu0 0.0
        %v1189 = vand.u32 %v635, 4294901760
        %1190 = vmatpush1.msra.mxu0 %v1189
        %1191 = vmatprep.subr.mxu0 0.0
        %v1192 = vand.u32 %v636, 4294901760
        %1193 = vmatpush1.msra.mxu0 %v1192
        %1194 = vmatprep.subr.mxu0 0.0
        %v1195 = vand.u32 %v637, 4294901760
        %1196 = vmatpush1.msra.mxu0 %v1195
        %1197 = vmatprep.subr.mxu0 0.0
        %v1198 = vand.u32 %v638, 4294901760
        %1199 = vmatpush1.msra.mxu0 %v1198
        %1200 = vmatprep.subr.mxu0 0.0
        %v1201 = vand.u32 %v639, 4294901760
        %1202 = vmatpush1.msra.mxu0 %v1201
        %1203 = vmatprep.subr.mxu0 0.0
        %v1204 = vand.u32 %v640, 4294901760
        %1205 = vmatpush1.msra.mxu0 %v1204
        %1206 = vmatprep.subr.mxu0 0.0
        %v1207 = vand.u32 %v641, 4294901760
        %1208 = vmatpush1.msra.mxu0 %v1207
        %1209 = vmatprep.subr.mxu0 0.0
        %v1210 = vand.u32 %v642, 4294901760
        %1211 = vmatpush1.msra.mxu0 %v1210
        %1212 = vmatprep.subr.mxu0 0.0
        %v1213 = vand.u32 %v643, 4294901760
        %1214 = vmatpush1.msra.mxu0 %v1213
        %1215 = vmatprep.subr.mxu0 0.0
        %v1216 = vand.u32 %v644, 4294901760
        %1217 = vmatpush1.msra.mxu0 %v1216
        %1218 = vmatprep.subr.mxu0 0.0
        %v1219 = vand.u32 %v645, 4294901760
        %1220 = vmatpush1.msra.mxu0 %v1219
        %1221 = vmatprep.subr.mxu0 0.0
        %v1222 = vand.u32 %v646, 4294901760
        %1223 = vmatpush1.msra.mxu0 %v1222
        %1224 = vmatprep.subr.mxu0 0.0
        %v1225 = vand.u32 %v647, 4294901760
        %1226 = vmatpush1.msra.mxu0 %v1225
        %1227 = vmatprep.subr.mxu0 0.0
        %v1228 = vand.u32 %v648, 4294901760
        %1229 = vmatpush1.msra.mxu0 %v1228
        %1230 = vmatprep.subr.mxu0 0.0
        %v1231 = vand.u32 %v649, 4294901760
        %1232 = vmatpush1.msra.mxu0 %v1231
        %1233 = vmatprep.subr.mxu0 0.0
        %v1234 = vand.u32 %v650, 4294901760
        %1235 = vmatpush1.msra.mxu0 %v1234
        %1236 = vmatprep.subr.mxu0 0.0
        %v1237 = vand.u32 %v651, 4294901760
        %1238 = vmatpush1.msra.mxu0 %v1237
        %1239 = vmatprep.subr.mxu0 0.0
        %v1240 = vand.u32 %v652, 4294901760
        %1241 = vmatpush1.msra.mxu0 %v1240
        %v1242 = vand.u32 %v402, 4294901760
        %v1243 = vsub.f32 %v402, %v1242
        %v1244 = vand.u32 %v1243, 4294901760
        %1245 = vmatprep.mubr.f32.mxu0 %v1244
        %v1246 = vand.u32 %v401, 4294901760
        %v1247 = vsub.f32 %v401, %v1246
        %v1248 = vand.u32 %v1247, 4294901760
        %1249 = vmatmul.mubr.f32.gmra.mrb[0].mxu0 %v1248
        %v1250 = vpop.f32.mrb[0].mxu0
        %v1251 = vadd.f32 %v1143, %v1250
        %v1252 = vpop.f32.mrb[0].mxu0
        %1253 = vdwg.mxu0
        %1254 = vmatprep.subr.mxu0 0.0
        %v1255 = vand.u32 %v621, 4294901760
        %v1256 = vsub.f32 %v621, %v1255
        %v1257 = vand.u32 %v1256, 4294901760
        %1258 = vmatpush1.msra.mxu0 %v1257
        %1259 = vmatprep.subr.mxu0 0.0
        %v1260 = vand.u32 %v622, 4294901760
        %v1261 = vsub.f32 %v622, %v1260
        %v1262 = vand.u32 %v1261, 4294901760
        %1263 = vmatpush1.msra.mxu0 %v1262
        %1264 = vmatprep.subr.mxu0 0.0
        %v1265 = vand.u32 %v623, 4294901760
        %v1266 = vsub.f32 %v623, %v1265
        %v1267 = vand.u32 %v1266, 4294901760
        %1268 = vmatpush1.msra.mxu0 %v1267
        %1269 = vmatprep.subr.mxu0 0.0
        %v1270 = vand.u32 %v624, 4294901760
        %v1271 = vsub.f32 %v624, %v1270
        %v1272 = vand.u32 %v1271, 4294901760
        %1273 = vmatpush1.msra.mxu0 %v1272
        %1274 = vmatprep.subr.mxu0 0.0
        %v1275 = vand.u32 %v625, 4294901760
        %v1276 = vsub.f32 %v625, %v1275
        %v1277 = vand.u32 %v1276, 4294901760
        %1278 = vmatpush1.msra.mxu0 %v1277
        %1279 = vmatprep.subr.mxu0 0.0
        %v1280 = vand.u32 %v626, 4294901760
        %v1281 = vsub.f32 %v626, %v1280
        %v1282 = vand.u32 %v1281, 4294901760
        %1283 = vmatpush1.msra.mxu0 %v1282
        %1284 = vmatprep.subr.mxu0 0.0
        %v1285 = vand.u32 %v627, 4294901760
        %v1286 = vsub.f32 %v627, %v1285
        %v1287 = vand.u32 %v1286, 4294901760
        %1288 = vmatpush1.msra.mxu0 %v1287
        %1289 = vmatprep.subr.mxu0 0.0
        %v1290 = vand.u32 %v628, 4294901760
        %v1291 = vsub.f32 %v628, %v1290
        %v1292 = vand.u32 %v1291, 4294901760
        %1293 = vmatpush1.msra.mxu0 %v1292
        %1294 = vmatprep.subr.mxu0 0.0
        %v1295 = vand.u32 %v629, 4294901760
        %v1296 = vsub.f32 %v629, %v1295
        %v1297 = vand.u32 %v1296, 4294901760
        %1298 = vmatpush1.msra.mxu0 %v1297
        %1299 = vmatprep.subr.mxu0 0.0
        %v1300 = vand.u32 %v630, 4294901760
        %v1301 = vsub.f32 %v630, %v1300
        %v1302 = vand.u32 %v1301, 4294901760
        %1303 = vmatpush1.msra.mxu0 %v1302
        %1304 = vmatprep.subr.mxu0 0.0
        %v1305 = vand.u32 %v631, 4294901760
        %v1306 = vsub.f32 %v631, %v1305
        %v1307 = vand.u32 %v1306, 4294901760
        %1308 = vmatpush1.msra.mxu0 %v1307
        %1309 = vmatprep.subr.mxu0 0.0
        %v1310 = vand.u32 %v632, 4294901760
        %v1311 = vsub.f32 %v632, %v1310
        %v1312 = vand.u32 %v1311, 4294901760
        %1313 = vmatpush1.msra.mxu0 %v1312
        %1314 = vmatprep.subr.mxu0 0.0
        %v1315 = vand.u32 %v633, 4294901760
        %v1316 = vsub.f32 %v633, %v1315
        %v1317 = vand.u32 %v1316, 4294901760
        %1318 = vmatpush1.msra.mxu0 %v1317
        %1319 = vmatprep.subr.mxu0 0.0
        %v1320 = vand.u32 %v634, 4294901760
        %v1321 = vsub.f32 %v634, %v1320
        %v1322 = vand.u32 %v1321, 4294901760
        %1323 = vmatpush1.msra.mxu0 %v1322
        %1324 = vmatprep.subr.mxu0 0.0
        %v1325 = vand.u32 %v635, 4294901760
        %v1326 = vsub.f32 %v635, %v1325
        %v1327 = vand.u32 %v1326, 4294901760
        %1328 = vmatpush1.msra.mxu0 %v1327
        %1329 = vmatprep.subr.mxu0 0.0
        %v1330 = vand.u32 %v636, 4294901760
        %v1331 = vsub.f32 %v636, %v1330
        %v1332 = vand.u32 %v1331, 4294901760
        %1333 = vmatpush1.msra.mxu0 %v1332
        %1334 = vmatprep.subr.mxu0 0.0
        %v1335 = vand.u32 %v637, 4294901760
        %v1336 = vsub.f32 %v637, %v1335
        %v1337 = vand.u32 %v1336, 4294901760
        %1338 = vmatpush1.msra.mxu0 %v1337
        %1339 = vmatprep.subr.mxu0 0.0
        %v1340 = vand.u32 %v638, 4294901760
        %v1341 = vsub.f32 %v638, %v1340
        %v1342 = vand.u32 %v1341, 4294901760
        %1343 = vmatpush1.msra.mxu0 %v1342
        %1344 = vmatprep.subr.mxu0 0.0
        %v1345 = vand.u32 %v639, 4294901760
        %v1346 = vsub.f32 %v639, %v1345
        %v1347 = vand.u32 %v1346, 4294901760
        %1348 = vmatpush1.msra.mxu0 %v1347
        %1349 = vmatprep.subr.mxu0 0.0
        %v1350 = vand.u32 %v640, 4294901760
        %v1351 = vsub.f32 %v640, %v1350
        %v1352 = vand.u32 %v1351, 4294901760
        %1353 = vmatpush1.msra.mxu0 %v1352
        %1354 = vmatprep.subr.mxu0 0.0
        %v1355 = vand.u32 %v641, 4294901760
        %v1356 = vsub.f32 %v641, %v1355
        %v1357 = vand.u32 %v1356, 4294901760
        %1358 = vmatpush1.msra.mxu0 %v1357
        %1359 = vmatprep.subr.mxu0 0.0
        %v1360 = vand.u32 %v642, 4294901760
        %v1361 = vsub.f32 %v642, %v1360
        %v1362 = vand.u32 %v1361, 4294901760
        %1363 = vmatpush1.msra.mxu0 %v1362
        %1364 = vmatprep.subr.mxu0 0.0
        %v1365 = vand.u32 %v643, 4294901760
        %v1366 = vsub.f32 %v643, %v1365
        %v1367 = vand.u32 %v1366, 4294901760
        %1368 = vmatpush1.msra.mxu0 %v1367
        %1369 = vmatprep.subr.mxu0 0.0
        %v1370 = vand.u32 %v644, 4294901760
        %v1371 = vsub.f32 %v644, %v1370
        %v1372 = vand.u32 %v1371, 4294901760
        %1373 = vmatpush1.msra.mxu0 %v1372
        %1374 = vmatprep.subr.mxu0 0.0
        %v1375 = vand.u32 %v645, 4294901760
        %v1376 = vsub.f32 %v645, %v1375
        %v1377 = vand.u32 %v1376, 4294901760
        %1378 = vmatpush1.msra.mxu0 %v1377
        %1379 = vmatprep.subr.mxu0 0.0
        %v1380 = vand.u32 %v646, 4294901760
        %v1381 = vsub.f32 %v646, %v1380
        %v1382 = vand.u32 %v1381, 4294901760
        %1383 = vmatpush1.msra.mxu0 %v1382
        %1384 = vmatprep.subr.mxu0 0.0
        %v1385 = vand.u32 %v647, 4294901760
        %v1386 = vsub.f32 %v647, %v1385
        %v1387 = vand.u32 %v1386, 4294901760
        %1388 = vmatpush1.msra.mxu0 %v1387
        %1389 = vmatprep.subr.mxu0 0.0
        %v1390 = vand.u32 %v648, 4294901760
        %v1391 = vsub.f32 %v648, %v1390
        %v1392 = vand.u32 %v1391, 4294901760
        %1393 = vmatpush1.msra.mxu0 %v1392
        %1394 = vmatprep.subr.mxu0 0.0
        %v1395 = vand.u32 %v649, 4294901760
        %v1396 = vsub.f32 %v649, %v1395
        %v1397 = vand.u32 %v1396, 4294901760
        %1398 = vmatpush1.msra.mxu0 %v1397
        %1399 = vmatprep.subr.mxu0 0.0
        %v1400 = vand.u32 %v650, 4294901760
        %v1401 = vsub.f32 %v650, %v1400
        %v1402 = vand.u32 %v1401, 4294901760
        %1403 = vmatpush1.msra.mxu0 %v1402
        %1404 = vmatprep.subr.mxu0 0.0
        %v1405 = vand.u32 %v651, 4294901760
        %v1406 = vsub.f32 %v651, %v1405
        %v1407 = vand.u32 %v1406, 4294901760
        %1408 = vmatpush1.msra.mxu0 %v1407
        %1409 = vmatprep.subr.mxu0 0.0
        %v1410 = vand.u32 %v652, 4294901760
        %v1411 = vsub.f32 %v652, %v1410
        %v1412 = vand.u32 %v1411, 4294901760
        %1413 = vmatpush1.msra.mxu0 %v1412
        %v1414 = vand.u32 %v402, 4294901760
        %1415 = vmatprep.mubr.f32.mxu0 %v1414
        %v1416 = vand.u32 %v401, 4294901760
        %1417 = vmatmul.mubr.f32.gmra.mrb[0].mxu0 %v1416
        %v1418 = vpop.f32.mrb[0].mxu0
        %v1419 = vadd.f32 %v1251, %v1418
        %v1420 = vpop.f32.mrb[0].mxu0
        %1421 = vdwg.mxu0
        %1422 = vmatprep.subr.mxu0 0.0
        %v1423 = vand.u32 %v621, 4294901760
        %1424 = vmatpush1.msra.mxu0 %v1423
        %1425 = vmatprep.subr.mxu0 0.0
        %v1426 = vand.u32 %v622, 4294901760
        %1427 = vmatpush1.msra.mxu0 %v1426
        %1428 = vmatprep.subr.mxu0 0.0
        %v1429 = vand.u32 %v623, 4294901760
        %1430 = vmatpush1.msra.mxu0 %v1429
        %1431 = vmatprep.subr.mxu0 0.0
        %v1432 = vand.u32 %v624, 4294901760
        %1433 = vmatpush1.msra.mxu0 %v1432
        %1434 = vmatprep.subr.mxu0 0.0
        %v1435 = vand.u32 %v625, 4294901760
        %1436 = vmatpush1.msra.mxu0 %v1435
        %1437 = vmatprep.subr.mxu0 0.0
        %v1438 = vand.u32 %v626, 4294901760
        %1439 = vmatpush1.msra.mxu0 %v1438
        %1440 = vmatprep.subr.mxu0 0.0
        %v1441 = vand.u32 %v627, 4294901760
        %1442 = vmatpush1.msra.mxu0 %v1441
        %1443 = vmatprep.subr.mxu0 0.0
        %v1444 = vand.u32 %v628, 4294901760
        %1445 = vmatpush1.msra.mxu0 %v1444
        %1446 = vmatprep.subr.mxu0 0.0
        %v1447 = vand.u32 %v629, 4294901760
        %1448 = vmatpush1.msra.mxu0 %v1447
        %1449 = vmatprep.subr.mxu0 0.0
        %v1450 = vand.u32 %v630, 4294901760
        %1451 = vmatpush1.msra.mxu0 %v1450
        %1452 = vmatprep.subr.mxu0 0.0
        %v1453 = vand.u32 %v631, 4294901760
        %1454 = vmatpush1.msra.mxu0 %v1453
        %1455 = vmatprep.subr.mxu0 0.0
        %v1456 = vand.u32 %v632, 4294901760
        %1457 = vmatpush1.msra.mxu0 %v1456
        %1458 = vmatprep.subr.mxu0 0.0
        %v1459 = vand.u32 %v633, 4294901760
        %1460 = vmatpush1.msra.mxu0 %v1459
        %1461 = vmatprep.subr.mxu0 0.0
        %v1462 = vand.u32 %v634, 4294901760
        %1463 = vmatpush1.msra.mxu0 %v1462
        %1464 = vmatprep.subr.mxu0 0.0
        %v1465 = vand.u32 %v635, 4294901760
        %1466 = vmatpush1.msra.mxu0 %v1465
        %1467 = vmatprep.subr.mxu0 0.0
        %v1468 = vand.u32 %v636, 4294901760
        %1469 = vmatpush1.msra.mxu0 %v1468
        %1470 = vmatprep.subr.mxu0 0.0
        %v1471 = vand.u32 %v637, 4294901760
        %1472 = vmatpush1.msra.mxu0 %v1471
        %1473 = vmatprep.subr.mxu0 0.0
        %v1474 = vand.u32 %v638, 4294901760
        %1475 = vmatpush1.msra.mxu0 %v1474
        %1476 = vmatprep.subr.mxu0 0.0
        %v1477 = vand.u32 %v639, 4294901760
        %1478 = vmatpush1.msra.mxu0 %v1477
        %1479 = vmatprep.subr.mxu0 0.0
        %v1480 = vand.u32 %v640, 4294901760
        %1481 = vmatpush1.msra.mxu0 %v1480
        %1482 = vmatprep.subr.mxu0 0.0
        %v1483 = vand.u32 %v641, 4294901760
        %1484 = vmatpush1.msra.mxu0 %v1483
        %1485 = vmatprep.subr.mxu0 0.0
        %v1486 = vand.u32 %v642, 4294901760
        %1487 = vmatpush1.msra.mxu0 %v1486
        %1488 = vmatprep.subr.mxu0 0.0
        %v1489 = vand.u32 %v643, 4294901760
        %1490 = vmatpush1.msra.mxu0 %v1489
        %1491 = vmatprep.subr.mxu0 0.0
        %v1492 = vand.u32 %v644, 4294901760
        %1493 = vmatpush1.msra.mxu0 %v1492
        %1494 = vmatprep.subr.mxu0 0.0
        %v1495 = vand.u32 %v645, 4294901760
        %1496 = vmatpush1.msra.mxu0 %v1495
        %1497 = vmatprep.subr.mxu0 0.0
        %v1498 = vand.u32 %v646, 4294901760
        %1499 = vmatpush1.msra.mxu0 %v1498
        %1500 = vmatprep.subr.mxu0 0.0
        %v1501 = vand.u32 %v647, 4294901760
        %1502 = vmatpush1.msra.mxu0 %v1501
        %1503 = vmatprep.subr.mxu0 0.0
        %v1504 = vand.u32 %v648, 4294901760
        %1505 = vmatpush1.msra.mxu0 %v1504
        %1506 = vmatprep.subr.mxu0 0.0
        %v1507 = vand.u32 %v649, 4294901760
        %1508 = vmatpush1.msra.mxu0 %v1507
        %1509 = vmatprep.subr.mxu0 0.0
        %v1510 = vand.u32 %v650, 4294901760
        %1511 = vmatpush1.msra.mxu0 %v1510
        %1512 = vmatprep.subr.mxu0 0.0
        %v1513 = vand.u32 %v651, 4294901760
        %1514 = vmatpush1.msra.mxu0 %v1513
        %1515 = vmatprep.subr.mxu0 0.0
        %v1516 = vand.u32 %v652, 4294901760
        %1517 = vmatpush1.msra.mxu0 %v1516
        %v1518 = vand.u32 %v402, 4294901760
        %1519 = vmatprep.mubr.f32.mxu0 %v1518
        %v1520 = vand.u32 %v401, 4294901760
        %1521 = vmatmul.mubr.f32.gmra.mrb[0].mxu0 %v1520
        %v1522 = vpop.f32.mrb[0].mxu0
        %v1523 = vadd.f32 %v1419, %v1522
        %v1524 = vpop.f32.mrb[0].mxu0
        %1525 = vdwg.mxu0
        %1526 = vmatprep.subr.mxu0 0.0
        %v1527 = vand.u32 %v653, 4294901760
        %1528 = vmatpush1.msra.mxu0 %v1527
        %1529 = vmatprep.subr.mxu0 0.0
        %v1530 = vand.u32 %v654, 4294901760
        %1531 = vmatpush1.msra.mxu0 %v1530
        %1532 = vmatprep.subr.mxu0 0.0
        %v1533 = vand.u32 %v655, 4294901760
        %1534 = vmatpush1.msra.mxu0 %v1533
        %1535 = vmatprep.subr.mxu0 0.0
        %v1536 = vand.u32 %v656, 4294901760
        %1537 = vmatpush1.msra.mxu0 %v1536
        %1538 = vmatprep.subr.mxu0 0.0
        %v1539 = vand.u32 %v657, 4294901760
        %1540 = vmatpush1.msra.mxu0 %v1539
        %1541 = vmatprep.subr.mxu0 0.0
        %v1542 = vand.u32 %v658, 4294901760
        %1543 = vmatpush1.msra.mxu0 %v1542
        %1544 = vmatprep.subr.mxu0 0.0
        %v1545 = vand.u32 %v659, 4294901760
        %1546 = vmatpush1.msra.mxu0 %v1545
        %1547 = vmatprep.subr.mxu0 0.0
        %v1548 = vand.u32 %v660, 4294901760
        %1549 = vmatpush1.msra.mxu0 %v1548
        %1550 = vmatprep.subr.mxu0 0.0
        %1551 = vmatpush1.msra.mxu0 0.0
        %1552 = vmatprep.subr.mxu0 0.0
        %1553 = vmatpush1.msra.mxu0 0.0
        %1554 = vmatprep.subr.mxu0 0.0
        %1555 = vmatpush1.msra.mxu0 0.0
        %1556 = vmatprep.subr.mxu0 0.0
        %1557 = vmatpush1.msra.mxu0 0.0
        %1558 = vmatprep.subr.mxu0 0.0
        %1559 = vmatpush1.msra.mxu0 0.0
        %1560 = vmatprep.subr.mxu0 0.0
        %1561 = vmatpush1.msra.mxu0 0.0
        %1562 = vmatprep.subr.mxu0 0.0
        %1563 = vmatpush1.msra.mxu0 0.0
        %1564 = vmatprep.subr.mxu0 0.0
        %1565 = vmatpush1.msra.mxu0 0.0
        %1566 = vmatprep.subr.mxu0 0.0
        %1567 = vmatpush1.msra.mxu0 0.0
        %1568 = vmatprep.subr.mxu0 0.0
        %1569 = vmatpush1.msra.mxu0 0.0
        %1570 = vmatprep.subr.mxu0 0.0
        %1571 = vmatpush1.msra.mxu0 0.0
        %1572 = vmatprep.subr.mxu0 0.0
        %1573 = vmatpush1.msra.mxu0 0.0
        %1574 = vmatprep.subr.mxu0 0.0
        %1575 = vmatpush1.msra.mxu0 0.0
        %1576 = vmatprep.subr.mxu0 0.0
        %1577 = vmatpush1.msra.mxu0 0.0
        %1578 = vmatprep.subr.mxu0 0.0
        %1579 = vmatpush1.msra.mxu0 0.0
        %1580 = vmatprep.subr.mxu0 0.0
        %1581 = vmatpush1.msra.mxu0 0.0
        %1582 = vmatprep.subr.mxu0 0.0
        %1583 = vmatpush1.msra.mxu0 0.0
        %1584 = vmatprep.subr.mxu0 0.0
        %1585 = vmatpush1.msra.mxu0 0.0
        %1586 = vmatprep.subr.mxu0 0.0
        %1587 = vmatpush1.msra.mxu0 0.0
        %1588 = vmatprep.subr.mxu0 0.0
        %1589 = vmatpush1.msra.mxu0 0.0
        %1590 = vmatprep.subr.mxu0 0.0
        %1591 = vmatpush1.msra.mxu0 0.0
        %1592 = vmatprep.subr.mxu0 0.0
        %1593 = vmatpush1.msra.mxu0 0.0
        %1594 = vmatprep.subr.mxu0 0.0
        %1595 = vmatpush1.msra.mxu0 0.0
        %1596 = vmatprep.subr.mxu0 0.0
        %1597 = vmatpush1.msra.mxu0 0.0
        %1598 = vmatprep.mubr.f32.mxu0 0.0
        %v1599 = vand.u32 %v662, 4294901760
        %v1600 = vsub.f32 %v662, %v1599
        %v1601 = vand.u32 %v1600, 4294901760
        %v1602 = vsub.f32 %v1600, %v1601
        %v1603 = vand.u32 %v1602, 4294901760
        %1604 = vmatmul.mubr.f32.gmra.mrb[0].mxu0 %v1603
        %v1605 = vpop.f32.mrb[0].mxu0
        %v1606 = vadd.f32 %v1523, %v1605
        %v1607 = vpop.f32.mrb[0].mxu0
        %1608 = vdwg.mxu0
        %1609 = vmatprep.subr.mxu0 0.0
        %v1610 = vand.u32 %v653, 4294901760
        %v1611 = vsub.f32 %v653, %v1610
        %v1612 = vand.u32 %v1611, 4294901760
        %v1613 = vsub.f32 %v1611, %v1612
        %v1614 = vand.u32 %v1613, 4294901760
        %1615 = vmatpush1.msra.mxu0 %v1614
        %1616 = vmatprep.subr.mxu0 0.0
        %v1617 = vand.u32 %v654, 4294901760
        %v1618 = vsub.f32 %v654, %v1617
        %v1619 = vand.u32 %v1618, 4294901760
        %v1620 = vsub.f32 %v1618, %v1619
        %v1621 = vand.u32 %v1620, 4294901760
        %1622 = vmatpush1.msra.mxu0 %v1621
        %1623 = vmatprep.subr.mxu0 0.0
        %v1624 = vand.u32 %v655, 4294901760
        %v1625 = vsub.f32 %v655, %v1624
        %v1626 = vand.u32 %v1625, 4294901760
        %v1627 = vsub.f32 %v1625, %v1626
        %v1628 = vand.u32 %v1627, 4294901760
        %1629 = vmatpush1.msra.mxu0 %v1628
        %1630 = vmatprep.subr.mxu0 0.0
        %v1631 = vand.u32 %v656, 4294901760
        %v1632 = vsub.f32 %v656, %v1631
        %v1633 = vand.u32 %v1632, 4294901760
        %v1634 = vsub.f32 %v1632, %v1633
        %v1635 = vand.u32 %v1634, 4294901760
        %1636 = vmatpush1.msra.mxu0 %v1635
        %1637 = vmatprep.subr.mxu0 0.0
        %v1638 = vand.u32 %v657, 4294901760
        %v1639 = vsub.f32 %v657, %v1638
        %v1640 = vand.u32 %v1639, 4294901760
        %v1641 = vsub.f32 %v1639, %v1640
        %v1642 = vand.u32 %v1641, 4294901760
        %1643 = vmatpush1.msra.mxu0 %v1642
        %1644 = vmatprep.subr.mxu0 0.0
        %v1645 = vand.u32 %v658, 4294901760
        %v1646 = vsub.f32 %v658, %v1645
        %v1647 = vand.u32 %v1646, 4294901760
        %v1648 = vsub.f32 %v1646, %v1647
        %v1649 = vand.u32 %v1648, 4294901760
        %1650 = vmatpush1.msra.mxu0 %v1649
        %1651 = vmatprep.subr.mxu0 0.0
        %v1652 = vand.u32 %v659, 4294901760
        %v1653 = vsub.f32 %v659, %v1652
        %v1654 = vand.u32 %v1653, 4294901760
        %v1655 = vsub.f32 %v1653, %v1654
        %v1656 = vand.u32 %v1655, 4294901760
        %1657 = vmatpush1.msra.mxu0 %v1656
        %1658 = vmatprep.subr.mxu0 0.0
        %v1659 = vand.u32 %v660, 4294901760
        %v1660 = vsub.f32 %v660, %v1659
        %v1661 = vand.u32 %v1660, 4294901760
        %v1662 = vsub.f32 %v1660, %v1661
        %v1663 = vand.u32 %v1662, 4294901760
        %1664 = vmatpush1.msra.mxu0 %v1663
        %1665 = vmatprep.subr.mxu0 0.0
        %1666 = vmatpush1.msra.mxu0 0.0
        %1667 = vmatprep.subr.mxu0 0.0
        %1668 = vmatpush1.msra.mxu0 0.0
        %1669 = vmatprep.subr.mxu0 0.0
        %1670 = vmatpush1.msra.mxu0 0.0
        %1671 = vmatprep.subr.mxu0 0.0
        %1672 = vmatpush1.msra.mxu0 0.0
        %1673 = vmatprep.subr.mxu0 0.0
        %1674 = vmatpush1.msra.mxu0 0.0
        %1675 = vmatprep.subr.mxu0 0.0
        %1676 = vmatpush1.msra.mxu0 0.0
        %1677 = vmatprep.subr.mxu0 0.0
        %1678 = vmatpush1.msra.mxu0 0.0
        %1679 = vmatprep.subr.mxu0 0.0
        %1680 = vmatpush1.msra.mxu0 0.0
        %1681 = vmatprep.subr.mxu0 0.0
        %1682 = vmatpush1.msra.mxu0 0.0
        %1683 = vmatprep.subr.mxu0 0.0
        %1684 = vmatpush1.msra.mxu0 0.0
        %1685 = vmatprep.subr.mxu0 0.0
        %1686 = vmatpush1.msra.mxu0 0.0
        %1687 = vmatprep.subr.mxu0 0.0
        %1688 = vmatpush1.msra.mxu0 0.0
        %1689 = vmatprep.subr.mxu0 0.0
        %1690 = vmatpush1.msra.mxu0 0.0
        %1691 = vmatprep.subr.mxu0 0.0
        %1692 = vmatpush1.msra.mxu0 0.0
        %1693 = vmatprep.subr.mxu0 0.0
        %1694 = vmatpush1.msra.mxu0 0.0
        %1695 = vmatprep.subr.mxu0 0.0
        %1696 = vmatpush1.msra.mxu0 0.0
        %1697 = vmatprep.subr.mxu0 0.0
        %1698 = vmatpush1.msra.mxu0 0.0
        %1699 = vmatprep.subr.mxu0 0.0
        %1700 = vmatpush1.msra.mxu0 0.0
        %1701 = vmatprep.subr.mxu0 0.0
        %1702 = vmatpush1.msra.mxu0 0.0
        %1703 = vmatprep.subr.mxu0 0.0
        %1704 = vmatpush1.msra.mxu0 0.0
        %1705 = vmatprep.subr.mxu0 0.0
        %1706 = vmatpush1.msra.mxu0 0.0
        %1707 = vmatprep.subr.mxu0 0.0
        %1708 = vmatpush1.msra.mxu0 0.0
        %1709 = vmatprep.subr.mxu0 0.0
        %1710 = vmatpush1.msra.mxu0 0.0
        %1711 = vmatprep.subr.mxu0 0.0
        %1712 = vmatpush1.msra.mxu0 0.0
        %1713 = vmatprep.mubr.f32.mxu0 0.0
        %v1714 = vand.u32 %v662, 4294901760
        %1715 = vmatmul.mubr.f32.gmra.mrb[0].mxu0 %v1714
        %v1716 = vpop.f32.mrb[0].mxu0
        %v1717 = vadd.f32 %v1606, %v1716
        %v1718 = vpop.f32.mrb[0].mxu0
        %1719 = vdwg.mxu0
        %1720 = vmatprep.subr.mxu0 0.0
        %v1721 = vand.u32 %v653, 4294901760
        %v1722 = vsub.f32 %v653, %v1721
        %1723 = vmatpush1.msra.mxu0 %v1722
        %1724 = vmatprep.subr.mxu0 0.0
        %v1725 = vand.u32 %v654, 4294901760
        %v1726 = vsub.f32 %v654, %v1725
        %1727 = vmatpush1.msra.mxu0 %v1726
        %1728 = vmatprep.subr.mxu0 0.0
        %v1729 = vand.u32 %v655, 4294901760
        %v1730 = vsub.f32 %v655, %v1729
        %1731 = vmatpush1.msra.mxu0 %v1730
        %1732 = vmatprep.subr.mxu0 0.0
        %v1733 = vand.u32 %v656, 4294901760
        %v1734 = vsub.f32 %v656, %v1733
        %1735 = vmatpush1.msra.mxu0 %v1734
        %1736 = vmatprep.subr.mxu0 0.0
        %v1737 = vand.u32 %v657, 4294901760
        %v1738 = vsub.f32 %v657, %v1737
        %1739 = vmatpush1.msra.mxu0 %v1738
        %1740 = vmatprep.subr.mxu0 0.0
        %v1741 = vand.u32 %v658, 4294901760
        %v1742 = vsub.f32 %v658, %v1741
        %1743 = vmatpush1.msra.mxu0 %v1742
        %1744 = vmatprep.subr.mxu0 0.0
        %v1745 = vand.u32 %v659, 4294901760
        %v1746 = vsub.f32 %v659, %v1745
        %1747 = vmatpush1.msra.mxu0 %v1746
        %1748 = vmatprep.subr.mxu0 0.0
        %v1749 = vand.u32 %v660, 4294901760
        %v1750 = vsub.f32 %v660, %v1749
        %1751 = vmatpush1.msra.mxu0 %v1750
        %1752 = vmatprep.subr.mxu0 0.0
        %1753 = vmatpush1.msra.mxu0 0.0
        %1754 = vmatprep.subr.mxu0 0.0
        %1755 = vmatpush1.msra.mxu0 0.0
        %1756 = vmatprep.subr.mxu0 0.0
        %1757 = vmatpush1.msra.mxu0 0.0
        %1758 = vmatprep.subr.mxu0 0.0
        %1759 = vmatpush1.msra.mxu0 0.0
        %1760 = vmatprep.subr.mxu0 0.0
        %1761 = vmatpush1.msra.mxu0 0.0
        %1762 = vmatprep.subr.mxu0 0.0
        %1763 = vmatpush1.msra.mxu0 0.0
        %1764 = vmatprep.subr.mxu0 0.0
        %1765 = vmatpush1.msra.mxu0 0.0
        %1766 = vmatprep.subr.mxu0 0.0
        %1767 = vmatpush1.msra.mxu0 0.0
        %1768 = vmatprep.subr.mxu0 0.0
        %1769 = vmatpush1.msra.mxu0 0.0
        %1770 = vmatprep.subr.mxu0 0.0
        %1771 = vmatpush1.msra.mxu0 0.0
        %1772 = vmatprep.subr.mxu0 0.0
        %1773 = vmatpush1.msra.mxu0 0.0
        %1774 = vmatprep.subr.mxu0 0.0
        %1775 = vmatpush1.msra.mxu0 0.0
        %1776 = vmatprep.subr.mxu0 0.0
        %1777 = vmatpush1.msra.mxu0 0.0
        %1778 = vmatprep.subr.mxu0 0.0
        %1779 = vmatpush1.msra.mxu0 0.0
        %1780 = vmatprep.subr.mxu0 0.0
        %1781 = vmatpush1.msra.mxu0 0.0
        %1782 = vmatprep.subr.mxu0 0.0
        %1783 = vmatpush1.msra.mxu0 0.0
        %1784 = vmatprep.subr.mxu0 0.0
        %1785 = vmatpush1.msra.mxu0 0.0
        %1786 = vmatprep.subr.mxu0 0.0
        %1787 = vmatpush1.msra.mxu0 0.0
        %1788 = vmatprep.subr.mxu0 0.0
        %1789 = vmatpush1.msra.mxu0 0.0
        %1790 = vmatprep.subr.mxu0 0.0
        %1791 = vmatpush1.msra.mxu0 0.0
        %1792 = vmatprep.subr.mxu0 0.0
        %1793 = vmatpush1.msra.mxu0 0.0
        %1794 = vmatprep.subr.mxu0 0.0
        %1795 = vmatpush1.msra.mxu0 0.0
        %1796 = vmatprep.subr.mxu0 0.0
        %1797 = vmatpush1.msra.mxu0 0.0
        %1798 = vmatprep.subr.mxu0 0.0
        %1799 = vmatpush1.msra.mxu0 0.0
        %1800 = vmatprep.mubr.f32.mxu0 0.0
        %v1801 = vand.u32 %v662, 4294901760
        %v1802 = vsub.f32 %v662, %v1801
        %1803 = vmatmul.mubr.f32.gmra.mrb[0].mxu0 %v1802
        %v1804 = vpop.f32.mrb[0].mxu0
        %v1805 = vadd.f32 %v1717, %v1804
        %v1806 = vpop.f32.mrb[0].mxu0
        %1807 = vdwg.mxu0
        %1808 = vmatprep.subr.mxu0 0.0
        %v1809 = vand.u32 %v653, 4294901760
        %1810 = vmatpush1.msra.mxu0 %v1809
        %1811 = vmatprep.subr.mxu0 0.0
        %v1812 = vand.u32 %v654, 4294901760
        %1813 = vmatpush1.msra.mxu0 %v1812
        %1814 = vmatprep.subr.mxu0 0.0
        %v1815 = vand.u32 %v655, 4294901760
        %1816 = vmatpush1.msra.mxu0 %v1815
        %1817 = vmatprep.subr.mxu0 0.0
        %v1818 = vand.u32 %v656, 4294901760
        %1819 = vmatpush1.msra.mxu0 %v1818
        %1820 = vmatprep.subr.mxu0 0.0
        %v1821 = vand.u32 %v657, 4294901760
        %1822 = vmatpush1.msra.mxu0 %v1821
        %1823 = vmatprep.subr.mxu0 0.0
        %v1824 = vand.u32 %v658, 4294901760
        %1825 = vmatpush1.msra.mxu0 %v1824
        %1826 = vmatprep.subr.mxu0 0.0
        %v1827 = vand.u32 %v659, 4294901760
        %1828 = vmatpush1.msra.mxu0 %v1827
        %1829 = vmatprep.subr.mxu0 0.0
        %v1830 = vand.u32 %v660, 4294901760
        %1831 = vmatpush1.msra.mxu0 %v1830
        %1832 = vmatprep.subr.mxu0 0.0
        %1833 = vmatpush1.msra.mxu0 0.0
        %1834 = vmatprep.subr.mxu0 0.0
        %1835 = vmatpush1.msra.mxu0 0.0
        %1836 = vmatprep.subr.mxu0 0.0
        %1837 = vmatpush1.msra.mxu0 0.0
        %1838 = vmatprep.subr.mxu0 0.0
        %1839 = vmatpush1.msra.mxu0 0.0
        %1840 = vmatprep.subr.mxu0 0.0
        %1841 = vmatpush1.msra.mxu0 0.0
        %1842 = vmatprep.subr.mxu0 0.0
        %1843 = vmatpush1.msra.mxu0 0.0
        %1844 = vmatprep.subr.mxu0 0.0
        %1845 = vmatpush1.msra.mxu0 0.0
        %1846 = vmatprep.subr.mxu0 0.0
        %1847 = vmatpush1.msra.mxu0 0.0
        %1848 = vmatprep.subr.mxu0 0.0
        %1849 = vmatpush1.msra.mxu0 0.0
        %1850 = vmatprep.subr.mxu0 0.0
        %1851 = vmatpush1.msra.mxu0 0.0
        %1852 = vmatprep.subr.mxu0 0.0
        %1853 = vmatpush1.msra.mxu0 0.0
        %1854 = vmatprep.subr.mxu0 0.0
        %1855 = vmatpush1.msra.mxu0 0.0
        %1856 = vmatprep.subr.mxu0 0.0
        %1857 = vmatpush1.msra.mxu0 0.0
        %1858 = vmatprep.subr.mxu0 0.0
        %1859 = vmatpush1.msra.mxu0 0.0
        %1860 = vmatprep.subr.mxu0 0.0
        %1861 = vmatpush1.msra.mxu0 0.0
        %1862 = vmatprep.subr.mxu0 0.0
        %1863 = vmatpush1.msra.mxu0 0.0
        %1864 = vmatprep.subr.mxu0 0.0
        %1865 = vmatpush1.msra.mxu0 0.0
        %1866 = vmatprep.subr.mxu0 0.0
        %1867 = vmatpush1.msra.mxu0 0.0
        %1868 = vmatprep.subr.mxu0 0.0
        %1869 = vmatpush1.msra.mxu0 0.0
        %1870 = vmatprep.subr.mxu0 0.0
        %1871 = vmatpush1.msra.mxu0 0.0
        %1872 = vmatprep.subr.mxu0 0.0
        %1873 = vmatpush1.msra.mxu0 0.0
        %1874 = vmatprep.subr.mxu0 0.0
        %1875 = vmatpush1.msra.mxu0 0.0
        %1876 = vmatprep.subr.mxu0 0.0
        %1877 = vmatpush1.msra.mxu0 0.0
        %1878 = vmatprep.subr.mxu0 0.0
        %1879 = vmatpush1.msra.mxu0 0.0
        %1880 = vmatprep.mubr.f32.mxu0 0.0
        %v1881 = vand.u32 %v662, 4294901760
        %v1882 = vsub.f32 %v662, %v1881
        %v1883 = vand.u32 %v1882, 4294901760
        %1884 = vmatmul.mubr.f32.gmra.mrb[0].mxu0 %v1883
        %v1885 = vpop.f32.mrb[0].mxu0
        %v1886 = vadd.f32 %v1805, %v1885
        %v1887 = vpop.f32.mrb[0].mxu0
        %1888 = vdwg.mxu0
        %1889 = vmatprep.subr.mxu0 0.0
        %v1890 = vand.u32 %v653, 4294901760
        %v1891 = vsub.f32 %v653, %v1890
        %v1892 = vand.u32 %v1891, 4294901760
        %1893 = vmatpush1.msra.mxu0 %v1892
        %1894 = vmatprep.subr.mxu0 0.0
        %v1895 = vand.u32 %v654, 4294901760
        %v1896 = vsub.f32 %v654, %v1895
        %v1897 = vand.u32 %v1896, 4294901760
        %1898 = vmatpush1.msra.mxu0 %v1897
        %1899 = vmatprep.subr.mxu0 0.0
        %v1900 = vand.u32 %v655, 4294901760
        %v1901 = vsub.f32 %v655, %v1900
        %v1902 = vand.u32 %v1901, 4294901760
        %1903 = vmatpush1.msra.mxu0 %v1902
        %1904 = vmatprep.subr.mxu0 0.0
        %v1905 = vand.u32 %v656, 4294901760
        %v1906 = vsub.f32 %v656, %v1905
        %v1907 = vand.u32 %v1906, 4294901760
        %1908 = vmatpush1.msra.mxu0 %v1907
        %1909 = vmatprep.subr.mxu0 0.0
        %v1910 = vand.u32 %v657, 4294901760
        %v1911 = vsub.f32 %v657, %v1910
        %v1912 = vand.u32 %v1911, 4294901760
        %1913 = vmatpush1.msra.mxu0 %v1912
        %1914 = vmatprep.subr.mxu0 0.0
        %v1915 = vand.u32 %v658, 4294901760
        %v1916 = vsub.f32 %v658, %v1915
        %v1917 = vand.u32 %v1916, 4294901760
        %1918 = vmatpush1.msra.mxu0 %v1917
        %1919 = vmatprep.subr.mxu0 0.0
        %v1920 = vand.u32 %v659, 4294901760
        %v1921 = vsub.f32 %v659, %v1920
        %v1922 = vand.u32 %v1921, 4294901760
        %1923 = vmatpush1.msra.mxu0 %v1922
        %1924 = vmatprep.subr.mxu0 0.0
        %v1925 = vand.u32 %v660, 4294901760
        %v1926 = vsub.f32 %v660, %v1925
        %v1927 = vand.u32 %v1926, 4294901760
        %1928 = vmatpush1.msra.mxu0 %v1927
        %1929 = vmatprep.subr.mxu0 0.0
        %1930 = vmatpush1.msra.mxu0 0.0
        %1931 = vmatprep.subr.mxu0 0.0
        %1932 = vmatpush1.msra.mxu0 0.0
        %1933 = vmatprep.subr.mxu0 0.0
        %1934 = vmatpush1.msra.mxu0 0.0
        %1935 = vmatprep.subr.mxu0 0.0
        %1936 = vmatpush1.msra.mxu0 0.0
        %1937 = vmatprep.subr.mxu0 0.0
        %1938 = vmatpush1.msra.mxu0 0.0
        %1939 = vmatprep.subr.mxu0 0.0
        %1940 = vmatpush1.msra.mxu0 0.0
        %1941 = vmatprep.subr.mxu0 0.0
        %1942 = vmatpush1.msra.mxu0 0.0
        %1943 = vmatprep.subr.mxu0 0.0
        %1944 = vmatpush1.msra.mxu0 0.0
        %1945 = vmatprep.subr.mxu0 0.0
        %1946 = vmatpush1.msra.mxu0 0.0
        %1947 = vmatprep.subr.mxu0 0.0
        %1948 = vmatpush1.msra.mxu0 0.0
        %1949 = vmatprep.subr.mxu0 0.0
        %1950 = vmatpush1.msra.mxu0 0.0
        %1951 = vmatprep.subr.mxu0 0.0
        %1952 = vmatpush1.msra.mxu0 0.0
        %1953 = vmatprep.subr.mxu0 0.0
        %1954 = vmatpush1.msra.mxu0 0.0
        %1955 = vmatprep.subr.mxu0 0.0
        %1956 = vmatpush1.msra.mxu0 0.0
        %1957 = vmatprep.subr.mxu0 0.0
        %1958 = vmatpush1.msra.mxu0 0.0
        %1959 = vmatprep.subr.mxu0 0.0
        %1960 = vmatpush1.msra.mxu0 0.0
        %1961 = vmatprep.subr.mxu0 0.0
        %1962 = vmatpush1.msra.mxu0 0.0
        %1963 = vmatprep.subr.mxu0 0.0
        %1964 = vmatpush1.msra.mxu0 0.0
        %1965 = vmatprep.subr.mxu0 0.0
        %1966 = vmatpush1.msra.mxu0 0.0
        %1967 = vmatprep.subr.mxu0 0.0
        %1968 = vmatpush1.msra.mxu0 0.0
        %1969 = vmatprep.subr.mxu0 0.0
        %1970 = vmatpush1.msra.mxu0 0.0
        %1971 = vmatprep.subr.mxu0 0.0
        %1972 = vmatpush1.msra.mxu0 0.0
        %1973 = vmatprep.subr.mxu0 0.0
        %1974 = vmatpush1.msra.mxu0 0.0
        %1975 = vmatprep.subr.mxu0 0.0
        %1976 = vmatpush1.msra.mxu0 0.0
        %1977 = vmatprep.mubr.f32.mxu0 0.0
        %v1978 = vand.u32 %v662, 4294901760
        %1979 = vmatmul.mubr.f32.gmra.mrb[0].mxu0 %v1978
        %v1980 = vpop.f32.mrb[0].mxu0
        %v1981 = vadd.f32 %v1886, %v1980
        %v1982 = vpop.f32.mrb[0].mxu0
        %1983 = vdwg.mxu0
        %1984 = vmatprep.subr.mxu0 0.0
        %v1985 = vand.u32 %v653, 4294901760
        %1986 = vmatpush1.msra.mxu0 %v1985
        %1987 = vmatprep.subr.mxu0 0.0
        %v1988 = vand.u32 %v654, 4294901760
        %1989 = vmatpush1.msra.mxu0 %v1988
        %1990 = vmatprep.subr.mxu0 0.0
        %v1991 = vand.u32 %v655, 4294901760
        %1992 = vmatpush1.msra.mxu0 %v1991
        %1993 = vmatprep.subr.mxu0 0.0
        %v1994 = vand.u32 %v656, 4294901760
        %1995 = vmatpush1.msra.mxu0 %v1994
        %1996 = vmatprep.subr.mxu0 0.0
        %v1997 = vand.u32 %v657, 4294901760
        %1998 = vmatpush1.msra.mxu0 %v1997
        %1999 = vmatprep.subr.mxu0 0.0
        %v2000 = vand.u32 %v658, 4294901760
        %2001 = vmatpush1.msra.mxu0 %v2000
        %2002 = vmatprep.subr.mxu0 0.0
        %v2003 = vand.u32 %v659, 4294901760
        %2004 = vmatpush1.msra.mxu0 %v2003
        %2005 = vmatprep.subr.mxu0 0.0
        %v2006 = vand.u32 %v660, 4294901760
        %2007 = vmatpush1.msra.mxu0 %v2006
        %2008 = vmatprep.subr.mxu0 0.0
        %2009 = vmatpush1.msra.mxu0 0.0
        %2010 = vmatprep.subr.mxu0 0.0
        %2011 = vmatpush1.msra.mxu0 0.0
        %2012 = vmatprep.subr.mxu0 0.0
        %2013 = vmatpush1.msra.mxu0 0.0
        %2014 = vmatprep.subr.mxu0 0.0
        %2015 = vmatpush1.msra.mxu0 0.0
        %2016 = vmatprep.subr.mxu0 0.0
        %2017 = vmatpush1.msra.mxu0 0.0
        %2018 = vmatprep.subr.mxu0 0.0
        %2019 = vmatpush1.msra.mxu0 0.0
        %2020 = vmatprep.subr.mxu0 0.0
        %2021 = vmatpush1.msra.mxu0 0.0
        %2022 = vmatprep.subr.mxu0 0.0
        %2023 = vmatpush1.msra.mxu0 0.0
        %2024 = vmatprep.subr.mxu0 0.0
        %2025 = vmatpush1.msra.mxu0 0.0
        %2026 = vmatprep.subr.mxu0 0.0
        %2027 = vmatpush1.msra.mxu0 0.0
        %2028 = vmatprep.subr.mxu0 0.0
        %2029 = vmatpush1.msra.mxu0 0.0
        %2030 = vmatprep.subr.mxu0 0.0
        %2031 = vmatpush1.msra.mxu0 0.0
        %2032 = vmatprep.subr.mxu0 0.0
        %2033 = vmatpush1.msra.mxu0 0.0
        %2034 = vmatprep.subr.mxu0 0.0
        %2035 = vmatpush1.msra.mxu0 0.0
        %2036 = vmatprep.subr.mxu0 0.0
        %2037 = vmatpush1.msra.mxu0 0.0
        %2038 = vmatprep.subr.mxu0 0.0
        %2039 = vmatpush1.msra.mxu0 0.0
        %2040 = vmatprep.subr.mxu0 0.0
        %2041 = vmatpush1.msra.mxu0 0.0
        %2042 = vmatprep.subr.mxu0 0.0
        %2043 = vmatpush1.msra.mxu0 0.0
        %2044 = vmatprep.subr.mxu0 0.0
        %2045 = vmatpush1.msra.mxu0 0.0
        %2046 = vmatprep.subr.mxu0 0.0
        %2047 = vmatpush1.msra.mxu0 0.0
        %2048 = vmatprep.subr.mxu0 0.0
        %2049 = vmatpush1.msra.mxu0 0.0
        %2050 = vmatprep.subr.mxu0 0.0
        %2051 = vmatpush1.msra.mxu0 0.0
        %2052 = vmatprep.subr.mxu0 0.0
        %2053 = vmatpush1.msra.mxu0 0.0
        %2054 = vmatprep.subr.mxu0 0.0
        %2055 = vmatpush1.msra.mxu0 0.0
        %2056 = vmatprep.mubr.f32.mxu0 0.0
        %v2057 = vand.u32 %v662, 4294901760
        %2058 = vmatmul.mubr.f32.gmra.mrb[0].mxu0 %v2057
        %v2059 = vpop.f32.mrb[0].mxu0
        %v2060 = vadd.f32 %v1981, %v2059
        %v2061 = vpop.f32.mrb[0].mxu0
        %2062 = vdwg.mxu0
        %v2063 = vadd.s32 %v364, 320
        %v2064 = vadd.s32 %v364, 328
        %v2065 = vadd.s32 %v364, 336
        %v2066 = vadd.s32 %v364, 344
        %v2067 = vadd.s32 %v364, 352
        %v2068 = vadd.s32 %v364, 360
        %v2069 = vadd.s32 %v364, 368
        %v2070 = vadd.s32 %v364, 376
        %v2071 = vadd.s32 %v364, 384
        %v2072 = vadd.s32 %v364, 392
        %v2073 = vadd.s32 %v364, 400
        %v2074 = vadd.s32 %v364, 408
        %v2075 = vadd.s32 %v364, 416
        %v2076 = vadd.s32 %v364, 424
        %v2077 = vadd.s32 %v364, 432
        %v2078 = vadd.s32 %v364, 440
        %v2079 = vadd.s32 %v364, 448
        %v2080 = vadd.s32 %v364, 456
        %v2081 = vadd.s32 %v364, 464
        %v2082 = vadd.s32 %v364, 472
        %v2083 = vadd.s32 %v364, 480
        %v2084 = vadd.s32 %v364, 488
        %v2085 = vadd.s32 %v364, 496
        %v2086 = vadd.s32 %v364, 504
        %v2087 = vadd.s32 %v364, 512
        %v2088 = vadd.s32 %v364, 520
        %v2089 = vadd.s32 %v364, 528
        %v2090 = vadd.s32 %v364, 536
        %v2091 = vadd.s32 %v364, 544
        %v2092 = vadd.s32 %v364, 552
        %v2093 = vadd.s32 %v364, 560
        %v2094 = vadd.s32 %v364, 568
        %v2095 = vadd.s32 %v364, 576
        %v2096 = vadd.s32 %v364, 584
        %v2097 = vadd.s32 %v364, 592
        %v2098 = vadd.s32 %v364, 600
        %v2099 = vadd.s32 %v364, 608
        %v2100 = vadd.s32 %v364, 616
        %v2101 = vadd.s32 %v364, 624
        %v2102 = vadd.s32 %v364, 632
        %v2103 = vadd.s32 %v364, 640
        %v2104 = vadd.s32 %v364, 648
        %v2105 = vadd.s32 %v364, 656
        %v2106 = vadd.s32 %v364, 664
        %v2107 = vadd.s32 %v364, 672
        %v2108 = vadd.s32 %v364, 680
        %v2109 = vadd.s32 %v364, 688
        %v2110 = vadd.s32 %v364, 696
        %v2111 = vadd.s32 %v364, 704
        %v2112 = vadd.s32 %v364, 712
        %v2113 = vadd.s32 %v364, 720
        %v2114 = vadd.s32 %v364, 728
        %v2115 = vadd.s32 %v364, 736
        %v2116 = vadd.s32 %v364, 744
        %v2117 = vadd.s32 %v364, 752
        %v2118 = vadd.s32 %v364, 760
        %v2119 = vadd.s32 %v364, 768
        %v2120 = vadd.s32 %v364, 776
        %v2121 = vadd.s32 %v364, 784
        %v2122 = vadd.s32 %v364, 792
        %v2123 = vadd.s32 %v364, 800
        %v2124 = vadd.s32 %v364, 808
        %v2125 = vadd.s32 %v364, 816
        %v2126 = vadd.s32 %v364, 824
        %v2127 = vadd.s32 %v364, 832
        %v2128 = vadd.s32 %v364, 840
        %v2129 = vadd.s32 %v364, 848
        %v2130 = vadd.s32 %v364, 856
        %v2131 = vadd.s32 %v364, 864
        %v2132 = vadd.s32 %v364, 872
        %v2133 = vadd.s32 %v364, 880
        %v2134 = vadd.s32 %v364, 888
        %v2135 = vadd.s32 %v364, 896
        %v2136 = vadd.s32 %v364, 904
        %v2137 = vadd.s32 %v364, 912
        %v2138 = vadd.s32 %v364, 920
        %v2139 = vadd.s32 %v364, 928
        %v2140 = vadd.s32 %v364, 936
        %v2141 = vadd.s32 %v364, 944
        %v2142 = vadd.s32 %v364, 952
        %v2143 = vadd.s32 %v364, 960
        %v2144 = vadd.s32 %v364, 968
        %v2145 = vadd.s32 %v364, 976
        %v2146 = vadd.s32 %v364, 984
        %v2147 = vadd.s32 %v364, 992
        %v2148 = vadd.s32 %v364, 1000
        %v2149 = vadd.s32 %v364, 1008
        %v2150 = vadd.s32 %v364, 1016
        %v2151 = vadd.s32 %v364, 1024
        %v2152 = vadd.s32 %v364, 1032
        %v2153 = vadd.s32 %v364, 1040
        %v2154 = vadd.s32 %v364, 1048
        %v2155 = vadd.s32 %v364, 1056
        %v2156 = vadd.s32 %v364, 1064
        %v2157 = vadd.s32 %v364, 1072
        %v2158 = vadd.s32 %v364, 1080
        %v2159 = vadd.s32 %v364, 1088
        %v2160 = vadd.s32 %v364, 1096
        %v2161 = vadd.s32 %v364, 1104
        %v2162 = vadd.s32 %v364, 1112
        %v2163 = vadd.s32 %v364, 1120
        %v2164 = vadd.s32 %v364, 1128
        %v2165 = vadd.s32 %v364, 1136
        %v2166 = vadd.s32 %v364, 1144
        %v2167 = vadd.s32 %v364, 1152
        %v2168 = vadd.s32 %v364, 1160
        %v2169 = vadd.s32 %v364, 1168
        %v2170 = vadd.s32 %v364, 1176
        %v2171 = vadd.s32 %v364, 1184
        %v2172 = vadd.s32 %v364, 1192
        %v2173 = vadd.s32 %v364, 1200
        %v2174 = vadd.s32 %v364, 1208
        %v2175 = vadd.s32 %v364, 1216
        %v2176 = vadd.s32 %v364, 1224
        %v2177 = vadd.s32 %v364, 1232
        %v2178 = vadd.s32 %v364, 1240
        %v2179 = vadd.s32 %v364, 1248
        %v2180 = vadd.s32 %v364, 1256
        %v2181 = vadd.s32 %v364, 1264
        %v2182 = vadd.s32 %v364, 1272
        %v2183 = vadd.s32 %v364, 1280
        %v2184 = vadd.s32 %v364, 1288
        %v2185 = vadd.s32 %v364, 1296
        %v2186 = vadd.s32 %v364, 1304
        %v2187 = vadd.s32 %v364, 1312
        %v2188 = vadd.s32 %v364, 1320
        %v2189 = vadd.s32 %v364, 1328
        %v2190 = vadd.s32 %v364, 1336
        %v2191 = vadd.s32 %v364, 1344
        %v2192 = vadd.s32 %v364, 1352
        %v2193 = vadd.s32 %v364, 1360
        %v2194 = vadd.s32 %v364, 1368
        %v2195 = vadd.s32 %v364, 1376
        %v2196 = vadd.s32 %v364, 1384
        %v2197 = vadd.s32 %v364, 1392
        %v2198 = vadd.s32 %v364, 1400
        %v2199 = vadd.s32 %v364, 1408
        %v2200 = vadd.s32 %v364, 1416
        %v2201 = vadd.s32 %v364, 1424
        %v2202 = vadd.s32 %v364, 1432
        %v2203 = vadd.s32 %v364, 1440
        %v2204 = vadd.s32 %v364, 1448
        %v2205 = vadd.s32 %v364, 1456
        %v2206 = vadd.s32 %v364, 1464
        %v2207 = vadd.s32 %v364, 1472
        %v2208 = vadd.s32 %v364, 1480
        %v2209 = vadd.s32 %v364, 1488
        %v2210 = vadd.s32 %v364, 1496
        %v2211 = vadd.s32 %v364, 1504
        %v2212 = vadd.s32 %v364, 1512
        %v2213 = vadd.s32 %v364, 1520
        %v2214 = vadd.s32 %v364, 1528
        %v2215 = vadd.s32 %v364, 1536
        %v2216 = vadd.s32 %v364, 1544
        %v2217 = vadd.s32 %v364, 1552
        %v2218 = vadd.s32 %v364, 1560
        %v2219 = vadd.s32 %v364, 1568
        %v2220 = vadd.s32 %v364, 1576
        %v2221 = vadd.s32 %v364, 1584
        %v2222 = vadd.s32 %v364, 1592
        %vm2223 = vcmp.ge.s32.totalorder %v2063, %v458
        %vm2224 = vcmp.ge.s32.totalorder %v2064, %v458
        %vm2225 = vcmp.ge.s32.totalorder %v2065, %v458
        %vm2226 = vcmp.ge.s32.totalorder %v2066, %v458
        %vm2227 = vcmp.ge.s32.totalorder %v2067, %v458
        %vm2228 = vcmp.ge.s32.totalorder %v2068, %v458
        %vm2229 = vcmp.ge.s32.totalorder %v2069, %v458
        %vm2230 = vcmp.ge.s32.totalorder %v2070, %v458
        %vm2231 = vcmp.ge.s32.totalorder %v2071, %v458
        %vm2232 = vcmp.ge.s32.totalorder %v2072, %v458
        %vm2233 = vcmp.ge.s32.totalorder %v2073, %v458
        %vm2234 = vcmp.ge.s32.totalorder %v2074, %v458
        %vm2235 = vcmp.ge.s32.totalorder %v2075, %v458
        %vm2236 = vcmp.ge.s32.totalorder %v2076, %v458
        %vm2237 = vcmp.ge.s32.totalorder %v2077, %v458
        %vm2238 = vcmp.ge.s32.totalorder %v2078, %v458
        %vm2239 = vcmp.ge.s32.totalorder %v2079, %v458
        %vm2240 = vcmp.ge.s32.totalorder %v2080, %v458
        %vm2241 = vcmp.ge.s32.totalorder %v2081, %v458
        %vm2242 = vcmp.ge.s32.totalorder %v2082, %v458
        %vm2243 = vcmp.ge.s32.totalorder %v2083, %v458
        %vm2244 = vcmp.ge.s32.totalorder %v2084, %v458
        %vm2245 = vcmp.ge.s32.totalorder %v2085, %v458
        %vm2246 = vcmp.ge.s32.totalorder %v2086, %v458
        %vm2247 = vcmp.ge.s32.totalorder %v2087, %v458
        %vm2248 = vcmp.ge.s32.totalorder %v2088, %v458
        %vm2249 = vcmp.ge.s32.totalorder %v2089, %v458
        %vm2250 = vcmp.ge.s32.totalorder %v2090, %v458
        %vm2251 = vcmp.ge.s32.totalorder %v2091, %v458
        %vm2252 = vcmp.ge.s32.totalorder %v2092, %v458
        %vm2253 = vcmp.ge.s32.totalorder %v2093, %v458
        %vm2254 = vcmp.ge.s32.totalorder %v2094, %v458
        %vm2255 = vcmp.ge.s32.totalorder %v2095, %v458
        %vm2256 = vcmp.ge.s32.totalorder %v2096, %v458
        %vm2257 = vcmp.ge.s32.totalorder %v2097, %v458
        %vm2258 = vcmp.ge.s32.totalorder %v2098, %v458
        %vm2259 = vcmp.ge.s32.totalorder %v2099, %v458
        %vm2260 = vcmp.ge.s32.totalorder %v2100, %v458
        %vm2261 = vcmp.ge.s32.totalorder %v2101, %v458
        %vm2262 = vcmp.ge.s32.totalorder %v2102, %v458
        %vm2263 = vcmp.ge.s32.totalorder %v2103, %v458
        %vm2264 = vcmp.ge.s32.totalorder %v2104, %v458
        %vm2265 = vcmp.ge.s32.totalorder %v2105, %v458
        %vm2266 = vcmp.ge.s32.totalorder %v2106, %v458
        %vm2267 = vcmp.ge.s32.totalorder %v2107, %v458
        %vm2268 = vcmp.ge.s32.totalorder %v2108, %v458
        %vm2269 = vcmp.ge.s32.totalorder %v2109, %v458
        %vm2270 = vcmp.ge.s32.totalorder %v2110, %v458
        %vm2271 = vcmp.ge.s32.totalorder %v2111, %v458
        %vm2272 = vcmp.ge.s32.totalorder %v2112, %v458
        %vm2273 = vcmp.ge.s32.totalorder %v2113, %v458
        %vm2274 = vcmp.ge.s32.totalorder %v2114, %v458
        %vm2275 = vcmp.ge.s32.totalorder %v2115, %v458
        %vm2276 = vcmp.ge.s32.totalorder %v2116, %v458
        %vm2277 = vcmp.ge.s32.totalorder %v2117, %v458
        %vm2278 = vcmp.ge.s32.totalorder %v2118, %v458
        %vm2279 = vcmp.ge.s32.totalorder %v2119, %v458
        %vm2280 = vcmp.ge.s32.totalorder %v2120, %v458
        %vm2281 = vcmp.ge.s32.totalorder %v2121, %v458
        %vm2282 = vcmp.ge.s32.totalorder %v2122, %v458
        %vm2283 = vcmp.ge.s32.totalorder %v2123, %v458
        %vm2284 = vcmp.ge.s32.totalorder %v2124, %v458
        %vm2285 = vcmp.ge.s32.totalorder %v2125, %v458
        %vm2286 = vcmp.ge.s32.totalorder %v2126, %v458
        %vm2287 = vcmp.ge.s32.totalorder %v2127, %v458
        %vm2288 = vcmp.ge.s32.totalorder %v2128, %v458
        %vm2289 = vcmp.ge.s32.totalorder %v2129, %v458
        %vm2290 = vcmp.ge.s32.totalorder %v2130, %v458
        %vm2291 = vcmp.ge.s32.totalorder %v2131, %v458
        %vm2292 = vcmp.ge.s32.totalorder %v2132, %v458
        %vm2293 = vcmp.ge.s32.totalorder %v2133, %v458
        %vm2294 = vcmp.ge.s32.totalorder %v2134, %v458
        %vm2295 = vcmp.ge.s32.totalorder %v2135, %v458
        %vm2296 = vcmp.ge.s32.totalorder %v2136, %v458
        %vm2297 = vcmp.ge.s32.totalorder %v2137, %v458
        %vm2298 = vcmp.ge.s32.totalorder %v2138, %v458
        %vm2299 = vcmp.ge.s32.totalorder %v2139, %v458
        %vm2300 = vcmp.ge.s32.totalorder %v2140, %v458
        %vm2301 = vcmp.ge.s32.totalorder %v2141, %v458
        %vm2302 = vcmp.ge.s32.totalorder %v2142, %v458
        %vm2303 = vcmp.ge.s32.totalorder %v2143, %v458
        %vm2304 = vcmp.ge.s32.totalorder %v2144, %v458
        %vm2305 = vcmp.ge.s32.totalorder %v2145, %v458
        %vm2306 = vcmp.ge.s32.totalorder %v2146, %v458
        %vm2307 = vcmp.ge.s32.totalorder %v2147, %v458
        %vm2308 = vcmp.ge.s32.totalorder %v2148, %v458
        %vm2309 = vcmp.ge.s32.totalorder %v2149, %v458
        %vm2310 = vcmp.ge.s32.totalorder %v2150, %v458
        %vm2311 = vcmp.ge.s32.totalorder %v2151, %v458
        %vm2312 = vcmp.ge.s32.totalorder %v2152, %v458
        %vm2313 = vcmp.ge.s32.totalorder %v2153, %v458
        %vm2314 = vcmp.ge.s32.totalorder %v2154, %v458
        %vm2315 = vcmp.ge.s32.totalorder %v2155, %v458
        %vm2316 = vcmp.ge.s32.totalorder %v2156, %v458
        %vm2317 = vcmp.ge.s32.totalorder %v2157, %v458
        %vm2318 = vcmp.ge.s32.totalorder %v2158, %v458
        %vm2319 = vcmp.ge.s32.totalorder %v2159, %v458
        %vm2320 = vcmp.ge.s32.totalorder %v2160, %v458
        %vm2321 = vcmp.ge.s32.totalorder %v2161, %v458
        %vm2322 = vcmp.ge.s32.totalorder %v2162, %v458
        %vm2323 = vcmp.ge.s32.totalorder %v2163, %v458
        %vm2324 = vcmp.ge.s32.totalorder %v2164, %v458
        %vm2325 = vcmp.ge.s32.totalorder %v2165, %v458
        %vm2326 = vcmp.ge.s32.totalorder %v2166, %v458
        %vm2327 = vcmp.ge.s32.totalorder %v2167, %v458
        %vm2328 = vcmp.ge.s32.totalorder %v2168, %v458
        %vm2329 = vcmp.ge.s32.totalorder %v2169, %v458
        %vm2330 = vcmp.ge.s32.totalorder %v2170, %v458
        %vm2331 = vcmp.ge.s32.totalorder %v2171, %v458
        %vm2332 = vcmp.ge.s32.totalorder %v2172, %v458
        %vm2333 = vcmp.ge.s32.totalorder %v2173, %v458
        %vm2334 = vcmp.ge.s32.totalorder %v2174, %v458
        %vm2335 = vcmp.ge.s32.totalorder %v2175, %v458
        %vm2336 = vcmp.ge.s32.totalorder %v2176, %v458
        %vm2337 = vcmp.ge.s32.totalorder %v2177, %v458
        %vm2338 = vcmp.ge.s32.totalorder %v2178, %v458
        %vm2339 = vcmp.ge.s32.totalorder %v2179, %v458
        %vm2340 = vcmp.ge.s32.totalorder %v2180, %v458
        %vm2341 = vcmp.ge.s32.totalorder %v2181, %v458
        %vm2342 = vcmp.ge.s32.totalorder %v2182, %v458
        %vm2343 = vcmp.ge.s32.totalorder %v2183, %v458
        %vm2344 = vcmp.ge.s32.totalorder %v2184, %v458
        %vm2345 = vcmp.ge.s32.totalorder %v2185, %v458
        %vm2346 = vcmp.ge.s32.totalorder %v2186, %v458
        %vm2347 = vcmp.ge.s32.totalorder %v2187, %v458
        %vm2348 = vcmp.ge.s32.totalorder %v2188, %v458
        %vm2349 = vcmp.ge.s32.totalorder %v2189, %v458
        %vm2350 = vcmp.ge.s32.totalorder %v2190, %v458
        %vm2351 = vcmp.ge.s32.totalorder %v2191, %v458
        %vm2352 = vcmp.ge.s32.totalorder %v2192, %v458
        %vm2353 = vcmp.ge.s32.totalorder %v2193, %v458
        %vm2354 = vcmp.ge.s32.totalorder %v2194, %v458
        %vm2355 = vcmp.ge.s32.totalorder %v2195, %v458
        %vm2356 = vcmp.ge.s32.totalorder %v2196, %v458
        %vm2357 = vcmp.ge.s32.totalorder %v2197, %v458
        %vm2358 = vcmp.ge.s32.totalorder %v2198, %v458
        %vm2359 = vcmp.ge.s32.totalorder %v2199, %v458
        %vm2360 = vcmp.ge.s32.totalorder %v2200, %v458
        %vm2361 = vcmp.ge.s32.totalorder %v2201, %v458
        %vm2362 = vcmp.ge.s32.totalorder %v2202, %v458
        %vm2363 = vcmp.ge.s32.totalorder %v2203, %v458
        %vm2364 = vcmp.ge.s32.totalorder %v2204, %v458
        %vm2365 = vcmp.ge.s32.totalorder %v2205, %v458
        %vm2366 = vcmp.ge.s32.totalorder %v2206, %v458
        %vm2367 = vcmp.ge.s32.totalorder %v2207, %v458
        %vm2368 = vcmp.ge.s32.totalorder %v2208, %v458
        %vm2369 = vcmp.ge.s32.totalorder %v2209, %v458
        %vm2370 = vcmp.ge.s32.totalorder %v2210, %v458
        %vm2371 = vcmp.ge.s32.totalorder %v2211, %v458
        %vm2372 = vcmp.ge.s32.totalorder %v2212, %v458
        %vm2373 = vcmp.ge.s32.totalorder %v2213, %v458
        %vm2374 = vcmp.ge.s32.totalorder %v2214, %v458
        %vm2375 = vcmp.ge.s32.totalorder %v2215, %v458
        %vm2376 = vcmp.ge.s32.totalorder %v2216, %v458
        %vm2377 = vcmp.ge.s32.totalorder %v2217, %v458
        %vm2378 = vcmp.ge.s32.totalorder %v2218, %v458
        %vm2379 = vcmp.ge.s32.totalorder %v2219, %v458
        %vm2380 = vcmp.ge.s32.totalorder %v2220, %v458
        %vm2381 = vcmp.ge.s32.totalorder %v2221, %v458
        %vm2382 = vcmp.ge.s32.totalorder %v2222, %v458
        %vm2383 = vcmp.lt.s32.totalorder %v2063, %v500
        %vm2384 = vcmp.lt.s32.totalorder %v2064, %v500
        %vm2385 = vcmp.lt.s32.totalorder %v2065, %v500
        %vm2386 = vcmp.lt.s32.totalorder %v2066, %v500
        %vm2387 = vcmp.lt.s32.totalorder %v2067, %v500
        %vm2388 = vcmp.lt.s32.totalorder %v2068, %v500
        %vm2389 = vcmp.lt.s32.totalorder %v2069, %v500
        %vm2390 = vcmp.lt.s32.totalorder %v2070, %v500
        %vm2391 = vcmp.lt.s32.totalorder %v2071, %v500
        %vm2392 = vcmp.lt.s32.totalorder %v2072, %v500
        %vm2393 = vcmp.lt.s32.totalorder %v2073, %v500
        %vm2394 = vcmp.lt.s32.totalorder %v2074, %v500
        %vm2395 = vcmp.lt.s32.totalorder %v2075, %v500
        %vm2396 = vcmp.lt.s32.totalorder %v2076, %v500
        %vm2397 = vcmp.lt.s32.totalorder %v2077, %v500
        %vm2398 = vcmp.lt.s32.totalorder %v2078, %v500
        %vm2399 = vcmp.lt.s32.totalorder %v2079, %v500
        %vm2400 = vcmp.lt.s32.totalorder %v2080, %v500
        %vm2401 = vcmp.lt.s32.totalorder %v2081, %v500
        %vm2402 = vcmp.lt.s32.totalorder %v2082, %v500
        %vm2403 = vcmp.lt.s32.totalorder %v2083, %v500
        %vm2404 = vcmp.lt.s32.totalorder %v2084, %v500
        %vm2405 = vcmp.lt.s32.totalorder %v2085, %v500
        %vm2406 = vcmp.lt.s32.totalorder %v2086, %v500
        %vm2407 = vcmp.lt.s32.totalorder %v2087, %v500
        %vm2408 = vcmp.lt.s32.totalorder %v2088, %v500
        %vm2409 = vcmp.lt.s32.totalorder %v2089, %v500
        %vm2410 = vcmp.lt.s32.totalorder %v2090, %v500
        %vm2411 = vcmp.lt.s32.totalorder %v2091, %v500
        %vm2412 = vcmp.lt.s32.totalorder %v2092, %v500
        %vm2413 = vcmp.lt.s32.totalorder %v2093, %v500
        %vm2414 = vcmp.lt.s32.totalorder %v2094, %v500
        %vm2415 = vcmp.lt.s32.totalorder %v2095, %v500
        %vm2416 = vcmp.lt.s32.totalorder %v2096, %v500
        %vm2417 = vcmp.lt.s32.totalorder %v2097, %v500
        %vm2418 = vcmp.lt.s32.totalorder %v2098, %v500
        %vm2419 = vcmp.lt.s32.totalorder %v2099, %v500
        %vm2420 = vcmp.lt.s32.totalorder %v2100, %v500
        %vm2421 = vcmp.lt.s32.totalorder %v2101, %v500
        %vm2422 = vcmp.lt.s32.totalorder %v2102, %v500
        %vm2423 = vcmp.lt.s32.totalorder %v2103, %v500
        %vm2424 = vcmp.lt.s32.totalorder %v2104, %v500
        %vm2425 = vcmp.lt.s32.totalorder %v2105, %v500
        %vm2426 = vcmp.lt.s32.totalorder %v2106, %v500
        %vm2427 = vcmp.lt.s32.totalorder %v2107, %v500
        %vm2428 = vcmp.lt.s32.totalorder %v2108, %v500
        %vm2429 = vcmp.lt.s32.totalorder %v2109, %v500
        %vm2430 = vcmp.lt.s32.totalorder %v2110, %v500
        %vm2431 = vcmp.lt.s32.totalorder %v2111, %v500
        %vm2432 = vcmp.lt.s32.totalorder %v2112, %v500
        %vm2433 = vcmp.lt.s32.totalorder %v2113, %v500
        %vm2434 = vcmp.lt.s32.totalorder %v2114, %v500
        %vm2435 = vcmp.lt.s32.totalorder %v2115, %v500
        %vm2436 = vcmp.lt.s32.totalorder %v2116, %v500
        %vm2437 = vcmp.lt.s32.totalorder %v2117, %v500
        %vm2438 = vcmp.lt.s32.totalorder %v2118, %v500
        %vm2439 = vcmp.lt.s32.totalorder %v2119, %v500
        %vm2440 = vcmp.lt.s32.totalorder %v2120, %v500
        %vm2441 = vcmp.lt.s32.totalorder %v2121, %v500
        %vm2442 = vcmp.lt.s32.totalorder %v2122, %v500
        %vm2443 = vcmp.lt.s32.totalorder %v2123, %v500
        %vm2444 = vcmp.lt.s32.totalorder %v2124, %v500
        %vm2445 = vcmp.lt.s32.totalorder %v2125, %v500
        %vm2446 = vcmp.lt.s32.totalorder %v2126, %v500
        %vm2447 = vcmp.lt.s32.totalorder %v2127, %v500
        %vm2448 = vcmp.lt.s32.totalorder %v2128, %v500
        %vm2449 = vcmp.lt.s32.totalorder %v2129, %v500
        %vm2450 = vcmp.lt.s32.totalorder %v2130, %v500
        %vm2451 = vcmp.lt.s32.totalorder %v2131, %v500
        %vm2452 = vcmp.lt.s32.totalorder %v2132, %v500
        %vm2453 = vcmp.lt.s32.totalorder %v2133, %v500
        %vm2454 = vcmp.lt.s32.totalorder %v2134, %v500
        %vm2455 = vcmp.lt.s32.totalorder %v2135, %v500
        %vm2456 = vcmp.lt.s32.totalorder %v2136, %v500
        %vm2457 = vcmp.lt.s32.totalorder %v2137, %v500
        %vm2458 = vcmp.lt.s32.totalorder %v2138, %v500
        %vm2459 = vcmp.lt.s32.totalorder %v2139, %v500
        %vm2460 = vcmp.lt.s32.totalorder %v2140, %v500
        %vm2461 = vcmp.lt.s32.totalorder %v2141, %v500
        %vm2462 = vcmp.lt.s32.totalorder %v2142, %v500
        %vm2463 = vcmp.lt.s32.totalorder %v2143, %v500
        %vm2464 = vcmp.lt.s32.totalorder %v2144, %v500
        %vm2465 = vcmp.lt.s32.totalorder %v2145, %v500
        %vm2466 = vcmp.lt.s32.totalorder %v2146, %v500
        %vm2467 = vcmp.lt.s32.totalorder %v2147, %v500
        %vm2468 = vcmp.lt.s32.totalorder %v2148, %v500
        %vm2469 = vcmp.lt.s32.totalorder %v2149, %v500
        %vm2470 = vcmp.lt.s32.totalorder %v2150, %v500
        %vm2471 = vcmp.lt.s32.totalorder %v2151, %v500
        %vm2472 = vcmp.lt.s32.totalorder %v2152, %v500
        %vm2473 = vcmp.lt.s32.totalorder %v2153, %v500
        %vm2474 = vcmp.lt.s32.totalorder %v2154, %v500
        %vm2475 = vcmp.lt.s32.totalorder %v2155, %v500
        %vm2476 = vcmp.lt.s32.totalorder %v2156, %v500
        %vm2477 = vcmp.lt.s32.totalorder %v2157, %v500
        %vm2478 = vcmp.lt.s32.totalorder %v2158, %v500
        %vm2479 = vcmp.lt.s32.totalorder %v2159, %v500
        %vm2480 = vcmp.lt.s32.totalorder %v2160, %v500
        %vm2481 = vcmp.lt.s32.totalorder %v2161, %v500
        %vm2482 = vcmp.lt.s32.totalorder %v2162, %v500
        %vm2483 = vcmp.lt.s32.totalorder %v2163, %v500
        %vm2484 = vcmp.lt.s32.totalorder %v2164, %v500
        %vm2485 = vcmp.lt.s32.totalorder %v2165, %v500
        %vm2486 = vcmp.lt.s32.totalorder %v2166, %v500
        %vm2487 = vcmp.lt.s32.totalorder %v2167, %v500
        %vm2488 = vcmp.lt.s32.totalorder %v2168, %v500
        %vm2489 = vcmp.lt.s32.totalorder %v2169, %v500
        %vm2490 = vcmp.lt.s32.totalorder %v2170, %v500
        %vm2491 = vcmp.lt.s32.totalorder %v2171, %v500
        %vm2492 = vcmp.lt.s32.totalorder %v2172, %v500
        %vm2493 = vcmp.lt.s32.totalorder %v2173, %v500
        %vm2494 = vcmp.lt.s32.totalorder %v2174, %v500
        %vm2495 = vcmp.lt.s32.totalorder %v2175, %v500
        %vm2496 = vcmp.lt.s32.totalorder %v2176, %v500
        %vm2497 = vcmp.lt.s32.totalorder %v2177, %v500
        %vm2498 = vcmp.lt.s32.totalorder %v2178, %v500
        %vm2499 = vcmp.lt.s32.totalorder %v2179, %v500
        %vm2500 = vcmp.lt.s32.totalorder %v2180, %v500
        %vm2501 = vcmp.lt.s32.totalorder %v2181, %v500
        %vm2502 = vcmp.lt.s32.totalorder %v2182, %v500
        %vm2503 = vcmp.lt.s32.totalorder %v2183, %v500
        %vm2504 = vcmp.lt.s32.totalorder %v2184, %v500
        %vm2505 = vcmp.lt.s32.totalorder %v2185, %v500
        %vm2506 = vcmp.lt.s32.totalorder %v2186, %v500
        %vm2507 = vcmp.lt.s32.totalorder %v2187, %v500
        %vm2508 = vcmp.lt.s32.totalorder %v2188, %v500
        %vm2509 = vcmp.lt.s32.totalorder %v2189, %v500
        %vm2510 = vcmp.lt.s32.totalorder %v2190, %v500
        %vm2511 = vcmp.lt.s32.totalorder %v2191, %v500
        %vm2512 = vcmp.lt.s32.totalorder %v2192, %v500
        %vm2513 = vcmp.lt.s32.totalorder %v2193, %v500
        %vm2514 = vcmp.lt.s32.totalorder %v2194, %v500
        %vm2515 = vcmp.lt.s32.totalorder %v2195, %v500
        %vm2516 = vcmp.lt.s32.totalorder %v2196, %v500
        %vm2517 = vcmp.lt.s32.totalorder %v2197, %v500
        %vm2518 = vcmp.lt.s32.totalorder %v2198, %v500
        %vm2519 = vcmp.lt.s32.totalorder %v2199, %v500
        %vm2520 = vcmp.lt.s32.totalorder %v2200, %v500
        %vm2521 = vcmp.lt.s32.totalorder %v2201, %v500
        %vm2522 = vcmp.lt.s32.totalorder %v2202, %v500
        %vm2523 = vcmp.lt.s32.totalorder %v2203, %v500
        %vm2524 = vcmp.lt.s32.totalorder %v2204, %v500
        %vm2525 = vcmp.lt.s32.totalorder %v2205, %v500
        %vm2526 = vcmp.lt.s32.totalorder %v2206, %v500
        %vm2527 = vcmp.lt.s32.totalorder %v2207, %v500
        %vm2528 = vcmp.lt.s32.totalorder %v2208, %v500
        %vm2529 = vcmp.lt.s32.totalorder %v2209, %v500
        %vm2530 = vcmp.lt.s32.totalorder %v2210, %v500
        %vm2531 = vcmp.lt.s32.totalorder %v2211, %v500
        %vm2532 = vcmp.lt.s32.totalorder %v2212, %v500
        %vm2533 = vcmp.lt.s32.totalorder %v2213, %v500
        %vm2534 = vcmp.lt.s32.totalorder %v2214, %v500
        %vm2535 = vcmp.lt.s32.totalorder %v2215, %v500
        %vm2536 = vcmp.lt.s32.totalorder %v2216, %v500
        %vm2537 = vcmp.lt.s32.totalorder %v2217, %v500
        %vm2538 = vcmp.lt.s32.totalorder %v2218, %v500
        %vm2539 = vcmp.lt.s32.totalorder %v2219, %v500
        %vm2540 = vcmp.lt.s32.totalorder %v2220, %v500
        %vm2541 = vcmp.lt.s32.totalorder %v2221, %v500
        %vm2542 = vcmp.lt.s32.totalorder %v2222, %v500
        %vm2543 = vmand %vm2223, %vm2383
        %vm2544 = vmand %vm2224, %vm2384
        %vm2545 = vmand %vm2225, %vm2385
        %vm2546 = vmand %vm2226, %vm2386
        %vm2547 = vmand %vm2227, %vm2387
        %vm2548 = vmand %vm2228, %vm2388
        %vm2549 = vmand %vm2229, %vm2389
        %vm2550 = vmand %vm2230, %vm2390
        %vm2551 = vmand %vm2231, %vm2391
        %vm2552 = vmand %vm2232, %vm2392
        %vm2553 = vmand %vm2233, %vm2393
        %vm2554 = vmand %vm2234, %vm2394
        %vm2555 = vmand %vm2235, %vm2395
        %vm2556 = vmand %vm2236, %vm2396
        %vm2557 = vmand %vm2237, %vm2397
        %vm2558 = vmand %vm2238, %vm2398
        %vm2559 = vmand %vm2239, %vm2399
        %vm2560 = vmand %vm2240, %vm2400
        %vm2561 = vmand %vm2241, %vm2401
        %vm2562 = vmand %vm2242, %vm2402
        %vm2563 = vmand %vm2243, %vm2403
        %vm2564 = vmand %vm2244, %vm2404
        %vm2565 = vmand %vm2245, %vm2405
        %vm2566 = vmand %vm2246, %vm2406
        %vm2567 = vmand %vm2247, %vm2407
        %vm2568 = vmand %vm2248, %vm2408
        %vm2569 = vmand %vm2249, %vm2409
        %vm2570 = vmand %vm2250, %vm2410
        %vm2571 = vmand %vm2251, %vm2411
        %vm2572 = vmand %vm2252, %vm2412
        %vm2573 = vmand %vm2253, %vm2413
        %vm2574 = vmand %vm2254, %vm2414
        %vm2575 = vmand %vm2255, %vm2415
        %vm2576 = vmand %vm2256, %vm2416
        %vm2577 = vmand %vm2257, %vm2417
        %vm2578 = vmand %vm2258, %vm2418
        %vm2579 = vmand %vm2259, %vm2419
        %vm2580 = vmand %vm2260, %vm2420
        %vm2581 = vmand %vm2261, %vm2421
        %vm2582 = vmand %vm2262, %vm2422
        %vm2583 = vmand %vm2263, %vm2423
        %vm2584 = vmand %vm2264, %vm2424
        %vm2585 = vmand %vm2265, %vm2425
        %vm2586 = vmand %vm2266, %vm2426
        %vm2587 = vmand %vm2267, %vm2427
        %vm2588 = vmand %vm2268, %vm2428
        %vm2589 = vmand %vm2269, %vm2429
        %vm2590 = vmand %vm2270, %vm2430
        %vm2591 = vmand %vm2271, %vm2431
        %vm2592 = vmand %vm2272, %vm2432
        %vm2593 = vmand %vm2273, %vm2433
        %vm2594 = vmand %vm2274, %vm2434
        %vm2595 = vmand %vm2275, %vm2435
        %vm2596 = vmand %vm2276, %vm2436
        %vm2597 = vmand %vm2277, %vm2437
        %vm2598 = vmand %vm2278, %vm2438
        %vm2599 = vmand %vm2279, %vm2439
        %vm2600 = vmand %vm2280, %vm2440
        %vm2601 = vmand %vm2281, %vm2441
        %vm2602 = vmand %vm2282, %vm2442
        %vm2603 = vmand %vm2283, %vm2443
        %vm2604 = vmand %vm2284, %vm2444
        %vm2605 = vmand %vm2285, %vm2445
        %vm2606 = vmand %vm2286, %vm2446
        %vm2607 = vmand %vm2287, %vm2447
        %vm2608 = vmand %vm2288, %vm2448
        %vm2609 = vmand %vm2289, %vm2449
        %vm2610 = vmand %vm2290, %vm2450
        %vm2611 = vmand %vm2291, %vm2451
        %vm2612 = vmand %vm2292, %vm2452
        %vm2613 = vmand %vm2293, %vm2453
        %vm2614 = vmand %vm2294, %vm2454
        %vm2615 = vmand %vm2295, %vm2455
        %vm2616 = vmand %vm2296, %vm2456
        %vm2617 = vmand %vm2297, %vm2457
        %vm2618 = vmand %vm2298, %vm2458
        %vm2619 = vmand %vm2299, %vm2459
        %vm2620 = vmand %vm2300, %vm2460
        %vm2621 = vmand %vm2301, %vm2461
        %vm2622 = vmand %vm2302, %vm2462
        %vm2623 = vmand %vm2303, %vm2463
        %vm2624 = vmand %vm2304, %vm2464
        %vm2625 = vmand %vm2305, %vm2465
        %vm2626 = vmand %vm2306, %vm2466
        %vm2627 = vmand %vm2307, %vm2467
        %vm2628 = vmand %vm2308, %vm2468
        %vm2629 = vmand %vm2309, %vm2469
        %vm2630 = vmand %vm2310, %vm2470
        %vm2631 = vmand %vm2311, %vm2471
        %vm2632 = vmand %vm2312, %vm2472
        %vm2633 = vmand %vm2313, %vm2473
        %vm2634 = vmand %vm2314, %vm2474
        %vm2635 = vmand %vm2315, %vm2475
        %vm2636 = vmand %vm2316, %vm2476
        %vm2637 = vmand %vm2317, %vm2477
        %vm2638 = vmand %vm2318, %vm2478
        %vm2639 = vmand %vm2319, %vm2479
        %vm2640 = vmand %vm2320, %vm2480
        %vm2641 = vmand %vm2321, %vm2481
        %vm2642 = vmand %vm2322, %vm2482
        %vm2643 = vmand %vm2323, %vm2483
        %vm2644 = vmand %vm2324, %vm2484
        %vm2645 = vmand %vm2325, %vm2485
        %vm2646 = vmand %vm2326, %vm2486
        %vm2647 = vmand %vm2327, %vm2487
        %vm2648 = vmand %vm2328, %vm2488
        %vm2649 = vmand %vm2329, %vm2489
        %vm2650 = vmand %vm2330, %vm2490
        %vm2651 = vmand %vm2331, %vm2491
        %vm2652 = vmand %vm2332, %vm2492
        %vm2653 = vmand %vm2333, %vm2493
        %vm2654 = vmand %vm2334, %vm2494
        %vm2655 = vmand %vm2335, %vm2495
        %vm2656 = vmand %vm2336, %vm2496
        %vm2657 = vmand %vm2337, %vm2497
        %vm2658 = vmand %vm2338, %vm2498
        %vm2659 = vmand %vm2339, %vm2499
        %vm2660 = vmand %vm2340, %vm2500
        %vm2661 = vmand %vm2341, %vm2501
        %vm2662 = vmand %vm2342, %vm2502
        %vm2663 = vmand %vm2343, %vm2503
        %vm2664 = vmand %vm2344, %vm2504
        %vm2665 = vmand %vm2345, %vm2505
        %vm2666 = vmand %vm2346, %vm2506
        %vm2667 = vmand %vm2347, %vm2507
        %vm2668 = vmand %vm2348, %vm2508
        %vm2669 = vmand %vm2349, %vm2509
        %vm2670 = vmand %vm2350, %vm2510
        %vm2671 = vmand %vm2351, %vm2511
        %vm2672 = vmand %vm2352, %vm2512
        %vm2673 = vmand %vm2353, %vm2513
        %vm2674 = vmand %vm2354, %vm2514
        %vm2675 = vmand %vm2355, %vm2515
        %vm2676 = vmand %vm2356, %vm2516
        %vm2677 = vmand %vm2357, %vm2517
        %vm2678 = vmand %vm2358, %vm2518
        %vm2679 = vmand %vm2359, %vm2519
        %vm2680 = vmand %vm2360, %vm2520
        %vm2681 = vmand %vm2361, %vm2521
        %vm2682 = vmand %vm2362, %vm2522
        %vm2683 = vmand %vm2363, %vm2523
        %vm2684 = vmand %vm2364, %vm2524
        %vm2685 = vmand %vm2365, %vm2525
        %vm2686 = vmand %vm2366, %vm2526
        %vm2687 = vmand %vm2367, %vm2527
        %vm2688 = vmand %vm2368, %vm2528
        %vm2689 = vmand %vm2369, %vm2529
        %vm2690 = vmand %vm2370, %vm2530
        %vm2691 = vmand %vm2371, %vm2531
        %vm2692 = vmand %vm2372, %vm2532
        %vm2693 = vmand %vm2373, %vm2533
        %vm2694 = vmand %vm2374, %vm2534
        %vm2695 = vmand %vm2375, %vm2535
        %vm2696 = vmand %vm2376, %vm2536
        %vm2697 = vmand %vm2377, %vm2537
        %vm2698 = vmand %vm2378, %vm2538
        %vm2699 = vmand %vm2379, %vm2539
        %vm2700 = vmand %vm2380, %vm2540
        %vm2701 = vmand %vm2381, %vm2541
        %vm2702 = vmand %vm2382, %vm2542
        %v2703 = vsel %vm2543, 1, 0
        %v2704 = vsel %vm2544, 1, 0
        %v2705 = vsel %vm2545, 1, 0
        %v2706 = vsel %vm2546, 1, 0
        %v2707 = vsel %vm2547, 1, 0
        %v2708 = vsel %vm2548, 1, 0
        %v2709 = vsel %vm2549, 1, 0
        %v2710 = vsel %vm2550, 1, 0
        %v2711 = vsel %vm2551, 1, 0
        %v2712 = vsel %vm2552, 1, 0
        %v2713 = vsel %vm2553, 1, 0
        %v2714 = vsel %vm2554, 1, 0
        %v2715 = vsel %vm2555, 1, 0
        %v2716 = vsel %vm2556, 1, 0
        %v2717 = vsel %vm2557, 1, 0
        %v2718 = vsel %vm2558, 1, 0
        %v2719 = vsel %vm2559, 1, 0
        %v2720 = vsel %vm2560, 1, 0
        %v2721 = vsel %vm2561, 1, 0
        %v2722 = vsel %vm2562, 1, 0
        %v2723 = vsel %vm2563, 1, 0
        %v2724 = vsel %vm2564, 1, 0
        %v2725 = vsel %vm2565, 1, 0
        %v2726 = vsel %vm2566, 1, 0
        %v2727 = vsel %vm2567, 1, 0
        %v2728 = vsel %vm2568, 1, 0
        %v2729 = vsel %vm2569, 1, 0
        %v2730 = vsel %vm2570, 1, 0
        %v2731 = vsel %vm2571, 1, 0
        %v2732 = vsel %vm2572, 1, 0
        %v2733 = vsel %vm2573, 1, 0
        %v2734 = vsel %vm2574, 1, 0
        %v2735 = vsel %vm2575, 1, 0
        %v2736 = vsel %vm2576, 1, 0
        %v2737 = vsel %vm2577, 1, 0
        %v2738 = vsel %vm2578, 1, 0
        %v2739 = vsel %vm2579, 1, 0
        %v2740 = vsel %vm2580, 1, 0
        %v2741 = vsel %vm2581, 1, 0
        %v2742 = vsel %vm2582, 1, 0
        %v2743 = vsel %vm2583, 1, 0
        %v2744 = vsel %vm2584, 1, 0
        %v2745 = vsel %vm2585, 1, 0
        %v2746 = vsel %vm2586, 1, 0
        %v2747 = vsel %vm2587, 1, 0
        %v2748 = vsel %vm2588, 1, 0
        %v2749 = vsel %vm2589, 1, 0
        %v2750 = vsel %vm2590, 1, 0
        %v2751 = vsel %vm2591, 1, 0
        %v2752 = vsel %vm2592, 1, 0
        %v2753 = vsel %vm2593, 1, 0
        %v2754 = vsel %vm2594, 1, 0
        %v2755 = vsel %vm2595, 1, 0
        %v2756 = vsel %vm2596, 1, 0
        %v2757 = vsel %vm2597, 1, 0
        %v2758 = vsel %vm2598, 1, 0
        %v2759 = vsel %vm2599, 1, 0
        %v2760 = vsel %vm2600, 1, 0
        %v2761 = vsel %vm2601, 1, 0
        %v2762 = vsel %vm2602, 1, 0
        %v2763 = vsel %vm2603, 1, 0
        %v2764 = vsel %vm2604, 1, 0
        %v2765 = vsel %vm2605, 1, 0
        %v2766 = vsel %vm2606, 1, 0
        %v2767 = vsel %vm2607, 1, 0
        %v2768 = vsel %vm2608, 1, 0
        %v2769 = vsel %vm2609, 1, 0
        %v2770 = vsel %vm2610, 1, 0
        %v2771 = vsel %vm2611, 1, 0
        %v2772 = vsel %vm2612, 1, 0
        %v2773 = vsel %vm2613, 1, 0
        %v2774 = vsel %vm2614, 1, 0
        %v2775 = vsel %vm2615, 1, 0
        %v2776 = vsel %vm2616, 1, 0
        %v2777 = vsel %vm2617, 1, 0
        %v2778 = vsel %vm2618, 1, 0
        %v2779 = vsel %vm2619, 1, 0
        %v2780 = vsel %vm2620, 1, 0
        %v2781 = vsel %vm2621, 1, 0
        %v2782 = vsel %vm2622, 1, 0
        %v2783 = vsel %vm2623, 1, 0
        %v2784 = vsel %vm2624, 1, 0
        %v2785 = vsel %vm2625, 1, 0
        %v2786 = vsel %vm2626, 1, 0
        %v2787 = vsel %vm2627, 1, 0
        %v2788 = vsel %vm2628, 1, 0
        %v2789 = vsel %vm2629, 1, 0
        %v2790 = vsel %vm2630, 1, 0
        %v2791 = vsel %vm2631, 1, 0
        %v2792 = vsel %vm2632, 1, 0
        %v2793 = vsel %vm2633, 1, 0
        %v2794 = vsel %vm2634, 1, 0
        %v2795 = vsel %vm2635, 1, 0
        %v2796 = vsel %vm2636, 1, 0
        %v2797 = vsel %vm2637, 1, 0
        %v2798 = vsel %vm2638, 1, 0
        %v2799 = vsel %vm2639, 1, 0
        %v2800 = vsel %vm2640, 1, 0
        %v2801 = vsel %vm2641, 1, 0
        %v2802 = vsel %vm2642, 1, 0
        %v2803 = vsel %vm2643, 1, 0
        %v2804 = vsel %vm2644, 1, 0
        %v2805 = vsel %vm2645, 1, 0
        %v2806 = vsel %vm2646, 1, 0
        %v2807 = vsel %vm2647, 1, 0
        %v2808 = vsel %vm2648, 1, 0
        %v2809 = vsel %vm2649, 1, 0
        %v2810 = vsel %vm2650, 1, 0
        %v2811 = vsel %vm2651, 1, 0
        %v2812 = vsel %vm2652, 1, 0
        %v2813 = vsel %vm2653, 1, 0
        %v2814 = vsel %vm2654, 1, 0
        %v2815 = vsel %vm2655, 1, 0
        %v2816 = vsel %vm2656, 1, 0
        %v2817 = vsel %vm2657, 1, 0
        %v2818 = vsel %vm2658, 1, 0
        %v2819 = vsel %vm2659, 1, 0
        %v2820 = vsel %vm2660, 1, 0
        %v2821 = vsel %vm2661, 1, 0
        %v2822 = vsel %vm2662, 1, 0
        %v2823 = vsel %vm2663, 1, 0
        %v2824 = vsel %vm2664, 1, 0
        %v2825 = vsel %vm2665, 1, 0
        %v2826 = vsel %vm2666, 1, 0
        %v2827 = vsel %vm2667, 1, 0
        %v2828 = vsel %vm2668, 1, 0
        %v2829 = vsel %vm2669, 1, 0
        %v2830 = vsel %vm2670, 1, 0
        %v2831 = vsel %vm2671, 1, 0
        %v2832 = vsel %vm2672, 1, 0
        %v2833 = vsel %vm2673, 1, 0
        %v2834 = vsel %vm2674, 1, 0
        %v2835 = vsel %vm2675, 1, 0
        %v2836 = vsel %vm2676, 1, 0
        %v2837 = vsel %vm2677, 1, 0
        %v2838 = vsel %vm2678, 1, 0
        %v2839 = vsel %vm2679, 1, 0
        %v2840 = vsel %vm2680, 1, 0
        %v2841 = vsel %vm2681, 1, 0
        %v2842 = vsel %vm2682, 1, 0
        %v2843 = vsel %vm2683, 1, 0
        %v2844 = vsel %vm2684, 1, 0
        %v2845 = vsel %vm2685, 1, 0
        %v2846 = vsel %vm2686, 1, 0
        %v2847 = vsel %vm2687, 1, 0
        %v2848 = vsel %vm2688, 1, 0
        %v2849 = vsel %vm2689, 1, 0
        %v2850 = vsel %vm2690, 1, 0
        %v2851 = vsel %vm2691, 1, 0
        %v2852 = vsel %vm2692, 1, 0
        %v2853 = vsel %vm2693, 1, 0
        %v2854 = vsel %vm2694, 1, 0
        %v2855 = vsel %vm2695, 1, 0
        %v2856 = vsel %vm2696, 1, 0
        %v2857 = vsel %vm2697, 1, 0
        %v2858 = vsel %vm2698, 1, 0
        %v2859 = vsel %vm2699, 1, 0
        %v2860 = vsel %vm2700, 1, 0
        %v2861 = vsel %vm2701, 1, 0
        %v2862 = vsel %vm2702, 1, 0
        %v2863 = vcvt.s32.f32 %v2703
        %v2864 = vcvt.s32.f32 %v2704
        %v2865 = vcvt.s32.f32 %v2705
        %v2866 = vcvt.s32.f32 %v2706
        %v2867 = vcvt.s32.f32 %v2707
        %v2868 = vcvt.s32.f32 %v2708
        %v2869 = vcvt.s32.f32 %v2709
        %v2870 = vcvt.s32.f32 %v2710
        %v2871 = vcvt.s32.f32 %v2711
        %v2872 = vcvt.s32.f32 %v2712
        %v2873 = vcvt.s32.f32 %v2713
        %v2874 = vcvt.s32.f32 %v2714
        %v2875 = vcvt.s32.f32 %v2715
        %v2876 = vcvt.s32.f32 %v2716
        %v2877 = vcvt.s32.f32 %v2717
        %v2878 = vcvt.s32.f32 %v2718
        %v2879 = vcvt.s32.f32 %v2719
        %v2880 = vcvt.s32.f32 %v2720
        %v2881 = vcvt.s32.f32 %v2721
        %v2882 = vcvt.s32.f32 %v2722
        %v2883 = vcvt.s32.f32 %v2723
        %v2884 = vcvt.s32.f32 %v2724
        %v2885 = vcvt.s32.f32 %v2725
        %v2886 = vcvt.s32.f32 %v2726
        %v2887 = vcvt.s32.f32 %v2727
        %v2888 = vcvt.s32.f32 %v2728
        %v2889 = vcvt.s32.f32 %v2729
        %v2890 = vcvt.s32.f32 %v2730
        %v2891 = vcvt.s32.f32 %v2731
        %v2892 = vcvt.s32.f32 %v2732
        %v2893 = vcvt.s32.f32 %v2733
        %v2894 = vcvt.s32.f32 %v2734
        %v2895 = vcvt.s32.f32 %v2735
        %v2896 = vcvt.s32.f32 %v2736
        %v2897 = vcvt.s32.f32 %v2737
        %v2898 = vcvt.s32.f32 %v2738
        %v2899 = vcvt.s32.f32 %v2739
        %v2900 = vcvt.s32.f32 %v2740
        %v2901 = vcvt.s32.f32 %v2741
        %v2902 = vcvt.s32.f32 %v2742
        %v2903 = vcvt.s32.f32 %v2743
        %v2904 = vcvt.s32.f32 %v2744
        %v2905 = vcvt.s32.f32 %v2745
        %v2906 = vcvt.s32.f32 %v2746
        %v2907 = vcvt.s32.f32 %v2747
        %v2908 = vcvt.s32.f32 %v2748
        %v2909 = vcvt.s32.f32 %v2749
        %v2910 = vcvt.s32.f32 %v2750
        %v2911 = vcvt.s32.f32 %v2751
        %v2912 = vcvt.s32.f32 %v2752
        %v2913 = vcvt.s32.f32 %v2753
        %v2914 = vcvt.s32.f32 %v2754
        %v2915 = vcvt.s32.f32 %v2755
        %v2916 = vcvt.s32.f32 %v2756
        %v2917 = vcvt.s32.f32 %v2757
        %v2918 = vcvt.s32.f32 %v2758
        %v2919 = vcvt.s32.f32 %v2759
        %v2920 = vcvt.s32.f32 %v2760
        %v2921 = vcvt.s32.f32 %v2761
        %v2922 = vcvt.s32.f32 %v2762
        %v2923 = vcvt.s32.f32 %v2763
        %v2924 = vcvt.s32.f32 %v2764
        %v2925 = vcvt.s32.f32 %v2765
        %v2926 = vcvt.s32.f32 %v2766
        %v2927 = vcvt.s32.f32 %v2767
        %v2928 = vcvt.s32.f32 %v2768
        %v2929 = vcvt.s32.f32 %v2769
        %v2930 = vcvt.s32.f32 %v2770
        %v2931 = vcvt.s32.f32 %v2771
        %v2932 = vcvt.s32.f32 %v2772
        %v2933 = vcvt.s32.f32 %v2773
        %v2934 = vcvt.s32.f32 %v2774
        %v2935 = vcvt.s32.f32 %v2775
        %v2936 = vcvt.s32.f32 %v2776
        %v2937 = vcvt.s32.f32 %v2777
        %v2938 = vcvt.s32.f32 %v2778
        %v2939 = vcvt.s32.f32 %v2779
        %v2940 = vcvt.s32.f32 %v2780
        %v2941 = vcvt.s32.f32 %v2781
        %v2942 = vcvt.s32.f32 %v2782
        %v2943 = vcvt.s32.f32 %v2783
        %v2944 = vcvt.s32.f32 %v2784
        %v2945 = vcvt.s32.f32 %v2785
        %v2946 = vcvt.s32.f32 %v2786
        %v2947 = vcvt.s32.f32 %v2787
        %v2948 = vcvt.s32.f32 %v2788
        %v2949 = vcvt.s32.f32 %v2789
        %v2950 = vcvt.s32.f32 %v2790
        %v2951 = vcvt.s32.f32 %v2791
        %v2952 = vcvt.s32.f32 %v2792
        %v2953 = vcvt.s32.f32 %v2793
        %v2954 = vcvt.s32.f32 %v2794
        %v2955 = vcvt.s32.f32 %v2795
        %v2956 = vcvt.s32.f32 %v2796
        %v2957 = vcvt.s32.f32 %v2797
        %v2958 = vcvt.s32.f32 %v2798
        %v2959 = vcvt.s32.f32 %v2799
        %v2960 = vcvt.s32.f32 %v2800
        %v2961 = vcvt.s32.f32 %v2801
        %v2962 = vcvt.s32.f32 %v2802
        %v2963 = vcvt.s32.f32 %v2803
        %v2964 = vcvt.s32.f32 %v2804
        %v2965 = vcvt.s32.f32 %v2805
        %v2966 = vcvt.s32.f32 %v2806
        %v2967 = vcvt.s32.f32 %v2807
        %v2968 = vcvt.s32.f32 %v2808
        %v2969 = vcvt.s32.f32 %v2809
        %v2970 = vcvt.s32.f32 %v2810
        %v2971 = vcvt.s32.f32 %v2811
        %v2972 = vcvt.s32.f32 %v2812
        %v2973 = vcvt.s32.f32 %v2813
        %v2974 = vcvt.s32.f32 %v2814
        %v2975 = vcvt.s32.f32 %v2815
        %v2976 = vcvt.s32.f32 %v2816
        %v2977 = vcvt.s32.f32 %v2817
        %v2978 = vcvt.s32.f32 %v2818
        %v2979 = vcvt.s32.f32 %v2819
        %v2980 = vcvt.s32.f32 %v2820
        %v2981 = vcvt.s32.f32 %v2821
        %v2982 = vcvt.s32.f32 %v2822
        %v2983 = vcvt.s32.f32 %v2823
        %v2984 = vcvt.s32.f32 %v2824
        %v2985 = vcvt.s32.f32 %v2825
        %v2986 = vcvt.s32.f32 %v2826
        %v2987 = vcvt.s32.f32 %v2827
        %v2988 = vcvt.s32.f32 %v2828
        %v2989 = vcvt.s32.f32 %v2829
        %v2990 = vcvt.s32.f32 %v2830
        %v2991 = vcvt.s32.f32 %v2831
        %v2992 = vcvt.s32.f32 %v2832
        %v2993 = vcvt.s32.f32 %v2833
        %v2994 = vcvt.s32.f32 %v2834
        %v2995 = vcvt.s32.f32 %v2835
        %v2996 = vcvt.s32.f32 %v2836
        %v2997 = vcvt.s32.f32 %v2837
        %v2998 = vcvt.s32.f32 %v2838
        %v2999 = vcvt.s32.f32 %v2839
        %v3000 = vcvt.s32.f32 %v2840
        %v3001 = vcvt.s32.f32 %v2841
        %v3002 = vcvt.s32.f32 %v2842
        %v3003 = vcvt.s32.f32 %v2843
        %v3004 = vcvt.s32.f32 %v2844
        %v3005 = vcvt.s32.f32 %v2845
        %v3006 = vcvt.s32.f32 %v2846
        %v3007 = vcvt.s32.f32 %v2847
        %v3008 = vcvt.s32.f32 %v2848
        %v3009 = vcvt.s32.f32 %v2849
        %v3010 = vcvt.s32.f32 %v2850
        %v3011 = vcvt.s32.f32 %v2851
        %v3012 = vcvt.s32.f32 %v2852
        %v3013 = vcvt.s32.f32 %v2853
        %v3014 = vcvt.s32.f32 %v2854
        %v3015 = vcvt.s32.f32 %v2855
        %v3016 = vcvt.s32.f32 %v2856
        %v3017 = vcvt.s32.f32 %v2857
        %v3018 = vcvt.s32.f32 %v2858
        %v3019 = vcvt.s32.f32 %v2859
        %v3020 = vcvt.s32.f32 %v2860
        %v3021 = vcvt.s32.f32 %v2861
        %v3022 = vcvt.s32.f32 %v2862
        %v3024 = vsel %vm397, %v416, 0
        %3026 = vmatprep.subr.mxu0 0.0
        %v3027 = vand.u32 %v621, 4294901760
        %3028 = vmatpush1.msra.mxu0 %v3027
        %3029 = vmatprep.subr.mxu0 0.0
        %v3030 = vand.u32 %v622, 4294901760
        %3031 = vmatpush1.msra.mxu0 %v3030
        %3032 = vmatprep.subr.mxu0 0.0
        %v3033 = vand.u32 %v623, 4294901760
        %3034 = vmatpush1.msra.mxu0 %v3033
        %3035 = vmatprep.subr.mxu0 0.0
        %v3036 = vand.u32 %v624, 4294901760
        %3037 = vmatpush1.msra.mxu0 %v3036
        %3038 = vmatprep.subr.mxu0 0.0
        %v3039 = vand.u32 %v625, 4294901760
        %3040 = vmatpush1.msra.mxu0 %v3039
        %3041 = vmatprep.subr.mxu0 0.0
        %v3042 = vand.u32 %v626, 4294901760
        %3043 = vmatpush1.msra.mxu0 %v3042
        %3044 = vmatprep.subr.mxu0 0.0
        %v3045 = vand.u32 %v627, 4294901760
        %3046 = vmatpush1.msra.mxu0 %v3045
        %3047 = vmatprep.subr.mxu0 0.0
        %v3048 = vand.u32 %v628, 4294901760
        %3049 = vmatpush1.msra.mxu0 %v3048
        %3050 = vmatprep.subr.mxu0 0.0
        %v3051 = vand.u32 %v629, 4294901760
        %3052 = vmatpush1.msra.mxu0 %v3051
        %3053 = vmatprep.subr.mxu0 0.0
        %v3054 = vand.u32 %v630, 4294901760
        %3055 = vmatpush1.msra.mxu0 %v3054
        %3056 = vmatprep.subr.mxu0 0.0
        %v3057 = vand.u32 %v631, 4294901760
        %3058 = vmatpush1.msra.mxu0 %v3057
        %3059 = vmatprep.subr.mxu0 0.0
        %v3060 = vand.u32 %v632, 4294901760
        %3061 = vmatpush1.msra.mxu0 %v3060
        %3062 = vmatprep.subr.mxu0 0.0
        %v3063 = vand.u32 %v633, 4294901760
        %3064 = vmatpush1.msra.mxu0 %v3063
        %3065 = vmatprep.subr.mxu0 0.0
        %v3066 = vand.u32 %v634, 4294901760
        %3067 = vmatpush1.msra.mxu0 %v3066
        %3068 = vmatprep.subr.mxu0 0.0
        %v3069 = vand.u32 %v635, 4294901760
        %3070 = vmatpush1.msra.mxu0 %v3069
        %3071 = vmatprep.subr.mxu0 0.0
        %v3072 = vand.u32 %v636, 4294901760
        %3073 = vmatpush1.msra.mxu0 %v3072
        %3074 = vmatprep.subr.mxu0 0.0
        %v3075 = vand.u32 %v637, 4294901760
        %3076 = vmatpush1.msra.mxu0 %v3075
        %3077 = vmatprep.subr.mxu0 0.0
        %v3078 = vand.u32 %v638, 4294901760
        %3079 = vmatpush1.msra.mxu0 %v3078
        %3080 = vmatprep.subr.mxu0 0.0
        %v3081 = vand.u32 %v639, 4294901760
        %3082 = vmatpush1.msra.mxu0 %v3081
        %3083 = vmatprep.subr.mxu0 0.0
        %v3084 = vand.u32 %v640, 4294901760
        %3085 = vmatpush1.msra.mxu0 %v3084
        %3086 = vmatprep.subr.mxu0 0.0
        %v3087 = vand.u32 %v641, 4294901760
        %3088 = vmatpush1.msra.mxu0 %v3087
        %3089 = vmatprep.subr.mxu0 0.0
        %v3090 = vand.u32 %v642, 4294901760
        %3091 = vmatpush1.msra.mxu0 %v3090
        %3092 = vmatprep.subr.mxu0 0.0
        %v3093 = vand.u32 %v643, 4294901760
        %3094 = vmatpush1.msra.mxu0 %v3093
        %3095 = vmatprep.subr.mxu0 0.0
        %v3096 = vand.u32 %v644, 4294901760
        %3097 = vmatpush1.msra.mxu0 %v3096
        %3098 = vmatprep.subr.mxu0 0.0
        %v3099 = vand.u32 %v645, 4294901760
        %3100 = vmatpush1.msra.mxu0 %v3099
        %3101 = vmatprep.subr.mxu0 0.0
        %v3102 = vand.u32 %v646, 4294901760
        %3103 = vmatpush1.msra.mxu0 %v3102
        %3104 = vmatprep.subr.mxu0 0.0
        %v3105 = vand.u32 %v647, 4294901760
        %3106 = vmatpush1.msra.mxu0 %v3105
        %3107 = vmatprep.subr.mxu0 0.0
        %v3108 = vand.u32 %v648, 4294901760
        %3109 = vmatpush1.msra.mxu0 %v3108
        %3110 = vmatprep.subr.mxu0 0.0
        %v3111 = vand.u32 %v649, 4294901760
        %3112 = vmatpush1.msra.mxu0 %v3111
        %3113 = vmatprep.subr.mxu0 0.0
        %v3114 = vand.u32 %v650, 4294901760
        %3115 = vmatpush1.msra.mxu0 %v3114
        %3116 = vmatprep.subr.mxu0 0.0
        %v3117 = vand.u32 %v651, 4294901760
        %3118 = vmatpush1.msra.mxu0 %v3117
        %3119 = vmatprep.subr.mxu0 0.0
        %v3120 = vand.u32 %v652, 4294901760
        %3121 = vmatpush1.msra.mxu0 %v3120
        %v3122 = vand.u32 %v405, 4294901760
        %v3123 = vsub.f32 %v405, %v3122
        %v3124 = vand.u32 %v3123, 4294901760
        %v3125 = vsub.f32 %v3123, %v3124
        %v3126 = vand.u32 %v3125, 4294901760
        %3127 = vmatprep.mubr.f32.mxu0 %v3126
        %v3128 = vand.u32 %v404, 4294901760
        %v3129 = vsub.f32 %v404, %v3128
        %v3130 = vand.u32 %v3129, 4294901760
        %v3131 = vsub.f32 %v3129, %v3130
        %v3132 = vand.u32 %v3131, 4294901760
        %3133 = vmatmul.mubr.f32.gmra.mrb[0].mxu0 %v3132
        %v3134 = vpop.f32.mrb[0].mxu0
        %v3135 = vadd.f32 0.0, %v3134
        %v3136 = vpop.f32.mrb[0].mxu0
        %3137 = vdwg.mxu0
        %3138 = vmatprep.subr.mxu0 0.0
        %v3139 = vand.u32 %v621, 4294901760
        %v3140 = vsub.f32 %v621, %v3139
        %v3141 = vand.u32 %v3140, 4294901760
        %v3142 = vsub.f32 %v3140, %v3141
        %v3143 = vand.u32 %v3142, 4294901760
        %3144 = vmatpush1.msra.mxu0 %v3143
        %3145 = vmatprep.subr.mxu0 0.0
        %v3146 = vand.u32 %v622, 4294901760
        %v3147 = vsub.f32 %v622, %v3146
        %v3148 = vand.u32 %v3147, 4294901760
        %v3149 = vsub.f32 %v3147, %v3148
        %v3150 = vand.u32 %v3149, 4294901760
        %3151 = vmatpush1.msra.mxu0 %v3150
        %3152 = vmatprep.subr.mxu0 0.0
        %v3153 = vand.u32 %v623, 4294901760
        %v3154 = vsub.f32 %v623, %v3153
        %v3155 = vand.u32 %v3154, 4294901760
        %v3156 = vsub.f32 %v3154, %v3155
        %v3157 = vand.u32 %v3156, 4294901760
        %3158 = vmatpush1.msra.mxu0 %v3157
        %3159 = vmatprep.subr.mxu0 0.0
        %v3160 = vand.u32 %v624, 4294901760
        %v3161 = vsub.f32 %v624, %v3160
        %v3162 = vand.u32 %v3161, 4294901760
        %v3163 = vsub.f32 %v3161, %v3162
        %v3164 = vand.u32 %v3163, 4294901760
        %3165 = vmatpush1.msra.mxu0 %v3164
        %3166 = vmatprep.subr.mxu0 0.0
        %v3167 = vand.u32 %v625, 4294901760
        %v3168 = vsub.f32 %v625, %v3167
        %v3169 = vand.u32 %v3168, 4294901760
        %v3170 = vsub.f32 %v3168, %v3169
        %v3171 = vand.u32 %v3170, 4294901760
        %3172 = vmatpush1.msra.mxu0 %v3171
        %3173 = vmatprep.subr.mxu0 0.0
        %v3174 = vand.u32 %v626, 4294901760
        %v3175 = vsub.f32 %v626, %v3174
        %v3176 = vand.u32 %v3175, 4294901760
        %v3177 = vsub.f32 %v3175, %v3176
        %v3178 = vand.u32 %v3177, 4294901760
        %3179 = vmatpush1.msra.mxu0 %v3178
        %3180 = vmatprep.subr.mxu0 0.0
        %v3181 = vand.u32 %v627, 4294901760
        %v3182 = vsub.f32 %v627, %v3181
        %v3183 = vand.u32 %v3182, 4294901760
        %v3184 = vsub.f32 %v3182, %v3183
        %v3185 = vand.u32 %v3184, 4294901760
        %3186 = vmatpush1.msra.mxu0 %v3185
        %3187 = vmatprep.subr.mxu0 0.0
        %v3188 = vand.u32 %v628, 4294901760
        %v3189 = vsub.f32 %v628, %v3188
        %v3190 = vand.u32 %v3189, 4294901760
        %v3191 = vsub.f32 %v3189, %v3190
        %v3192 = vand.u32 %v3191, 4294901760
        %3193 = vmatpush1.msra.mxu0 %v3192
        %3194 = vmatprep.subr.mxu0 0.0
        %v3195 = vand.u32 %v629, 4294901760
        %v3196 = vsub.f32 %v629, %v3195
        %v3197 = vand.u32 %v3196, 4294901760
        %v3198 = vsub.f32 %v3196, %v3197
        %v3199 = vand.u32 %v3198, 4294901760
        %3200 = vmatpush1.msra.mxu0 %v3199
        %3201 = vmatprep.subr.mxu0 0.0
        %v3202 = vand.u32 %v630, 4294901760
        %v3203 = vsub.f32 %v630, %v3202
        %v3204 = vand.u32 %v3203, 4294901760
        %v3205 = vsub.f32 %v3203, %v3204
        %v3206 = vand.u32 %v3205, 4294901760
        %3207 = vmatpush1.msra.mxu0 %v3206
        %3208 = vmatprep.subr.mxu0 0.0
        %v3209 = vand.u32 %v631, 4294901760
        %v3210 = vsub.f32 %v631, %v3209
        %v3211 = vand.u32 %v3210, 4294901760
        %v3212 = vsub.f32 %v3210, %v3211
        %v3213 = vand.u32 %v3212, 4294901760
        %3214 = vmatpush1.msra.mxu0 %v3213
        %3215 = vmatprep.subr.mxu0 0.0
        %v3216 = vand.u32 %v632, 4294901760
        %v3217 = vsub.f32 %v632, %v3216
        %v3218 = vand.u32 %v3217, 4294901760
        %v3219 = vsub.f32 %v3217, %v3218
        %v3220 = vand.u32 %v3219, 4294901760
        %3221 = vmatpush1.msra.mxu0 %v3220
        %3222 = vmatprep.subr.mxu0 0.0
        %v3223 = vand.u32 %v633, 4294901760
        %v3224 = vsub.f32 %v633, %v3223
        %v3225 = vand.u32 %v3224, 4294901760
        %v3226 = vsub.f32 %v3224, %v3225
        %v3227 = vand.u32 %v3226, 4294901760
        %3228 = vmatpush1.msra.mxu0 %v3227
        %3229 = vmatprep.subr.mxu0 0.0
        %v3230 = vand.u32 %v634, 4294901760
        %v3231 = vsub.f32 %v634, %v3230
        %v3232 = vand.u32 %v3231, 4294901760
        %v3233 = vsub.f32 %v3231, %v3232
        %v3234 = vand.u32 %v3233, 4294901760
        %3235 = vmatpush1.msra.mxu0 %v3234
        %3236 = vmatprep.subr.mxu0 0.0
        %v3237 = vand.u32 %v635, 4294901760
        %v3238 = vsub.f32 %v635, %v3237
        %v3239 = vand.u32 %v3238, 4294901760
        %v3240 = vsub.f32 %v3238, %v3239
        %v3241 = vand.u32 %v3240, 4294901760
        %3242 = vmatpush1.msra.mxu0 %v3241
        %3243 = vmatprep.subr.mxu0 0.0
        %v3244 = vand.u32 %v636, 4294901760
        %v3245 = vsub.f32 %v636, %v3244
        %v3246 = vand.u32 %v3245, 4294901760
        %v3247 = vsub.f32 %v3245, %v3246
        %v3248 = vand.u32 %v3247, 4294901760
        %3249 = vmatpush1.msra.mxu0 %v3248
        %3250 = vmatprep.subr.mxu0 0.0
        %v3251 = vand.u32 %v637, 4294901760
        %v3252 = vsub.f32 %v637, %v3251
        %v3253 = vand.u32 %v3252, 4294901760
        %v3254 = vsub.f32 %v3252, %v3253
        %v3255 = vand.u32 %v3254, 4294901760
        %3256 = vmatpush1.msra.mxu0 %v3255
        %3257 = vmatprep.subr.mxu0 0.0
        %v3258 = vand.u32 %v638, 4294901760
        %v3259 = vsub.f32 %v638, %v3258
        %v3260 = vand.u32 %v3259, 4294901760
        %v3261 = vsub.f32 %v3259, %v3260
        %v3262 = vand.u32 %v3261, 4294901760
        %3263 = vmatpush1.msra.mxu0 %v3262
        %3264 = vmatprep.subr.mxu0 0.0
        %v3265 = vand.u32 %v639, 4294901760
        %v3266 = vsub.f32 %v639, %v3265
        %v3267 = vand.u32 %v3266, 4294901760
        %v3268 = vsub.f32 %v3266, %v3267
        %v3269 = vand.u32 %v3268, 4294901760
        %3270 = vmatpush1.msra.mxu0 %v3269
        %3271 = vmatprep.subr.mxu0 0.0
        %v3272 = vand.u32 %v640, 4294901760
        %v3273 = vsub.f32 %v640, %v3272
        %v3274 = vand.u32 %v3273, 4294901760
        %v3275 = vsub.f32 %v3273, %v3274
        %v3276 = vand.u32 %v3275, 4294901760
        %3277 = vmatpush1.msra.mxu0 %v3276
        %3278 = vmatprep.subr.mxu0 0.0
        %v3279 = vand.u32 %v641, 4294901760
        %v3280 = vsub.f32 %v641, %v3279
        %v3281 = vand.u32 %v3280, 4294901760
        %v3282 = vsub.f32 %v3280, %v3281
        %v3283 = vand.u32 %v3282, 4294901760
        %3284 = vmatpush1.msra.mxu0 %v3283
        %3285 = vmatprep.subr.mxu0 0.0
        %v3286 = vand.u32 %v642, 4294901760
        %v3287 = vsub.f32 %v642, %v3286
        %v3288 = vand.u32 %v3287, 4294901760
        %v3289 = vsub.f32 %v3287, %v3288
        %v3290 = vand.u32 %v3289, 4294901760
        %3291 = vmatpush1.msra.mxu0 %v3290
        %3292 = vmatprep.subr.mxu0 0.0
        %v3293 = vand.u32 %v643, 4294901760
        %v3294 = vsub.f32 %v643, %v3293
        %v3295 = vand.u32 %v3294, 4294901760
        %v3296 = vsub.f32 %v3294, %v3295
        %v3297 = vand.u32 %v3296, 4294901760
        %3298 = vmatpush1.msra.mxu0 %v3297
        %3299 = vmatprep.subr.mxu0 0.0
        %v3300 = vand.u32 %v644, 4294901760
        %v3301 = vsub.f32 %v644, %v3300
        %v3302 = vand.u32 %v3301, 4294901760
        %v3303 = vsub.f32 %v3301, %v3302
        %v3304 = vand.u32 %v3303, 4294901760
        %3305 = vmatpush1.msra.mxu0 %v3304
        %3306 = vmatprep.subr.mxu0 0.0
        %v3307 = vand.u32 %v645, 4294901760
        %v3308 = vsub.f32 %v645, %v3307
        %v3309 = vand.u32 %v3308, 4294901760
        %v3310 = vsub.f32 %v3308, %v3309
        %v3311 = vand.u32 %v3310, 4294901760
        %3312 = vmatpush1.msra.mxu0 %v3311
        %3313 = vmatprep.subr.mxu0 0.0
        %v3314 = vand.u32 %v646, 4294901760
        %v3315 = vsub.f32 %v646, %v3314
        %v3316 = vand.u32 %v3315, 4294901760
        %v3317 = vsub.f32 %v3315, %v3316
        %v3318 = vand.u32 %v3317, 4294901760
        %3319 = vmatpush1.msra.mxu0 %v3318
        %3320 = vmatprep.subr.mxu0 0.0
        %v3321 = vand.u32 %v647, 4294901760
        %v3322 = vsub.f32 %v647, %v3321
        %v3323 = vand.u32 %v3322, 4294901760
        %v3324 = vsub.f32 %v3322, %v3323
        %v3325 = vand.u32 %v3324, 4294901760
        %3326 = vmatpush1.msra.mxu0 %v3325
        %3327 = vmatprep.subr.mxu0 0.0
        %v3328 = vand.u32 %v648, 4294901760
        %v3329 = vsub.f32 %v648, %v3328
        %v3330 = vand.u32 %v3329, 4294901760
        %v3331 = vsub.f32 %v3329, %v3330
        %v3332 = vand.u32 %v3331, 4294901760
        %3333 = vmatpush1.msra.mxu0 %v3332
        %3334 = vmatprep.subr.mxu0 0.0
        %v3335 = vand.u32 %v649, 4294901760
        %v3336 = vsub.f32 %v649, %v3335
        %v3337 = vand.u32 %v3336, 4294901760
        %v3338 = vsub.f32 %v3336, %v3337
        %v3339 = vand.u32 %v3338, 4294901760
        %3340 = vmatpush1.msra.mxu0 %v3339
        %3341 = vmatprep.subr.mxu0 0.0
        %v3342 = vand.u32 %v650, 4294901760
        %v3343 = vsub.f32 %v650, %v3342
        %v3344 = vand.u32 %v3343, 4294901760
        %v3345 = vsub.f32 %v3343, %v3344
        %v3346 = vand.u32 %v3345, 4294901760
        %3347 = vmatpush1.msra.mxu0 %v3346
        %3348 = vmatprep.subr.mxu0 0.0
        %v3349 = vand.u32 %v651, 4294901760
        %v3350 = vsub.f32 %v651, %v3349
        %v3351 = vand.u32 %v3350, 4294901760
        %v3352 = vsub.f32 %v3350, %v3351
        %v3353 = vand.u32 %v3352, 4294901760
        %3354 = vmatpush1.msra.mxu0 %v3353
        %3355 = vmatprep.subr.mxu0 0.0
        %v3356 = vand.u32 %v652, 4294901760
        %v3357 = vsub.f32 %v652, %v3356
        %v3358 = vand.u32 %v3357, 4294901760
        %v3359 = vsub.f32 %v3357, %v3358
        %v3360 = vand.u32 %v3359, 4294901760
        %3361 = vmatpush1.msra.mxu0 %v3360
        %v3362 = vand.u32 %v405, 4294901760
        %3363 = vmatprep.mubr.f32.mxu0 %v3362
        %v3364 = vand.u32 %v404, 4294901760
        %3365 = vmatmul.mubr.f32.gmra.mrb[0].mxu0 %v3364
        %v3366 = vpop.f32.mrb[0].mxu0
        %v3367 = vadd.f32 %v3135, %v3366
        %v3368 = vpop.f32.mrb[0].mxu0
        %3369 = vdwg.mxu0
        %3370 = vmatprep.subr.mxu0 0.0
        %v3371 = vand.u32 %v621, 4294901760
        %v3372 = vsub.f32 %v621, %v3371
        %3373 = vmatpush1.msra.mxu0 %v3372
        %3374 = vmatprep.subr.mxu0 0.0
        %v3375 = vand.u32 %v622, 4294901760
        %v3376 = vsub.f32 %v622, %v3375
        %3377 = vmatpush1.msra.mxu0 %v3376
        %3378 = vmatprep.subr.mxu0 0.0
        %v3379 = vand.u32 %v623, 4294901760
        %v3380 = vsub.f32 %v623, %v3379
        %3381 = vmatpush1.msra.mxu0 %v3380
        %3382 = vmatprep.subr.mxu0 0.0
        %v3383 = vand.u32 %v624, 4294901760
        %v3384 = vsub.f32 %v624, %v3383
        %3385 = vmatpush1.msra.mxu0 %v3384
        %3386 = vmatprep.subr.mxu0 0.0
        %v3387 = vand.u32 %v625, 4294901760
        %v3388 = vsub.f32 %v625, %v3387
        %3389 = vmatpush1.msra.mxu0 %v3388
        %3390 = vmatprep.subr.mxu0 0.0
        %v3391 = vand.u32 %v626, 4294901760
        %v3392 = vsub.f32 %v626, %v3391
        %3393 = vmatpush1.msra.mxu0 %v3392
        %3394 = vmatprep.subr.mxu0 0.0
        %v3395 = vand.u32 %v627, 4294901760
        %v3396 = vsub.f32 %v627, %v3395
        %3397 = vmatpush1.msra.mxu0 %v3396
        %3398 = vmatprep.subr.mxu0 0.0
        %v3399 = vand.u32 %v628, 4294901760
        %v3400 = vsub.f32 %v628, %v3399
        %3401 = vmatpush1.msra.mxu0 %v3400
        %3402 = vmatprep.subr.mxu0 0.0
        %v3403 = vand.u32 %v629, 4294901760
        %v3404 = vsub.f32 %v629, %v3403
        %3405 = vmatpush1.msra.mxu0 %v3404
        %3406 = vmatprep.subr.mxu0 0.0
        %v3407 = vand.u32 %v630, 4294901760
        %v3408 = vsub.f32 %v630, %v3407
        %3409 = vmatpush1.msra.mxu0 %v3408
        %3410 = vmatprep.subr.mxu0 0.0
        %v3411 = vand.u32 %v631, 4294901760
        %v3412 = vsub.f32 %v631, %v3411
        %3413 = vmatpush1.msra.mxu0 %v3412
        %3414 = vmatprep.subr.mxu0 0.0
        %v3415 = vand.u32 %v632, 4294901760
        %v3416 = vsub.f32 %v632, %v3415
        %3417 = vmatpush1.msra.mxu0 %v3416
        %3418 = vmatprep.subr.mxu0 0.0
        %v3419 = vand.u32 %v633, 4294901760
        %v3420 = vsub.f32 %v633, %v3419
        %3421 = vmatpush1.msra.mxu0 %v3420
        %3422 = vmatprep.subr.mxu0 0.0
        %v3423 = vand.u32 %v634, 4294901760
        %v3424 = vsub.f32 %v634, %v3423
        %3425 = vmatpush1.msra.mxu0 %v3424
        %3426 = vmatprep.subr.mxu0 0.0
        %v3427 = vand.u32 %v635, 4294901760
        %v3428 = vsub.f32 %v635, %v3427
        %3429 = vmatpush1.msra.mxu0 %v3428
        %3430 = vmatprep.subr.mxu0 0.0
        %v3431 = vand.u32 %v636, 4294901760
        %v3432 = vsub.f32 %v636, %v3431
        %3433 = vmatpush1.msra.mxu0 %v3432
        %3434 = vmatprep.subr.mxu0 0.0
        %v3435 = vand.u32 %v637, 4294901760
        %v3436 = vsub.f32 %v637, %v3435
        %3437 = vmatpush1.msra.mxu0 %v3436
        %3438 = vmatprep.subr.mxu0 0.0
        %v3439 = vand.u32 %v638, 4294901760
        %v3440 = vsub.f32 %v638, %v3439
        %3441 = vmatpush1.msra.mxu0 %v3440
        %3442 = vmatprep.subr.mxu0 0.0
        %v3443 = vand.u32 %v639, 4294901760
        %v3444 = vsub.f32 %v639, %v3443
        %3445 = vmatpush1.msra.mxu0 %v3444
        %3446 = vmatprep.subr.mxu0 0.0
        %v3447 = vand.u32 %v640, 4294901760
        %v3448 = vsub.f32 %v640, %v3447
        %3449 = vmatpush1.msra.mxu0 %v3448
        %3450 = vmatprep.subr.mxu0 0.0
        %v3451 = vand.u32 %v641, 4294901760
        %v3452 = vsub.f32 %v641, %v3451
        %3453 = vmatpush1.msra.mxu0 %v3452
        %3454 = vmatprep.subr.mxu0 0.0
        %v3455 = vand.u32 %v642, 4294901760
        %v3456 = vsub.f32 %v642, %v3455
        %3457 = vmatpush1.msra.mxu0 %v3456
        %3458 = vmatprep.subr.mxu0 0.0
        %v3459 = vand.u32 %v643, 4294901760
        %v3460 = vsub.f32 %v643, %v3459
        %3461 = vmatpush1.msra.mxu0 %v3460
        %3462 = vmatprep.subr.mxu0 0.0
        %v3463 = vand.u32 %v644, 4294901760
        %v3464 = vsub.f32 %v644, %v3463
        %3465 = vmatpush1.msra.mxu0 %v3464
        %3466 = vmatprep.subr.mxu0 0.0
        %v3467 = vand.u32 %v645, 4294901760
        %v3468 = vsub.f32 %v645, %v3467
        %3469 = vmatpush1.msra.mxu0 %v3468
        %3470 = vmatprep.subr.mxu0 0.0
        %v3471 = vand.u32 %v646, 4294901760
        %v3472 = vsub.f32 %v646, %v3471
        %3473 = vmatpush1.msra.mxu0 %v3472
        %3474 = vmatprep.subr.mxu0 0.0
        %v3475 = vand.u32 %v647, 4294901760
        %v3476 = vsub.f32 %v647, %v3475
        %3477 = vmatpush1.msra.mxu0 %v3476
        %3478 = vmatprep.subr.mxu0 0.0
        %v3479 = vand.u32 %v648, 4294901760
        %v3480 = vsub.f32 %v648, %v3479
        %3481 = vmatpush1.msra.mxu0 %v3480
        %3482 = vmatprep.subr.mxu0 0.0
        %v3483 = vand.u32 %v649, 4294901760
        %v3484 = vsub.f32 %v649, %v3483
        %3485 = vmatpush1.msra.mxu0 %v3484
        %3486 = vmatprep.subr.mxu0 0.0
        %v3487 = vand.u32 %v650, 4294901760
        %v3488 = vsub.f32 %v650, %v3487
        %3489 = vmatpush1.msra.mxu0 %v3488
        %3490 = vmatprep.subr.mxu0 0.0
        %v3491 = vand.u32 %v651, 4294901760
        %v3492 = vsub.f32 %v651, %v3491
        %3493 = vmatpush1.msra.mxu0 %v3492
        %3494 = vmatprep.subr.mxu0 0.0
        %v3495 = vand.u32 %v652, 4294901760
        %v3496 = vsub.f32 %v652, %v3495
        %3497 = vmatpush1.msra.mxu0 %v3496
        %v3498 = vand.u32 %v405, 4294901760
        %v3499 = vsub.f32 %v405, %v3498
        %3500 = vmatprep.mubr.f32.mxu0 %v3499
        %v3501 = vand.u32 %v404, 4294901760
        %v3502 = vsub.f32 %v404, %v3501
        %3503 = vmatmul.mubr.f32.gmra.mrb[0].mxu0 %v3502
        %v3504 = vpop.f32.mrb[0].mxu0
        %v3505 = vadd.f32 %v3367, %v3504
        %v3506 = vpop.f32.mrb[0].mxu0
        %3507 = vdwg.mxu0
        %3508 = vmatprep.subr.mxu0 0.0
        %v3509 = vand.u32 %v621, 4294901760
        %3510 = vmatpush1.msra.mxu0 %v3509
        %3511 = vmatprep.subr.mxu0 0.0
        %v3512 = vand.u32 %v622, 4294901760
        %3513 = vmatpush1.msra.mxu0 %v3512
        %3514 = vmatprep.subr.mxu0 0.0
        %v3515 = vand.u32 %v623, 4294901760
        %3516 = vmatpush1.msra.mxu0 %v3515
        %3517 = vmatprep.subr.mxu0 0.0
        %v3518 = vand.u32 %v624, 4294901760
        %3519 = vmatpush1.msra.mxu0 %v3518
        %3520 = vmatprep.subr.mxu0 0.0
        %v3521 = vand.u32 %v625, 4294901760
        %3522 = vmatpush1.msra.mxu0 %v3521
        %3523 = vmatprep.subr.mxu0 0.0
        %v3524 = vand.u32 %v626, 4294901760
        %3525 = vmatpush1.msra.mxu0 %v3524
        %3526 = vmatprep.subr.mxu0 0.0
        %v3527 = vand.u32 %v627, 4294901760
        %3528 = vmatpush1.msra.mxu0 %v3527
        %3529 = vmatprep.subr.mxu0 0.0
        %v3530 = vand.u32 %v628, 4294901760
        %3531 = vmatpush1.msra.mxu0 %v3530
        %3532 = vmatprep.subr.mxu0 0.0
        %v3533 = vand.u32 %v629, 4294901760
        %3534 = vmatpush1.msra.mxu0 %v3533
        %3535 = vmatprep.subr.mxu0 0.0
        %v3536 = vand.u32 %v630, 4294901760
        %3537 = vmatpush1.msra.mxu0 %v3536
        %3538 = vmatprep.subr.mxu0 0.0
        %v3539 = vand.u32 %v631, 4294901760
        %3540 = vmatpush1.msra.mxu0 %v3539
        %3541 = vmatprep.subr.mxu0 0.0
        %v3542 = vand.u32 %v632, 4294901760
        %3543 = vmatpush1.msra.mxu0 %v3542
        %3544 = vmatprep.subr.mxu0 0.0
        %v3545 = vand.u32 %v633, 4294901760
        %3546 = vmatpush1.msra.mxu0 %v3545
        %3547 = vmatprep.subr.mxu0 0.0
        %v3548 = vand.u32 %v634, 4294901760
        %3549 = vmatpush1.msra.mxu0 %v3548
        %3550 = vmatprep.subr.mxu0 0.0
        %v3551 = vand.u32 %v635, 4294901760
        %3552 = vmatpush1.msra.mxu0 %v3551
        %3553 = vmatprep.subr.mxu0 0.0
        %v3554 = vand.u32 %v636, 4294901760
        %3555 = vmatpush1.msra.mxu0 %v3554
        %3556 = vmatprep.subr.mxu0 0.0
        %v3557 = vand.u32 %v637, 4294901760
        %3558 = vmatpush1.msra.mxu0 %v3557
        %3559 = vmatprep.subr.mxu0 0.0
        %v3560 = vand.u32 %v638, 4294901760
        %3561 = vmatpush1.msra.mxu0 %v3560
        %3562 = vmatprep.subr.mxu0 0.0
        %v3563 = vand.u32 %v639, 4294901760
        %3564 = vmatpush1.msra.mxu0 %v3563
        %3565 = vmatprep.subr.mxu0 0.0
        %v3566 = vand.u32 %v640, 4294901760
        %3567 = vmatpush1.msra.mxu0 %v3566
        %3568 = vmatprep.subr.mxu0 0.0
        %v3569 = vand.u32 %v641, 4294901760
        %3570 = vmatpush1.msra.mxu0 %v3569
        %3571 = vmatprep.subr.mxu0 0.0
        %v3572 = vand.u32 %v642, 4294901760
        %3573 = vmatpush1.msra.mxu0 %v3572
        %3574 = vmatprep.subr.mxu0 0.0
        %v3575 = vand.u32 %v643, 4294901760
        %3576 = vmatpush1.msra.mxu0 %v3575
        %3577 = vmatprep.subr.mxu0 0.0
        %v3578 = vand.u32 %v644, 4294901760
        %3579 = vmatpush1.msra.mxu0 %v3578
        %3580 = vmatprep.subr.mxu0 0.0
        %v3581 = vand.u32 %v645, 4294901760
        %3582 = vmatpush1.msra.mxu0 %v3581
        %3583 = vmatprep.subr.mxu0 0.0
        %v3584 = vand.u32 %v646, 4294901760
        %3585 = vmatpush1.msra.mxu0 %v3584
        %3586 = vmatprep.subr.mxu0 0.0
        %v3587 = vand.u32 %v647, 4294901760
        %3588 = vmatpush1.msra.mxu0 %v3587
        %3589 = vmatprep.subr.mxu0 0.0
        %v3590 = vand.u32 %v648, 4294901760
        %3591 = vmatpush1.msra.mxu0 %v3590
        %3592 = vmatprep.subr.mxu0 0.0
        %v3593 = vand.u32 %v649, 4294901760
        %3594 = vmatpush1.msra.mxu0 %v3593
        %3595 = vmatprep.subr.mxu0 0.0
        %v3596 = vand.u32 %v650, 4294901760
        %3597 = vmatpush1.msra.mxu0 %v3596
        %3598 = vmatprep.subr.mxu0 0.0
        %v3599 = vand.u32 %v651, 4294901760
        %3600 = vmatpush1.msra.mxu0 %v3599
        %3601 = vmatprep.subr.mxu0 0.0
        %v3602 = vand.u32 %v652, 4294901760
        %3603 = vmatpush1.msra.mxu0 %v3602
        %v3604 = vand.u32 %v405, 4294901760
        %v3605 = vsub.f32 %v405, %v3604
        %v3606 = vand.u32 %v3605, 4294901760
        %3607 = vmatprep.mubr.f32.mxu0 %v3606
        %v3608 = vand.u32 %v404, 4294901760
        %v3609 = vsub.f32 %v404, %v3608
        %v3610 = vand.u32 %v3609, 4294901760
        %3611 = vmatmul.mubr.f32.gmra.mrb[0].mxu0 %v3610
        %v3612 = vpop.f32.mrb[0].mxu0
        %v3613 = vadd.f32 %v3505, %v3612
        %v3614 = vpop.f32.mrb[0].mxu0
        %3615 = vdwg.mxu0
        %3616 = vmatprep.subr.mxu0 0.0
        %v3617 = vand.u32 %v621, 4294901760
        %v3618 = vsub.f32 %v621, %v3617
        %v3619 = vand.u32 %v3618, 4294901760
        %3620 = vmatpush1.msra.mxu0 %v3619
        %3621 = vmatprep.subr.mxu0 0.0
        %v3622 = vand.u32 %v622, 4294901760
        %v3623 = vsub.f32 %v622, %v3622
        %v3624 = vand.u32 %v3623, 4294901760
        %3625 = vmatpush1.msra.mxu0 %v3624
        %3626 = vmatprep.subr.mxu0 0.0
        %v3627 = vand.u32 %v623, 4294901760
        %v3628 = vsub.f32 %v623, %v3627
        %v3629 = vand.u32 %v3628, 4294901760
        %3630 = vmatpush1.msra.mxu0 %v3629
        %3631 = vmatprep.subr.mxu0 0.0
        %v3632 = vand.u32 %v624, 4294901760
        %v3633 = vsub.f32 %v624, %v3632
        %v3634 = vand.u32 %v3633, 4294901760
        %3635 = vmatpush1.msra.mxu0 %v3634
        %3636 = vmatprep.subr.mxu0 0.0
        %v3637 = vand.u32 %v625, 4294901760
        %v3638 = vsub.f32 %v625, %v3637
        %v3639 = vand.u32 %v3638, 4294901760
        %3640 = vmatpush1.msra.mxu0 %v3639
        %3641 = vmatprep.subr.mxu0 0.0
        %v3642 = vand.u32 %v626, 4294901760
        %v3643 = vsub.f32 %v626, %v3642
        %v3644 = vand.u32 %v3643, 4294901760
        %3645 = vmatpush1.msra.mxu0 %v3644
        %3646 = vmatprep.subr.mxu0 0.0
        %v3647 = vand.u32 %v627, 4294901760
        %v3648 = vsub.f32 %v627, %v3647
        %v3649 = vand.u32 %v3648, 4294901760
        %3650 = vmatpush1.msra.mxu0 %v3649
        %3651 = vmatprep.subr.mxu0 0.0
        %v3652 = vand.u32 %v628, 4294901760
        %v3653 = vsub.f32 %v628, %v3652
        %v3654 = vand.u32 %v3653, 4294901760
        %3655 = vmatpush1.msra.mxu0 %v3654
        %3656 = vmatprep.subr.mxu0 0.0
        %v3657 = vand.u32 %v629, 4294901760
        %v3658 = vsub.f32 %v629, %v3657
        %v3659 = vand.u32 %v3658, 4294901760
        %3660 = vmatpush1.msra.mxu0 %v3659
        %3661 = vmatprep.subr.mxu0 0.0
        %v3662 = vand.u32 %v630, 4294901760
        %v3663 = vsub.f32 %v630, %v3662
        %v3664 = vand.u32 %v3663, 4294901760
        %3665 = vmatpush1.msra.mxu0 %v3664
        %3666 = vmatprep.subr.mxu0 0.0
        %v3667 = vand.u32 %v631, 4294901760
        %v3668 = vsub.f32 %v631, %v3667
        %v3669 = vand.u32 %v3668, 4294901760
        %3670 = vmatpush1.msra.mxu0 %v3669
        %3671 = vmatprep.subr.mxu0 0.0
        %v3672 = vand.u32 %v632, 4294901760
        %v3673 = vsub.f32 %v632, %v3672
        %v3674 = vand.u32 %v3673, 4294901760
        %3675 = vmatpush1.msra.mxu0 %v3674
        %3676 = vmatprep.subr.mxu0 0.0
        %v3677 = vand.u32 %v633, 4294901760
        %v3678 = vsub.f32 %v633, %v3677
        %v3679 = vand.u32 %v3678, 4294901760
        %3680 = vmatpush1.msra.mxu0 %v3679
        %3681 = vmatprep.subr.mxu0 0.0
        %v3682 = vand.u32 %v634, 4294901760
        %v3683 = vsub.f32 %v634, %v3682
        %v3684 = vand.u32 %v3683, 4294901760
        %3685 = vmatpush1.msra.mxu0 %v3684
        %3686 = vmatprep.subr.mxu0 0.0
        %v3687 = vand.u32 %v635, 4294901760
        %v3688 = vsub.f32 %v635, %v3687
        %v3689 = vand.u32 %v3688, 4294901760
        %3690 = vmatpush1.msra.mxu0 %v3689
        %3691 = vmatprep.subr.mxu0 0.0
        %v3692 = vand.u32 %v636, 4294901760
        %v3693 = vsub.f32 %v636, %v3692
        %v3694 = vand.u32 %v3693, 4294901760
        %3695 = vmatpush1.msra.mxu0 %v3694
        %3696 = vmatprep.subr.mxu0 0.0
        %v3697 = vand.u32 %v637, 4294901760
        %v3698 = vsub.f32 %v637, %v3697
        %v3699 = vand.u32 %v3698, 4294901760
        %3700 = vmatpush1.msra.mxu0 %v3699
        %3701 = vmatprep.subr.mxu0 0.0
        %v3702 = vand.u32 %v638, 4294901760
        %v3703 = vsub.f32 %v638, %v3702
        %v3704 = vand.u32 %v3703, 4294901760
        %3705 = vmatpush1.msra.mxu0 %v3704
        %3706 = vmatprep.subr.mxu0 0.0
        %v3707 = vand.u32 %v639, 4294901760
        %v3708 = vsub.f32 %v639, %v3707
        %v3709 = vand.u32 %v3708, 4294901760
        %3710 = vmatpush1.msra.mxu0 %v3709
        %3711 = vmatprep.subr.mxu0 0.0
        %v3712 = vand.u32 %v640, 4294901760
        %v3713 = vsub.f32 %v640, %v3712
        %v3714 = vand.u32 %v3713, 4294901760
        %3715 = vmatpush1.msra.mxu0 %v3714
        %3716 = vmatprep.subr.mxu0 0.0
        %v3717 = vand.u32 %v641, 4294901760
        %v3718 = vsub.f32 %v641, %v3717
        %v3719 = vand.u32 %v3718, 4294901760
        %3720 = vmatpush1.msra.mxu0 %v3719
        %3721 = vmatprep.subr.mxu0 0.0
        %v3722 = vand.u32 %v642, 4294901760
        %v3723 = vsub.f32 %v642, %v3722
        %v3724 = vand.u32 %v3723, 4294901760
        %3725 = vmatpush1.msra.mxu0 %v3724
        %3726 = vmatprep.subr.mxu0 0.0
        %v3727 = vand.u32 %v643, 4294901760
        %v3728 = vsub.f32 %v643, %v3727
        %v3729 = vand.u32 %v3728, 4294901760
        %3730 = vmatpush1.msra.mxu0 %v3729
        %3731 = vmatprep.subr.mxu0 0.0
        %v3732 = vand.u32 %v644, 4294901760
        %v3733 = vsub.f32 %v644, %v3732
        %v3734 = vand.u32 %v3733, 4294901760
        %3735 = vmatpush1.msra.mxu0 %v3734
        %3736 = vmatprep.subr.mxu0 0.0
        %v3737 = vand.u32 %v645, 4294901760
        %v3738 = vsub.f32 %v645, %v3737
        %v3739 = vand.u32 %v3738, 4294901760
        %3740 = vmatpush1.msra.mxu0 %v3739
        %3741 = vmatprep.subr.mxu0 0.0
        %v3742 = vand.u32 %v646, 4294901760
        %v3743 = vsub.f32 %v646, %v3742
        %v3744 = vand.u32 %v3743, 4294901760
        %3745 = vmatpush1.msra.mxu0 %v3744
        %3746 = vmatprep.subr.mxu0 0.0
        %v3747 = vand.u32 %v647, 4294901760
        %v3748 = vsub.f32 %v647, %v3747
        %v3749 = vand.u32 %v3748, 4294901760
        %3750 = vmatpush1.msra.mxu0 %v3749
        %3751 = vmatprep.subr.mxu0 0.0
        %v3752 = vand.u32 %v648, 4294901760
        %v3753 = vsub.f32 %v648, %v3752
        %v3754 = vand.u32 %v3753, 4294901760
        %3755 = vmatpush1.msra.mxu0 %v3754
        %3756 = vmatprep.subr.mxu0 0.0
        %v3757 = vand.u32 %v649, 4294901760
        %v3758 = vsub.f32 %v649, %v3757
        %v3759 = vand.u32 %v3758, 4294901760
        %3760 = vmatpush1.msra.mxu0 %v3759
        %3761 = vmatprep.subr.mxu0 0.0
        %v3762 = vand.u32 %v650, 4294901760
        %v3763 = vsub.f32 %v650, %v3762
        %v3764 = vand.u32 %v3763, 4294901760
        %3765 = vmatpush1.msra.mxu0 %v3764
        %3766 = vmatprep.subr.mxu0 0.0
        %v3767 = vand.u32 %v651, 4294901760
        %v3768 = vsub.f32 %v651, %v3767
        %v3769 = vand.u32 %v3768, 4294901760
        %3770 = vmatpush1.msra.mxu0 %v3769
        %3771 = vmatprep.subr.mxu0 0.0
        %v3772 = vand.u32 %v652, 4294901760
        %v3773 = vsub.f32 %v652, %v3772
        %v3774 = vand.u32 %v3773, 4294901760
        %3775 = vmatpush1.msra.mxu0 %v3774
        %v3776 = vand.u32 %v405, 4294901760
        %3777 = vmatprep.mubr.f32.mxu0 %v3776
        %v3778 = vand.u32 %v404, 4294901760
        %3779 = vmatmul.mubr.f32.gmra.mrb[0].mxu0 %v3778
        %v3780 = vpop.f32.mrb[0].mxu0
        %v3781 = vadd.f32 %v3613, %v3780
        %v3782 = vpop.f32.mrb[0].mxu0
        %3783 = vdwg.mxu0
        %3784 = vmatprep.subr.mxu0 0.0
        %v3785 = vand.u32 %v621, 4294901760
        %3786 = vmatpush1.msra.mxu0 %v3785
        %3787 = vmatprep.subr.mxu0 0.0
        %v3788 = vand.u32 %v622, 4294901760
        %3789 = vmatpush1.msra.mxu0 %v3788
        %3790 = vmatprep.subr.mxu0 0.0
        %v3791 = vand.u32 %v623, 4294901760
        %3792 = vmatpush1.msra.mxu0 %v3791
        %3793 = vmatprep.subr.mxu0 0.0
        %v3794 = vand.u32 %v624, 4294901760
        %3795 = vmatpush1.msra.mxu0 %v3794
        %3796 = vmatprep.subr.mxu0 0.0
        %v3797 = vand.u32 %v625, 4294901760
        %3798 = vmatpush1.msra.mxu0 %v3797
        %3799 = vmatprep.subr.mxu0 0.0
        %v3800 = vand.u32 %v626, 4294901760
        %3801 = vmatpush1.msra.mxu0 %v3800
        %3802 = vmatprep.subr.mxu0 0.0
        %v3803 = vand.u32 %v627, 4294901760
        %3804 = vmatpush1.msra.mxu0 %v3803
        %3805 = vmatprep.subr.mxu0 0.0
        %v3806 = vand.u32 %v628, 4294901760
        %3807 = vmatpush1.msra.mxu0 %v3806
        %3808 = vmatprep.subr.mxu0 0.0
        %v3809 = vand.u32 %v629, 4294901760
        %3810 = vmatpush1.msra.mxu0 %v3809
        %3811 = vmatprep.subr.mxu0 0.0
        %v3812 = vand.u32 %v630, 4294901760
        %3813 = vmatpush1.msra.mxu0 %v3812
        %3814 = vmatprep.subr.mxu0 0.0
        %v3815 = vand.u32 %v631, 4294901760
        %3816 = vmatpush1.msra.mxu0 %v3815
        %3817 = vmatprep.subr.mxu0 0.0
        %v3818 = vand.u32 %v632, 4294901760
        %3819 = vmatpush1.msra.mxu0 %v3818
        %3820 = vmatprep.subr.mxu0 0.0
        %v3821 = vand.u32 %v633, 4294901760
        %3822 = vmatpush1.msra.mxu0 %v3821
        %3823 = vmatprep.subr.mxu0 0.0
        %v3824 = vand.u32 %v634, 4294901760
        %3825 = vmatpush1.msra.mxu0 %v3824
        %3826 = vmatprep.subr.mxu0 0.0
        %v3827 = vand.u32 %v635, 4294901760
        %3828 = vmatpush1.msra.mxu0 %v3827
        %3829 = vmatprep.subr.mxu0 0.0
        %v3830 = vand.u32 %v636, 4294901760
        %3831 = vmatpush1.msra.mxu0 %v3830
        %3832 = vmatprep.subr.mxu0 0.0
        %v3833 = vand.u32 %v637, 4294901760
        %3834 = vmatpush1.msra.mxu0 %v3833
        %3835 = vmatprep.subr.mxu0 0.0
        %v3836 = vand.u32 %v638, 4294901760
        %3837 = vmatpush1.msra.mxu0 %v3836
        %3838 = vmatprep.subr.mxu0 0.0
        %v3839 = vand.u32 %v639, 4294901760
        %3840 = vmatpush1.msra.mxu0 %v3839
        %3841 = vmatprep.subr.mxu0 0.0
        %v3842 = vand.u32 %v640, 4294901760
        %3843 = vmatpush1.msra.mxu0 %v3842
        %3844 = vmatprep.subr.mxu0 0.0
        %v3845 = vand.u32 %v641, 4294901760
        %3846 = vmatpush1.msra.mxu0 %v3845
        %3847 = vmatprep.subr.mxu0 0.0
        %v3848 = vand.u32 %v642, 4294901760
        %3849 = vmatpush1.msra.mxu0 %v3848
        %3850 = vmatprep.subr.mxu0 0.0
        %v3851 = vand.u32 %v643, 4294901760
        %3852 = vmatpush1.msra.mxu0 %v3851
        %3853 = vmatprep.subr.mxu0 0.0
        %v3854 = vand.u32 %v644, 4294901760
        %3855 = vmatpush1.msra.mxu0 %v3854
        %3856 = vmatprep.subr.mxu0 0.0
        %v3857 = vand.u32 %v645, 4294901760
        %3858 = vmatpush1.msra.mxu0 %v3857
        %3859 = vmatprep.subr.mxu0 0.0
        %v3860 = vand.u32 %v646, 4294901760
        %3861 = vmatpush1.msra.mxu0 %v3860
        %3862 = vmatprep.subr.mxu0 0.0
        %v3863 = vand.u32 %v647, 4294901760
        %3864 = vmatpush1.msra.mxu0 %v3863
        %3865 = vmatprep.subr.mxu0 0.0
        %v3866 = vand.u32 %v648, 4294901760
        %3867 = vmatpush1.msra.mxu0 %v3866
        %3868 = vmatprep.subr.mxu0 0.0
        %v3869 = vand.u32 %v649, 4294901760
        %3870 = vmatpush1.msra.mxu0 %v3869
        %3871 = vmatprep.subr.mxu0 0.0
        %v3872 = vand.u32 %v650, 4294901760
        %3873 = vmatpush1.msra.mxu0 %v3872
        %3874 = vmatprep.subr.mxu0 0.0
        %v3875 = vand.u32 %v651, 4294901760
        %3876 = vmatpush1.msra.mxu0 %v3875
        %3877 = vmatprep.subr.mxu0 0.0
        %v3878 = vand.u32 %v652, 4294901760
        %3879 = vmatpush1.msra.mxu0 %v3878
        %v3880 = vand.u32 %v405, 4294901760
        %3881 = vmatprep.mubr.f32.mxu0 %v3880
        %v3882 = vand.u32 %v404, 4294901760
        %3883 = vmatmul.mubr.f32.gmra.mrb[0].mxu0 %v3882
        %v3884 = vpop.f32.mrb[0].mxu0
        %v3885 = vadd.f32 %v3781, %v3884
        %v3886 = vpop.f32.mrb[0].mxu0
        %3887 = vdwg.mxu0
        %3888 = vmatprep.subr.mxu0 0.0
        %v3889 = vand.u32 %v653, 4294901760
        %3890 = vmatpush1.msra.mxu0 %v3889
        %3891 = vmatprep.subr.mxu0 0.0
        %v3892 = vand.u32 %v654, 4294901760
        %3893 = vmatpush1.msra.mxu0 %v3892
        %3894 = vmatprep.subr.mxu0 0.0
        %v3895 = vand.u32 %v655, 4294901760
        %3896 = vmatpush1.msra.mxu0 %v3895
        %3897 = vmatprep.subr.mxu0 0.0
        %v3898 = vand.u32 %v656, 4294901760
        %3899 = vmatpush1.msra.mxu0 %v3898
        %3900 = vmatprep.subr.mxu0 0.0
        %v3901 = vand.u32 %v657, 4294901760
        %3902 = vmatpush1.msra.mxu0 %v3901
        %3903 = vmatprep.subr.mxu0 0.0
        %v3904 = vand.u32 %v658, 4294901760
        %3905 = vmatpush1.msra.mxu0 %v3904
        %3906 = vmatprep.subr.mxu0 0.0
        %v3907 = vand.u32 %v659, 4294901760
        %3908 = vmatpush1.msra.mxu0 %v3907
        %3909 = vmatprep.subr.mxu0 0.0
        %v3910 = vand.u32 %v660, 4294901760
        %3911 = vmatpush1.msra.mxu0 %v3910
        %3912 = vmatprep.subr.mxu0 0.0
        %v3913 = vand.u32 %v2863, 4294901760
        %3914 = vmatpush1.msra.mxu0 %v3913
        %3915 = vmatprep.subr.mxu0 0.0
        %v3916 = vand.u32 %v2864, 4294901760
        %3917 = vmatpush1.msra.mxu0 %v3916
        %3918 = vmatprep.subr.mxu0 0.0
        %v3919 = vand.u32 %v2865, 4294901760
        %3920 = vmatpush1.msra.mxu0 %v3919
        %3921 = vmatprep.subr.mxu0 0.0
        %v3922 = vand.u32 %v2866, 4294901760
        %3923 = vmatpush1.msra.mxu0 %v3922
        %3924 = vmatprep.subr.mxu0 0.0
        %v3925 = vand.u32 %v2867, 4294901760
        %3926 = vmatpush1.msra.mxu0 %v3925
        %3927 = vmatprep.subr.mxu0 0.0
        %v3928 = vand.u32 %v2868, 4294901760
        %3929 = vmatpush1.msra.mxu0 %v3928
        %3930 = vmatprep.subr.mxu0 0.0
        %v3931 = vand.u32 %v2869, 4294901760
        %3932 = vmatpush1.msra.mxu0 %v3931
        %3933 = vmatprep.subr.mxu0 0.0
        %v3934 = vand.u32 %v2870, 4294901760
        %3935 = vmatpush1.msra.mxu0 %v3934
        %3936 = vmatprep.subr.mxu0 0.0
        %v3937 = vand.u32 %v2871, 4294901760
        %3938 = vmatpush1.msra.mxu0 %v3937
        %3939 = vmatprep.subr.mxu0 0.0
        %v3940 = vand.u32 %v2872, 4294901760
        %3941 = vmatpush1.msra.mxu0 %v3940
        %3942 = vmatprep.subr.mxu0 0.0
        %v3943 = vand.u32 %v2873, 4294901760
        %3944 = vmatpush1.msra.mxu0 %v3943
        %3945 = vmatprep.subr.mxu0 0.0
        %v3946 = vand.u32 %v2874, 4294901760
        %3947 = vmatpush1.msra.mxu0 %v3946
        %3948 = vmatprep.subr.mxu0 0.0
        %v3949 = vand.u32 %v2875, 4294901760
        %3950 = vmatpush1.msra.mxu0 %v3949
        %3951 = vmatprep.subr.mxu0 0.0
        %v3952 = vand.u32 %v2876, 4294901760
        %3953 = vmatpush1.msra.mxu0 %v3952
        %3954 = vmatprep.subr.mxu0 0.0
        %v3955 = vand.u32 %v2877, 4294901760
        %3956 = vmatpush1.msra.mxu0 %v3955
        %3957 = vmatprep.subr.mxu0 0.0
        %v3958 = vand.u32 %v2878, 4294901760
        %3959 = vmatpush1.msra.mxu0 %v3958
        %3960 = vmatprep.subr.mxu0 0.0
        %v3961 = vand.u32 %v2879, 4294901760
        %3962 = vmatpush1.msra.mxu0 %v3961
        %3963 = vmatprep.subr.mxu0 0.0
        %v3964 = vand.u32 %v2880, 4294901760
        %3965 = vmatpush1.msra.mxu0 %v3964
        %3966 = vmatprep.subr.mxu0 0.0
        %v3967 = vand.u32 %v2881, 4294901760
        %3968 = vmatpush1.msra.mxu0 %v3967
        %3969 = vmatprep.subr.mxu0 0.0
        %v3970 = vand.u32 %v2882, 4294901760
        %3971 = vmatpush1.msra.mxu0 %v3970
        %3972 = vmatprep.subr.mxu0 0.0
        %v3973 = vand.u32 %v2883, 4294901760
        %3974 = vmatpush1.msra.mxu0 %v3973
        %3975 = vmatprep.subr.mxu0 0.0
        %v3976 = vand.u32 %v2884, 4294901760
        %3977 = vmatpush1.msra.mxu0 %v3976
        %3978 = vmatprep.subr.mxu0 0.0
        %v3979 = vand.u32 %v2885, 4294901760
        %3980 = vmatpush1.msra.mxu0 %v3979
        %3981 = vmatprep.subr.mxu0 0.0
        %v3982 = vand.u32 %v2886, 4294901760
        %3983 = vmatpush1.msra.mxu0 %v3982
        %v3984 = vand.u32 %v407, 4294901760
        %v3985 = vsub.f32 %v407, %v3984
        %v3986 = vand.u32 %v3985, 4294901760
        %v3987 = vsub.f32 %v3985, %v3986
        %v3988 = vand.u32 %v3987, 4294901760
        %3989 = vmatprep.mubr.f32.mxu0 %v3988
        %v3990 = vand.u32 %v406, 4294901760
        %v3991 = vsub.f32 %v406, %v3990
        %v3992 = vand.u32 %v3991, 4294901760
        %v3993 = vsub.f32 %v3991, %v3992
        %v3994 = vand.u32 %v3993, 4294901760
        %3995 = vmatmul.mubr.f32.gmra.mrb[0].mxu0 %v3994
        %v3996 = vpop.f32.mrb[0].mxu0
        %v3997 = vadd.f32 %v3885, %v3996
        %v3998 = vpop.f32.mrb[0].mxu0
        %3999 = vdwg.mxu0
        %4000 = vmatprep.subr.mxu0 0.0
        %v4001 = vand.u32 %v653, 4294901760
        %v4002 = vsub.f32 %v653, %v4001
        %v4003 = vand.u32 %v4002, 4294901760
        %v4004 = vsub.f32 %v4002, %v4003
        %v4005 = vand.u32 %v4004, 4294901760
        %4006 = vmatpush1.msra.mxu0 %v4005
        %4007 = vmatprep.subr.mxu0 0.0
        %v4008 = vand.u32 %v654, 4294901760
        %v4009 = vsub.f32 %v654, %v4008
        %v4010 = vand.u32 %v4009, 4294901760
        %v4011 = vsub.f32 %v4009, %v4010
        %v4012 = vand.u32 %v4011, 4294901760
        %4013 = vmatpush1.msra.mxu0 %v4012
        %4014 = vmatprep.subr.mxu0 0.0
        %v4015 = vand.u32 %v655, 4294901760
        %v4016 = vsub.f32 %v655, %v4015
        %v4017 = vand.u32 %v4016, 4294901760
        %v4018 = vsub.f32 %v4016, %v4017
        %v4019 = vand.u32 %v4018, 4294901760
        %4020 = vmatpush1.msra.mxu0 %v4019
        %4021 = vmatprep.subr.mxu0 0.0
        %v4022 = vand.u32 %v656, 4294901760
        %v4023 = vsub.f32 %v656, %v4022
        %v4024 = vand.u32 %v4023, 4294901760
        %v4025 = vsub.f32 %v4023, %v4024
        %v4026 = vand.u32 %v4025, 4294901760
        %4027 = vmatpush1.msra.mxu0 %v4026
        %4028 = vmatprep.subr.mxu0 0.0
        %v4029 = vand.u32 %v657, 4294901760
        %v4030 = vsub.f32 %v657, %v4029
        %v4031 = vand.u32 %v4030, 4294901760
        %v4032 = vsub.f32 %v4030, %v4031
        %v4033 = vand.u32 %v4032, 4294901760
        %4034 = vmatpush1.msra.mxu0 %v4033
        %4035 = vmatprep.subr.mxu0 0.0
        %v4036 = vand.u32 %v658, 4294901760
        %v4037 = vsub.f32 %v658, %v4036
        %v4038 = vand.u32 %v4037, 4294901760
        %v4039 = vsub.f32 %v4037, %v4038
        %v4040 = vand.u32 %v4039, 4294901760
        %4041 = vmatpush1.msra.mxu0 %v4040
        %4042 = vmatprep.subr.mxu0 0.0
        %v4043 = vand.u32 %v659, 4294901760
        %v4044 = vsub.f32 %v659, %v4043
        %v4045 = vand.u32 %v4044, 4294901760
        %v4046 = vsub.f32 %v4044, %v4045
        %v4047 = vand.u32 %v4046, 4294901760
        %4048 = vmatpush1.msra.mxu0 %v4047
        %4049 = vmatprep.subr.mxu0 0.0
        %v4050 = vand.u32 %v660, 4294901760
        %v4051 = vsub.f32 %v660, %v4050
        %v4052 = vand.u32 %v4051, 4294901760
        %v4053 = vsub.f32 %v4051, %v4052
        %v4054 = vand.u32 %v4053, 4294901760
        %4055 = vmatpush1.msra.mxu0 %v4054
        %4056 = vmatprep.subr.mxu0 0.0
        %v4057 = vand.u32 %v2863, 4294901760
        %v4058 = vsub.f32 %v2863, %v4057
        %v4059 = vand.u32 %v4058, 4294901760
        %v4060 = vsub.f32 %v4058, %v4059
        %v4061 = vand.u32 %v4060, 4294901760
        %4062 = vmatpush1.msra.mxu0 %v4061
        %4063 = vmatprep.subr.mxu0 0.0
        %v4064 = vand.u32 %v2864, 4294901760
        %v4065 = vsub.f32 %v2864, %v4064
        %v4066 = vand.u32 %v4065, 4294901760
        %v4067 = vsub.f32 %v4065, %v4066
        %v4068 = vand.u32 %v4067, 4294901760
        %4069 = vmatpush1.msra.mxu0 %v4068
        %4070 = vmatprep.subr.mxu0 0.0
        %v4071 = vand.u32 %v2865, 4294901760
        %v4072 = vsub.f32 %v2865, %v4071
        %v4073 = vand.u32 %v4072, 4294901760
        %v4074 = vsub.f32 %v4072, %v4073
        %v4075 = vand.u32 %v4074, 4294901760
        %4076 = vmatpush1.msra.mxu0 %v4075
        %4077 = vmatprep.subr.mxu0 0.0
        %v4078 = vand.u32 %v2866, 4294901760
        %v4079 = vsub.f32 %v2866, %v4078
        %v4080 = vand.u32 %v4079, 4294901760
        %v4081 = vsub.f32 %v4079, %v4080
        %v4082 = vand.u32 %v4081, 4294901760
        %4083 = vmatpush1.msra.mxu0 %v4082
        %4084 = vmatprep.subr.mxu0 0.0
        %v4085 = vand.u32 %v2867, 4294901760
        %v4086 = vsub.f32 %v2867, %v4085
        %v4087 = vand.u32 %v4086, 4294901760
        %v4088 = vsub.f32 %v4086, %v4087
        %v4089 = vand.u32 %v4088, 4294901760
        %4090 = vmatpush1.msra.mxu0 %v4089
        %4091 = vmatprep.subr.mxu0 0.0
        %v4092 = vand.u32 %v2868, 4294901760
        %v4093 = vsub.f32 %v2868, %v4092
        %v4094 = vand.u32 %v4093, 4294901760
        %v4095 = vsub.f32 %v4093, %v4094
        %v4096 = vand.u32 %v4095, 4294901760
        %4097 = vmatpush1.msra.mxu0 %v4096
        %4098 = vmatprep.subr.mxu0 0.0
        %v4099 = vand.u32 %v2869, 4294901760
        %v4100 = vsub.f32 %v2869, %v4099
        %v4101 = vand.u32 %v4100, 4294901760
        %v4102 = vsub.f32 %v4100, %v4101
        %v4103 = vand.u32 %v4102, 4294901760
        %4104 = vmatpush1.msra.mxu0 %v4103
        %4105 = vmatprep.subr.mxu0 0.0
        %v4106 = vand.u32 %v2870, 4294901760
        %v4107 = vsub.f32 %v2870, %v4106
        %v4108 = vand.u32 %v4107, 4294901760
        %v4109 = vsub.f32 %v4107, %v4108
        %v4110 = vand.u32 %v4109, 4294901760
        %4111 = vmatpush1.msra.mxu0 %v4110
        %4112 = vmatprep.subr.mxu0 0.0
        %v4113 = vand.u32 %v2871, 4294901760
        %v4114 = vsub.f32 %v2871, %v4113
        %v4115 = vand.u32 %v4114, 4294901760
        %v4116 = vsub.f32 %v4114, %v4115
        %v4117 = vand.u32 %v4116, 4294901760
        %4118 = vmatpush1.msra.mxu0 %v4117
        %4119 = vmatprep.subr.mxu0 0.0
        %v4120 = vand.u32 %v2872, 4294901760
        %v4121 = vsub.f32 %v2872, %v4120
        %v4122 = vand.u32 %v4121, 4294901760
        %v4123 = vsub.f32 %v4121, %v4122
        %v4124 = vand.u32 %v4123, 4294901760
        %4125 = vmatpush1.msra.mxu0 %v4124
        %4126 = vmatprep.subr.mxu0 0.0
        %v4127 = vand.u32 %v2873, 4294901760
        %v4128 = vsub.f32 %v2873, %v4127
        %v4129 = vand.u32 %v4128, 4294901760
        %v4130 = vsub.f32 %v4128, %v4129
        %v4131 = vand.u32 %v4130, 4294901760
        %4132 = vmatpush1.msra.mxu0 %v4131
        %4133 = vmatprep.subr.mxu0 0.0
        %v4134 = vand.u32 %v2874, 4294901760
        %v4135 = vsub.f32 %v2874, %v4134
        %v4136 = vand.u32 %v4135, 4294901760
        %v4137 = vsub.f32 %v4135, %v4136
        %v4138 = vand.u32 %v4137, 4294901760
        %4139 = vmatpush1.msra.mxu0 %v4138
        %4140 = vmatprep.subr.mxu0 0.0
        %v4141 = vand.u32 %v2875, 4294901760
        %v4142 = vsub.f32 %v2875, %v4141
        %v4143 = vand.u32 %v4142, 4294901760
        %v4144 = vsub.f32 %v4142, %v4143
        %v4145 = vand.u32 %v4144, 4294901760
        %4146 = vmatpush1.msra.mxu0 %v4145
        %4147 = vmatprep.subr.mxu0 0.0
        %v4148 = vand.u32 %v2876, 4294901760
        %v4149 = vsub.f32 %v2876, %v4148
        %v4150 = vand.u32 %v4149, 4294901760
        %v4151 = vsub.f32 %v4149, %v4150
        %v4152 = vand.u32 %v4151, 4294901760
        %4153 = vmatpush1.msra.mxu0 %v4152
        %4154 = vmatprep.subr.mxu0 0.0
        %v4155 = vand.u32 %v2877, 4294901760
        %v4156 = vsub.f32 %v2877, %v4155
        %v4157 = vand.u32 %v4156, 4294901760
        %v4158 = vsub.f32 %v4156, %v4157
        %v4159 = vand.u32 %v4158, 4294901760
        %4160 = vmatpush1.msra.mxu0 %v4159
        %4161 = vmatprep.subr.mxu0 0.0
        %v4162 = vand.u32 %v2878, 4294901760
        %v4163 = vsub.f32 %v2878, %v4162
        %v4164 = vand.u32 %v4163, 4294901760
        %v4165 = vsub.f32 %v4163, %v4164
        %v4166 = vand.u32 %v4165, 4294901760
        %4167 = vmatpush1.msra.mxu0 %v4166
        %4168 = vmatprep.subr.mxu0 0.0
        %v4169 = vand.u32 %v2879, 4294901760
        %v4170 = vsub.f32 %v2879, %v4169
        %v4171 = vand.u32 %v4170, 4294901760
        %v4172 = vsub.f32 %v4170, %v4171
        %v4173 = vand.u32 %v4172, 4294901760
        %4174 = vmatpush1.msra.mxu0 %v4173
        %4175 = vmatprep.subr.mxu0 0.0
        %v4176 = vand.u32 %v2880, 4294901760
        %v4177 = vsub.f32 %v2880, %v4176
        %v4178 = vand.u32 %v4177, 4294901760
        %v4179 = vsub.f32 %v4177, %v4178
        %v4180 = vand.u32 %v4179, 4294901760
        %4181 = vmatpush1.msra.mxu0 %v4180
        %4182 = vmatprep.subr.mxu0 0.0
        %v4183 = vand.u32 %v2881, 4294901760
        %v4184 = vsub.f32 %v2881, %v4183
        %v4185 = vand.u32 %v4184, 4294901760
        %v4186 = vsub.f32 %v4184, %v4185
        %v4187 = vand.u32 %v4186, 4294901760
        %4188 = vmatpush1.msra.mxu0 %v4187
        %4189 = vmatprep.subr.mxu0 0.0
        %v4190 = vand.u32 %v2882, 4294901760
        %v4191 = vsub.f32 %v2882, %v4190
        %v4192 = vand.u32 %v4191, 4294901760
        %v4193 = vsub.f32 %v4191, %v4192
        %v4194 = vand.u32 %v4193, 4294901760
        %4195 = vmatpush1.msra.mxu0 %v4194
        %4196 = vmatprep.subr.mxu0 0.0
        %v4197 = vand.u32 %v2883, 4294901760
        %v4198 = vsub.f32 %v2883, %v4197
        %v4199 = vand.u32 %v4198, 4294901760
        %v4200 = vsub.f32 %v4198, %v4199
        %v4201 = vand.u32 %v4200, 4294901760
        %4202 = vmatpush1.msra.mxu0 %v4201
        %4203 = vmatprep.subr.mxu0 0.0
        %v4204 = vand.u32 %v2884, 4294901760
        %v4205 = vsub.f32 %v2884, %v4204
        %v4206 = vand.u32 %v4205, 4294901760
        %v4207 = vsub.f32 %v4205, %v4206
        %v4208 = vand.u32 %v4207, 4294901760
        %4209 = vmatpush1.msra.mxu0 %v4208
        %4210 = vmatprep.subr.mxu0 0.0
        %v4211 = vand.u32 %v2885, 4294901760
        %v4212 = vsub.f32 %v2885, %v4211
        %v4213 = vand.u32 %v4212, 4294901760
        %v4214 = vsub.f32 %v4212, %v4213
        %v4215 = vand.u32 %v4214, 4294901760
        %4216 = vmatpush1.msra.mxu0 %v4215
        %4217 = vmatprep.subr.mxu0 0.0
        %v4218 = vand.u32 %v2886, 4294901760
        %v4219 = vsub.f32 %v2886, %v4218
        %v4220 = vand.u32 %v4219, 4294901760
        %v4221 = vsub.f32 %v4219, %v4220
        %v4222 = vand.u32 %v4221, 4294901760
        %4223 = vmatpush1.msra.mxu0 %v4222
        %v4224 = vand.u32 %v407, 4294901760
        %4225 = vmatprep.mubr.f32.mxu0 %v4224
        %v4226 = vand.u32 %v406, 4294901760
        %4227 = vmatmul.mubr.f32.gmra.mrb[0].mxu0 %v4226
        %v4228 = vpop.f32.mrb[0].mxu0
        %v4229 = vadd.f32 %v3997, %v4228
        %v4230 = vpop.f32.mrb[0].mxu0
        %4231 = vdwg.mxu0
        %4232 = vmatprep.subr.mxu0 0.0
        %v4233 = vand.u32 %v653, 4294901760
        %v4234 = vsub.f32 %v653, %v4233
        %4235 = vmatpush1.msra.mxu0 %v4234
        %4236 = vmatprep.subr.mxu0 0.0
        %v4237 = vand.u32 %v654, 4294901760
        %v4238 = vsub.f32 %v654, %v4237
        %4239 = vmatpush1.msra.mxu0 %v4238
        %4240 = vmatprep.subr.mxu0 0.0
        %v4241 = vand.u32 %v655, 4294901760
        %v4242 = vsub.f32 %v655, %v4241
        %4243 = vmatpush1.msra.mxu0 %v4242
        %4244 = vmatprep.subr.mxu0 0.0
        %v4245 = vand.u32 %v656, 4294901760
        %v4246 = vsub.f32 %v656, %v4245
        %4247 = vmatpush1.msra.mxu0 %v4246
        %4248 = vmatprep.subr.mxu0 0.0
        %v4249 = vand.u32 %v657, 4294901760
        %v4250 = vsub.f32 %v657, %v4249
        %4251 = vmatpush1.msra.mxu0 %v4250
        %4252 = vmatprep.subr.mxu0 0.0
        %v4253 = vand.u32 %v658, 4294901760
        %v4254 = vsub.f32 %v658, %v4253
        %4255 = vmatpush1.msra.mxu0 %v4254
        %4256 = vmatprep.subr.mxu0 0.0
        %v4257 = vand.u32 %v659, 4294901760
        %v4258 = vsub.f32 %v659, %v4257
        %4259 = vmatpush1.msra.mxu0 %v4258
        %4260 = vmatprep.subr.mxu0 0.0
        %v4261 = vand.u32 %v660, 4294901760
        %v4262 = vsub.f32 %v660, %v4261
        %4263 = vmatpush1.msra.mxu0 %v4262
        %4264 = vmatprep.subr.mxu0 0.0
        %v4265 = vand.u32 %v2863, 4294901760
        %v4266 = vsub.f32 %v2863, %v4265
        %4267 = vmatpush1.msra.mxu0 %v4266
        %4268 = vmatprep.subr.mxu0 0.0
        %v4269 = vand.u32 %v2864, 4294901760
        %v4270 = vsub.f32 %v2864, %v4269
        %4271 = vmatpush1.msra.mxu0 %v4270
        %4272 = vmatprep.subr.mxu0 0.0
        %v4273 = vand.u32 %v2865, 4294901760
        %v4274 = vsub.f32 %v2865, %v4273
        %4275 = vmatpush1.msra.mxu0 %v4274
        %4276 = vmatprep.subr.mxu0 0.0
        %v4277 = vand.u32 %v2866, 4294901760
        %v4278 = vsub.f32 %v2866, %v4277
        %4279 = vmatpush1.msra.mxu0 %v4278
        %4280 = vmatprep.subr.mxu0 0.0
        %v4281 = vand.u32 %v2867, 4294901760
        %v4282 = vsub.f32 %v2867, %v4281
        %4283 = vmatpush1.msra.mxu0 %v4282
        %4284 = vmatprep.subr.mxu0 0.0
        %v4285 = vand.u32 %v2868, 4294901760
        %v4286 = vsub.f32 %v2868, %v4285
        %4287 = vmatpush1.msra.mxu0 %v4286
        %4288 = vmatprep.subr.mxu0 0.0
        %v4289 = vand.u32 %v2869, 4294901760
        %v4290 = vsub.f32 %v2869, %v4289
        %4291 = vmatpush1.msra.mxu0 %v4290
        %4292 = vmatprep.subr.mxu0 0.0
        %v4293 = vand.u32 %v2870, 4294901760
        %v4294 = vsub.f32 %v2870, %v4293
        %4295 = vmatpush1.msra.mxu0 %v4294
        %4296 = vmatprep.subr.mxu0 0.0
        %v4297 = vand.u32 %v2871, 4294901760
        %v4298 = vsub.f32 %v2871, %v4297
        %4299 = vmatpush1.msra.mxu0 %v4298
        %4300 = vmatprep.subr.mxu0 0.0
        %v4301 = vand.u32 %v2872, 4294901760
        %v4302 = vsub.f32 %v2872, %v4301
        %4303 = vmatpush1.msra.mxu0 %v4302
        %4304 = vmatprep.subr.mxu0 0.0
        %v4305 = vand.u32 %v2873, 4294901760
        %v4306 = vsub.f32 %v2873, %v4305
        %4307 = vmatpush1.msra.mxu0 %v4306
        %4308 = vmatprep.subr.mxu0 0.0
        %v4309 = vand.u32 %v2874, 4294901760
        %v4310 = vsub.f32 %v2874, %v4309
        %4311 = vmatpush1.msra.mxu0 %v4310
        %4312 = vmatprep.subr.mxu0 0.0
        %v4313 = vand.u32 %v2875, 4294901760
        %v4314 = vsub.f32 %v2875, %v4313
        %4315 = vmatpush1.msra.mxu0 %v4314
        %4316 = vmatprep.subr.mxu0 0.0
        %v4317 = vand.u32 %v2876, 4294901760
        %v4318 = vsub.f32 %v2876, %v4317
        %4319 = vmatpush1.msra.mxu0 %v4318
        %4320 = vmatprep.subr.mxu0 0.0
        %v4321 = vand.u32 %v2877, 4294901760
        %v4322 = vsub.f32 %v2877, %v4321
        %4323 = vmatpush1.msra.mxu0 %v4322
        %4324 = vmatprep.subr.mxu0 0.0
        %v4325 = vand.u32 %v2878, 4294901760
        %v4326 = vsub.f32 %v2878, %v4325
        %4327 = vmatpush1.msra.mxu0 %v4326
        %4328 = vmatprep.subr.mxu0 0.0
        %v4329 = vand.u32 %v2879, 4294901760
        %v4330 = vsub.f32 %v2879, %v4329
        %4331 = vmatpush1.msra.mxu0 %v4330
        %4332 = vmatprep.subr.mxu0 0.0
        %v4333 = vand.u32 %v2880, 4294901760
        %v4334 = vsub.f32 %v2880, %v4333
        %4335 = vmatpush1.msra.mxu0 %v4334
        %4336 = vmatprep.subr.mxu0 0.0
        %v4337 = vand.u32 %v2881, 4294901760
        %v4338 = vsub.f32 %v2881, %v4337
        %4339 = vmatpush1.msra.mxu0 %v4338
        %4340 = vmatprep.subr.mxu0 0.0
        %v4341 = vand.u32 %v2882, 4294901760
        %v4342 = vsub.f32 %v2882, %v4341
        %4343 = vmatpush1.msra.mxu0 %v4342
        %4344 = vmatprep.subr.mxu0 0.0
        %v4345 = vand.u32 %v2883, 4294901760
        %v4346 = vsub.f32 %v2883, %v4345
        %4347 = vmatpush1.msra.mxu0 %v4346
        %4348 = vmatprep.subr.mxu0 0.0
        %v4349 = vand.u32 %v2884, 4294901760
        %v4350 = vsub.f32 %v2884, %v4349
        %4351 = vmatpush1.msra.mxu0 %v4350
        %4352 = vmatprep.subr.mxu0 0.0
        %v4353 = vand.u32 %v2885, 4294901760
        %v4354 = vsub.f32 %v2885, %v4353
        %4355 = vmatpush1.msra.mxu0 %v4354
        %4356 = vmatprep.subr.mxu0 0.0
        %v4357 = vand.u32 %v2886, 4294901760
        %v4358 = vsub.f32 %v2886, %v4357
        %4359 = vmatpush1.msra.mxu0 %v4358
        %v4360 = vand.u32 %v407, 4294901760
        %v4361 = vsub.f32 %v407, %v4360
        %4362 = vmatprep.mubr.f32.mxu0 %v4361
        %v4363 = vand.u32 %v406, 4294901760
        %v4364 = vsub.f32 %v406, %v4363
        %4365 = vmatmul.mubr.f32.gmra.mrb[0].mxu0 %v4364
        %v4366 = vpop.f32.mrb[0].mxu0
        %v4367 = vadd.f32 %v4229, %v4366
        %v4368 = vpop.f32.mrb[0].mxu0
        %4369 = vdwg.mxu0
        %4370 = vmatprep.subr.mxu0 0.0
        %v4371 = vand.u32 %v653, 4294901760
        %4372 = vmatpush1.msra.mxu0 %v4371
        %4373 = vmatprep.subr.mxu0 0.0
        %v4374 = vand.u32 %v654, 4294901760
        %4375 = vmatpush1.msra.mxu0 %v4374
        %4376 = vmatprep.subr.mxu0 0.0
        %v4377 = vand.u32 %v655, 4294901760
        %4378 = vmatpush1.msra.mxu0 %v4377
        %4379 = vmatprep.subr.mxu0 0.0
        %v4380 = vand.u32 %v656, 4294901760
        %4381 = vmatpush1.msra.mxu0 %v4380
        %4382 = vmatprep.subr.mxu0 0.0
        %v4383 = vand.u32 %v657, 4294901760
        %4384 = vmatpush1.msra.mxu0 %v4383
        %4385 = vmatprep.subr.mxu0 0.0
        %v4386 = vand.u32 %v658, 4294901760
        %4387 = vmatpush1.msra.mxu0 %v4386
        %4388 = vmatprep.subr.mxu0 0.0
        %v4389 = vand.u32 %v659, 4294901760
        %4390 = vmatpush1.msra.mxu0 %v4389
        %4391 = vmatprep.subr.mxu0 0.0
        %v4392 = vand.u32 %v660, 4294901760
        %4393 = vmatpush1.msra.mxu0 %v4392
        %4394 = vmatprep.subr.mxu0 0.0
        %v4395 = vand.u32 %v2863, 4294901760
        %4396 = vmatpush1.msra.mxu0 %v4395
        %4397 = vmatprep.subr.mxu0 0.0
        %v4398 = vand.u32 %v2864, 4294901760
        %4399 = vmatpush1.msra.mxu0 %v4398
        %4400 = vmatprep.subr.mxu0 0.0
        %v4401 = vand.u32 %v2865, 4294901760
        %4402 = vmatpush1.msra.mxu0 %v4401
        %4403 = vmatprep.subr.mxu0 0.0
        %v4404 = vand.u32 %v2866, 4294901760
        %4405 = vmatpush1.msra.mxu0 %v4404
        %4406 = vmatprep.subr.mxu0 0.0
        %v4407 = vand.u32 %v2867, 4294901760
        %4408 = vmatpush1.msra.mxu0 %v4407
        %4409 = vmatprep.subr.mxu0 0.0
        %v4410 = vand.u32 %v2868, 4294901760
        %4411 = vmatpush1.msra.mxu0 %v4410
        %4412 = vmatprep.subr.mxu0 0.0
        %v4413 = vand.u32 %v2869, 4294901760
        %4414 = vmatpush1.msra.mxu0 %v4413
        %4415 = vmatprep.subr.mxu0 0.0
        %v4416 = vand.u32 %v2870, 4294901760
        %4417 = vmatpush1.msra.mxu0 %v4416
        %4418 = vmatprep.subr.mxu0 0.0
        %v4419 = vand.u32 %v2871, 4294901760
        %4420 = vmatpush1.msra.mxu0 %v4419
        %4421 = vmatprep.subr.mxu0 0.0
        %v4422 = vand.u32 %v2872, 4294901760
        %4423 = vmatpush1.msra.mxu0 %v4422
        %4424 = vmatprep.subr.mxu0 0.0
        %v4425 = vand.u32 %v2873, 4294901760
        %4426 = vmatpush1.msra.mxu0 %v4425
        %4427 = vmatprep.subr.mxu0 0.0
        %v4428 = vand.u32 %v2874, 4294901760
        %4429 = vmatpush1.msra.mxu0 %v4428
        %4430 = vmatprep.subr.mxu0 0.0
        %v4431 = vand.u32 %v2875, 4294901760
        %4432 = vmatpush1.msra.mxu0 %v4431
        %4433 = vmatprep.subr.mxu0 0.0
        %v4434 = vand.u32 %v2876, 4294901760
        %4435 = vmatpush1.msra.mxu0 %v4434
        %4436 = vmatprep.subr.mxu0 0.0
        %v4437 = vand.u32 %v2877, 4294901760
        %4438 = vmatpush1.msra.mxu0 %v4437
        %4439 = vmatprep.subr.mxu0 0.0
        %v4440 = vand.u32 %v2878, 4294901760
        %4441 = vmatpush1.msra.mxu0 %v4440
        %4442 = vmatprep.subr.mxu0 0.0
        %v4443 = vand.u32 %v2879, 4294901760
        %4444 = vmatpush1.msra.mxu0 %v4443
        %4445 = vmatprep.subr.mxu0 0.0
        %v4446 = vand.u32 %v2880, 4294901760
        %4447 = vmatpush1.msra.mxu0 %v4446
        %4448 = vmatprep.subr.mxu0 0.0
        %v4449 = vand.u32 %v2881, 4294901760
        %4450 = vmatpush1.msra.mxu0 %v4449
        %4451 = vmatprep.subr.mxu0 0.0
        %v4452 = vand.u32 %v2882, 4294901760
        %4453 = vmatpush1.msra.mxu0 %v4452
        %4454 = vmatprep.subr.mxu0 0.0
        %v4455 = vand.u32 %v2883, 4294901760
        %4456 = vmatpush1.msra.mxu0 %v4455
        %4457 = vmatprep.subr.mxu0 0.0
        %v4458 = vand.u32 %v2884, 4294901760
        %4459 = vmatpush1.msra.mxu0 %v4458
        %4460 = vmatprep.subr.mxu0 0.0
        %v4461 = vand.u32 %v2885, 4294901760
        %4462 = vmatpush1.msra.mxu0 %v4461
        %4463 = vmatprep.subr.mxu0 0.0
        %v4464 = vand.u32 %v2886, 4294901760
        %4465 = vmatpush1.msra.mxu0 %v4464
        %v4466 = vand.u32 %v407, 4294901760
        %v4467 = vsub.f32 %v407, %v4466
        %v4468 = vand.u32 %v4467, 4294901760
        %4469 = vmatprep.mubr.f32.mxu0 %v4468
        %v4470 = vand.u32 %v406, 4294901760
        %v4471 = vsub.f32 %v406, %v4470
        %v4472 = vand.u32 %v4471, 4294901760
        %4473 = vmatmul.mubr.f32.gmra.mrb[0].mxu0 %v4472
        %v4474 = vpop.f32.mrb[0].mxu0
        %v4475 = vadd.f32 %v4367, %v4474
        %v4476 = vpop.f32.mrb[0].mxu0
        %4477 = vdwg.mxu0
        %4478 = vmatprep.subr.mxu0 0.0
        %v4479 = vand.u32 %v653, 4294901760
        %v4480 = vsub.f32 %v653, %v4479
        %v4481 = vand.u32 %v4480, 4294901760
        %4482 = vmatpush1.msra.mxu0 %v4481
        %4483 = vmatprep.subr.mxu0 0.0
        %v4484 = vand.u32 %v654, 4294901760
        %v4485 = vsub.f32 %v654, %v4484
        %v4486 = vand.u32 %v4485, 4294901760
        %4487 = vmatpush1.msra.mxu0 %v4486
        %4488 = vmatprep.subr.mxu0 0.0
        %v4489 = vand.u32 %v655, 4294901760
        %v4490 = vsub.f32 %v655, %v4489
        %v4491 = vand.u32 %v4490, 4294901760
        %4492 = vmatpush1.msra.mxu0 %v4491
        %4493 = vmatprep.subr.mxu0 0.0
        %v4494 = vand.u32 %v656, 4294901760
        %v4495 = vsub.f32 %v656, %v4494
        %v4496 = vand.u32 %v4495, 4294901760
        %4497 = vmatpush1.msra.mxu0 %v4496
        %4498 = vmatprep.subr.mxu0 0.0
        %v4499 = vand.u32 %v657, 4294901760
        %v4500 = vsub.f32 %v657, %v4499
        %v4501 = vand.u32 %v4500, 4294901760
        %4502 = vmatpush1.msra.mxu0 %v4501
        %4503 = vmatprep.subr.mxu0 0.0
        %v4504 = vand.u32 %v658, 4294901760
        %v4505 = vsub.f32 %v658, %v4504
        %v4506 = vand.u32 %v4505, 4294901760
        %4507 = vmatpush1.msra.mxu0 %v4506
        %4508 = vmatprep.subr.mxu0 0.0
        %v4509 = vand.u32 %v659, 4294901760
        %v4510 = vsub.f32 %v659, %v4509
        %v4511 = vand.u32 %v4510, 4294901760
        %4512 = vmatpush1.msra.mxu0 %v4511
        %4513 = vmatprep.subr.mxu0 0.0
        %v4514 = vand.u32 %v660, 4294901760
        %v4515 = vsub.f32 %v660, %v4514
        %v4516 = vand.u32 %v4515, 4294901760
        %4517 = vmatpush1.msra.mxu0 %v4516
        %4518 = vmatprep.subr.mxu0 0.0
        %v4519 = vand.u32 %v2863, 4294901760
        %v4520 = vsub.f32 %v2863, %v4519
        %v4521 = vand.u32 %v4520, 4294901760
        %4522 = vmatpush1.msra.mxu0 %v4521
        %4523 = vmatprep.subr.mxu0 0.0
        %v4524 = vand.u32 %v2864, 4294901760
        %v4525 = vsub.f32 %v2864, %v4524
        %v4526 = vand.u32 %v4525, 4294901760
        %4527 = vmatpush1.msra.mxu0 %v4526
        %4528 = vmatprep.subr.mxu0 0.0
        %v4529 = vand.u32 %v2865, 4294901760
        %v4530 = vsub.f32 %v2865, %v4529
        %v4531 = vand.u32 %v4530, 4294901760
        %4532 = vmatpush1.msra.mxu0 %v4531
        %4533 = vmatprep.subr.mxu0 0.0
        %v4534 = vand.u32 %v2866, 4294901760
        %v4535 = vsub.f32 %v2866, %v4534
        %v4536 = vand.u32 %v4535, 4294901760
        %4537 = vmatpush1.msra.mxu0 %v4536
        %4538 = vmatprep.subr.mxu0 0.0
        %v4539 = vand.u32 %v2867, 4294901760
        %v4540 = vsub.f32 %v2867, %v4539
        %v4541 = vand.u32 %v4540, 4294901760
        %4542 = vmatpush1.msra.mxu0 %v4541
        %4543 = vmatprep.subr.mxu0 0.0
        %v4544 = vand.u32 %v2868, 4294901760
        %v4545 = vsub.f32 %v2868, %v4544
        %v4546 = vand.u32 %v4545, 4294901760
        %4547 = vmatpush1.msra.mxu0 %v4546
        %4548 = vmatprep.subr.mxu0 0.0
        %v4549 = vand.u32 %v2869, 4294901760
        %v4550 = vsub.f32 %v2869, %v4549
        %v4551 = vand.u32 %v4550, 4294901760
        %4552 = vmatpush1.msra.mxu0 %v4551
        %4553 = vmatprep.subr.mxu0 0.0
        %v4554 = vand.u32 %v2870, 4294901760
        %v4555 = vsub.f32 %v2870, %v4554
        %v4556 = vand.u32 %v4555, 4294901760
        %4557 = vmatpush1.msra.mxu0 %v4556
        %4558 = vmatprep.subr.mxu0 0.0
        %v4559 = vand.u32 %v2871, 4294901760
        %v4560 = vsub.f32 %v2871, %v4559
        %v4561 = vand.u32 %v4560, 4294901760
        %4562 = vmatpush1.msra.mxu0 %v4561
        %4563 = vmatprep.subr.mxu0 0.0
        %v4564 = vand.u32 %v2872, 4294901760
        %v4565 = vsub.f32 %v2872, %v4564
        %v4566 = vand.u32 %v4565, 4294901760
        %4567 = vmatpush1.msra.mxu0 %v4566
        %4568 = vmatprep.subr.mxu0 0.0
        %v4569 = vand.u32 %v2873, 4294901760
        %v4570 = vsub.f32 %v2873, %v4569
        %v4571 = vand.u32 %v4570, 4294901760
        %4572 = vmatpush1.msra.mxu0 %v4571
        %4573 = vmatprep.subr.mxu0 0.0
        %v4574 = vand.u32 %v2874, 4294901760
        %v4575 = vsub.f32 %v2874, %v4574
        %v4576 = vand.u32 %v4575, 4294901760
        %4577 = vmatpush1.msra.mxu0 %v4576
        %4578 = vmatprep.subr.mxu0 0.0
        %v4579 = vand.u32 %v2875, 4294901760
        %v4580 = vsub.f32 %v2875, %v4579
        %v4581 = vand.u32 %v4580, 4294901760
        %4582 = vmatpush1.msra.mxu0 %v4581
        %4583 = vmatprep.subr.mxu0 0.0
        %v4584 = vand.u32 %v2876, 4294901760
        %v4585 = vsub.f32 %v2876, %v4584
        %v4586 = vand.u32 %v4585, 4294901760
        %4587 = vmatpush1.msra.mxu0 %v4586
        %4588 = vmatprep.subr.mxu0 0.0
        %v4589 = vand.u32 %v2877, 4294901760
        %v4590 = vsub.f32 %v2877, %v4589
        %v4591 = vand.u32 %v4590, 4294901760
        %4592 = vmatpush1.msra.mxu0 %v4591
        %4593 = vmatprep.subr.mxu0 0.0
        %v4594 = vand.u32 %v2878, 4294901760
        %v4595 = vsub.f32 %v2878, %v4594
        %v4596 = vand.u32 %v4595, 4294901760
        %4597 = vmatpush1.msra.mxu0 %v4596
        %4598 = vmatprep.subr.mxu0 0.0
        %v4599 = vand.u32 %v2879, 4294901760
        %v4600 = vsub.f32 %v2879, %v4599
        %v4601 = vand.u32 %v4600, 4294901760
        %4602 = vmatpush1.msra.mxu0 %v4601
        %4603 = vmatprep.subr.mxu0 0.0
        %v4604 = vand.u32 %v2880, 4294901760
        %v4605 = vsub.f32 %v2880, %v4604
        %v4606 = vand.u32 %v4605, 4294901760
        %4607 = vmatpush1.msra.mxu0 %v4606
        %4608 = vmatprep.subr.mxu0 0.0
        %v4609 = vand.u32 %v2881, 4294901760
        %v4610 = vsub.f32 %v2881, %v4609
        %v4611 = vand.u32 %v4610, 4294901760
        %4612 = vmatpush1.msra.mxu0 %v4611
        %4613 = vmatprep.subr.mxu0 0.0
        %v4614 = vand.u32 %v2882, 4294901760
        %v4615 = vsub.f32 %v2882, %v4614
        %v4616 = vand.u32 %v4615, 4294901760
        %4617 = vmatpush1.msra.mxu0 %v4616
        %4618 = vmatprep.subr.mxu0 0.0
        %v4619 = vand.u32 %v2883, 4294901760
        %v4620 = vsub.f32 %v2883, %v4619
        %v4621 = vand.u32 %v4620, 4294901760
        %4622 = vmatpush1.msra.mxu0 %v4621
        %4623 = vmatprep.subr.mxu0 0.0
        %v4624 = vand.u32 %v2884, 4294901760
        %v4625 = vsub.f32 %v2884, %v4624
        %v4626 = vand.u32 %v4625, 4294901760
        %4627 = vmatpush1.msra.mxu0 %v4626
        %4628 = vmatprep.subr.mxu0 0.0
        %v4629 = vand.u32 %v2885, 4294901760
        %v4630 = vsub.f32 %v2885, %v4629
        %v4631 = vand.u32 %v4630, 4294901760
        %4632 = vmatpush1.msra.mxu0 %v4631
        %4633 = vmatprep.subr.mxu0 0.0
        %v4634 = vand.u32 %v2886, 4294901760
        %v4635 = vsub.f32 %v2886, %v4634
        %v4636 = vand.u32 %v4635, 4294901760
        %4637 = vmatpush1.msra.mxu0 %v4636
        %v4638 = vand.u32 %v407, 4294901760
        %4639 = vmatprep.mubr.f32.mxu0 %v4638
        %v4640 = vand.u32 %v406, 4294901760
        %4641 = vmatmul.mubr.f32.gmra.mrb[0].mxu0 %v4640
        %v4642 = vpop.f32.mrb[0].mxu0
        %v4643 = vadd.f32 %v4475, %v4642
        %v4644 = vpop.f32.mrb[0].mxu0
        %4645 = vdwg.mxu0
        %4646 = vmatprep.subr.mxu0 0.0
        %v4647 = vand.u32 %v653, 4294901760
        %4648 = vmatpush1.msra.mxu0 %v4647
        %4649 = vmatprep.subr.mxu0 0.0
        %v4650 = vand.u32 %v654, 4294901760
        %4651 = vmatpush1.msra.mxu0 %v4650
        %4652 = vmatprep.subr.mxu0 0.0
        %v4653 = vand.u32 %v655, 4294901760
        %4654 = vmatpush1.msra.mxu0 %v4653
        %4655 = vmatprep.subr.mxu0 0.0
        %v4656 = vand.u32 %v656, 4294901760
        %4657 = vmatpush1.msra.mxu0 %v4656
        %4658 = vmatprep.subr.mxu0 0.0
        %v4659 = vand.u32 %v657, 4294901760
        %4660 = vmatpush1.msra.mxu0 %v4659
        %4661 = vmatprep.subr.mxu0 0.0
        %v4662 = vand.u32 %v658, 4294901760
        %4663 = vmatpush1.msra.mxu0 %v4662
        %4664 = vmatprep.subr.mxu0 0.0
        %v4665 = vand.u32 %v659, 4294901760
        %4666 = vmatpush1.msra.mxu0 %v4665
        %4667 = vmatprep.subr.mxu0 0.0
        %v4668 = vand.u32 %v660, 4294901760
        %4669 = vmatpush1.msra.mxu0 %v4668
        %4670 = vmatprep.subr.mxu0 0.0
        %v4671 = vand.u32 %v2863, 4294901760
        %4672 = vmatpush1.msra.mxu0 %v4671
        %4673 = vmatprep.subr.mxu0 0.0
        %v4674 = vand.u32 %v2864, 4294901760
        %4675 = vmatpush1.msra.mxu0 %v4674
        %4676 = vmatprep.subr.mxu0 0.0
        %v4677 = vand.u32 %v2865, 4294901760
        %4678 = vmatpush1.msra.mxu0 %v4677
        %4679 = vmatprep.subr.mxu0 0.0
        %v4680 = vand.u32 %v2866, 4294901760
        %4681 = vmatpush1.msra.mxu0 %v4680
        %4682 = vmatprep.subr.mxu0 0.0
        %v4683 = vand.u32 %v2867, 4294901760
        %4684 = vmatpush1.msra.mxu0 %v4683
        %4685 = vmatprep.subr.mxu0 0.0
        %v4686 = vand.u32 %v2868, 4294901760
        %4687 = vmatpush1.msra.mxu0 %v4686
        %4688 = vmatprep.subr.mxu0 0.0
        %v4689 = vand.u32 %v2869, 4294901760
        %4690 = vmatpush1.msra.mxu0 %v4689
        %4691 = vmatprep.subr.mxu0 0.0
        %v4692 = vand.u32 %v2870, 4294901760
        %4693 = vmatpush1.msra.mxu0 %v4692
        %4694 = vmatprep.subr.mxu0 0.0
        %v4695 = vand.u32 %v2871, 4294901760
        %4696 = vmatpush1.msra.mxu0 %v4695
        %4697 = vmatprep.subr.mxu0 0.0
        %v4698 = vand.u32 %v2872, 4294901760
        %4699 = vmatpush1.msra.mxu0 %v4698
        %4700 = vmatprep.subr.mxu0 0.0
        %v4701 = vand.u32 %v2873, 4294901760
        %4702 = vmatpush1.msra.mxu0 %v4701
        %4703 = vmatprep.subr.mxu0 0.0
        %v4704 = vand.u32 %v2874, 4294901760
        %4705 = vmatpush1.msra.mxu0 %v4704
        %4706 = vmatprep.subr.mxu0 0.0
        %v4707 = vand.u32 %v2875, 4294901760
        %4708 = vmatpush1.msra.mxu0 %v4707
        %4709 = vmatprep.subr.mxu0 0.0
        %v4710 = vand.u32 %v2876, 4294901760
        %4711 = vmatpush1.msra.mxu0 %v4710
        %4712 = vmatprep.subr.mxu0 0.0
        %v4713 = vand.u32 %v2877, 4294901760
        %4714 = vmatpush1.msra.mxu0 %v4713
        %4715 = vmatprep.subr.mxu0 0.0
        %v4716 = vand.u32 %v2878, 4294901760
        %4717 = vmatpush1.msra.mxu0 %v4716
        %4718 = vmatprep.subr.mxu0 0.0
        %v4719 = vand.u32 %v2879, 4294901760
        %4720 = vmatpush1.msra.mxu0 %v4719
        %4721 = vmatprep.subr.mxu0 0.0
        %v4722 = vand.u32 %v2880, 4294901760
        %4723 = vmatpush1.msra.mxu0 %v4722
        %4724 = vmatprep.subr.mxu0 0.0
        %v4725 = vand.u32 %v2881, 4294901760
        %4726 = vmatpush1.msra.mxu0 %v4725
        %4727 = vmatprep.subr.mxu0 0.0
        %v4728 = vand.u32 %v2882, 4294901760
        %4729 = vmatpush1.msra.mxu0 %v4728
        %4730 = vmatprep.subr.mxu0 0.0
        %v4731 = vand.u32 %v2883, 4294901760
        %4732 = vmatpush1.msra.mxu0 %v4731
        %4733 = vmatprep.subr.mxu0 0.0
        %v4734 = vand.u32 %v2884, 4294901760
        %4735 = vmatpush1.msra.mxu0 %v4734
        %4736 = vmatprep.subr.mxu0 0.0
        %v4737 = vand.u32 %v2885, 4294901760
        %4738 = vmatpush1.msra.mxu0 %v4737
        %4739 = vmatprep.subr.mxu0 0.0
        %v4740 = vand.u32 %v2886, 4294901760
        %4741 = vmatpush1.msra.mxu0 %v4740
        %v4742 = vand.u32 %v407, 4294901760
        %4743 = vmatprep.mubr.f32.mxu0 %v4742
        %v4744 = vand.u32 %v406, 4294901760
        %4745 = vmatmul.mubr.f32.gmra.mrb[0].mxu0 %v4744
        %v4746 = vpop.f32.mrb[0].mxu0
        %v4747 = vadd.f32 %v4643, %v4746
        %v4748 = vpop.f32.mrb[0].mxu0
        %4749 = vdwg.mxu0
        %4750 = vmatprep.subr.mxu0 0.0
        %v4751 = vand.u32 %v2887, 4294901760
        %4752 = vmatpush1.msra.mxu0 %v4751
        %4753 = vmatprep.subr.mxu0 0.0
        %v4754 = vand.u32 %v2888, 4294901760
        %4755 = vmatpush1.msra.mxu0 %v4754
        %4756 = vmatprep.subr.mxu0 0.0
        %v4757 = vand.u32 %v2889, 4294901760
        %4758 = vmatpush1.msra.mxu0 %v4757
        %4759 = vmatprep.subr.mxu0 0.0
        %v4760 = vand.u32 %v2890, 4294901760
        %4761 = vmatpush1.msra.mxu0 %v4760
        %4762 = vmatprep.subr.mxu0 0.0
        %v4763 = vand.u32 %v2891, 4294901760
        %4764 = vmatpush1.msra.mxu0 %v4763
        %4765 = vmatprep.subr.mxu0 0.0
        %v4766 = vand.u32 %v2892, 4294901760
        %4767 = vmatpush1.msra.mxu0 %v4766
        %4768 = vmatprep.subr.mxu0 0.0
        %v4769 = vand.u32 %v2893, 4294901760
        %4770 = vmatpush1.msra.mxu0 %v4769
        %4771 = vmatprep.subr.mxu0 0.0
        %v4772 = vand.u32 %v2894, 4294901760
        %4773 = vmatpush1.msra.mxu0 %v4772
        %4774 = vmatprep.subr.mxu0 0.0
        %v4775 = vand.u32 %v2895, 4294901760
        %4776 = vmatpush1.msra.mxu0 %v4775
        %4777 = vmatprep.subr.mxu0 0.0
        %v4778 = vand.u32 %v2896, 4294901760
        %4779 = vmatpush1.msra.mxu0 %v4778
        %4780 = vmatprep.subr.mxu0 0.0
        %v4781 = vand.u32 %v2897, 4294901760
        %4782 = vmatpush1.msra.mxu0 %v4781
        %4783 = vmatprep.subr.mxu0 0.0
        %v4784 = vand.u32 %v2898, 4294901760
        %4785 = vmatpush1.msra.mxu0 %v4784
        %4786 = vmatprep.subr.mxu0 0.0
        %v4787 = vand.u32 %v2899, 4294901760
        %4788 = vmatpush1.msra.mxu0 %v4787
        %4789 = vmatprep.subr.mxu0 0.0
        %v4790 = vand.u32 %v2900, 4294901760
        %4791 = vmatpush1.msra.mxu0 %v4790
        %4792 = vmatprep.subr.mxu0 0.0
        %v4793 = vand.u32 %v2901, 4294901760
        %4794 = vmatpush1.msra.mxu0 %v4793
        %4795 = vmatprep.subr.mxu0 0.0
        %v4796 = vand.u32 %v2902, 4294901760
        %4797 = vmatpush1.msra.mxu0 %v4796
        %4798 = vmatprep.subr.mxu0 0.0
        %v4799 = vand.u32 %v2903, 4294901760
        %4800 = vmatpush1.msra.mxu0 %v4799
        %4801 = vmatprep.subr.mxu0 0.0
        %v4802 = vand.u32 %v2904, 4294901760
        %4803 = vmatpush1.msra.mxu0 %v4802
        %4804 = vmatprep.subr.mxu0 0.0
        %v4805 = vand.u32 %v2905, 4294901760
        %4806 = vmatpush1.msra.mxu0 %v4805
        %4807 = vmatprep.subr.mxu0 0.0
        %v4808 = vand.u32 %v2906, 4294901760
        %4809 = vmatpush1.msra.mxu0 %v4808
        %4810 = vmatprep.subr.mxu0 0.0
        %v4811 = vand.u32 %v2907, 4294901760
        %4812 = vmatpush1.msra.mxu0 %v4811
        %4813 = vmatprep.subr.mxu0 0.0
        %v4814 = vand.u32 %v2908, 4294901760
        %4815 = vmatpush1.msra.mxu0 %v4814
        %4816 = vmatprep.subr.mxu0 0.0
        %v4817 = vand.u32 %v2909, 4294901760
        %4818 = vmatpush1.msra.mxu0 %v4817
        %4819 = vmatprep.subr.mxu0 0.0
        %v4820 = vand.u32 %v2910, 4294901760
        %4821 = vmatpush1.msra.mxu0 %v4820
        %4822 = vmatprep.subr.mxu0 0.0
        %v4823 = vand.u32 %v2911, 4294901760
        %4824 = vmatpush1.msra.mxu0 %v4823
        %4825 = vmatprep.subr.mxu0 0.0
        %v4826 = vand.u32 %v2912, 4294901760
        %4827 = vmatpush1.msra.mxu0 %v4826
        %4828 = vmatprep.subr.mxu0 0.0
        %v4829 = vand.u32 %v2913, 4294901760
        %4830 = vmatpush1.msra.mxu0 %v4829
        %4831 = vmatprep.subr.mxu0 0.0
        %v4832 = vand.u32 %v2914, 4294901760
        %4833 = vmatpush1.msra.mxu0 %v4832
        %4834 = vmatprep.subr.mxu0 0.0
        %v4835 = vand.u32 %v2915, 4294901760
        %4836 = vmatpush1.msra.mxu0 %v4835
        %4837 = vmatprep.subr.mxu0 0.0
        %v4838 = vand.u32 %v2916, 4294901760
        %4839 = vmatpush1.msra.mxu0 %v4838
        %4840 = vmatprep.subr.mxu0 0.0
        %v4841 = vand.u32 %v2917, 4294901760
        %4842 = vmatpush1.msra.mxu0 %v4841
        %4843 = vmatprep.subr.mxu0 0.0
        %v4844 = vand.u32 %v2918, 4294901760
        %4845 = vmatpush1.msra.mxu0 %v4844
        %v4846 = vand.u32 %v409, 4294901760
        %v4847 = vsub.f32 %v409, %v4846
        %v4848 = vand.u32 %v4847, 4294901760
        %v4849 = vsub.f32 %v4847, %v4848
        %v4850 = vand.u32 %v4849, 4294901760
        %4851 = vmatprep.mubr.f32.mxu0 %v4850
        %v4852 = vand.u32 %v408, 4294901760
        %v4853 = vsub.f32 %v408, %v4852
        %v4854 = vand.u32 %v4853, 4294901760
        %v4855 = vsub.f32 %v4853, %v4854
        %v4856 = vand.u32 %v4855, 4294901760
        %4857 = vmatmul.mubr.f32.gmra.mrb[0].mxu0 %v4856
        %v4858 = vpop.f32.mrb[0].mxu0
        %v4859 = vadd.f32 %v4747, %v4858
        %v4860 = vpop.f32.mrb[0].mxu0
        %4861 = vdwg.mxu0
        %4862 = vmatprep.subr.mxu0 0.0
        %v4863 = vand.u32 %v2887, 4294901760
        %v4864 = vsub.f32 %v2887, %v4863
        %v4865 = vand.u32 %v4864, 4294901760
        %v4866 = vsub.f32 %v4864, %v4865
        %v4867 = vand.u32 %v4866, 4294901760
        %4868 = vmatpush1.msra.mxu0 %v4867
        %4869 = vmatprep.subr.mxu0 0.0
        %v4870 = vand.u32 %v2888, 4294901760
        %v4871 = vsub.f32 %v2888, %v4870
        %v4872 = vand.u32 %v4871, 4294901760
        %v4873 = vsub.f32 %v4871, %v4872
        %v4874 = vand.u32 %v4873, 4294901760
        %4875 = vmatpush1.msra.mxu0 %v4874
        %4876 = vmatprep.subr.mxu0 0.0
        %v4877 = vand.u32 %v2889, 4294901760
        %v4878 = vsub.f32 %v2889, %v4877
        %v4879 = vand.u32 %v4878, 4294901760
        %v4880 = vsub.f32 %v4878, %v4879
        %v4881 = vand.u32 %v4880, 4294901760
        %4882 = vmatpush1.msra.mxu0 %v4881
        %4883 = vmatprep.subr.mxu0 0.0
        %v4884 = vand.u32 %v2890, 4294901760
        %v4885 = vsub.f32 %v2890, %v4884
        %v4886 = vand.u32 %v4885, 4294901760
        %v4887 = vsub.f32 %v4885, %v4886
        %v4888 = vand.u32 %v4887, 4294901760
        %4889 = vmatpush1.msra.mxu0 %v4888
        %4890 = vmatprep.subr.mxu0 0.0
        %v4891 = vand.u32 %v2891, 4294901760
        %v4892 = vsub.f32 %v2891, %v4891
        %v4893 = vand.u32 %v4892, 4294901760
        %v4894 = vsub.f32 %v4892, %v4893
        %v4895 = vand.u32 %v4894, 4294901760
        %4896 = vmatpush1.msra.mxu0 %v4895
        %4897 = vmatprep.subr.mxu0 0.0
        %v4898 = vand.u32 %v2892, 4294901760
        %v4899 = vsub.f32 %v2892, %v4898
        %v4900 = vand.u32 %v4899, 4294901760
        %v4901 = vsub.f32 %v4899, %v4900
        %v4902 = vand.u32 %v4901, 4294901760
        %4903 = vmatpush1.msra.mxu0 %v4902
        %4904 = vmatprep.subr.mxu0 0.0
        %v4905 = vand.u32 %v2893, 4294901760
        %v4906 = vsub.f32 %v2893, %v4905
        %v4907 = vand.u32 %v4906, 4294901760
        %v4908 = vsub.f32 %v4906, %v4907
        %v4909 = vand.u32 %v4908, 4294901760
        %4910 = vmatpush1.msra.mxu0 %v4909
        %4911 = vmatprep.subr.mxu0 0.0
        %v4912 = vand.u32 %v2894, 4294901760
        %v4913 = vsub.f32 %v2894, %v4912
        %v4914 = vand.u32 %v4913, 4294901760
        %v4915 = vsub.f32 %v4913, %v4914
        %v4916 = vand.u32 %v4915, 4294901760
        %4917 = vmatpush1.msra.mxu0 %v4916
        %4918 = vmatprep.subr.mxu0 0.0
        %v4919 = vand.u32 %v2895, 4294901760
        %v4920 = vsub.f32 %v2895, %v4919
        %v4921 = vand.u32 %v4920, 4294901760
        %v4922 = vsub.f32 %v4920, %v4921
        %v4923 = vand.u32 %v4922, 4294901760
        %4924 = vmatpush1.msra.mxu0 %v4923
        %4925 = vmatprep.subr.mxu0 0.0
        %v4926 = vand.u32 %v2896, 4294901760
        %v4927 = vsub.f32 %v2896, %v4926
        %v4928 = vand.u32 %v4927, 4294901760
        %v4929 = vsub.f32 %v4927, %v4928
        %v4930 = vand.u32 %v4929, 4294901760
        %4931 = vmatpush1.msra.mxu0 %v4930
        %4932 = vmatprep.subr.mxu0 0.0
        %v4933 = vand.u32 %v2897, 4294901760
        %v4934 = vsub.f32 %v2897, %v4933
        %v4935 = vand.u32 %v4934, 4294901760
        %v4936 = vsub.f32 %v4934, %v4935
        %v4937 = vand.u32 %v4936, 4294901760
        %4938 = vmatpush1.msra.mxu0 %v4937
        %4939 = vmatprep.subr.mxu0 0.0
        %v4940 = vand.u32 %v2898, 4294901760
        %v4941 = vsub.f32 %v2898, %v4940
        %v4942 = vand.u32 %v4941, 4294901760
        %v4943 = vsub.f32 %v4941, %v4942
        %v4944 = vand.u32 %v4943, 4294901760
        %4945 = vmatpush1.msra.mxu0 %v4944
        %4946 = vmatprep.subr.mxu0 0.0
        %v4947 = vand.u32 %v2899, 4294901760
        %v4948 = vsub.f32 %v2899, %v4947
        %v4949 = vand.u32 %v4948, 4294901760
        %v4950 = vsub.f32 %v4948, %v4949
        %v4951 = vand.u32 %v4950, 4294901760
        %4952 = vmatpush1.msra.mxu0 %v4951
        %4953 = vmatprep.subr.mxu0 0.0
        %v4954 = vand.u32 %v2900, 4294901760
        %v4955 = vsub.f32 %v2900, %v4954
        %v4956 = vand.u32 %v4955, 4294901760
        %v4957 = vsub.f32 %v4955, %v4956
        %v4958 = vand.u32 %v4957, 4294901760
        %4959 = vmatpush1.msra.mxu0 %v4958
        %4960 = vmatprep.subr.mxu0 0.0
        %v4961 = vand.u32 %v2901, 4294901760
        %v4962 = vsub.f32 %v2901, %v4961
        %v4963 = vand.u32 %v4962, 4294901760
        %v4964 = vsub.f32 %v4962, %v4963
        %v4965 = vand.u32 %v4964, 4294901760
        %4966 = vmatpush1.msra.mxu0 %v4965
        %4967 = vmatprep.subr.mxu0 0.0
        %v4968 = vand.u32 %v2902, 4294901760
        %v4969 = vsub.f32 %v2902, %v4968
        %v4970 = vand.u32 %v4969, 4294901760
        %v4971 = vsub.f32 %v4969, %v4970
        %v4972 = vand.u32 %v4971, 4294901760
        %4973 = vmatpush1.msra.mxu0 %v4972
        %4974 = vmatprep.subr.mxu0 0.0
        %v4975 = vand.u32 %v2903, 4294901760
        %v4976 = vsub.f32 %v2903, %v4975
        %v4977 = vand.u32 %v4976, 4294901760
        %v4978 = vsub.f32 %v4976, %v4977
        %v4979 = vand.u32 %v4978, 4294901760
        %4980 = vmatpush1.msra.mxu0 %v4979
        %4981 = vmatprep.subr.mxu0 0.0
        %v4982 = vand.u32 %v2904, 4294901760
        %v4983 = vsub.f32 %v2904, %v4982
        %v4984 = vand.u32 %v4983, 4294901760
        %v4985 = vsub.f32 %v4983, %v4984
        %v4986 = vand.u32 %v4985, 4294901760
        %4987 = vmatpush1.msra.mxu0 %v4986
        %4988 = vmatprep.subr.mxu0 0.0
        %v4989 = vand.u32 %v2905, 4294901760
        %v4990 = vsub.f32 %v2905, %v4989
        %v4991 = vand.u32 %v4990, 4294901760
        %v4992 = vsub.f32 %v4990, %v4991
        %v4993 = vand.u32 %v4992, 4294901760
        %4994 = vmatpush1.msra.mxu0 %v4993
        %4995 = vmatprep.subr.mxu0 0.0
        %v4996 = vand.u32 %v2906, 4294901760
        %v4997 = vsub.f32 %v2906, %v4996
        %v4998 = vand.u32 %v4997, 4294901760
        %v4999 = vsub.f32 %v4997, %v4998
        %v5000 = vand.u32 %v4999, 4294901760
        %5001 = vmatpush1.msra.mxu0 %v5000
        %5002 = vmatprep.subr.mxu0 0.0
        %v5003 = vand.u32 %v2907, 4294901760
        %v5004 = vsub.f32 %v2907, %v5003
        %v5005 = vand.u32 %v5004, 4294901760
        %v5006 = vsub.f32 %v5004, %v5005
        %v5007 = vand.u32 %v5006, 4294901760
        %5008 = vmatpush1.msra.mxu0 %v5007
        %5009 = vmatprep.subr.mxu0 0.0
        %v5010 = vand.u32 %v2908, 4294901760
        %v5011 = vsub.f32 %v2908, %v5010
        %v5012 = vand.u32 %v5011, 4294901760
        %v5013 = vsub.f32 %v5011, %v5012
        %v5014 = vand.u32 %v5013, 4294901760
        %5015 = vmatpush1.msra.mxu0 %v5014
        %5016 = vmatprep.subr.mxu0 0.0
        %v5017 = vand.u32 %v2909, 4294901760
        %v5018 = vsub.f32 %v2909, %v5017
        %v5019 = vand.u32 %v5018, 4294901760
        %v5020 = vsub.f32 %v5018, %v5019
        %v5021 = vand.u32 %v5020, 4294901760
        %5022 = vmatpush1.msra.mxu0 %v5021
        %5023 = vmatprep.subr.mxu0 0.0
        %v5024 = vand.u32 %v2910, 4294901760
        %v5025 = vsub.f32 %v2910, %v5024
        %v5026 = vand.u32 %v5025, 4294901760
        %v5027 = vsub.f32 %v5025, %v5026
        %v5028 = vand.u32 %v5027, 4294901760
        %5029 = vmatpush1.msra.mxu0 %v5028
        %5030 = vmatprep.subr.mxu0 0.0
        %v5031 = vand.u32 %v2911, 4294901760
        %v5032 = vsub.f32 %v2911, %v5031
        %v5033 = vand.u32 %v5032, 4294901760
        %v5034 = vsub.f32 %v5032, %v5033
        %v5035 = vand.u32 %v5034, 4294901760
        %5036 = vmatpush1.msra.mxu0 %v5035
        %5037 = vmatprep.subr.mxu0 0.0
        %v5038 = vand.u32 %v2912, 4294901760
        %v5039 = vsub.f32 %v2912, %v5038
        %v5040 = vand.u32 %v5039, 4294901760
        %v5041 = vsub.f32 %v5039, %v5040
        %v5042 = vand.u32 %v5041, 4294901760
        %5043 = vmatpush1.msra.mxu0 %v5042
        %5044 = vmatprep.subr.mxu0 0.0
        %v5045 = vand.u32 %v2913, 4294901760
        %v5046 = vsub.f32 %v2913, %v5045
        %v5047 = vand.u32 %v5046, 4294901760
        %v5048 = vsub.f32 %v5046, %v5047
        %v5049 = vand.u32 %v5048, 4294901760
        %5050 = vmatpush1.msra.mxu0 %v5049
        %5051 = vmatprep.subr.mxu0 0.0
        %v5052 = vand.u32 %v2914, 4294901760
        %v5053 = vsub.f32 %v2914, %v5052
        %v5054 = vand.u32 %v5053, 4294901760
        %v5055 = vsub.f32 %v5053, %v5054
        %v5056 = vand.u32 %v5055, 4294901760
        %5057 = vmatpush1.msra.mxu0 %v5056
        %5058 = vmatprep.subr.mxu0 0.0
        %v5059 = vand.u32 %v2915, 4294901760
        %v5060 = vsub.f32 %v2915, %v5059
        %v5061 = vand.u32 %v5060, 4294901760
        %v5062 = vsub.f32 %v5060, %v5061
        %v5063 = vand.u32 %v5062, 4294901760
        %5064 = vmatpush1.msra.mxu0 %v5063
        %5065 = vmatprep.subr.mxu0 0.0
        %v5066 = vand.u32 %v2916, 4294901760
        %v5067 = vsub.f32 %v2916, %v5066
        %v5068 = vand.u32 %v5067, 4294901760
        %v5069 = vsub.f32 %v5067, %v5068
        %v5070 = vand.u32 %v5069, 4294901760
        %5071 = vmatpush1.msra.mxu0 %v5070
        %5072 = vmatprep.subr.mxu0 0.0
        %v5073 = vand.u32 %v2917, 4294901760
        %v5074 = vsub.f32 %v2917, %v5073
        %v5075 = vand.u32 %v5074, 4294901760
        %v5076 = vsub.f32 %v5074, %v5075
        %v5077 = vand.u32 %v5076, 4294901760
        %5078 = vmatpush1.msra.mxu0 %v5077
        %5079 = vmatprep.subr.mxu0 0.0
        %v5080 = vand.u32 %v2918, 4294901760
        %v5081 = vsub.f32 %v2918, %v5080
        %v5082 = vand.u32 %v5081, 4294901760
        %v5083 = vsub.f32 %v5081, %v5082
        %v5084 = vand.u32 %v5083, 4294901760
        %5085 = vmatpush1.msra.mxu0 %v5084
        %v5086 = vand.u32 %v409, 4294901760
        %5087 = vmatprep.mubr.f32.mxu0 %v5086
        %v5088 = vand.u32 %v408, 4294901760
        %5089 = vmatmul.mubr.f32.gmra.mrb[0].mxu0 %v5088
        %v5090 = vpop.f32.mrb[0].mxu0
        %v5091 = vadd.f32 %v4859, %v5090
        %v5092 = vpop.f32.mrb[0].mxu0
        %5093 = vdwg.mxu0
        %5094 = vmatprep.subr.mxu0 0.0
        %v5095 = vand.u32 %v2887, 4294901760
        %v5096 = vsub.f32 %v2887, %v5095
        %5097 = vmatpush1.msra.mxu0 %v5096
        %5098 = vmatprep.subr.mxu0 0.0
        %v5099 = vand.u32 %v2888, 4294901760
        %v5100 = vsub.f32 %v2888, %v5099
        %5101 = vmatpush1.msra.mxu0 %v5100
        %5102 = vmatprep.subr.mxu0 0.0
        %v5103 = vand.u32 %v2889, 4294901760
        %v5104 = vsub.f32 %v2889, %v5103
        %5105 = vmatpush1.msra.mxu0 %v5104
        %5106 = vmatprep.subr.mxu0 0.0
        %v5107 = vand.u32 %v2890, 4294901760
        %v5108 = vsub.f32 %v2890, %v5107
        %5109 = vmatpush1.msra.mxu0 %v5108
        %5110 = vmatprep.subr.mxu0 0.0
        %v5111 = vand.u32 %v2891, 4294901760
        %v5112 = vsub.f32 %v2891, %v5111
        %5113 = vmatpush1.msra.mxu0 %v5112
        %5114 = vmatprep.subr.mxu0 0.0
        %v5115 = vand.u32 %v2892, 4294901760
        %v5116 = vsub.f32 %v2892, %v5115
        %5117 = vmatpush1.msra.mxu0 %v5116
        %5118 = vmatprep.subr.mxu0 0.0
        %v5119 = vand.u32 %v2893, 4294901760
        %v5120 = vsub.f32 %v2893, %v5119
        %5121 = vmatpush1.msra.mxu0 %v5120
        %5122 = vmatprep.subr.mxu0 0.0
        %v5123 = vand.u32 %v2894, 4294901760
        %v5124 = vsub.f32 %v2894, %v5123
        %5125 = vmatpush1.msra.mxu0 %v5124
        %5126 = vmatprep.subr.mxu0 0.0
        %v5127 = vand.u32 %v2895, 4294901760
        %v5128 = vsub.f32 %v2895, %v5127
        %5129 = vmatpush1.msra.mxu0 %v5128
        %5130 = vmatprep.subr.mxu0 0.0
        %v5131 = vand.u32 %v2896, 4294901760
        %v5132 = vsub.f32 %v2896, %v5131
        %5133 = vmatpush1.msra.mxu0 %v5132
        %5134 = vmatprep.subr.mxu0 0.0
        %v5135 = vand.u32 %v2897, 4294901760
        %v5136 = vsub.f32 %v2897, %v5135
        %5137 = vmatpush1.msra.mxu0 %v5136
        %5138 = vmatprep.subr.mxu0 0.0
        %v5139 = vand.u32 %v2898, 4294901760
        %v5140 = vsub.f32 %v2898, %v5139
        %5141 = vmatpush1.msra.mxu0 %v5140
        %5142 = vmatprep.subr.mxu0 0.0
        %v5143 = vand.u32 %v2899, 4294901760
        %v5144 = vsub.f32 %v2899, %v5143
        %5145 = vmatpush1.msra.mxu0 %v5144
        %5146 = vmatprep.subr.mxu0 0.0
        %v5147 = vand.u32 %v2900, 4294901760
        %v5148 = vsub.f32 %v2900, %v5147
        %5149 = vmatpush1.msra.mxu0 %v5148
        %5150 = vmatprep.subr.mxu0 0.0
        %v5151 = vand.u32 %v2901, 4294901760
        %v5152 = vsub.f32 %v2901, %v5151
        %5153 = vmatpush1.msra.mxu0 %v5152
        %5154 = vmatprep.subr.mxu0 0.0
        %v5155 = vand.u32 %v2902, 4294901760
        %v5156 = vsub.f32 %v2902, %v5155
        %5157 = vmatpush1.msra.mxu0 %v5156
        %5158 = vmatprep.subr.mxu0 0.0
        %v5159 = vand.u32 %v2903, 4294901760
        %v5160 = vsub.f32 %v2903, %v5159
        %5161 = vmatpush1.msra.mxu0 %v5160
        %5162 = vmatprep.subr.mxu0 0.0
        %v5163 = vand.u32 %v2904, 4294901760
        %v5164 = vsub.f32 %v2904, %v5163
        %5165 = vmatpush1.msra.mxu0 %v5164
        %5166 = vmatprep.subr.mxu0 0.0
        %v5167 = vand.u32 %v2905, 4294901760
        %v5168 = vsub.f32 %v2905, %v5167
        %5169 = vmatpush1.msra.mxu0 %v5168
        %5170 = vmatprep.subr.mxu0 0.0
        %v5171 = vand.u32 %v2906, 4294901760
        %v5172 = vsub.f32 %v2906, %v5171
        %5173 = vmatpush1.msra.mxu0 %v5172
        %5174 = vmatprep.subr.mxu0 0.0
        %v5175 = vand.u32 %v2907, 4294901760
        %v5176 = vsub.f32 %v2907, %v5175
        %5177 = vmatpush1.msra.mxu0 %v5176
        %5178 = vmatprep.subr.mxu0 0.0
        %v5179 = vand.u32 %v2908, 4294901760
        %v5180 = vsub.f32 %v2908, %v5179
        %5181 = vmatpush1.msra.mxu0 %v5180
        %5182 = vmatprep.subr.mxu0 0.0
        %v5183 = vand.u32 %v2909, 4294901760
        %v5184 = vsub.f32 %v2909, %v5183
        %5185 = vmatpush1.msra.mxu0 %v5184
        %5186 = vmatprep.subr.mxu0 0.0
        %v5187 = vand.u32 %v2910, 4294901760
        %v5188 = vsub.f32 %v2910, %v5187
        %5189 = vmatpush1.msra.mxu0 %v5188
        %5190 = vmatprep.subr.mxu0 0.0
        %v5191 = vand.u32 %v2911, 4294901760
        %v5192 = vsub.f32 %v2911, %v5191
        %5193 = vmatpush1.msra.mxu0 %v5192
        %5194 = vmatprep.subr.mxu0 0.0
        %v5195 = vand.u32 %v2912, 4294901760
        %v5196 = vsub.f32 %v2912, %v5195
        %5197 = vmatpush1.msra.mxu0 %v5196
        %5198 = vmatprep.subr.mxu0 0.0
        %v5199 = vand.u32 %v2913, 4294901760
        %v5200 = vsub.f32 %v2913, %v5199
        %5201 = vmatpush1.msra.mxu0 %v5200
        %5202 = vmatprep.subr.mxu0 0.0
        %v5203 = vand.u32 %v2914, 4294901760
        %v5204 = vsub.f32 %v2914, %v5203
        %5205 = vmatpush1.msra.mxu0 %v5204
        %5206 = vmatprep.subr.mxu0 0.0
        %v5207 = vand.u32 %v2915, 4294901760
        %v5208 = vsub.f32 %v2915, %v5207
        %5209 = vmatpush1.msra.mxu0 %v5208
        %5210 = vmatprep.subr.mxu0 0.0
        %v5211 = vand.u32 %v2916, 4294901760
        %v5212 = vsub.f32 %v2916, %v5211
        %5213 = vmatpush1.msra.mxu0 %v5212
        %5214 = vmatprep.subr.mxu0 0.0
        %v5215 = vand.u32 %v2917, 4294901760
        %v5216 = vsub.f32 %v2917, %v5215
        %5217 = vmatpush1.msra.mxu0 %v5216
        %5218 = vmatprep.subr.mxu0 0.0
        %v5219 = vand.u32 %v2918, 4294901760
        %v5220 = vsub.f32 %v2918, %v5219
        %5221 = vmatpush1.msra.mxu0 %v5220
        %v5222 = vand.u32 %v409, 4294901760
        %v5223 = vsub.f32 %v409, %v5222
        %5224 = vmatprep.mubr.f32.mxu0 %v5223
        %v5225 = vand.u32 %v408, 4294901760
        %v5226 = vsub.f32 %v408, %v5225
        %5227 = vmatmul.mubr.f32.gmra.mrb[0].mxu0 %v5226
        %v5228 = vpop.f32.mrb[0].mxu0
        %v5229 = vadd.f32 %v5091, %v5228
        %v5230 = vpop.f32.mrb[0].mxu0
        %5231 = vdwg.mxu0
        %5232 = vmatprep.subr.mxu0 0.0
        %v5233 = vand.u32 %v2887, 4294901760
        %5234 = vmatpush1.msra.mxu0 %v5233
        %5235 = vmatprep.subr.mxu0 0.0
        %v5236 = vand.u32 %v2888, 4294901760
        %5237 = vmatpush1.msra.mxu0 %v5236
        %5238 = vmatprep.subr.mxu0 0.0
        %v5239 = vand.u32 %v2889, 4294901760
        %5240 = vmatpush1.msra.mxu0 %v5239
        %5241 = vmatprep.subr.mxu0 0.0
        %v5242 = vand.u32 %v2890, 4294901760
        %5243 = vmatpush1.msra.mxu0 %v5242
        %5244 = vmatprep.subr.mxu0 0.0
        %v5245 = vand.u32 %v2891, 4294901760
        %5246 = vmatpush1.msra.mxu0 %v5245
        %5247 = vmatprep.subr.mxu0 0.0
        %v5248 = vand.u32 %v2892, 4294901760
        %5249 = vmatpush1.msra.mxu0 %v5248
        %5250 = vmatprep.subr.mxu0 0.0
        %v5251 = vand.u32 %v2893, 4294901760
        %5252 = vmatpush1.msra.mxu0 %v5251
        %5253 = vmatprep.subr.mxu0 0.0
        %v5254 = vand.u32 %v2894, 4294901760
        %5255 = vmatpush1.msra.mxu0 %v5254
        %5256 = vmatprep.subr.mxu0 0.0
        %v5257 = vand.u32 %v2895, 4294901760
        %5258 = vmatpush1.msra.mxu0 %v5257
        %5259 = vmatprep.subr.mxu0 0.0
        %v5260 = vand.u32 %v2896, 4294901760
        %5261 = vmatpush1.msra.mxu0 %v5260
        %5262 = vmatprep.subr.mxu0 0.0
        %v5263 = vand.u32 %v2897, 4294901760
        %5264 = vmatpush1.msra.mxu0 %v5263
        %5265 = vmatprep.subr.mxu0 0.0
        %v5266 = vand.u32 %v2898, 4294901760
        %5267 = vmatpush1.msra.mxu0 %v5266
        %5268 = vmatprep.subr.mxu0 0.0
        %v5269 = vand.u32 %v2899, 4294901760
        %5270 = vmatpush1.msra.mxu0 %v5269
        %5271 = vmatprep.subr.mxu0 0.0
        %v5272 = vand.u32 %v2900, 4294901760
        %5273 = vmatpush1.msra.mxu0 %v5272
        %5274 = vmatprep.subr.mxu0 0.0
        %v5275 = vand.u32 %v2901, 4294901760
        %5276 = vmatpush1.msra.mxu0 %v5275
        %5277 = vmatprep.subr.mxu0 0.0
        %v5278 = vand.u32 %v2902, 4294901760
        %5279 = vmatpush1.msra.mxu0 %v5278
        %5280 = vmatprep.subr.mxu0 0.0
        %v5281 = vand.u32 %v2903, 4294901760
        %5282 = vmatpush1.msra.mxu0 %v5281
        %5283 = vmatprep.subr.mxu0 0.0
        %v5284 = vand.u32 %v2904, 4294901760
        %5285 = vmatpush1.msra.mxu0 %v5284
        %5286 = vmatprep.subr.mxu0 0.0
        %v5287 = vand.u32 %v2905, 4294901760
        %5288 = vmatpush1.msra.mxu0 %v5287
        %5289 = vmatprep.subr.mxu0 0.0
        %v5290 = vand.u32 %v2906, 4294901760
        %5291 = vmatpush1.msra.mxu0 %v5290
        %5292 = vmatprep.subr.mxu0 0.0
        %v5293 = vand.u32 %v2907, 4294901760
        %5294 = vmatpush1.msra.mxu0 %v5293
        %5295 = vmatprep.subr.mxu0 0.0
        %v5296 = vand.u32 %v2908, 4294901760
        %5297 = vmatpush1.msra.mxu0 %v5296
        %5298 = vmatprep.subr.mxu0 0.0
        %v5299 = vand.u32 %v2909, 4294901760
        %5300 = vmatpush1.msra.mxu0 %v5299
        %5301 = vmatprep.subr.mxu0 0.0
        %v5302 = vand.u32 %v2910, 4294901760
        %5303 = vmatpush1.msra.mxu0 %v5302
        %5304 = vmatprep.subr.mxu0 0.0
        %v5305 = vand.u32 %v2911, 4294901760
        %5306 = vmatpush1.msra.mxu0 %v5305
        %5307 = vmatprep.subr.mxu0 0.0
        %v5308 = vand.u32 %v2912, 4294901760
        %5309 = vmatpush1.msra.mxu0 %v5308
        %5310 = vmatprep.subr.mxu0 0.0
        %v5311 = vand.u32 %v2913, 4294901760
        %5312 = vmatpush1.msra.mxu0 %v5311
        %5313 = vmatprep.subr.mxu0 0.0
        %v5314 = vand.u32 %v2914, 4294901760
        %5315 = vmatpush1.msra.mxu0 %v5314
        %5316 = vmatprep.subr.mxu0 0.0
        %v5317 = vand.u32 %v2915, 4294901760
        %5318 = vmatpush1.msra.mxu0 %v5317
        %5319 = vmatprep.subr.mxu0 0.0
        %v5320 = vand.u32 %v2916, 4294901760
        %5321 = vmatpush1.msra.mxu0 %v5320
        %5322 = vmatprep.subr.mxu0 0.0
        %v5323 = vand.u32 %v2917, 4294901760
        %5324 = vmatpush1.msra.mxu0 %v5323
        %5325 = vmatprep.subr.mxu0 0.0
        %v5326 = vand.u32 %v2918, 4294901760
        %5327 = vmatpush1.msra.mxu0 %v5326
        %v5328 = vand.u32 %v409, 4294901760
        %v5329 = vsub.f32 %v409, %v5328
        %v5330 = vand.u32 %v5329, 4294901760
        %5331 = vmatprep.mubr.f32.mxu0 %v5330
        %v5332 = vand.u32 %v408, 4294901760
        %v5333 = vsub.f32 %v408, %v5332
        %v5334 = vand.u32 %v5333, 4294901760
        %5335 = vmatmul.mubr.f32.gmra.mrb[0].mxu0 %v5334
        %v5336 = vpop.f32.mrb[0].mxu0
        %v5337 = vadd.f32 %v5229, %v5336
        %v5338 = vpop.f32.mrb[0].mxu0
        %5339 = vdwg.mxu0
        %5340 = vmatprep.subr.mxu0 0.0
        %v5341 = vand.u32 %v2887, 4294901760
        %v5342 = vsub.f32 %v2887, %v5341
        %v5343 = vand.u32 %v5342, 4294901760
        %5344 = vmatpush1.msra.mxu0 %v5343
        %5345 = vmatprep.subr.mxu0 0.0
        %v5346 = vand.u32 %v2888, 4294901760
        %v5347 = vsub.f32 %v2888, %v5346
        %v5348 = vand.u32 %v5347, 4294901760
        %5349 = vmatpush1.msra.mxu0 %v5348
        %5350 = vmatprep.subr.mxu0 0.0
        %v5351 = vand.u32 %v2889, 4294901760
        %v5352 = vsub.f32 %v2889, %v5351
        %v5353 = vand.u32 %v5352, 4294901760
        %5354 = vmatpush1.msra.mxu0 %v5353
        %5355 = vmatprep.subr.mxu0 0.0
        %v5356 = vand.u32 %v2890, 4294901760
        %v5357 = vsub.f32 %v2890, %v5356
        %v5358 = vand.u32 %v5357, 4294901760
        %5359 = vmatpush1.msra.mxu0 %v5358
        %5360 = vmatprep.subr.mxu0 0.0
        %v5361 = vand.u32 %v2891, 4294901760
        %v5362 = vsub.f32 %v2891, %v5361
        %v5363 = vand.u32 %v5362, 4294901760
        %5364 = vmatpush1.msra.mxu0 %v5363
        %5365 = vmatprep.subr.mxu0 0.0
        %v5366 = vand.u32 %v2892, 4294901760
        %v5367 = vsub.f32 %v2892, %v5366
        %v5368 = vand.u32 %v5367, 4294901760
        %5369 = vmatpush1.msra.mxu0 %v5368
        %5370 = vmatprep.subr.mxu0 0.0
        %v5371 = vand.u32 %v2893, 4294901760
        %v5372 = vsub.f32 %v2893, %v5371
        %v5373 = vand.u32 %v5372, 4294901760
        %5374 = vmatpush1.msra.mxu0 %v5373
        %5375 = vmatprep.subr.mxu0 0.0
        %v5376 = vand.u32 %v2894, 4294901760
        %v5377 = vsub.f32 %v2894, %v5376
        %v5378 = vand.u32 %v5377, 4294901760
        %5379 = vmatpush1.msra.mxu0 %v5378
        %5380 = vmatprep.subr.mxu0 0.0
        %v5381 = vand.u32 %v2895, 4294901760
        %v5382 = vsub.f32 %v2895, %v5381
        %v5383 = vand.u32 %v5382, 4294901760
        %5384 = vmatpush1.msra.mxu0 %v5383
        %5385 = vmatprep.subr.mxu0 0.0
        %v5386 = vand.u32 %v2896, 4294901760
        %v5387 = vsub.f32 %v2896, %v5386
        %v5388 = vand.u32 %v5387, 4294901760
        %5389 = vmatpush1.msra.mxu0 %v5388
        %5390 = vmatprep.subr.mxu0 0.0
        %v5391 = vand.u32 %v2897, 4294901760
        %v5392 = vsub.f32 %v2897, %v5391
        %v5393 = vand.u32 %v5392, 4294901760
        %5394 = vmatpush1.msra.mxu0 %v5393
        %5395 = vmatprep.subr.mxu0 0.0
        %v5396 = vand.u32 %v2898, 4294901760
        %v5397 = vsub.f32 %v2898, %v5396
        %v5398 = vand.u32 %v5397, 4294901760
        %5399 = vmatpush1.msra.mxu0 %v5398
        %5400 = vmatprep.subr.mxu0 0.0
        %v5401 = vand.u32 %v2899, 4294901760
        %v5402 = vsub.f32 %v2899, %v5401
        %v5403 = vand.u32 %v5402, 4294901760
        %5404 = vmatpush1.msra.mxu0 %v5403
        %5405 = vmatprep.subr.mxu0 0.0
        %v5406 = vand.u32 %v2900, 4294901760
        %v5407 = vsub.f32 %v2900, %v5406
        %v5408 = vand.u32 %v5407, 4294901760
        %5409 = vmatpush1.msra.mxu0 %v5408
        %5410 = vmatprep.subr.mxu0 0.0
        %v5411 = vand.u32 %v2901, 4294901760
        %v5412 = vsub.f32 %v2901, %v5411
        %v5413 = vand.u32 %v5412, 4294901760
        %5414 = vmatpush1.msra.mxu0 %v5413
        %5415 = vmatprep.subr.mxu0 0.0
        %v5416 = vand.u32 %v2902, 4294901760
        %v5417 = vsub.f32 %v2902, %v5416
        %v5418 = vand.u32 %v5417, 4294901760
        %5419 = vmatpush1.msra.mxu0 %v5418
        %5420 = vmatprep.subr.mxu0 0.0
        %v5421 = vand.u32 %v2903, 4294901760
        %v5422 = vsub.f32 %v2903, %v5421
        %v5423 = vand.u32 %v5422, 4294901760
        %5424 = vmatpush1.msra.mxu0 %v5423
        %5425 = vmatprep.subr.mxu0 0.0
        %v5426 = vand.u32 %v2904, 4294901760
        %v5427 = vsub.f32 %v2904, %v5426
        %v5428 = vand.u32 %v5427, 4294901760
        %5429 = vmatpush1.msra.mxu0 %v5428
        %5430 = vmatprep.subr.mxu0 0.0
        %v5431 = vand.u32 %v2905, 4294901760
        %v5432 = vsub.f32 %v2905, %v5431
        %v5433 = vand.u32 %v5432, 4294901760
        %5434 = vmatpush1.msra.mxu0 %v5433
        %5435 = vmatprep.subr.mxu0 0.0
        %v5436 = vand.u32 %v2906, 4294901760
        %v5437 = vsub.f32 %v2906, %v5436
        %v5438 = vand.u32 %v5437, 4294901760
        %5439 = vmatpush1.msra.mxu0 %v5438
        %5440 = vmatprep.subr.mxu0 0.0
        %v5441 = vand.u32 %v2907, 4294901760
        %v5442 = vsub.f32 %v2907, %v5441
        %v5443 = vand.u32 %v5442, 4294901760
        %5444 = vmatpush1.msra.mxu0 %v5443
        %5445 = vmatprep.subr.mxu0 0.0
        %v5446 = vand.u32 %v2908, 4294901760
        %v5447 = vsub.f32 %v2908, %v5446
        %v5448 = vand.u32 %v5447, 4294901760
        %5449 = vmatpush1.msra.mxu0 %v5448
        %5450 = vmatprep.subr.mxu0 0.0
        %v5451 = vand.u32 %v2909, 4294901760
        %v5452 = vsub.f32 %v2909, %v5451
        %v5453 = vand.u32 %v5452, 4294901760
        %5454 = vmatpush1.msra.mxu0 %v5453
        %5455 = vmatprep.subr.mxu0 0.0
        %v5456 = vand.u32 %v2910, 4294901760
        %v5457 = vsub.f32 %v2910, %v5456
        %v5458 = vand.u32 %v5457, 4294901760
        %5459 = vmatpush1.msra.mxu0 %v5458
        %5460 = vmatprep.subr.mxu0 0.0
        %v5461 = vand.u32 %v2911, 4294901760
        %v5462 = vsub.f32 %v2911, %v5461
        %v5463 = vand.u32 %v5462, 4294901760
        %5464 = vmatpush1.msra.mxu0 %v5463
        %5465 = vmatprep.subr.mxu0 0.0
        %v5466 = vand.u32 %v2912, 4294901760
        %v5467 = vsub.f32 %v2912, %v5466
        %v5468 = vand.u32 %v5467, 4294901760
        %5469 = vmatpush1.msra.mxu0 %v5468
        %5470 = vmatprep.subr.mxu0 0.0
        %v5471 = vand.u32 %v2913, 4294901760
        %v5472 = vsub.f32 %v2913, %v5471
        %v5473 = vand.u32 %v5472, 4294901760
        %5474 = vmatpush1.msra.mxu0 %v5473
        %5475 = vmatprep.subr.mxu0 0.0
        %v5476 = vand.u32 %v2914, 4294901760
        %v5477 = vsub.f32 %v2914, %v5476
        %v5478 = vand.u32 %v5477, 4294901760
        %5479 = vmatpush1.msra.mxu0 %v5478
        %5480 = vmatprep.subr.mxu0 0.0
        %v5481 = vand.u32 %v2915, 4294901760
        %v5482 = vsub.f32 %v2915, %v5481
        %v5483 = vand.u32 %v5482, 4294901760
        %5484 = vmatpush1.msra.mxu0 %v5483
        %5485 = vmatprep.subr.mxu0 0.0
        %v5486 = vand.u32 %v2916, 4294901760
        %v5487 = vsub.f32 %v2916, %v5486
        %v5488 = vand.u32 %v5487, 4294901760
        %5489 = vmatpush1.msra.mxu0 %v5488
        %5490 = vmatprep.subr.mxu0 0.0
        %v5491 = vand.u32 %v2917, 4294901760
        %v5492 = vsub.f32 %v2917, %v5491
        %v5493 = vand.u32 %v5492, 4294901760
        %5494 = vmatpush1.msra.mxu0 %v5493
        %5495 = vmatprep.subr.mxu0 0.0
        %v5496 = vand.u32 %v2918, 4294901760
        %v5497 = vsub.f32 %v2918, %v5496
        %v5498 = vand.u32 %v5497, 4294901760
        %5499 = vmatpush1.msra.mxu0 %v5498
        %v5500 = vand.u32 %v409, 4294901760
        %5501 = vmatprep.mubr.f32.mxu0 %v5500
        %v5502 = vand.u32 %v408, 4294901760
        %5503 = vmatmul.mubr.f32.gmra.mrb[0].mxu0 %v5502
        %v5504 = vpop.f32.mrb[0].mxu0
        %v5505 = vadd.f32 %v5337, %v5504
        %v5506 = vpop.f32.mrb[0].mxu0
        %5507 = vdwg.mxu0
        %5508 = vmatprep.subr.mxu0 0.0
        %v5509 = vand.u32 %v2887, 4294901760
        %5510 = vmatpush1.msra.mxu0 %v5509
        %5511 = vmatprep.subr.mxu0 0.0
        %v5512 = vand.u32 %v2888, 4294901760
        %5513 = vmatpush1.msra.mxu0 %v5512
        %5514 = vmatprep.subr.mxu0 0.0
        %v5515 = vand.u32 %v2889, 4294901760
        %5516 = vmatpush1.msra.mxu0 %v5515
        %5517 = vmatprep.subr.mxu0 0.0
        %v5518 = vand.u32 %v2890, 4294901760
        %5519 = vmatpush1.msra.mxu0 %v5518
        %5520 = vmatprep.subr.mxu0 0.0
        %v5521 = vand.u32 %v2891, 4294901760
        %5522 = vmatpush1.msra.mxu0 %v5521
        %5523 = vmatprep.subr.mxu0 0.0
        %v5524 = vand.u32 %v2892, 4294901760
        %5525 = vmatpush1.msra.mxu0 %v5524
        %5526 = vmatprep.subr.mxu0 0.0
        %v5527 = vand.u32 %v2893, 4294901760
        %5528 = vmatpush1.msra.mxu0 %v5527
        %5529 = vmatprep.subr.mxu0 0.0
        %v5530 = vand.u32 %v2894, 4294901760
        %5531 = vmatpush1.msra.mxu0 %v5530
        %5532 = vmatprep.subr.mxu0 0.0
        %v5533 = vand.u32 %v2895, 4294901760
        %5534 = vmatpush1.msra.mxu0 %v5533
        %5535 = vmatprep.subr.mxu0 0.0
        %v5536 = vand.u32 %v2896, 4294901760
        %5537 = vmatpush1.msra.mxu0 %v5536
        %5538 = vmatprep.subr.mxu0 0.0
        %v5539 = vand.u32 %v2897, 4294901760
        %5540 = vmatpush1.msra.mxu0 %v5539
        %5541 = vmatprep.subr.mxu0 0.0
        %v5542 = vand.u32 %v2898, 4294901760
        %5543 = vmatpush1.msra.mxu0 %v5542
        %5544 = vmatprep.subr.mxu0 0.0
        %v5545 = vand.u32 %v2899, 4294901760
        %5546 = vmatpush1.msra.mxu0 %v5545
        %5547 = vmatprep.subr.mxu0 0.0
        %v5548 = vand.u32 %v2900, 4294901760
        %5549 = vmatpush1.msra.mxu0 %v5548
        %5550 = vmatprep.subr.mxu0 0.0
        %v5551 = vand.u32 %v2901, 4294901760
        %5552 = vmatpush1.msra.mxu0 %v5551
        %5553 = vmatprep.subr.mxu0 0.0
        %v5554 = vand.u32 %v2902, 4294901760
        %5555 = vmatpush1.msra.mxu0 %v5554
        %5556 = vmatprep.subr.mxu0 0.0
        %v5557 = vand.u32 %v2903, 4294901760
        %5558 = vmatpush1.msra.mxu0 %v5557
        %5559 = vmatprep.subr.mxu0 0.0
        %v5560 = vand.u32 %v2904, 4294901760
        %5561 = vmatpush1.msra.mxu0 %v5560
        %5562 = vmatprep.subr.mxu0 0.0
        %v5563 = vand.u32 %v2905, 4294901760
        %5564 = vmatpush1.msra.mxu0 %v5563
        %5565 = vmatprep.subr.mxu0 0.0
        %v5566 = vand.u32 %v2906, 4294901760
        %5567 = vmatpush1.msra.mxu0 %v5566
        %5568 = vmatprep.subr.mxu0 0.0
        %v5569 = vand.u32 %v2907, 4294901760
        %5570 = vmatpush1.msra.mxu0 %v5569
        %5571 = vmatprep.subr.mxu0 0.0
        %v5572 = vand.u32 %v2908, 4294901760
        %5573 = vmatpush1.msra.mxu0 %v5572
        %5574 = vmatprep.subr.mxu0 0.0
        %v5575 = vand.u32 %v2909, 4294901760
        %5576 = vmatpush1.msra.mxu0 %v5575
        %5577 = vmatprep.subr.mxu0 0.0
        %v5578 = vand.u32 %v2910, 4294901760
        %5579 = vmatpush1.msra.mxu0 %v5578
        %5580 = vmatprep.subr.mxu0 0.0
        %v5581 = vand.u32 %v2911, 4294901760
        %5582 = vmatpush1.msra.mxu0 %v5581
        %5583 = vmatprep.subr.mxu0 0.0
        %v5584 = vand.u32 %v2912, 4294901760
        %5585 = vmatpush1.msra.mxu0 %v5584
        %5586 = vmatprep.subr.mxu0 0.0
        %v5587 = vand.u32 %v2913, 4294901760
        %5588 = vmatpush1.msra.mxu0 %v5587
        %5589 = vmatprep.subr.mxu0 0.0
        %v5590 = vand.u32 %v2914, 4294901760
        %5591 = vmatpush1.msra.mxu0 %v5590
        %5592 = vmatprep.subr.mxu0 0.0
        %v5593 = vand.u32 %v2915, 4294901760
        %5594 = vmatpush1.msra.mxu0 %v5593
        %5595 = vmatprep.subr.mxu0 0.0
        %v5596 = vand.u32 %v2916, 4294901760
        %5597 = vmatpush1.msra.mxu0 %v5596
        %5598 = vmatprep.subr.mxu0 0.0
        %v5599 = vand.u32 %v2917, 4294901760
        %5600 = vmatpush1.msra.mxu0 %v5599
        %5601 = vmatprep.subr.mxu0 0.0
        %v5602 = vand.u32 %v2918, 4294901760
        %5603 = vmatpush1.msra.mxu0 %v5602
        %v5604 = vand.u32 %v409, 4294901760
        %5605 = vmatprep.mubr.f32.mxu0 %v5604
        %v5606 = vand.u32 %v408, 4294901760
        %5607 = vmatmul.mubr.f32.gmra.mrb[0].mxu0 %v5606
        %v5608 = vpop.f32.mrb[0].mxu0
        %v5609 = vadd.f32 %v5505, %v5608
        %v5610 = vpop.f32.mrb[0].mxu0
        %5611 = vdwg.mxu0
        %5612 = vmatprep.subr.mxu0 0.0
        %v5613 = vand.u32 %v2919, 4294901760
        %5614 = vmatpush1.msra.mxu0 %v5613
        %5615 = vmatprep.subr.mxu0 0.0
        %v5616 = vand.u32 %v2920, 4294901760
        %5617 = vmatpush1.msra.mxu0 %v5616
        %5618 = vmatprep.subr.mxu0 0.0
        %v5619 = vand.u32 %v2921, 4294901760
        %5620 = vmatpush1.msra.mxu0 %v5619
        %5621 = vmatprep.subr.mxu0 0.0
        %v5622 = vand.u32 %v2922, 4294901760
        %5623 = vmatpush1.msra.mxu0 %v5622
        %5624 = vmatprep.subr.mxu0 0.0
        %v5625 = vand.u32 %v2923, 4294901760
        %5626 = vmatpush1.msra.mxu0 %v5625
        %5627 = vmatprep.subr.mxu0 0.0
        %v5628 = vand.u32 %v2924, 4294901760
        %5629 = vmatpush1.msra.mxu0 %v5628
        %5630 = vmatprep.subr.mxu0 0.0
        %v5631 = vand.u32 %v2925, 4294901760
        %5632 = vmatpush1.msra.mxu0 %v5631
        %5633 = vmatprep.subr.mxu0 0.0
        %v5634 = vand.u32 %v2926, 4294901760
        %5635 = vmatpush1.msra.mxu0 %v5634
        %5636 = vmatprep.subr.mxu0 0.0
        %v5637 = vand.u32 %v2927, 4294901760
        %5638 = vmatpush1.msra.mxu0 %v5637
        %5639 = vmatprep.subr.mxu0 0.0
        %v5640 = vand.u32 %v2928, 4294901760
        %5641 = vmatpush1.msra.mxu0 %v5640
        %5642 = vmatprep.subr.mxu0 0.0
        %v5643 = vand.u32 %v2929, 4294901760
        %5644 = vmatpush1.msra.mxu0 %v5643
        %5645 = vmatprep.subr.mxu0 0.0
        %v5646 = vand.u32 %v2930, 4294901760
        %5647 = vmatpush1.msra.mxu0 %v5646
        %5648 = vmatprep.subr.mxu0 0.0
        %v5649 = vand.u32 %v2931, 4294901760
        %5650 = vmatpush1.msra.mxu0 %v5649
        %5651 = vmatprep.subr.mxu0 0.0
        %v5652 = vand.u32 %v2932, 4294901760
        %5653 = vmatpush1.msra.mxu0 %v5652
        %5654 = vmatprep.subr.mxu0 0.0
        %v5655 = vand.u32 %v2933, 4294901760
        %5656 = vmatpush1.msra.mxu0 %v5655
        %5657 = vmatprep.subr.mxu0 0.0
        %v5658 = vand.u32 %v2934, 4294901760
        %5659 = vmatpush1.msra.mxu0 %v5658
        %5660 = vmatprep.subr.mxu0 0.0
        %v5661 = vand.u32 %v2935, 4294901760
        %5662 = vmatpush1.msra.mxu0 %v5661
        %5663 = vmatprep.subr.mxu0 0.0
        %v5664 = vand.u32 %v2936, 4294901760
        %5665 = vmatpush1.msra.mxu0 %v5664
        %5666 = vmatprep.subr.mxu0 0.0
        %v5667 = vand.u32 %v2937, 4294901760
        %5668 = vmatpush1.msra.mxu0 %v5667
        %5669 = vmatprep.subr.mxu0 0.0
        %v5670 = vand.u32 %v2938, 4294901760
        %5671 = vmatpush1.msra.mxu0 %v5670
        %5672 = vmatprep.subr.mxu0 0.0
        %v5673 = vand.u32 %v2939, 4294901760
        %5674 = vmatpush1.msra.mxu0 %v5673
        %5675 = vmatprep.subr.mxu0 0.0
        %v5676 = vand.u32 %v2940, 4294901760
        %5677 = vmatpush1.msra.mxu0 %v5676
        %5678 = vmatprep.subr.mxu0 0.0
        %v5679 = vand.u32 %v2941, 4294901760
        %5680 = vmatpush1.msra.mxu0 %v5679
        %5681 = vmatprep.subr.mxu0 0.0
        %v5682 = vand.u32 %v2942, 4294901760
        %5683 = vmatpush1.msra.mxu0 %v5682
        %5684 = vmatprep.subr.mxu0 0.0
        %v5685 = vand.u32 %v2943, 4294901760
        %5686 = vmatpush1.msra.mxu0 %v5685
        %5687 = vmatprep.subr.mxu0 0.0
        %v5688 = vand.u32 %v2944, 4294901760
        %5689 = vmatpush1.msra.mxu0 %v5688
        %5690 = vmatprep.subr.mxu0 0.0
        %v5691 = vand.u32 %v2945, 4294901760
        %5692 = vmatpush1.msra.mxu0 %v5691
        %5693 = vmatprep.subr.mxu0 0.0
        %v5694 = vand.u32 %v2946, 4294901760
        %5695 = vmatpush1.msra.mxu0 %v5694
        %5696 = vmatprep.subr.mxu0 0.0
        %v5697 = vand.u32 %v2947, 4294901760
        %5698 = vmatpush1.msra.mxu0 %v5697
        %5699 = vmatprep.subr.mxu0 0.0
        %v5700 = vand.u32 %v2948, 4294901760
        %5701 = vmatpush1.msra.mxu0 %v5700
        %5702 = vmatprep.subr.mxu0 0.0
        %v5703 = vand.u32 %v2949, 4294901760
        %5704 = vmatpush1.msra.mxu0 %v5703
        %5705 = vmatprep.subr.mxu0 0.0
        %v5706 = vand.u32 %v2950, 4294901760
        %5707 = vmatpush1.msra.mxu0 %v5706
        %v5708 = vand.u32 %v411, 4294901760
        %v5709 = vsub.f32 %v411, %v5708
        %v5710 = vand.u32 %v5709, 4294901760
        %v5711 = vsub.f32 %v5709, %v5710
        %v5712 = vand.u32 %v5711, 4294901760
        %5713 = vmatprep.mubr.f32.mxu0 %v5712
        %v5714 = vand.u32 %v410, 4294901760
        %v5715 = vsub.f32 %v410, %v5714
        %v5716 = vand.u32 %v5715, 4294901760
        %v5717 = vsub.f32 %v5715, %v5716
        %v5718 = vand.u32 %v5717, 4294901760
        %5719 = vmatmul.mubr.f32.gmra.mrb[0].mxu0 %v5718
        %v5720 = vpop.f32.mrb[0].mxu0
        %v5721 = vadd.f32 %v5609, %v5720
        %v5722 = vpop.f32.mrb[0].mxu0
        %5723 = vdwg.mxu0
        %5724 = vmatprep.subr.mxu0 0.0
        %v5725 = vand.u32 %v2919, 4294901760
        %v5726 = vsub.f32 %v2919, %v5725
        %v5727 = vand.u32 %v5726, 4294901760
        %v5728 = vsub.f32 %v5726, %v5727
        %v5729 = vand.u32 %v5728, 4294901760
        %5730 = vmatpush1.msra.mxu0 %v5729
        %5731 = vmatprep.subr.mxu0 0.0
        %v5732 = vand.u32 %v2920, 4294901760
        %v5733 = vsub.f32 %v2920, %v5732
        %v5734 = vand.u32 %v5733, 4294901760
        %v5735 = vsub.f32 %v5733, %v5734
        %v5736 = vand.u32 %v5735, 4294901760
        %5737 = vmatpush1.msra.mxu0 %v5736
        %5738 = vmatprep.subr.mxu0 0.0
        %v5739 = vand.u32 %v2921, 4294901760
        %v5740 = vsub.f32 %v2921, %v5739
        %v5741 = vand.u32 %v5740, 4294901760
        %v5742 = vsub.f32 %v5740, %v5741
        %v5743 = vand.u32 %v5742, 4294901760
        %5744 = vmatpush1.msra.mxu0 %v5743
        %5745 = vmatprep.subr.mxu0 0.0
        %v5746 = vand.u32 %v2922, 4294901760
        %v5747 = vsub.f32 %v2922, %v5746
        %v5748 = vand.u32 %v5747, 4294901760
        %v5749 = vsub.f32 %v5747, %v5748
        %v5750 = vand.u32 %v5749, 4294901760
        %5751 = vmatpush1.msra.mxu0 %v5750
        %5752 = vmatprep.subr.mxu0 0.0
        %v5753 = vand.u32 %v2923, 4294901760
        %v5754 = vsub.f32 %v2923, %v5753
        %v5755 = vand.u32 %v5754, 4294901760
        %v5756 = vsub.f32 %v5754, %v5755
        %v5757 = vand.u32 %v5756, 4294901760
        %5758 = vmatpush1.msra.mxu0 %v5757
        %5759 = vmatprep.subr.mxu0 0.0
        %v5760 = vand.u32 %v2924, 4294901760
        %v5761 = vsub.f32 %v2924, %v5760
        %v5762 = vand.u32 %v5761, 4294901760
        %v5763 = vsub.f32 %v5761, %v5762
        %v5764 = vand.u32 %v5763, 4294901760
        %5765 = vmatpush1.msra.mxu0 %v5764
        %5766 = vmatprep.subr.mxu0 0.0
        %v5767 = vand.u32 %v2925, 4294901760
        %v5768 = vsub.f32 %v2925, %v5767
        %v5769 = vand.u32 %v5768, 4294901760
        %v5770 = vsub.f32 %v5768, %v5769
        %v5771 = vand.u32 %v5770, 4294901760
        %5772 = vmatpush1.msra.mxu0 %v5771
        %5773 = vmatprep.subr.mxu0 0.0
        %v5774 = vand.u32 %v2926, 4294901760
        %v5775 = vsub.f32 %v2926, %v5774
        %v5776 = vand.u32 %v5775, 4294901760
        %v5777 = vsub.f32 %v5775, %v5776
        %v5778 = vand.u32 %v5777, 4294901760
        %5779 = vmatpush1.msra.mxu0 %v5778
        %5780 = vmatprep.subr.mxu0 0.0
        %v5781 = vand.u32 %v2927, 4294901760
        %v5782 = vsub.f32 %v2927, %v5781
        %v5783 = vand.u32 %v5782, 4294901760
        %v5784 = vsub.f32 %v5782, %v5783
        %v5785 = vand.u32 %v5784, 4294901760
        %5786 = vmatpush1.msra.mxu0 %v5785
        %5787 = vmatprep.subr.mxu0 0.0
        %v5788 = vand.u32 %v2928, 4294901760
        %v5789 = vsub.f32 %v2928, %v5788
        %v5790 = vand.u32 %v5789, 4294901760
        %v5791 = vsub.f32 %v5789, %v5790
        %v5792 = vand.u32 %v5791, 4294901760
        %5793 = vmatpush1.msra.mxu0 %v5792
        %5794 = vmatprep.subr.mxu0 0.0
        %v5795 = vand.u32 %v2929, 4294901760
        %v5796 = vsub.f32 %v2929, %v5795
        %v5797 = vand.u32 %v5796, 4294901760
        %v5798 = vsub.f32 %v5796, %v5797
        %v5799 = vand.u32 %v5798, 4294901760
        %5800 = vmatpush1.msra.mxu0 %v5799
        %5801 = vmatprep.subr.mxu0 0.0
        %v5802 = vand.u32 %v2930, 4294901760
        %v5803 = vsub.f32 %v2930, %v5802
        %v5804 = vand.u32 %v5803, 4294901760
        %v5805 = vsub.f32 %v5803, %v5804
        %v5806 = vand.u32 %v5805, 4294901760
        %5807 = vmatpush1.msra.mxu0 %v5806
        %5808 = vmatprep.subr.mxu0 0.0
        %v5809 = vand.u32 %v2931, 4294901760
        %v5810 = vsub.f32 %v2931, %v5809
        %v5811 = vand.u32 %v5810, 4294901760
        %v5812 = vsub.f32 %v5810, %v5811
        %v5813 = vand.u32 %v5812, 4294901760
        %5814 = vmatpush1.msra.mxu0 %v5813
        %5815 = vmatprep.subr.mxu0 0.0
        %v5816 = vand.u32 %v2932, 4294901760
        %v5817 = vsub.f32 %v2932, %v5816
        %v5818 = vand.u32 %v5817, 4294901760
        %v5819 = vsub.f32 %v5817, %v5818
        %v5820 = vand.u32 %v5819, 4294901760
        %5821 = vmatpush1.msra.mxu0 %v5820
        %5822 = vmatprep.subr.mxu0 0.0
        %v5823 = vand.u32 %v2933, 4294901760
        %v5824 = vsub.f32 %v2933, %v5823
        %v5825 = vand.u32 %v5824, 4294901760
        %v5826 = vsub.f32 %v5824, %v5825
        %v5827 = vand.u32 %v5826, 4294901760
        %5828 = vmatpush1.msra.mxu0 %v5827
        %5829 = vmatprep.subr.mxu0 0.0
        %v5830 = vand.u32 %v2934, 4294901760
        %v5831 = vsub.f32 %v2934, %v5830
        %v5832 = vand.u32 %v5831, 4294901760
        %v5833 = vsub.f32 %v5831, %v5832
        %v5834 = vand.u32 %v5833, 4294901760
        %5835 = vmatpush1.msra.mxu0 %v5834
        %5836 = vmatprep.subr.mxu0 0.0
        %v5837 = vand.u32 %v2935, 4294901760
        %v5838 = vsub.f32 %v2935, %v5837
        %v5839 = vand.u32 %v5838, 4294901760
        %v5840 = vsub.f32 %v5838, %v5839
        %v5841 = vand.u32 %v5840, 4294901760
        %5842 = vmatpush1.msra.mxu0 %v5841
        %5843 = vmatprep.subr.mxu0 0.0
        %v5844 = vand.u32 %v2936, 4294901760
        %v5845 = vsub.f32 %v2936, %v5844
        %v5846 = vand.u32 %v5845, 4294901760
        %v5847 = vsub.f32 %v5845, %v5846
        %v5848 = vand.u32 %v5847, 4294901760
        %5849 = vmatpush1.msra.mxu0 %v5848
        %5850 = vmatprep.subr.mxu0 0.0
        %v5851 = vand.u32 %v2937, 4294901760
        %v5852 = vsub.f32 %v2937, %v5851
        %v5853 = vand.u32 %v5852, 4294901760
        %v5854 = vsub.f32 %v5852, %v5853
        %v5855 = vand.u32 %v5854, 4294901760
        %5856 = vmatpush1.msra.mxu0 %v5855
        %5857 = vmatprep.subr.mxu0 0.0
        %v5858 = vand.u32 %v2938, 4294901760
        %v5859 = vsub.f32 %v2938, %v5858
        %v5860 = vand.u32 %v5859, 4294901760
        %v5861 = vsub.f32 %v5859, %v5860
        %v5862 = vand.u32 %v5861, 4294901760
        %5863 = vmatpush1.msra.mxu0 %v5862
        %5864 = vmatprep.subr.mxu0 0.0
        %v5865 = vand.u32 %v2939, 4294901760
        %v5866 = vsub.f32 %v2939, %v5865
        %v5867 = vand.u32 %v5866, 4294901760
        %v5868 = vsub.f32 %v5866, %v5867
        %v5869 = vand.u32 %v5868, 4294901760
        %5870 = vmatpush1.msra.mxu0 %v5869
        %5871 = vmatprep.subr.mxu0 0.0
        %v5872 = vand.u32 %v2940, 4294901760
        %v5873 = vsub.f32 %v2940, %v5872
        %v5874 = vand.u32 %v5873, 4294901760
        %v5875 = vsub.f32 %v5873, %v5874
        %v5876 = vand.u32 %v5875, 4294901760
        %5877 = vmatpush1.msra.mxu0 %v5876
        %5878 = vmatprep.subr.mxu0 0.0
        %v5879 = vand.u32 %v2941, 4294901760
        %v5880 = vsub.f32 %v2941, %v5879
        %v5881 = vand.u32 %v5880, 4294901760
        %v5882 = vsub.f32 %v5880, %v5881
        %v5883 = vand.u32 %v5882, 4294901760
        %5884 = vmatpush1.msra.mxu0 %v5883
        %5885 = vmatprep.subr.mxu0 0.0
        %v5886 = vand.u32 %v2942, 4294901760
        %v5887 = vsub.f32 %v2942, %v5886
        %v5888 = vand.u32 %v5887, 4294901760
        %v5889 = vsub.f32 %v5887, %v5888
        %v5890 = vand.u32 %v5889, 4294901760
        %5891 = vmatpush1.msra.mxu0 %v5890
        %5892 = vmatprep.subr.mxu0 0.0
        %v5893 = vand.u32 %v2943, 4294901760
        %v5894 = vsub.f32 %v2943, %v5893
        %v5895 = vand.u32 %v5894, 4294901760
        %v5896 = vsub.f32 %v5894, %v5895
        %v5897 = vand.u32 %v5896, 4294901760
        %5898 = vmatpush1.msra.mxu0 %v5897
        %5899 = vmatprep.subr.mxu0 0.0
        %v5900 = vand.u32 %v2944, 4294901760
        %v5901 = vsub.f32 %v2944, %v5900
        %v5902 = vand.u32 %v5901, 4294901760
        %v5903 = vsub.f32 %v5901, %v5902
        %v5904 = vand.u32 %v5903, 4294901760
        %5905 = vmatpush1.msra.mxu0 %v5904
        %5906 = vmatprep.subr.mxu0 0.0
        %v5907 = vand.u32 %v2945, 4294901760
        %v5908 = vsub.f32 %v2945, %v5907
        %v5909 = vand.u32 %v5908, 4294901760
        %v5910 = vsub.f32 %v5908, %v5909
        %v5911 = vand.u32 %v5910, 4294901760
        %5912 = vmatpush1.msra.mxu0 %v5911
        %5913 = vmatprep.subr.mxu0 0.0
        %v5914 = vand.u32 %v2946, 4294901760
        %v5915 = vsub.f32 %v2946, %v5914
        %v5916 = vand.u32 %v5915, 4294901760
        %v5917 = vsub.f32 %v5915, %v5916
        %v5918 = vand.u32 %v5917, 4294901760
        %5919 = vmatpush1.msra.mxu0 %v5918
        %5920 = vmatprep.subr.mxu0 0.0
        %v5921 = vand.u32 %v2947, 4294901760
        %v5922 = vsub.f32 %v2947, %v5921
        %v5923 = vand.u32 %v5922, 4294901760
        %v5924 = vsub.f32 %v5922, %v5923
        %v5925 = vand.u32 %v5924, 4294901760
        %5926 = vmatpush1.msra.mxu0 %v5925
        %5927 = vmatprep.subr.mxu0 0.0
        %v5928 = vand.u32 %v2948, 4294901760
        %v5929 = vsub.f32 %v2948, %v5928
        %v5930 = vand.u32 %v5929, 4294901760
        %v5931 = vsub.f32 %v5929, %v5930
        %v5932 = vand.u32 %v5931, 4294901760
        %5933 = vmatpush1.msra.mxu0 %v5932
        %5934 = vmatprep.subr.mxu0 0.0
        %v5935 = vand.u32 %v2949, 4294901760
        %v5936 = vsub.f32 %v2949, %v5935
        %v5937 = vand.u32 %v5936, 4294901760
        %v5938 = vsub.f32 %v5936, %v5937
        %v5939 = vand.u32 %v5938, 4294901760
        %5940 = vmatpush1.msra.mxu0 %v5939
        %5941 = vmatprep.subr.mxu0 0.0
        %v5942 = vand.u32 %v2950, 4294901760
        %v5943 = vsub.f32 %v2950, %v5942
        %v5944 = vand.u32 %v5943, 4294901760
        %v5945 = vsub.f32 %v5943, %v5944
        %v5946 = vand.u32 %v5945, 4294901760
        %5947 = vmatpush1.msra.mxu0 %v5946
        %v5948 = vand.u32 %v411, 4294901760
        %5949 = vmatprep.mubr.f32.mxu0 %v5948
        %v5950 = vand.u32 %v410, 4294901760
        %5951 = vmatmul.mubr.f32.gmra.mrb[0].mxu0 %v5950
        %v5952 = vpop.f32.mrb[0].mxu0
        %v5953 = vadd.f32 %v5721, %v5952
        %v5954 = vpop.f32.mrb[0].mxu0
        %5955 = vdwg.mxu0
        %5956 = vmatprep.subr.mxu0 0.0
        %v5957 = vand.u32 %v2919, 4294901760
        %v5958 = vsub.f32 %v2919, %v5957
        %5959 = vmatpush1.msra.mxu0 %v5958
        %5960 = vmatprep.subr.mxu0 0.0
        %v5961 = vand.u32 %v2920, 4294901760
        %v5962 = vsub.f32 %v2920, %v5961
        %5963 = vmatpush1.msra.mxu0 %v5962
        %5964 = vmatprep.subr.mxu0 0.0
        %v5965 = vand.u32 %v2921, 4294901760
        %v5966 = vsub.f32 %v2921, %v5965
        %5967 = vmatpush1.msra.mxu0 %v5966
        %5968 = vmatprep.subr.mxu0 0.0
        %v5969 = vand.u32 %v2922, 4294901760
        %v5970 = vsub.f32 %v2922, %v5969
        %5971 = vmatpush1.msra.mxu0 %v5970
        %5972 = vmatprep.subr.mxu0 0.0
        %v5973 = vand.u32 %v2923, 4294901760
        %v5974 = vsub.f32 %v2923, %v5973
        %5975 = vmatpush1.msra.mxu0 %v5974
        %5976 = vmatprep.subr.mxu0 0.0
        %v5977 = vand.u32 %v2924, 4294901760
        %v5978 = vsub.f32 %v2924, %v5977
        %5979 = vmatpush1.msra.mxu0 %v5978
        %5980 = vmatprep.subr.mxu0 0.0
        %v5981 = vand.u32 %v2925, 4294901760
        %v5982 = vsub.f32 %v2925, %v5981
        %5983 = vmatpush1.msra.mxu0 %v5982
        %5984 = vmatprep.subr.mxu0 0.0
        %v5985 = vand.u32 %v2926, 4294901760
        %v5986 = vsub.f32 %v2926, %v5985
        %5987 = vmatpush1.msra.mxu0 %v5986
        %5988 = vmatprep.subr.mxu0 0.0
        %v5989 = vand.u32 %v2927, 4294901760
        %v5990 = vsub.f32 %v2927, %v5989
        %5991 = vmatpush1.msra.mxu0 %v5990
        %5992 = vmatprep.subr.mxu0 0.0
        %v5993 = vand.u32 %v2928, 4294901760
        %v5994 = vsub.f32 %v2928, %v5993
        %5995 = vmatpush1.msra.mxu0 %v5994
        %5996 = vmatprep.subr.mxu0 0.0
        %v5997 = vand.u32 %v2929, 4294901760
        %v5998 = vsub.f32 %v2929, %v5997
        %5999 = vmatpush1.msra.mxu0 %v5998
        %6000 = vmatprep.subr.mxu0 0.0
        %v6001 = vand.u32 %v2930, 4294901760
        %v6002 = vsub.f32 %v2930, %v6001
        %6003 = vmatpush1.msra.mxu0 %v6002
        %6004 = vmatprep.subr.mxu0 0.0
        %v6005 = vand.u32 %v2931, 4294901760
        %v6006 = vsub.f32 %v2931, %v6005
        %6007 = vmatpush1.msra.mxu0 %v6006
        %6008 = vmatprep.subr.mxu0 0.0
        %v6009 = vand.u32 %v2932, 4294901760
        %v6010 = vsub.f32 %v2932, %v6009
        %6011 = vmatpush1.msra.mxu0 %v6010
        %6012 = vmatprep.subr.mxu0 0.0
        %v6013 = vand.u32 %v2933, 4294901760
        %v6014 = vsub.f32 %v2933, %v6013
        %6015 = vmatpush1.msra.mxu0 %v6014
        %6016 = vmatprep.subr.mxu0 0.0
        %v6017 = vand.u32 %v2934, 4294901760
        %v6018 = vsub.f32 %v2934, %v6017
        %6019 = vmatpush1.msra.mxu0 %v6018
        %6020 = vmatprep.subr.mxu0 0.0
        %v6021 = vand.u32 %v2935, 4294901760
        %v6022 = vsub.f32 %v2935, %v6021
        %6023 = vmatpush1.msra.mxu0 %v6022
        %6024 = vmatprep.subr.mxu0 0.0
        %v6025 = vand.u32 %v2936, 4294901760
        %v6026 = vsub.f32 %v2936, %v6025
        %6027 = vmatpush1.msra.mxu0 %v6026
        %6028 = vmatprep.subr.mxu0 0.0
        %v6029 = vand.u32 %v2937, 4294901760
        %v6030 = vsub.f32 %v2937, %v6029
        %6031 = vmatpush1.msra.mxu0 %v6030
        %6032 = vmatprep.subr.mxu0 0.0
        %v6033 = vand.u32 %v2938, 4294901760
        %v6034 = vsub.f32 %v2938, %v6033
        %6035 = vmatpush1.msra.mxu0 %v6034
        %6036 = vmatprep.subr.mxu0 0.0
        %v6037 = vand.u32 %v2939, 4294901760
        %v6038 = vsub.f32 %v2939, %v6037
        %6039 = vmatpush1.msra.mxu0 %v6038
        %6040 = vmatprep.subr.mxu0 0.0
        %v6041 = vand.u32 %v2940, 4294901760
        %v6042 = vsub.f32 %v2940, %v6041
        %6043 = vmatpush1.msra.mxu0 %v6042
        %6044 = vmatprep.subr.mxu0 0.0
        %v6045 = vand.u32 %v2941, 4294901760
        %v6046 = vsub.f32 %v2941, %v6045
        %6047 = vmatpush1.msra.mxu0 %v6046
        %6048 = vmatprep.subr.mxu0 0.0
        %v6049 = vand.u32 %v2942, 4294901760
        %v6050 = vsub.f32 %v2942, %v6049
        %6051 = vmatpush1.msra.mxu0 %v6050
        %6052 = vmatprep.subr.mxu0 0.0
        %v6053 = vand.u32 %v2943, 4294901760
        %v6054 = vsub.f32 %v2943, %v6053
        %6055 = vmatpush1.msra.mxu0 %v6054
        %6056 = vmatprep.subr.mxu0 0.0
        %v6057 = vand.u32 %v2944, 4294901760
        %v6058 = vsub.f32 %v2944, %v6057
        %6059 = vmatpush1.msra.mxu0 %v6058
        %6060 = vmatprep.subr.mxu0 0.0
        %v6061 = vand.u32 %v2945, 4294901760
        %v6062 = vsub.f32 %v2945, %v6061
        %6063 = vmatpush1.msra.mxu0 %v6062
        %6064 = vmatprep.subr.mxu0 0.0
        %v6065 = vand.u32 %v2946, 4294901760
        %v6066 = vsub.f32 %v2946, %v6065
        %6067 = vmatpush1.msra.mxu0 %v6066
        %6068 = vmatprep.subr.mxu0 0.0
        %v6069 = vand.u32 %v2947, 4294901760
        %v6070 = vsub.f32 %v2947, %v6069
        %6071 = vmatpush1.msra.mxu0 %v6070
        %6072 = vmatprep.subr.mxu0 0.0
        %v6073 = vand.u32 %v2948, 4294901760
        %v6074 = vsub.f32 %v2948, %v6073
        %6075 = vmatpush1.msra.mxu0 %v6074
        %6076 = vmatprep.subr.mxu0 0.0
        %v6077 = vand.u32 %v2949, 4294901760
        %v6078 = vsub.f32 %v2949, %v6077
        %6079 = vmatpush1.msra.mxu0 %v6078
        %6080 = vmatprep.subr.mxu0 0.0
        %v6081 = vand.u32 %v2950, 4294901760
        %v6082 = vsub.f32 %v2950, %v6081
        %6083 = vmatpush1.msra.mxu0 %v6082
        %v6084 = vand.u32 %v411, 4294901760
        %v6085 = vsub.f32 %v411, %v6084
        %6086 = vmatprep.mubr.f32.mxu0 %v6085
        %v6087 = vand.u32 %v410, 4294901760
        %v6088 = vsub.f32 %v410, %v6087
        %6089 = vmatmul.mubr.f32.gmra.mrb[0].mxu0 %v6088
        %v6090 = vpop.f32.mrb[0].mxu0
        %v6091 = vadd.f32 %v5953, %v6090
        %v6092 = vpop.f32.mrb[0].mxu0
        %6093 = vdwg.mxu0
        %6094 = vmatprep.subr.mxu0 0.0
        %v6095 = vand.u32 %v2919, 4294901760
        %6096 = vmatpush1.msra.mxu0 %v6095
        %6097 = vmatprep.subr.mxu0 0.0
        %v6098 = vand.u32 %v2920, 4294901760
        %6099 = vmatpush1.msra.mxu0 %v6098
        %6100 = vmatprep.subr.mxu0 0.0
        %v6101 = vand.u32 %v2921, 4294901760
        %6102 = vmatpush1.msra.mxu0 %v6101
        %6103 = vmatprep.subr.mxu0 0.0
        %v6104 = vand.u32 %v2922, 4294901760
        %6105 = vmatpush1.msra.mxu0 %v6104
        %6106 = vmatprep.subr.mxu0 0.0
        %v6107 = vand.u32 %v2923, 4294901760
        %6108 = vmatpush1.msra.mxu0 %v6107
        %6109 = vmatprep.subr.mxu0 0.0
        %v6110 = vand.u32 %v2924, 4294901760
        %6111 = vmatpush1.msra.mxu0 %v6110
        %6112 = vmatprep.subr.mxu0 0.0
        %v6113 = vand.u32 %v2925, 4294901760
        %6114 = vmatpush1.msra.mxu0 %v6113
        %6115 = vmatprep.subr.mxu0 0.0
        %v6116 = vand.u32 %v2926, 4294901760
        %6117 = vmatpush1.msra.mxu0 %v6116
        %6118 = vmatprep.subr.mxu0 0.0
        %v6119 = vand.u32 %v2927, 4294901760
        %6120 = vmatpush1.msra.mxu0 %v6119
        %6121 = vmatprep.subr.mxu0 0.0
        %v6122 = vand.u32 %v2928, 4294901760
        %6123 = vmatpush1.msra.mxu0 %v6122
        %6124 = vmatprep.subr.mxu0 0.0
        %v6125 = vand.u32 %v2929, 4294901760
        %6126 = vmatpush1.msra.mxu0 %v6125
        %6127 = vmatprep.subr.mxu0 0.0
        %v6128 = vand.u32 %v2930, 4294901760
        %6129 = vmatpush1.msra.mxu0 %v6128
        %6130 = vmatprep.subr.mxu0 0.0
        %v6131 = vand.u32 %v2931, 4294901760
        %6132 = vmatpush1.msra.mxu0 %v6131
        %6133 = vmatprep.subr.mxu0 0.0
        %v6134 = vand.u32 %v2932, 4294901760
        %6135 = vmatpush1.msra.mxu0 %v6134
        %6136 = vmatprep.subr.mxu0 0.0
        %v6137 = vand.u32 %v2933, 4294901760
        %6138 = vmatpush1.msra.mxu0 %v6137
        %6139 = vmatprep.subr.mxu0 0.0
        %v6140 = vand.u32 %v2934, 4294901760
        %6141 = vmatpush1.msra.mxu0 %v6140
        %6142 = vmatprep.subr.mxu0 0.0
        %v6143 = vand.u32 %v2935, 4294901760
        %6144 = vmatpush1.msra.mxu0 %v6143
        %6145 = vmatprep.subr.mxu0 0.0
        %v6146 = vand.u32 %v2936, 4294901760
        %6147 = vmatpush1.msra.mxu0 %v6146
        %6148 = vmatprep.subr.mxu0 0.0
        %v6149 = vand.u32 %v2937, 4294901760
        %6150 = vmatpush1.msra.mxu0 %v6149
        %6151 = vmatprep.subr.mxu0 0.0
        %v6152 = vand.u32 %v2938, 4294901760
        %6153 = vmatpush1.msra.mxu0 %v6152
        %6154 = vmatprep.subr.mxu0 0.0
        %v6155 = vand.u32 %v2939, 4294901760
        %6156 = vmatpush1.msra.mxu0 %v6155
        %6157 = vmatprep.subr.mxu0 0.0
        %v6158 = vand.u32 %v2940, 4294901760
        %6159 = vmatpush1.msra.mxu0 %v6158
        %6160 = vmatprep.subr.mxu0 0.0
        %v6161 = vand.u32 %v2941, 4294901760
        %6162 = vmatpush1.msra.mxu0 %v6161
        %6163 = vmatprep.subr.mxu0 0.0
        %v6164 = vand.u32 %v2942, 4294901760
        %6165 = vmatpush1.msra.mxu0 %v6164
        %6166 = vmatprep.subr.mxu0 0.0
        %v6167 = vand.u32 %v2943, 4294901760
        %6168 = vmatpush1.msra.mxu0 %v6167
        %6169 = vmatprep.subr.mxu0 0.0
        %v6170 = vand.u32 %v2944, 4294901760
        %6171 = vmatpush1.msra.mxu0 %v6170
        %6172 = vmatprep.subr.mxu0 0.0
        %v6173 = vand.u32 %v2945, 4294901760
        %6174 = vmatpush1.msra.mxu0 %v6173
        %6175 = vmatprep.subr.mxu0 0.0
        %v6176 = vand.u32 %v2946, 4294901760
        %6177 = vmatpush1.msra.mxu0 %v6176
        %6178 = vmatprep.subr.mxu0 0.0
        %v6179 = vand.u32 %v2947, 4294901760
        %6180 = vmatpush1.msra.mxu0 %v6179
        %6181 = vmatprep.subr.mxu0 0.0
        %v6182 = vand.u32 %v2948, 4294901760
        %6183 = vmatpush1.msra.mxu0 %v6182
        %6184 = vmatprep.subr.mxu0 0.0
        %v6185 = vand.u32 %v2949, 4294901760
        %6186 = vmatpush1.msra.mxu0 %v6185
        %6187 = vmatprep.subr.mxu0 0.0
        %v6188 = vand.u32 %v2950, 4294901760
        %6189 = vmatpush1.msra.mxu0 %v6188
        %v6190 = vand.u32 %v411, 4294901760
        %v6191 = vsub.f32 %v411, %v6190
        %v6192 = vand.u32 %v6191, 4294901760
        %6193 = vmatprep.mubr.f32.mxu0 %v6192
        %v6194 = vand.u32 %v410, 4294901760
        %v6195 = vsub.f32 %v410, %v6194
        %v6196 = vand.u32 %v6195, 4294901760
        %6197 = vmatmul.mubr.f32.gmra.mrb[0].mxu0 %v6196
        %v6198 = vpop.f32.mrb[0].mxu0
        %v6199 = vadd.f32 %v6091, %v6198
        %v6200 = vpop.f32.mrb[0].mxu0
        %6201 = vdwg.mxu0
        %6202 = vmatprep.subr.mxu0 0.0
        %v6203 = vand.u32 %v2919, 4294901760
        %v6204 = vsub.f32 %v2919, %v6203
        %v6205 = vand.u32 %v6204, 4294901760
        %6206 = vmatpush1.msra.mxu0 %v6205
        %6207 = vmatprep.subr.mxu0 0.0
        %v6208 = vand.u32 %v2920, 4294901760
        %v6209 = vsub.f32 %v2920, %v6208
        %v6210 = vand.u32 %v6209, 4294901760
        %6211 = vmatpush1.msra.mxu0 %v6210
        %6212 = vmatprep.subr.mxu0 0.0
        %v6213 = vand.u32 %v2921, 4294901760
        %v6214 = vsub.f32 %v2921, %v6213
        %v6215 = vand.u32 %v6214, 4294901760
        %6216 = vmatpush1.msra.mxu0 %v6215
        %6217 = vmatprep.subr.mxu0 0.0
        %v6218 = vand.u32 %v2922, 4294901760
        %v6219 = vsub.f32 %v2922, %v6218
        %v6220 = vand.u32 %v6219, 4294901760
        %6221 = vmatpush1.msra.mxu0 %v6220
        %6222 = vmatprep.subr.mxu0 0.0
        %v6223 = vand.u32 %v2923, 4294901760
        %v6224 = vsub.f32 %v2923, %v6223
        %v6225 = vand.u32 %v6224, 4294901760
        %6226 = vmatpush1.msra.mxu0 %v6225
        %6227 = vmatprep.subr.mxu0 0.0
        %v6228 = vand.u32 %v2924, 4294901760
        %v6229 = vsub.f32 %v2924, %v6228
        %v6230 = vand.u32 %v6229, 4294901760
        %6231 = vmatpush1.msra.mxu0 %v6230
        %6232 = vmatprep.subr.mxu0 0.0
        %v6233 = vand.u32 %v2925, 4294901760
        %v6234 = vsub.f32 %v2925, %v6233
        %v6235 = vand.u32 %v6234, 4294901760
        %6236 = vmatpush1.msra.mxu0 %v6235
        %6237 = vmatprep.subr.mxu0 0.0
        %v6238 = vand.u32 %v2926, 4294901760
        %v6239 = vsub.f32 %v2926, %v6238
        %v6240 = vand.u32 %v6239, 4294901760
        %6241 = vmatpush1.msra.mxu0 %v6240
        %6242 = vmatprep.subr.mxu0 0.0
        %v6243 = vand.u32 %v2927, 4294901760
        %v6244 = vsub.f32 %v2927, %v6243
        %v6245 = vand.u32 %v6244, 4294901760
        %6246 = vmatpush1.msra.mxu0 %v6245
        %6247 = vmatprep.subr.mxu0 0.0
        %v6248 = vand.u32 %v2928, 4294901760
        %v6249 = vsub.f32 %v2928, %v6248
        %v6250 = vand.u32 %v6249, 4294901760
        %6251 = vmatpush1.msra.mxu0 %v6250
        %6252 = vmatprep.subr.mxu0 0.0
        %v6253 = vand.u32 %v2929, 4294901760
        %v6254 = vsub.f32 %v2929, %v6253
        %v6255 = vand.u32 %v6254, 4294901760
        %6256 = vmatpush1.msra.mxu0 %v6255
        %6257 = vmatprep.subr.mxu0 0.0
        %v6258 = vand.u32 %v2930, 4294901760
        %v6259 = vsub.f32 %v2930, %v6258
        %v6260 = vand.u32 %v6259, 4294901760
        %6261 = vmatpush1.msra.mxu0 %v6260
        %6262 = vmatprep.subr.mxu0 0.0
        %v6263 = vand.u32 %v2931, 4294901760
        %v6264 = vsub.f32 %v2931, %v6263
        %v6265 = vand.u32 %v6264, 4294901760
        %6266 = vmatpush1.msra.mxu0 %v6265
        %6267 = vmatprep.subr.mxu0 0.0
        %v6268 = vand.u32 %v2932, 4294901760
        %v6269 = vsub.f32 %v2932, %v6268
        %v6270 = vand.u32 %v6269, 4294901760
        %6271 = vmatpush1.msra.mxu0 %v6270
        %6272 = vmatprep.subr.mxu0 0.0
        %v6273 = vand.u32 %v2933, 4294901760
        %v6274 = vsub.f32 %v2933, %v6273
        %v6275 = vand.u32 %v6274, 4294901760
        %6276 = vmatpush1.msra.mxu0 %v6275
        %6277 = vmatprep.subr.mxu0 0.0
        %v6278 = vand.u32 %v2934, 4294901760
        %v6279 = vsub.f32 %v2934, %v6278
        %v6280 = vand.u32 %v6279, 4294901760
        %6281 = vmatpush1.msra.mxu0 %v6280
        %6282 = vmatprep.subr.mxu0 0.0
        %v6283 = vand.u32 %v2935, 4294901760
        %v6284 = vsub.f32 %v2935, %v6283
        %v6285 = vand.u32 %v6284, 4294901760
        %6286 = vmatpush1.msra.mxu0 %v6285
        %6287 = vmatprep.subr.mxu0 0.0
        %v6288 = vand.u32 %v2936, 4294901760
        %v6289 = vsub.f32 %v2936, %v6288
        %v6290 = vand.u32 %v6289, 4294901760
        %6291 = vmatpush1.msra.mxu0 %v6290
        %6292 = vmatprep.subr.mxu0 0.0
        %v6293 = vand.u32 %v2937, 4294901760
        %v6294 = vsub.f32 %v2937, %v6293
        %v6295 = vand.u32 %v6294, 4294901760
        %6296 = vmatpush1.msra.mxu0 %v6295
        %6297 = vmatprep.subr.mxu0 0.0
        %v6298 = vand.u32 %v2938, 4294901760
        %v6299 = vsub.f32 %v2938, %v6298
        %v6300 = vand.u32 %v6299, 4294901760
        %6301 = vmatpush1.msra.mxu0 %v6300
        %6302 = vmatprep.subr.mxu0 0.0
        %v6303 = vand.u32 %v2939, 4294901760
        %v6304 = vsub.f32 %v2939, %v6303
        %v6305 = vand.u32 %v6304, 4294901760
        %6306 = vmatpush1.msra.mxu0 %v6305
        %6307 = vmatprep.subr.mxu0 0.0
        %v6308 = vand.u32 %v2940, 4294901760
        %v6309 = vsub.f32 %v2940, %v6308
        %v6310 = vand.u32 %v6309, 4294901760
        %6311 = vmatpush1.msra.mxu0 %v6310
        %6312 = vmatprep.subr.mxu0 0.0
        %v6313 = vand.u32 %v2941, 4294901760
        %v6314 = vsub.f32 %v2941, %v6313
        %v6315 = vand.u32 %v6314, 4294901760
        %6316 = vmatpush1.msra.mxu0 %v6315
        %6317 = vmatprep.subr.mxu0 0.0
        %v6318 = vand.u32 %v2942, 4294901760
        %v6319 = vsub.f32 %v2942, %v6318
        %v6320 = vand.u32 %v6319, 4294901760
        %6321 = vmatpush1.msra.mxu0 %v6320
        %6322 = vmatprep.subr.mxu0 0.0
        %v6323 = vand.u32 %v2943, 4294901760
        %v6324 = vsub.f32 %v2943, %v6323
        %v6325 = vand.u32 %v6324, 4294901760
        %6326 = vmatpush1.msra.mxu0 %v6325
        %6327 = vmatprep.subr.mxu0 0.0
        %v6328 = vand.u32 %v2944, 4294901760
        %v6329 = vsub.f32 %v2944, %v6328
        %v6330 = vand.u32 %v6329, 4294901760
        %6331 = vmatpush1.msra.mxu0 %v6330
        %6332 = vmatprep.subr.mxu0 0.0
        %v6333 = vand.u32 %v2945, 4294901760
        %v6334 = vsub.f32 %v2945, %v6333
        %v6335 = vand.u32 %v6334, 4294901760
        %6336 = vmatpush1.msra.mxu0 %v6335
        %6337 = vmatprep.subr.mxu0 0.0
        %v6338 = vand.u32 %v2946, 4294901760
        %v6339 = vsub.f32 %v2946, %v6338
        %v6340 = vand.u32 %v6339, 4294901760
        %6341 = vmatpush1.msra.mxu0 %v6340
        %6342 = vmatprep.subr.mxu0 0.0
        %v6343 = vand.u32 %v2947, 4294901760
        %v6344 = vsub.f32 %v2947, %v6343
        %v6345 = vand.u32 %v6344, 4294901760
        %6346 = vmatpush1.msra.mxu0 %v6345
        %6347 = vmatprep.subr.mxu0 0.0
        %v6348 = vand.u32 %v2948, 4294901760
        %v6349 = vsub.f32 %v2948, %v6348
        %v6350 = vand.u32 %v6349, 4294901760
        %6351 = vmatpush1.msra.mxu0 %v6350
        %6352 = vmatprep.subr.mxu0 0.0
        %v6353 = vand.u32 %v2949, 4294901760
        %v6354 = vsub.f32 %v2949, %v6353
        %v6355 = vand.u32 %v6354, 4294901760
        %6356 = vmatpush1.msra.mxu0 %v6355
        %6357 = vmatprep.subr.mxu0 0.0
        %v6358 = vand.u32 %v2950, 4294901760
        %v6359 = vsub.f32 %v2950, %v6358
        %v6360 = vand.u32 %v6359, 4294901760
        %6361 = vmatpush1.msra.mxu0 %v6360
        %v6362 = vand.u32 %v411, 4294901760
        %6363 = vmatprep.mubr.f32.mxu0 %v6362
        %v6364 = vand.u32 %v410, 4294901760
        %6365 = vmatmul.mubr.f32.gmra.mrb[0].mxu0 %v6364
        %v6366 = vpop.f32.mrb[0].mxu0
        %v6367 = vadd.f32 %v6199, %v6366
        %v6368 = vpop.f32.mrb[0].mxu0
        %6369 = vdwg.mxu0
        %6370 = vmatprep.subr.mxu0 0.0
        %v6371 = vand.u32 %v2919, 4294901760
        %6372 = vmatpush1.msra.mxu0 %v6371
        %6373 = vmatprep.subr.mxu0 0.0
        %v6374 = vand.u32 %v2920, 4294901760
        %6375 = vmatpush1.msra.mxu0 %v6374
        %6376 = vmatprep.subr.mxu0 0.0
        %v6377 = vand.u32 %v2921, 4294901760
        %6378 = vmatpush1.msra.mxu0 %v6377
        %6379 = vmatprep.subr.mxu0 0.0
        %v6380 = vand.u32 %v2922, 4294901760
        %6381 = vmatpush1.msra.mxu0 %v6380
        %6382 = vmatprep.subr.mxu0 0.0
        %v6383 = vand.u32 %v2923, 4294901760
        %6384 = vmatpush1.msra.mxu0 %v6383
        %6385 = vmatprep.subr.mxu0 0.0
        %v6386 = vand.u32 %v2924, 4294901760
        %6387 = vmatpush1.msra.mxu0 %v6386
        %6388 = vmatprep.subr.mxu0 0.0
        %v6389 = vand.u32 %v2925, 4294901760
        %6390 = vmatpush1.msra.mxu0 %v6389
        %6391 = vmatprep.subr.mxu0 0.0
        %v6392 = vand.u32 %v2926, 4294901760
        %6393 = vmatpush1.msra.mxu0 %v6392
        %6394 = vmatprep.subr.mxu0 0.0
        %v6395 = vand.u32 %v2927, 4294901760
        %6396 = vmatpush1.msra.mxu0 %v6395
        %6397 = vmatprep.subr.mxu0 0.0
        %v6398 = vand.u32 %v2928, 4294901760
        %6399 = vmatpush1.msra.mxu0 %v6398
        %6400 = vmatprep.subr.mxu0 0.0
        %v6401 = vand.u32 %v2929, 4294901760
        %6402 = vmatpush1.msra.mxu0 %v6401
        %6403 = vmatprep.subr.mxu0 0.0
        %v6404 = vand.u32 %v2930, 4294901760
        %6405 = vmatpush1.msra.mxu0 %v6404
        %6406 = vmatprep.subr.mxu0 0.0
        %v6407 = vand.u32 %v2931, 4294901760
        %6408 = vmatpush1.msra.mxu0 %v6407
        %6409 = vmatprep.subr.mxu0 0.0
        %v6410 = vand.u32 %v2932, 4294901760
        %6411 = vmatpush1.msra.mxu0 %v6410
        %6412 = vmatprep.subr.mxu0 0.0
        %v6413 = vand.u32 %v2933, 4294901760
        %6414 = vmatpush1.msra.mxu0 %v6413
        %6415 = vmatprep.subr.mxu0 0.0
        %v6416 = vand.u32 %v2934, 4294901760
        %6417 = vmatpush1.msra.mxu0 %v6416
        %6418 = vmatprep.subr.mxu0 0.0
        %v6419 = vand.u32 %v2935, 4294901760
        %6420 = vmatpush1.msra.mxu0 %v6419
        %6421 = vmatprep.subr.mxu0 0.0
        %v6422 = vand.u32 %v2936, 4294901760
        %6423 = vmatpush1.msra.mxu0 %v6422
        %6424 = vmatprep.subr.mxu0 0.0
        %v6425 = vand.u32 %v2937, 4294901760
        %6426 = vmatpush1.msra.mxu0 %v6425
        %6427 = vmatprep.subr.mxu0 0.0
        %v6428 = vand.u32 %v2938, 4294901760
        %6429 = vmatpush1.msra.mxu0 %v6428
        %6430 = vmatprep.subr.mxu0 0.0
        %v6431 = vand.u32 %v2939, 4294901760
        %6432 = vmatpush1.msra.mxu0 %v6431
        %6433 = vmatprep.subr.mxu0 0.0
        %v6434 = vand.u32 %v2940, 4294901760
        %6435 = vmatpush1.msra.mxu0 %v6434
        %6436 = vmatprep.subr.mxu0 0.0
        %v6437 = vand.u32 %v2941, 4294901760
        %6438 = vmatpush1.msra.mxu0 %v6437
        %6439 = vmatprep.subr.mxu0 0.0
        %v6440 = vand.u32 %v2942, 4294901760
        %6441 = vmatpush1.msra.mxu0 %v6440
        %6442 = vmatprep.subr.mxu0 0.0
        %v6443 = vand.u32 %v2943, 4294901760
        %6444 = vmatpush1.msra.mxu0 %v6443
        %6445 = vmatprep.subr.mxu0 0.0
        %v6446 = vand.u32 %v2944, 4294901760
        %6447 = vmatpush1.msra.mxu0 %v6446
        %6448 = vmatprep.subr.mxu0 0.0
        %v6449 = vand.u32 %v2945, 4294901760
        %6450 = vmatpush1.msra.mxu0 %v6449
        %6451 = vmatprep.subr.mxu0 0.0
        %v6452 = vand.u32 %v2946, 4294901760
        %6453 = vmatpush1.msra.mxu0 %v6452
        %6454 = vmatprep.subr.mxu0 0.0
        %v6455 = vand.u32 %v2947, 4294901760
        %6456 = vmatpush1.msra.mxu0 %v6455
        %6457 = vmatprep.subr.mxu0 0.0
        %v6458 = vand.u32 %v2948, 4294901760
        %6459 = vmatpush1.msra.mxu0 %v6458
        %6460 = vmatprep.subr.mxu0 0.0
        %v6461 = vand.u32 %v2949, 4294901760
        %6462 = vmatpush1.msra.mxu0 %v6461
        %6463 = vmatprep.subr.mxu0 0.0
        %v6464 = vand.u32 %v2950, 4294901760
        %6465 = vmatpush1.msra.mxu0 %v6464
        %v6466 = vand.u32 %v411, 4294901760
        %6467 = vmatprep.mubr.f32.mxu0 %v6466
        %v6468 = vand.u32 %v410, 4294901760
        %6469 = vmatmul.mubr.f32.gmra.mrb[0].mxu0 %v6468
        %v6470 = vpop.f32.mrb[0].mxu0
        %v6471 = vadd.f32 %v6367, %v6470
        %v6472 = vpop.f32.mrb[0].mxu0
        %6473 = vdwg.mxu0
        %6474 = vmatprep.subr.mxu0 0.0
        %v6475 = vand.u32 %v2951, 4294901760
        %6476 = vmatpush1.msra.mxu0 %v6475
        %6477 = vmatprep.subr.mxu0 0.0
        %v6478 = vand.u32 %v2952, 4294901760
        %6479 = vmatpush1.msra.mxu0 %v6478
        %6480 = vmatprep.subr.mxu0 0.0
        %v6481 = vand.u32 %v2953, 4294901760
        %6482 = vmatpush1.msra.mxu0 %v6481
        %6483 = vmatprep.subr.mxu0 0.0
        %v6484 = vand.u32 %v2954, 4294901760
        %6485 = vmatpush1.msra.mxu0 %v6484
        %6486 = vmatprep.subr.mxu0 0.0
        %v6487 = vand.u32 %v2955, 4294901760
        %6488 = vmatpush1.msra.mxu0 %v6487
        %6489 = vmatprep.subr.mxu0 0.0
        %v6490 = vand.u32 %v2956, 4294901760
        %6491 = vmatpush1.msra.mxu0 %v6490
        %6492 = vmatprep.subr.mxu0 0.0
        %v6493 = vand.u32 %v2957, 4294901760
        %6494 = vmatpush1.msra.mxu0 %v6493
        %6495 = vmatprep.subr.mxu0 0.0
        %v6496 = vand.u32 %v2958, 4294901760
        %6497 = vmatpush1.msra.mxu0 %v6496
        %6498 = vmatprep.subr.mxu0 0.0
        %v6499 = vand.u32 %v2959, 4294901760
        %6500 = vmatpush1.msra.mxu0 %v6499
        %6501 = vmatprep.subr.mxu0 0.0
        %v6502 = vand.u32 %v2960, 4294901760
        %6503 = vmatpush1.msra.mxu0 %v6502
        %6504 = vmatprep.subr.mxu0 0.0
        %v6505 = vand.u32 %v2961, 4294901760
        %6506 = vmatpush1.msra.mxu0 %v6505
        %6507 = vmatprep.subr.mxu0 0.0
        %v6508 = vand.u32 %v2962, 4294901760
        %6509 = vmatpush1.msra.mxu0 %v6508
        %6510 = vmatprep.subr.mxu0 0.0
        %v6511 = vand.u32 %v2963, 4294901760
        %6512 = vmatpush1.msra.mxu0 %v6511
        %6513 = vmatprep.subr.mxu0 0.0
        %v6514 = vand.u32 %v2964, 4294901760
        %6515 = vmatpush1.msra.mxu0 %v6514
        %6516 = vmatprep.subr.mxu0 0.0
        %v6517 = vand.u32 %v2965, 4294901760
        %6518 = vmatpush1.msra.mxu0 %v6517
        %6519 = vmatprep.subr.mxu0 0.0
        %v6520 = vand.u32 %v2966, 4294901760
        %6521 = vmatpush1.msra.mxu0 %v6520
        %6522 = vmatprep.subr.mxu0 0.0
        %v6523 = vand.u32 %v2967, 4294901760
        %6524 = vmatpush1.msra.mxu0 %v6523
        %6525 = vmatprep.subr.mxu0 0.0
        %v6526 = vand.u32 %v2968, 4294901760
        %6527 = vmatpush1.msra.mxu0 %v6526
        %6528 = vmatprep.subr.mxu0 0.0
        %v6529 = vand.u32 %v2969, 4294901760
        %6530 = vmatpush1.msra.mxu0 %v6529
        %6531 = vmatprep.subr.mxu0 0.0
        %v6532 = vand.u32 %v2970, 4294901760
        %6533 = vmatpush1.msra.mxu0 %v6532
        %6534 = vmatprep.subr.mxu0 0.0
        %v6535 = vand.u32 %v2971, 4294901760
        %6536 = vmatpush1.msra.mxu0 %v6535
        %6537 = vmatprep.subr.mxu0 0.0
        %v6538 = vand.u32 %v2972, 4294901760
        %6539 = vmatpush1.msra.mxu0 %v6538
        %6540 = vmatprep.subr.mxu0 0.0
        %v6541 = vand.u32 %v2973, 4294901760
        %6542 = vmatpush1.msra.mxu0 %v6541
        %6543 = vmatprep.subr.mxu0 0.0
        %v6544 = vand.u32 %v2974, 4294901760
        %6545 = vmatpush1.msra.mxu0 %v6544
        %6546 = vmatprep.subr.mxu0 0.0
        %v6547 = vand.u32 %v2975, 4294901760
        %6548 = vmatpush1.msra.mxu0 %v6547
        %6549 = vmatprep.subr.mxu0 0.0
        %v6550 = vand.u32 %v2976, 4294901760
        %6551 = vmatpush1.msra.mxu0 %v6550
        %6552 = vmatprep.subr.mxu0 0.0
        %v6553 = vand.u32 %v2977, 4294901760
        %6554 = vmatpush1.msra.mxu0 %v6553
        %6555 = vmatprep.subr.mxu0 0.0
        %v6556 = vand.u32 %v2978, 4294901760
        %6557 = vmatpush1.msra.mxu0 %v6556
        %6558 = vmatprep.subr.mxu0 0.0
        %v6559 = vand.u32 %v2979, 4294901760
        %6560 = vmatpush1.msra.mxu0 %v6559
        %6561 = vmatprep.subr.mxu0 0.0
        %v6562 = vand.u32 %v2980, 4294901760
        %6563 = vmatpush1.msra.mxu0 %v6562
        %6564 = vmatprep.subr.mxu0 0.0
        %v6565 = vand.u32 %v2981, 4294901760
        %6566 = vmatpush1.msra.mxu0 %v6565
        %6567 = vmatprep.subr.mxu0 0.0
        %v6568 = vand.u32 %v2982, 4294901760
        %6569 = vmatpush1.msra.mxu0 %v6568
        %v6570 = vand.u32 %v413, 4294901760
        %v6571 = vsub.f32 %v413, %v6570
        %v6572 = vand.u32 %v6571, 4294901760
        %v6573 = vsub.f32 %v6571, %v6572
        %v6574 = vand.u32 %v6573, 4294901760
        %6575 = vmatprep.mubr.f32.mxu0 %v6574
        %v6576 = vand.u32 %v412, 4294901760
        %v6577 = vsub.f32 %v412, %v6576
        %v6578 = vand.u32 %v6577, 4294901760
        %v6579 = vsub.f32 %v6577, %v6578
        %v6580 = vand.u32 %v6579, 4294901760
        %6581 = vmatmul.mubr.f32.gmra.mrb[0].mxu0 %v6580
        %v6582 = vpop.f32.mrb[0].mxu0
        %v6583 = vadd.f32 %v6471, %v6582
        %v6584 = vpop.f32.mrb[0].mxu0
        %6585 = vdwg.mxu0
        %6586 = vmatprep.subr.mxu0 0.0
        %v6587 = vand.u32 %v2951, 4294901760
        %v6588 = vsub.f32 %v2951, %v6587
        %v6589 = vand.u32 %v6588, 4294901760
        %v6590 = vsub.f32 %v6588, %v6589
        %v6591 = vand.u32 %v6590, 4294901760
        %6592 = vmatpush1.msra.mxu0 %v6591
        %6593 = vmatprep.subr.mxu0 0.0
        %v6594 = vand.u32 %v2952, 4294901760
        %v6595 = vsub.f32 %v2952, %v6594
        %v6596 = vand.u32 %v6595, 4294901760
        %v6597 = vsub.f32 %v6595, %v6596
        %v6598 = vand.u32 %v6597, 4294901760
        %6599 = vmatpush1.msra.mxu0 %v6598
        %6600 = vmatprep.subr.mxu0 0.0
        %v6601 = vand.u32 %v2953, 4294901760
        %v6602 = vsub.f32 %v2953, %v6601
        %v6603 = vand.u32 %v6602, 4294901760
        %v6604 = vsub.f32 %v6602, %v6603
        %v6605 = vand.u32 %v6604, 4294901760
        %6606 = vmatpush1.msra.mxu0 %v6605
        %6607 = vmatprep.subr.mxu0 0.0
        %v6608 = vand.u32 %v2954, 4294901760
        %v6609 = vsub.f32 %v2954, %v6608
        %v6610 = vand.u32 %v6609, 4294901760
        %v6611 = vsub.f32 %v6609, %v6610
        %v6612 = vand.u32 %v6611, 4294901760
        %6613 = vmatpush1.msra.mxu0 %v6612
        %6614 = vmatprep.subr.mxu0 0.0
        %v6615 = vand.u32 %v2955, 4294901760
        %v6616 = vsub.f32 %v2955, %v6615
        %v6617 = vand.u32 %v6616, 4294901760
        %v6618 = vsub.f32 %v6616, %v6617
        %v6619 = vand.u32 %v6618, 4294901760
        %6620 = vmatpush1.msra.mxu0 %v6619
        %6621 = vmatprep.subr.mxu0 0.0
        %v6622 = vand.u32 %v2956, 4294901760
        %v6623 = vsub.f32 %v2956, %v6622
        %v6624 = vand.u32 %v6623, 4294901760
        %v6625 = vsub.f32 %v6623, %v6624
        %v6626 = vand.u32 %v6625, 4294901760
        %6627 = vmatpush1.msra.mxu0 %v6626
        %6628 = vmatprep.subr.mxu0 0.0
        %v6629 = vand.u32 %v2957, 4294901760
        %v6630 = vsub.f32 %v2957, %v6629
        %v6631 = vand.u32 %v6630, 4294901760
        %v6632 = vsub.f32 %v6630, %v6631
        %v6633 = vand.u32 %v6632, 4294901760
        %6634 = vmatpush1.msra.mxu0 %v6633
        %6635 = vmatprep.subr.mxu0 0.0
        %v6636 = vand.u32 %v2958, 4294901760
        %v6637 = vsub.f32 %v2958, %v6636
        %v6638 = vand.u32 %v6637, 4294901760
        %v6639 = vsub.f32 %v6637, %v6638
        %v6640 = vand.u32 %v6639, 4294901760
        %6641 = vmatpush1.msra.mxu0 %v6640
        %6642 = vmatprep.subr.mxu0 0.0
        %v6643 = vand.u32 %v2959, 4294901760
        %v6644 = vsub.f32 %v2959, %v6643
        %v6645 = vand.u32 %v6644, 4294901760
        %v6646 = vsub.f32 %v6644, %v6645
        %v6647 = vand.u32 %v6646, 4294901760
        %6648 = vmatpush1.msra.mxu0 %v6647
        %6649 = vmatprep.subr.mxu0 0.0
        %v6650 = vand.u32 %v2960, 4294901760
        %v6651 = vsub.f32 %v2960, %v6650
        %v6652 = vand.u32 %v6651, 4294901760
        %v6653 = vsub.f32 %v6651, %v6652
        %v6654 = vand.u32 %v6653, 4294901760
        %6655 = vmatpush1.msra.mxu0 %v6654
        %6656 = vmatprep.subr.mxu0 0.0
        %v6657 = vand.u32 %v2961, 4294901760
        %v6658 = vsub.f32 %v2961, %v6657
        %v6659 = vand.u32 %v6658, 4294901760
        %v6660 = vsub.f32 %v6658, %v6659
        %v6661 = vand.u32 %v6660, 4294901760
        %6662 = vmatpush1.msra.mxu0 %v6661
        %6663 = vmatprep.subr.mxu0 0.0
        %v6664 = vand.u32 %v2962, 4294901760
        %v6665 = vsub.f32 %v2962, %v6664
        %v6666 = vand.u32 %v6665, 4294901760
        %v6667 = vsub.f32 %v6665, %v6666
        %v6668 = vand.u32 %v6667, 4294901760
        %6669 = vmatpush1.msra.mxu0 %v6668
        %6670 = vmatprep.subr.mxu0 0.0
        %v6671 = vand.u32 %v2963, 4294901760
        %v6672 = vsub.f32 %v2963, %v6671
        %v6673 = vand.u32 %v6672, 4294901760
        %v6674 = vsub.f32 %v6672, %v6673
        %v6675 = vand.u32 %v6674, 4294901760
        %6676 = vmatpush1.msra.mxu0 %v6675
        %6677 = vmatprep.subr.mxu0 0.0
        %v6678 = vand.u32 %v2964, 4294901760
        %v6679 = vsub.f32 %v2964, %v6678
        %v6680 = vand.u32 %v6679, 4294901760
        %v6681 = vsub.f32 %v6679, %v6680
        %v6682 = vand.u32 %v6681, 4294901760
        %6683 = vmatpush1.msra.mxu0 %v6682
        %6684 = vmatprep.subr.mxu0 0.0
        %v6685 = vand.u32 %v2965, 4294901760
        %v6686 = vsub.f32 %v2965, %v6685
        %v6687 = vand.u32 %v6686, 4294901760
        %v6688 = vsub.f32 %v6686, %v6687
        %v6689 = vand.u32 %v6688, 4294901760
        %6690 = vmatpush1.msra.mxu0 %v6689
        %6691 = vmatprep.subr.mxu0 0.0
        %v6692 = vand.u32 %v2966, 4294901760
        %v6693 = vsub.f32 %v2966, %v6692
        %v6694 = vand.u32 %v6693, 4294901760
        %v6695 = vsub.f32 %v6693, %v6694
        %v6696 = vand.u32 %v6695, 4294901760
        %6697 = vmatpush1.msra.mxu0 %v6696
        %6698 = vmatprep.subr.mxu0 0.0
        %v6699 = vand.u32 %v2967, 4294901760
        %v6700 = vsub.f32 %v2967, %v6699
        %v6701 = vand.u32 %v6700, 4294901760
        %v6702 = vsub.f32 %v6700, %v6701
        %v6703 = vand.u32 %v6702, 4294901760
        %6704 = vmatpush1.msra.mxu0 %v6703
        %6705 = vmatprep.subr.mxu0 0.0
        %v6706 = vand.u32 %v2968, 4294901760
        %v6707 = vsub.f32 %v2968, %v6706
        %v6708 = vand.u32 %v6707, 4294901760
        %v6709 = vsub.f32 %v6707, %v6708
        %v6710 = vand.u32 %v6709, 4294901760
        %6711 = vmatpush1.msra.mxu0 %v6710
        %6712 = vmatprep.subr.mxu0 0.0
        %v6713 = vand.u32 %v2969, 4294901760
        %v6714 = vsub.f32 %v2969, %v6713
        %v6715 = vand.u32 %v6714, 4294901760
        %v6716 = vsub.f32 %v6714, %v6715
        %v6717 = vand.u32 %v6716, 4294901760
        %6718 = vmatpush1.msra.mxu0 %v6717
        %6719 = vmatprep.subr.mxu0 0.0
        %v6720 = vand.u32 %v2970, 4294901760
        %v6721 = vsub.f32 %v2970, %v6720
        %v6722 = vand.u32 %v6721, 4294901760
        %v6723 = vsub.f32 %v6721, %v6722
        %v6724 = vand.u32 %v6723, 4294901760
        %6725 = vmatpush1.msra.mxu0 %v6724
        %6726 = vmatprep.subr.mxu0 0.0
        %v6727 = vand.u32 %v2971, 4294901760
        %v6728 = vsub.f32 %v2971, %v6727
        %v6729 = vand.u32 %v6728, 4294901760
        %v6730 = vsub.f32 %v6728, %v6729
        %v6731 = vand.u32 %v6730, 4294901760
        %6732 = vmatpush1.msra.mxu0 %v6731
        %6733 = vmatprep.subr.mxu0 0.0
        %v6734 = vand.u32 %v2972, 4294901760
        %v6735 = vsub.f32 %v2972, %v6734
        %v6736 = vand.u32 %v6735, 4294901760
        %v6737 = vsub.f32 %v6735, %v6736
        %v6738 = vand.u32 %v6737, 4294901760
        %6739 = vmatpush1.msra.mxu0 %v6738
        %6740 = vmatprep.subr.mxu0 0.0
        %v6741 = vand.u32 %v2973, 4294901760
        %v6742 = vsub.f32 %v2973, %v6741
        %v6743 = vand.u32 %v6742, 4294901760
        %v6744 = vsub.f32 %v6742, %v6743
        %v6745 = vand.u32 %v6744, 4294901760
        %6746 = vmatpush1.msra.mxu0 %v6745
        %6747 = vmatprep.subr.mxu0 0.0
        %v6748 = vand.u32 %v2974, 4294901760
        %v6749 = vsub.f32 %v2974, %v6748
        %v6750 = vand.u32 %v6749, 4294901760
        %v6751 = vsub.f32 %v6749, %v6750
        %v6752 = vand.u32 %v6751, 4294901760
        %6753 = vmatpush1.msra.mxu0 %v6752
        %6754 = vmatprep.subr.mxu0 0.0
        %v6755 = vand.u32 %v2975, 4294901760
        %v6756 = vsub.f32 %v2975, %v6755
        %v6757 = vand.u32 %v6756, 4294901760
        %v6758 = vsub.f32 %v6756, %v6757
        %v6759 = vand.u32 %v6758, 4294901760
        %6760 = vmatpush1.msra.mxu0 %v6759
        %6761 = vmatprep.subr.mxu0 0.0
        %v6762 = vand.u32 %v2976, 4294901760
        %v6763 = vsub.f32 %v2976, %v6762
        %v6764 = vand.u32 %v6763, 4294901760
        %v6765 = vsub.f32 %v6763, %v6764
        %v6766 = vand.u32 %v6765, 4294901760
        %6767 = vmatpush1.msra.mxu0 %v6766
        %6768 = vmatprep.subr.mxu0 0.0
        %v6769 = vand.u32 %v2977, 4294901760
        %v6770 = vsub.f32 %v2977, %v6769
        %v6771 = vand.u32 %v6770, 4294901760
        %v6772 = vsub.f32 %v6770, %v6771
        %v6773 = vand.u32 %v6772, 4294901760
        %6774 = vmatpush1.msra.mxu0 %v6773
        %6775 = vmatprep.subr.mxu0 0.0
        %v6776 = vand.u32 %v2978, 4294901760
        %v6777 = vsub.f32 %v2978, %v6776
        %v6778 = vand.u32 %v6777, 4294901760
        %v6779 = vsub.f32 %v6777, %v6778
        %v6780 = vand.u32 %v6779, 4294901760
        %6781 = vmatpush1.msra.mxu0 %v6780
        %6782 = vmatprep.subr.mxu0 0.0
        %v6783 = vand.u32 %v2979, 4294901760
        %v6784 = vsub.f32 %v2979, %v6783
        %v6785 = vand.u32 %v6784, 4294901760
        %v6786 = vsub.f32 %v6784, %v6785
        %v6787 = vand.u32 %v6786, 4294901760
        %6788 = vmatpush1.msra.mxu0 %v6787
        %6789 = vmatprep.subr.mxu0 0.0
        %v6790 = vand.u32 %v2980, 4294901760
        %v6791 = vsub.f32 %v2980, %v6790
        %v6792 = vand.u32 %v6791, 4294901760
        %v6793 = vsub.f32 %v6791, %v6792
        %v6794 = vand.u32 %v6793, 4294901760
        %6795 = vmatpush1.msra.mxu0 %v6794
        %6796 = vmatprep.subr.mxu0 0.0
        %v6797 = vand.u32 %v2981, 4294901760
        %v6798 = vsub.f32 %v2981, %v6797
        %v6799 = vand.u32 %v6798, 4294901760
        %v6800 = vsub.f32 %v6798, %v6799
        %v6801 = vand.u32 %v6800, 4294901760
        %6802 = vmatpush1.msra.mxu0 %v6801
        %6803 = vmatprep.subr.mxu0 0.0
        %v6804 = vand.u32 %v2982, 4294901760
        %v6805 = vsub.f32 %v2982, %v6804
        %v6806 = vand.u32 %v6805, 4294901760
        %v6807 = vsub.f32 %v6805, %v6806
        %v6808 = vand.u32 %v6807, 4294901760
        %6809 = vmatpush1.msra.mxu0 %v6808
        %v6810 = vand.u32 %v413, 4294901760
        %6811 = vmatprep.mubr.f32.mxu0 %v6810
        %v6812 = vand.u32 %v412, 4294901760
        %6813 = vmatmul.mubr.f32.gmra.mrb[0].mxu0 %v6812
        %v6814 = vpop.f32.mrb[0].mxu0
        %v6815 = vadd.f32 %v6583, %v6814
        %v6816 = vpop.f32.mrb[0].mxu0
        %6817 = vdwg.mxu0
        %6818 = vmatprep.subr.mxu0 0.0
        %v6819 = vand.u32 %v2951, 4294901760
        %v6820 = vsub.f32 %v2951, %v6819
        %6821 = vmatpush1.msra.mxu0 %v6820
        %6822 = vmatprep.subr.mxu0 0.0
        %v6823 = vand.u32 %v2952, 4294901760
        %v6824 = vsub.f32 %v2952, %v6823
        %6825 = vmatpush1.msra.mxu0 %v6824
        %6826 = vmatprep.subr.mxu0 0.0
        %v6827 = vand.u32 %v2953, 4294901760
        %v6828 = vsub.f32 %v2953, %v6827
        %6829 = vmatpush1.msra.mxu0 %v6828
        %6830 = vmatprep.subr.mxu0 0.0
        %v6831 = vand.u32 %v2954, 4294901760
        %v6832 = vsub.f32 %v2954, %v6831
        %6833 = vmatpush1.msra.mxu0 %v6832
        %6834 = vmatprep.subr.mxu0 0.0
        %v6835 = vand.u32 %v2955, 4294901760
        %v6836 = vsub.f32 %v2955, %v6835
        %6837 = vmatpush1.msra.mxu0 %v6836
        %6838 = vmatprep.subr.mxu0 0.0
        %v6839 = vand.u32 %v2956, 4294901760
        %v6840 = vsub.f32 %v2956, %v6839
        %6841 = vmatpush1.msra.mxu0 %v6840
        %6842 = vmatprep.subr.mxu0 0.0
        %v6843 = vand.u32 %v2957, 4294901760
        %v6844 = vsub.f32 %v2957, %v6843
        %6845 = vmatpush1.msra.mxu0 %v6844
        %6846 = vmatprep.subr.mxu0 0.0
        %v6847 = vand.u32 %v2958, 4294901760
        %v6848 = vsub.f32 %v2958, %v6847
        %6849 = vmatpush1.msra.mxu0 %v6848
        %6850 = vmatprep.subr.mxu0 0.0
        %v6851 = vand.u32 %v2959, 4294901760
        %v6852 = vsub.f32 %v2959, %v6851
        %6853 = vmatpush1.msra.mxu0 %v6852
        %6854 = vmatprep.subr.mxu0 0.0
        %v6855 = vand.u32 %v2960, 4294901760
        %v6856 = vsub.f32 %v2960, %v6855
        %6857 = vmatpush1.msra.mxu0 %v6856
        %6858 = vmatprep.subr.mxu0 0.0
        %v6859 = vand.u32 %v2961, 4294901760
        %v6860 = vsub.f32 %v2961, %v6859
        %6861 = vmatpush1.msra.mxu0 %v6860
        %6862 = vmatprep.subr.mxu0 0.0
        %v6863 = vand.u32 %v2962, 4294901760
        %v6864 = vsub.f32 %v2962, %v6863
        %6865 = vmatpush1.msra.mxu0 %v6864
        %6866 = vmatprep.subr.mxu0 0.0
        %v6867 = vand.u32 %v2963, 4294901760
        %v6868 = vsub.f32 %v2963, %v6867
        %6869 = vmatpush1.msra.mxu0 %v6868
        %6870 = vmatprep.subr.mxu0 0.0
        %v6871 = vand.u32 %v2964, 4294901760
        %v6872 = vsub.f32 %v2964, %v6871
        %6873 = vmatpush1.msra.mxu0 %v6872
        %6874 = vmatprep.subr.mxu0 0.0
        %v6875 = vand.u32 %v2965, 4294901760
        %v6876 = vsub.f32 %v2965, %v6875
        %6877 = vmatpush1.msra.mxu0 %v6876
        %6878 = vmatprep.subr.mxu0 0.0
        %v6879 = vand.u32 %v2966, 4294901760
        %v6880 = vsub.f32 %v2966, %v6879
        %6881 = vmatpush1.msra.mxu0 %v6880
        %6882 = vmatprep.subr.mxu0 0.0
        %v6883 = vand.u32 %v2967, 4294901760
        %v6884 = vsub.f32 %v2967, %v6883
        %6885 = vmatpush1.msra.mxu0 %v6884
        %6886 = vmatprep.subr.mxu0 0.0
        %v6887 = vand.u32 %v2968, 4294901760
        %v6888 = vsub.f32 %v2968, %v6887
        %6889 = vmatpush1.msra.mxu0 %v6888
        %6890 = vmatprep.subr.mxu0 0.0
        %v6891 = vand.u32 %v2969, 4294901760
        %v6892 = vsub.f32 %v2969, %v6891
        %6893 = vmatpush1.msra.mxu0 %v6892
        %6894 = vmatprep.subr.mxu0 0.0
        %v6895 = vand.u32 %v2970, 4294901760
        %v6896 = vsub.f32 %v2970, %v6895
        %6897 = vmatpush1.msra.mxu0 %v6896
        %6898 = vmatprep.subr.mxu0 0.0
        %v6899 = vand.u32 %v2971, 4294901760
        %v6900 = vsub.f32 %v2971, %v6899
        %6901 = vmatpush1.msra.mxu0 %v6900
        %6902 = vmatprep.subr.mxu0 0.0
        %v6903 = vand.u32 %v2972, 4294901760
        %v6904 = vsub.f32 %v2972, %v6903
        %6905 = vmatpush1.msra.mxu0 %v6904
        %6906 = vmatprep.subr.mxu0 0.0
        %v6907 = vand.u32 %v2973, 4294901760
        %v6908 = vsub.f32 %v2973, %v6907
        %6909 = vmatpush1.msra.mxu0 %v6908
        %6910 = vmatprep.subr.mxu0 0.0
        %v6911 = vand.u32 %v2974, 4294901760
        %v6912 = vsub.f32 %v2974, %v6911
        %6913 = vmatpush1.msra.mxu0 %v6912
        %6914 = vmatprep.subr.mxu0 0.0
        %v6915 = vand.u32 %v2975, 4294901760
        %v6916 = vsub.f32 %v2975, %v6915
        %6917 = vmatpush1.msra.mxu0 %v6916
        %6918 = vmatprep.subr.mxu0 0.0
        %v6919 = vand.u32 %v2976, 4294901760
        %v6920 = vsub.f32 %v2976, %v6919
        %6921 = vmatpush1.msra.mxu0 %v6920
        %6922 = vmatprep.subr.mxu0 0.0
        %v6923 = vand.u32 %v2977, 4294901760
        %v6924 = vsub.f32 %v2977, %v6923
        %6925 = vmatpush1.msra.mxu0 %v6924
        %6926 = vmatprep.subr.mxu0 0.0
        %v6927 = vand.u32 %v2978, 4294901760
        %v6928 = vsub.f32 %v2978, %v6927
        %6929 = vmatpush1.msra.mxu0 %v6928
        %6930 = vmatprep.subr.mxu0 0.0
        %v6931 = vand.u32 %v2979, 4294901760
        %v6932 = vsub.f32 %v2979, %v6931
        %6933 = vmatpush1.msra.mxu0 %v6932
        %6934 = vmatprep.subr.mxu0 0.0
        %v6935 = vand.u32 %v2980, 4294901760
        %v6936 = vsub.f32 %v2980, %v6935
        %6937 = vmatpush1.msra.mxu0 %v6936
        %6938 = vmatprep.subr.mxu0 0.0
        %v6939 = vand.u32 %v2981, 4294901760
        %v6940 = vsub.f32 %v2981, %v6939
        %6941 = vmatpush1.msra.mxu0 %v6940
        %6942 = vmatprep.subr.mxu0 0.0
        %v6943 = vand.u32 %v2982, 4294901760
        %v6944 = vsub.f32 %v2982, %v6943
        %6945 = vmatpush1.msra.mxu0 %v6944
        %v6946 = vand.u32 %v413, 4294901760
        %v6947 = vsub.f32 %v413, %v6946
        %6948 = vmatprep.mubr.f32.mxu0 %v6947
        %v6949 = vand.u32 %v412, 4294901760
        %v6950 = vsub.f32 %v412, %v6949
        %6951 = vmatmul.mubr.f32.gmra.mrb[0].mxu0 %v6950
        %v6952 = vpop.f32.mrb[0].mxu0
        %v6953 = vadd.f32 %v6815, %v6952
        %v6954 = vpop.f32.mrb[0].mxu0
        %6955 = vdwg.mxu0
        %6956 = vmatprep.subr.mxu0 0.0
        %v6957 = vand.u32 %v2951, 4294901760
        %6958 = vmatpush1.msra.mxu0 %v6957
        %6959 = vmatprep.subr.mxu0 0.0
        %v6960 = vand.u32 %v2952, 4294901760
        %6961 = vmatpush1.msra.mxu0 %v6960
        %6962 = vmatprep.subr.mxu0 0.0
        %v6963 = vand.u32 %v2953, 4294901760
        %6964 = vmatpush1.msra.mxu0 %v6963
        %6965 = vmatprep.subr.mxu0 0.0
        %v6966 = vand.u32 %v2954, 4294901760
        %6967 = vmatpush1.msra.mxu0 %v6966
        %6968 = vmatprep.subr.mxu0 0.0
        %v6969 = vand.u32 %v2955, 4294901760
        %6970 = vmatpush1.msra.mxu0 %v6969
        %6971 = vmatprep.subr.mxu0 0.0
        %v6972 = vand.u32 %v2956, 4294901760
        %6973 = vmatpush1.msra.mxu0 %v6972
        %6974 = vmatprep.subr.mxu0 0.0
        %v6975 = vand.u32 %v2957, 4294901760
        %6976 = vmatpush1.msra.mxu0 %v6975
        %6977 = vmatprep.subr.mxu0 0.0
        %v6978 = vand.u32 %v2958, 4294901760
        %6979 = vmatpush1.msra.mxu0 %v6978
        %6980 = vmatprep.subr.mxu0 0.0
        %v6981 = vand.u32 %v2959, 4294901760
        %6982 = vmatpush1.msra.mxu0 %v6981
        %6983 = vmatprep.subr.mxu0 0.0
        %v6984 = vand.u32 %v2960, 4294901760
        %6985 = vmatpush1.msra.mxu0 %v6984
        %6986 = vmatprep.subr.mxu0 0.0
        %v6987 = vand.u32 %v2961, 4294901760
        %6988 = vmatpush1.msra.mxu0 %v6987
        %6989 = vmatprep.subr.mxu0 0.0
        %v6990 = vand.u32 %v2962, 4294901760
        %6991 = vmatpush1.msra.mxu0 %v6990
        %6992 = vmatprep.subr.mxu0 0.0
        %v6993 = vand.u32 %v2963, 4294901760
        %6994 = vmatpush1.msra.mxu0 %v6993
        %6995 = vmatprep.subr.mxu0 0.0
        %v6996 = vand.u32 %v2964, 4294901760
        %6997 = vmatpush1.msra.mxu0 %v6996
        %6998 = vmatprep.subr.mxu0 0.0
        %v6999 = vand.u32 %v2965, 4294901760
        %7000 = vmatpush1.msra.mxu0 %v6999
        %7001 = vmatprep.subr.mxu0 0.0
        %v7002 = vand.u32 %v2966, 4294901760
        %7003 = vmatpush1.msra.mxu0 %v7002
        %7004 = vmatprep.subr.mxu0 0.0
        %v7005 = vand.u32 %v2967, 4294901760
        %7006 = vmatpush1.msra.mxu0 %v7005
        %7007 = vmatprep.subr.mxu0 0.0
        %v7008 = vand.u32 %v2968, 4294901760
        %7009 = vmatpush1.msra.mxu0 %v7008
        %7010 = vmatprep.subr.mxu0 0.0
        %v7011 = vand.u32 %v2969, 4294901760
        %7012 = vmatpush1.msra.mxu0 %v7011
        %7013 = vmatprep.subr.mxu0 0.0
        %v7014 = vand.u32 %v2970, 4294901760
        %7015 = vmatpush1.msra.mxu0 %v7014
        %7016 = vmatprep.subr.mxu0 0.0
        %v7017 = vand.u32 %v2971, 4294901760
        %7018 = vmatpush1.msra.mxu0 %v7017
        %7019 = vmatprep.subr.mxu0 0.0
        %v7020 = vand.u32 %v2972, 4294901760
        %7021 = vmatpush1.msra.mxu0 %v7020
        %7022 = vmatprep.subr.mxu0 0.0
        %v7023 = vand.u32 %v2973, 4294901760
        %7024 = vmatpush1.msra.mxu0 %v7023
        %7025 = vmatprep.subr.mxu0 0.0
        %v7026 = vand.u32 %v2974, 4294901760
        %7027 = vmatpush1.msra.mxu0 %v7026
        %7028 = vmatprep.subr.mxu0 0.0
        %v7029 = vand.u32 %v2975, 4294901760
        %7030 = vmatpush1.msra.mxu0 %v7029
        %7031 = vmatprep.subr.mxu0 0.0
        %v7032 = vand.u32 %v2976, 4294901760
        %7033 = vmatpush1.msra.mxu0 %v7032
        %7034 = vmatprep.subr.mxu0 0.0
        %v7035 = vand.u32 %v2977, 4294901760
        %7036 = vmatpush1.msra.mxu0 %v7035
        %7037 = vmatprep.subr.mxu0 0.0
        %v7038 = vand.u32 %v2978, 4294901760
        %7039 = vmatpush1.msra.mxu0 %v7038
        %7040 = vmatprep.subr.mxu0 0.0
        %v7041 = vand.u32 %v2979, 4294901760
        %7042 = vmatpush1.msra.mxu0 %v7041
        %7043 = vmatprep.subr.mxu0 0.0
        %v7044 = vand.u32 %v2980, 4294901760
        %7045 = vmatpush1.msra.mxu0 %v7044
        %7046 = vmatprep.subr.mxu0 0.0
        %v7047 = vand.u32 %v2981, 4294901760
        %7048 = vmatpush1.msra.mxu0 %v7047
        %7049 = vmatprep.subr.mxu0 0.0
        %v7050 = vand.u32 %v2982, 4294901760
        %7051 = vmatpush1.msra.mxu0 %v7050
        %v7052 = vand.u32 %v413, 4294901760
        %v7053 = vsub.f32 %v413, %v7052
        %v7054 = vand.u32 %v7053, 4294901760
        %7055 = vmatprep.mubr.f32.mxu0 %v7054
        %v7056 = vand.u32 %v412, 4294901760
        %v7057 = vsub.f32 %v412, %v7056
        %v7058 = vand.u32 %v7057, 4294901760
        %7059 = vmatmul.mubr.f32.gmra.mrb[0].mxu0 %v7058
        %v7060 = vpop.f32.mrb[0].mxu0
        %v7061 = vadd.f32 %v6953, %v7060
        %v7062 = vpop.f32.mrb[0].mxu0
        %7063 = vdwg.mxu0
        %7064 = vmatprep.subr.mxu0 0.0
        %v7065 = vand.u32 %v2951, 4294901760
        %v7066 = vsub.f32 %v2951, %v7065
        %v7067 = vand.u32 %v7066, 4294901760
        %7068 = vmatpush1.msra.mxu0 %v7067
        %7069 = vmatprep.subr.mxu0 0.0
        %v7070 = vand.u32 %v2952, 4294901760
        %v7071 = vsub.f32 %v2952, %v7070
        %v7072 = vand.u32 %v7071, 4294901760
        %7073 = vmatpush1.msra.mxu0 %v7072
        %7074 = vmatprep.subr.mxu0 0.0
        %v7075 = vand.u32 %v2953, 4294901760
        %v7076 = vsub.f32 %v2953, %v7075
        %v7077 = vand.u32 %v7076, 4294901760
        %7078 = vmatpush1.msra.mxu0 %v7077
        %7079 = vmatprep.subr.mxu0 0.0
        %v7080 = vand.u32 %v2954, 4294901760
        %v7081 = vsub.f32 %v2954, %v7080
        %v7082 = vand.u32 %v7081, 4294901760
        %7083 = vmatpush1.msra.mxu0 %v7082
        %7084 = vmatprep.subr.mxu0 0.0
        %v7085 = vand.u32 %v2955, 4294901760
        %v7086 = vsub.f32 %v2955, %v7085
        %v7087 = vand.u32 %v7086, 4294901760
        %7088 = vmatpush1.msra.mxu0 %v7087
        %7089 = vmatprep.subr.mxu0 0.0
        %v7090 = vand.u32 %v2956, 4294901760
        %v7091 = vsub.f32 %v2956, %v7090
        %v7092 = vand.u32 %v7091, 4294901760
        %7093 = vmatpush1.msra.mxu0 %v7092
        %7094 = vmatprep.subr.mxu0 0.0
        %v7095 = vand.u32 %v2957, 4294901760
        %v7096 = vsub.f32 %v2957, %v7095
        %v7097 = vand.u32 %v7096, 4294901760
        %7098 = vmatpush1.msra.mxu0 %v7097
        %7099 = vmatprep.subr.mxu0 0.0
        %v7100 = vand.u32 %v2958, 4294901760
        %v7101 = vsub.f32 %v2958, %v7100
        %v7102 = vand.u32 %v7101, 4294901760
        %7103 = vmatpush1.msra.mxu0 %v7102
        %7104 = vmatprep.subr.mxu0 0.0
        %v7105 = vand.u32 %v2959, 4294901760
        %v7106 = vsub.f32 %v2959, %v7105
        %v7107 = vand.u32 %v7106, 4294901760
        %7108 = vmatpush1.msra.mxu0 %v7107
        %7109 = vmatprep.subr.mxu0 0.0
        %v7110 = vand.u32 %v2960, 4294901760
        %v7111 = vsub.f32 %v2960, %v7110
        %v7112 = vand.u32 %v7111, 4294901760
        %7113 = vmatpush1.msra.mxu0 %v7112
        %7114 = vmatprep.subr.mxu0 0.0
        %v7115 = vand.u32 %v2961, 4294901760
        %v7116 = vsub.f32 %v2961, %v7115
        %v7117 = vand.u32 %v7116, 4294901760
        %7118 = vmatpush1.msra.mxu0 %v7117
        %7119 = vmatprep.subr.mxu0 0.0
        %v7120 = vand.u32 %v2962, 4294901760
        %v7121 = vsub.f32 %v2962, %v7120
        %v7122 = vand.u32 %v7121, 4294901760
        %7123 = vmatpush1.msra.mxu0 %v7122
        %7124 = vmatprep.subr.mxu0 0.0
        %v7125 = vand.u32 %v2963, 4294901760
        %v7126 = vsub.f32 %v2963, %v7125
        %v7127 = vand.u32 %v7126, 4294901760
        %7128 = vmatpush1.msra.mxu0 %v7127
        %7129 = vmatprep.subr.mxu0 0.0
        %v7130 = vand.u32 %v2964, 4294901760
        %v7131 = vsub.f32 %v2964, %v7130
        %v7132 = vand.u32 %v7131, 4294901760
        %7133 = vmatpush1.msra.mxu0 %v7132
        %7134 = vmatprep.subr.mxu0 0.0
        %v7135 = vand.u32 %v2965, 4294901760
        %v7136 = vsub.f32 %v2965, %v7135
        %v7137 = vand.u32 %v7136, 4294901760
        %7138 = vmatpush1.msra.mxu0 %v7137
        %7139 = vmatprep.subr.mxu0 0.0
        %v7140 = vand.u32 %v2966, 4294901760
        %v7141 = vsub.f32 %v2966, %v7140
        %v7142 = vand.u32 %v7141, 4294901760
        %7143 = vmatpush1.msra.mxu0 %v7142
        %7144 = vmatprep.subr.mxu0 0.0
        %v7145 = vand.u32 %v2967, 4294901760
        %v7146 = vsub.f32 %v2967, %v7145
        %v7147 = vand.u32 %v7146, 4294901760
        %7148 = vmatpush1.msra.mxu0 %v7147
        %7149 = vmatprep.subr.mxu0 0.0
        %v7150 = vand.u32 %v2968, 4294901760
        %v7151 = vsub.f32 %v2968, %v7150
        %v7152 = vand.u32 %v7151, 4294901760
        %7153 = vmatpush1.msra.mxu0 %v7152
        %7154 = vmatprep.subr.mxu0 0.0
        %v7155 = vand.u32 %v2969, 4294901760
        %v7156 = vsub.f32 %v2969, %v7155
        %v7157 = vand.u32 %v7156, 4294901760
        %7158 = vmatpush1.msra.mxu0 %v7157
        %7159 = vmatprep.subr.mxu0 0.0
        %v7160 = vand.u32 %v2970, 4294901760
        %v7161 = vsub.f32 %v2970, %v7160
        %v7162 = vand.u32 %v7161, 4294901760
        %7163 = vmatpush1.msra.mxu0 %v7162
        %7164 = vmatprep.subr.mxu0 0.0
        %v7165 = vand.u32 %v2971, 4294901760
        %v7166 = vsub.f32 %v2971, %v7165
        %v7167 = vand.u32 %v7166, 4294901760
        %7168 = vmatpush1.msra.mxu0 %v7167
        %7169 = vmatprep.subr.mxu0 0.0
        %v7170 = vand.u32 %v2972, 4294901760
        %v7171 = vsub.f32 %v2972, %v7170
        %v7172 = vand.u32 %v7171, 4294901760
        %7173 = vmatpush1.msra.mxu0 %v7172
        %7174 = vmatprep.subr.mxu0 0.0
        %v7175 = vand.u32 %v2973, 4294901760
        %v7176 = vsub.f32 %v2973, %v7175
        %v7177 = vand.u32 %v7176, 4294901760
        %7178 = vmatpush1.msra.mxu0 %v7177
        %7179 = vmatprep.subr.mxu0 0.0
        %v7180 = vand.u32 %v2974, 4294901760
        %v7181 = vsub.f32 %v2974, %v7180
        %v7182 = vand.u32 %v7181, 4294901760
        %7183 = vmatpush1.msra.mxu0 %v7182
        %7184 = vmatprep.subr.mxu0 0.0
        %v7185 = vand.u32 %v2975, 4294901760
        %v7186 = vsub.f32 %v2975, %v7185
        %v7187 = vand.u32 %v7186, 4294901760
        %7188 = vmatpush1.msra.mxu0 %v7187
        %7189 = vmatprep.subr.mxu0 0.0
        %v7190 = vand.u32 %v2976, 4294901760
        %v7191 = vsub.f32 %v2976, %v7190
        %v7192 = vand.u32 %v7191, 4294901760
        %7193 = vmatpush1.msra.mxu0 %v7192
        %7194 = vmatprep.subr.mxu0 0.0
        %v7195 = vand.u32 %v2977, 4294901760
        %v7196 = vsub.f32 %v2977, %v7195
        %v7197 = vand.u32 %v7196, 4294901760
        %7198 = vmatpush1.msra.mxu0 %v7197
        %7199 = vmatprep.subr.mxu0 0.0
        %v7200 = vand.u32 %v2978, 4294901760
        %v7201 = vsub.f32 %v2978, %v7200
        %v7202 = vand.u32 %v7201, 4294901760
        %7203 = vmatpush1.msra.mxu0 %v7202
        %7204 = vmatprep.subr.mxu0 0.0
        %v7205 = vand.u32 %v2979, 4294901760
        %v7206 = vsub.f32 %v2979, %v7205
        %v7207 = vand.u32 %v7206, 4294901760
        %7208 = vmatpush1.msra.mxu0 %v7207
        %7209 = vmatprep.subr.mxu0 0.0
        %v7210 = vand.u32 %v2980, 4294901760
        %v7211 = vsub.f32 %v2980, %v7210
        %v7212 = vand.u32 %v7211, 4294901760
        %7213 = vmatpush1.msra.mxu0 %v7212
        %7214 = vmatprep.subr.mxu0 0.0
        %v7215 = vand.u32 %v2981, 4294901760
        %v7216 = vsub.f32 %v2981, %v7215
        %v7217 = vand.u32 %v7216, 4294901760
        %7218 = vmatpush1.msra.mxu0 %v7217
        %7219 = vmatprep.subr.mxu0 0.0
        %v7220 = vand.u32 %v2982, 4294901760
        %v7221 = vsub.f32 %v2982, %v7220
        %v7222 = vand.u32 %v7221, 4294901760
        %7223 = vmatpush1.msra.mxu0 %v7222
        %v7224 = vand.u32 %v413, 4294901760
        %7225 = vmatprep.mubr.f32.mxu0 %v7224
        %v7226 = vand.u32 %v412, 4294901760
        %7227 = vmatmul.mubr.f32.gmra.mrb[0].mxu0 %v7226
        %v7228 = vpop.f32.mrb[0].mxu0
        %v7229 = vadd.f32 %v7061, %v7228
        %v7230 = vpop.f32.mrb[0].mxu0
        %7231 = vdwg.mxu0
        %7232 = vmatprep.subr.mxu0 0.0
        %v7233 = vand.u32 %v2951, 4294901760
        %7234 = vmatpush1.msra.mxu0 %v7233
        %7235 = vmatprep.subr.mxu0 0.0
        %v7236 = vand.u32 %v2952, 4294901760
        %7237 = vmatpush1.msra.mxu0 %v7236
        %7238 = vmatprep.subr.mxu0 0.0
        %v7239 = vand.u32 %v2953, 4294901760
        %7240 = vmatpush1.msra.mxu0 %v7239
        %7241 = vmatprep.subr.mxu0 0.0
        %v7242 = vand.u32 %v2954, 4294901760
        %7243 = vmatpush1.msra.mxu0 %v7242
        %7244 = vmatprep.subr.mxu0 0.0
        %v7245 = vand.u32 %v2955, 4294901760
        %7246 = vmatpush1.msra.mxu0 %v7245
        %7247 = vmatprep.subr.mxu0 0.0
        %v7248 = vand.u32 %v2956, 4294901760
        %7249 = vmatpush1.msra.mxu0 %v7248
        %7250 = vmatprep.subr.mxu0 0.0
        %v7251 = vand.u32 %v2957, 4294901760
        %7252 = vmatpush1.msra.mxu0 %v7251
        %7253 = vmatprep.subr.mxu0 0.0
        %v7254 = vand.u32 %v2958, 4294901760
        %7255 = vmatpush1.msra.mxu0 %v7254
        %7256 = vmatprep.subr.mxu0 0.0
        %v7257 = vand.u32 %v2959, 4294901760
        %7258 = vmatpush1.msra.mxu0 %v7257
        %7259 = vmatprep.subr.mxu0 0.0
        %v7260 = vand.u32 %v2960, 4294901760
        %7261 = vmatpush1.msra.mxu0 %v7260
        %7262 = vmatprep.subr.mxu0 0.0
        %v7263 = vand.u32 %v2961, 4294901760
        %7264 = vmatpush1.msra.mxu0 %v7263
        %7265 = vmatprep.subr.mxu0 0.0
        %v7266 = vand.u32 %v2962, 4294901760
        %7267 = vmatpush1.msra.mxu0 %v7266
        %7268 = vmatprep.subr.mxu0 0.0
        %v7269 = vand.u32 %v2963, 4294901760
        %7270 = vmatpush1.msra.mxu0 %v7269
        %7271 = vmatprep.subr.mxu0 0.0
        %v7272 = vand.u32 %v2964, 4294901760
        %7273 = vmatpush1.msra.mxu0 %v7272
        %7274 = vmatprep.subr.mxu0 0.0
        %v7275 = vand.u32 %v2965, 4294901760
        %7276 = vmatpush1.msra.mxu0 %v7275
        %7277 = vmatprep.subr.mxu0 0.0
        %v7278 = vand.u32 %v2966, 4294901760
        %7279 = vmatpush1.msra.mxu0 %v7278
        %7280 = vmatprep.subr.mxu0 0.0
        %v7281 = vand.u32 %v2967, 4294901760
        %7282 = vmatpush1.msra.mxu0 %v7281
        %7283 = vmatprep.subr.mxu0 0.0
        %v7284 = vand.u32 %v2968, 4294901760
        %7285 = vmatpush1.msra.mxu0 %v7284
        %7286 = vmatprep.subr.mxu0 0.0
        %v7287 = vand.u32 %v2969, 4294901760
        %7288 = vmatpush1.msra.mxu0 %v7287
        %7289 = vmatprep.subr.mxu0 0.0
        %v7290 = vand.u32 %v2970, 4294901760
        %7291 = vmatpush1.msra.mxu0 %v7290
        %7292 = vmatprep.subr.mxu0 0.0
        %v7293 = vand.u32 %v2971, 4294901760
        %7294 = vmatpush1.msra.mxu0 %v7293
        %7295 = vmatprep.subr.mxu0 0.0
        %v7296 = vand.u32 %v2972, 4294901760
        %7297 = vmatpush1.msra.mxu0 %v7296
        %7298 = vmatprep.subr.mxu0 0.0
        %v7299 = vand.u32 %v2973, 4294901760
        %7300 = vmatpush1.msra.mxu0 %v7299
        %7301 = vmatprep.subr.mxu0 0.0
        %v7302 = vand.u32 %v2974, 4294901760
        %7303 = vmatpush1.msra.mxu0 %v7302
        %7304 = vmatprep.subr.mxu0 0.0
        %v7305 = vand.u32 %v2975, 4294901760
        %7306 = vmatpush1.msra.mxu0 %v7305
        %7307 = vmatprep.subr.mxu0 0.0
        %v7308 = vand.u32 %v2976, 4294901760
        %7309 = vmatpush1.msra.mxu0 %v7308
        %7310 = vmatprep.subr.mxu0 0.0
        %v7311 = vand.u32 %v2977, 4294901760
        %7312 = vmatpush1.msra.mxu0 %v7311
        %7313 = vmatprep.subr.mxu0 0.0
        %v7314 = vand.u32 %v2978, 4294901760
        %7315 = vmatpush1.msra.mxu0 %v7314
        %7316 = vmatprep.subr.mxu0 0.0
        %v7317 = vand.u32 %v2979, 4294901760
        %7318 = vmatpush1.msra.mxu0 %v7317
        %7319 = vmatprep.subr.mxu0 0.0
        %v7320 = vand.u32 %v2980, 4294901760
        %7321 = vmatpush1.msra.mxu0 %v7320
        %7322 = vmatprep.subr.mxu0 0.0
        %v7323 = vand.u32 %v2981, 4294901760
        %7324 = vmatpush1.msra.mxu0 %v7323
        %7325 = vmatprep.subr.mxu0 0.0
        %v7326 = vand.u32 %v2982, 4294901760
        %7327 = vmatpush1.msra.mxu0 %v7326
        %v7328 = vand.u32 %v413, 4294901760
        %7329 = vmatprep.mubr.f32.mxu0 %v7328
        %v7330 = vand.u32 %v412, 4294901760
        %7331 = vmatmul.mubr.f32.gmra.mrb[0].mxu0 %v7330
        %v7332 = vpop.f32.mrb[0].mxu0
        %v7333 = vadd.f32 %v7229, %v7332
        %v7334 = vpop.f32.mrb[0].mxu0
        %7335 = vdwg.mxu0
        %7336 = vmatprep.subr.mxu0 0.0
        %v7337 = vand.u32 %v2983, 4294901760
        %7338 = vmatpush1.msra.mxu0 %v7337
        %7339 = vmatprep.subr.mxu0 0.0
        %v7340 = vand.u32 %v2984, 4294901760
        %7341 = vmatpush1.msra.mxu0 %v7340
        %7342 = vmatprep.subr.mxu0 0.0
        %v7343 = vand.u32 %v2985, 4294901760
        %7344 = vmatpush1.msra.mxu0 %v7343
        %7345 = vmatprep.subr.mxu0 0.0
        %v7346 = vand.u32 %v2986, 4294901760
        %7347 = vmatpush1.msra.mxu0 %v7346
        %7348 = vmatprep.subr.mxu0 0.0
        %v7349 = vand.u32 %v2987, 4294901760
        %7350 = vmatpush1.msra.mxu0 %v7349
        %7351 = vmatprep.subr.mxu0 0.0
        %v7352 = vand.u32 %v2988, 4294901760
        %7353 = vmatpush1.msra.mxu0 %v7352
        %7354 = vmatprep.subr.mxu0 0.0
        %v7355 = vand.u32 %v2989, 4294901760
        %7356 = vmatpush1.msra.mxu0 %v7355
        %7357 = vmatprep.subr.mxu0 0.0
        %v7358 = vand.u32 %v2990, 4294901760
        %7359 = vmatpush1.msra.mxu0 %v7358
        %7360 = vmatprep.subr.mxu0 0.0
        %v7361 = vand.u32 %v2991, 4294901760
        %7362 = vmatpush1.msra.mxu0 %v7361
        %7363 = vmatprep.subr.mxu0 0.0
        %v7364 = vand.u32 %v2992, 4294901760
        %7365 = vmatpush1.msra.mxu0 %v7364
        %7366 = vmatprep.subr.mxu0 0.0
        %v7367 = vand.u32 %v2993, 4294901760
        %7368 = vmatpush1.msra.mxu0 %v7367
        %7369 = vmatprep.subr.mxu0 0.0
        %v7370 = vand.u32 %v2994, 4294901760
        %7371 = vmatpush1.msra.mxu0 %v7370
        %7372 = vmatprep.subr.mxu0 0.0
        %v7373 = vand.u32 %v2995, 4294901760
        %7374 = vmatpush1.msra.mxu0 %v7373
        %7375 = vmatprep.subr.mxu0 0.0
        %v7376 = vand.u32 %v2996, 4294901760
        %7377 = vmatpush1.msra.mxu0 %v7376
        %7378 = vmatprep.subr.mxu0 0.0
        %v7379 = vand.u32 %v2997, 4294901760
        %7380 = vmatpush1.msra.mxu0 %v7379
        %7381 = vmatprep.subr.mxu0 0.0
        %v7382 = vand.u32 %v2998, 4294901760
        %7383 = vmatpush1.msra.mxu0 %v7382
        %7384 = vmatprep.subr.mxu0 0.0
        %v7385 = vand.u32 %v2999, 4294901760
        %7386 = vmatpush1.msra.mxu0 %v7385
        %7387 = vmatprep.subr.mxu0 0.0
        %v7388 = vand.u32 %v3000, 4294901760
        %7389 = vmatpush1.msra.mxu0 %v7388
        %7390 = vmatprep.subr.mxu0 0.0
        %v7391 = vand.u32 %v3001, 4294901760
        %7392 = vmatpush1.msra.mxu0 %v7391
        %7393 = vmatprep.subr.mxu0 0.0
        %v7394 = vand.u32 %v3002, 4294901760
        %7395 = vmatpush1.msra.mxu0 %v7394
        %7396 = vmatprep.subr.mxu0 0.0
        %v7397 = vand.u32 %v3003, 4294901760
        %7398 = vmatpush1.msra.mxu0 %v7397
        %7399 = vmatprep.subr.mxu0 0.0
        %v7400 = vand.u32 %v3004, 4294901760
        %7401 = vmatpush1.msra.mxu0 %v7400
        %7402 = vmatprep.subr.mxu0 0.0
        %v7403 = vand.u32 %v3005, 4294901760
        %7404 = vmatpush1.msra.mxu0 %v7403
        %7405 = vmatprep.subr.mxu0 0.0
        %v7406 = vand.u32 %v3006, 4294901760
        %7407 = vmatpush1.msra.mxu0 %v7406
        %7408 = vmatprep.subr.mxu0 0.0
        %v7409 = vand.u32 %v3007, 4294901760
        %7410 = vmatpush1.msra.mxu0 %v7409
        %7411 = vmatprep.subr.mxu0 0.0
        %v7412 = vand.u32 %v3008, 4294901760
        %7413 = vmatpush1.msra.mxu0 %v7412
        %7414 = vmatprep.subr.mxu0 0.0
        %v7415 = vand.u32 %v3009, 4294901760
        %7416 = vmatpush1.msra.mxu0 %v7415
        %7417 = vmatprep.subr.mxu0 0.0
        %v7418 = vand.u32 %v3010, 4294901760
        %7419 = vmatpush1.msra.mxu0 %v7418
        %7420 = vmatprep.subr.mxu0 0.0
        %v7421 = vand.u32 %v3011, 4294901760
        %7422 = vmatpush1.msra.mxu0 %v7421
        %7423 = vmatprep.subr.mxu0 0.0
        %v7424 = vand.u32 %v3012, 4294901760
        %7425 = vmatpush1.msra.mxu0 %v7424
        %7426 = vmatprep.subr.mxu0 0.0
        %v7427 = vand.u32 %v3013, 4294901760
        %7428 = vmatpush1.msra.mxu0 %v7427
        %7429 = vmatprep.subr.mxu0 0.0
        %v7430 = vand.u32 %v3014, 4294901760
        %7431 = vmatpush1.msra.mxu0 %v7430
        %v7432 = vand.u32 %v415, 4294901760
        %v7433 = vsub.f32 %v415, %v7432
        %v7434 = vand.u32 %v7433, 4294901760
        %v7435 = vsub.f32 %v7433, %v7434
        %v7436 = vand.u32 %v7435, 4294901760
        %7437 = vmatprep.mubr.f32.mxu0 %v7436
        %v7438 = vand.u32 %v414, 4294901760
        %v7439 = vsub.f32 %v414, %v7438
        %v7440 = vand.u32 %v7439, 4294901760
        %v7441 = vsub.f32 %v7439, %v7440
        %v7442 = vand.u32 %v7441, 4294901760
        %7443 = vmatmul.mubr.f32.gmra.mrb[0].mxu0 %v7442
        %v7444 = vpop.f32.mrb[0].mxu0
        %v7445 = vadd.f32 %v7333, %v7444
        %v7446 = vpop.f32.mrb[0].mxu0
        %7447 = vdwg.mxu0
        %7448 = vmatprep.subr.mxu0 0.0
        %v7449 = vand.u32 %v2983, 4294901760
        %v7450 = vsub.f32 %v2983, %v7449
        %v7451 = vand.u32 %v7450, 4294901760
        %v7452 = vsub.f32 %v7450, %v7451
        %v7453 = vand.u32 %v7452, 4294901760
        %7454 = vmatpush1.msra.mxu0 %v7453
        %7455 = vmatprep.subr.mxu0 0.0
        %v7456 = vand.u32 %v2984, 4294901760
        %v7457 = vsub.f32 %v2984, %v7456
        %v7458 = vand.u32 %v7457, 4294901760
        %v7459 = vsub.f32 %v7457, %v7458
        %v7460 = vand.u32 %v7459, 4294901760
        %7461 = vmatpush1.msra.mxu0 %v7460
        %7462 = vmatprep.subr.mxu0 0.0
        %v7463 = vand.u32 %v2985, 4294901760
        %v7464 = vsub.f32 %v2985, %v7463
        %v7465 = vand.u32 %v7464, 4294901760
        %v7466 = vsub.f32 %v7464, %v7465
        %v7467 = vand.u32 %v7466, 4294901760
        %7468 = vmatpush1.msra.mxu0 %v7467
        %7469 = vmatprep.subr.mxu0 0.0
        %v7470 = vand.u32 %v2986, 4294901760
        %v7471 = vsub.f32 %v2986, %v7470
        %v7472 = vand.u32 %v7471, 4294901760
        %v7473 = vsub.f32 %v7471, %v7472
        %v7474 = vand.u32 %v7473, 4294901760
        %7475 = vmatpush1.msra.mxu0 %v7474
        %7476 = vmatprep.subr.mxu0 0.0
        %v7477 = vand.u32 %v2987, 4294901760
        %v7478 = vsub.f32 %v2987, %v7477
        %v7479 = vand.u32 %v7478, 4294901760
        %v7480 = vsub.f32 %v7478, %v7479
        %v7481 = vand.u32 %v7480, 4294901760
        %7482 = vmatpush1.msra.mxu0 %v7481
        %7483 = vmatprep.subr.mxu0 0.0
        %v7484 = vand.u32 %v2988, 4294901760
        %v7485 = vsub.f32 %v2988, %v7484
        %v7486 = vand.u32 %v7485, 4294901760
        %v7487 = vsub.f32 %v7485, %v7486
        %v7488 = vand.u32 %v7487, 4294901760
        %7489 = vmatpush1.msra.mxu0 %v7488
        %7490 = vmatprep.subr.mxu0 0.0
        %v7491 = vand.u32 %v2989, 4294901760
        %v7492 = vsub.f32 %v2989, %v7491
        %v7493 = vand.u32 %v7492, 4294901760
        %v7494 = vsub.f32 %v7492, %v7493
        %v7495 = vand.u32 %v7494, 4294901760
        %7496 = vmatpush1.msra.mxu0 %v7495
        %7497 = vmatprep.subr.mxu0 0.0
        %v7498 = vand.u32 %v2990, 4294901760
        %v7499 = vsub.f32 %v2990, %v7498
        %v7500 = vand.u32 %v7499, 4294901760
        %v7501 = vsub.f32 %v7499, %v7500
        %v7502 = vand.u32 %v7501, 4294901760
        %7503 = vmatpush1.msra.mxu0 %v7502
        %7504 = vmatprep.subr.mxu0 0.0
        %v7505 = vand.u32 %v2991, 4294901760
        %v7506 = vsub.f32 %v2991, %v7505
        %v7507 = vand.u32 %v7506, 4294901760
        %v7508 = vsub.f32 %v7506, %v7507
        %v7509 = vand.u32 %v7508, 4294901760
        %7510 = vmatpush1.msra.mxu0 %v7509
        %7511 = vmatprep.subr.mxu0 0.0
        %v7512 = vand.u32 %v2992, 4294901760
        %v7513 = vsub.f32 %v2992, %v7512
        %v7514 = vand.u32 %v7513, 4294901760
        %v7515 = vsub.f32 %v7513, %v7514
        %v7516 = vand.u32 %v7515, 4294901760
        %7517 = vmatpush1.msra.mxu0 %v7516
        %7518 = vmatprep.subr.mxu0 0.0
        %v7519 = vand.u32 %v2993, 4294901760
        %v7520 = vsub.f32 %v2993, %v7519
        %v7521 = vand.u32 %v7520, 4294901760
        %v7522 = vsub.f32 %v7520, %v7521
        %v7523 = vand.u32 %v7522, 4294901760
        %7524 = vmatpush1.msra.mxu0 %v7523
        %7525 = vmatprep.subr.mxu0 0.0
        %v7526 = vand.u32 %v2994, 4294901760
        %v7527 = vsub.f32 %v2994, %v7526
        %v7528 = vand.u32 %v7527, 4294901760
        %v7529 = vsub.f32 %v7527, %v7528
        %v7530 = vand.u32 %v7529, 4294901760
        %7531 = vmatpush1.msra.mxu0 %v7530
        %7532 = vmatprep.subr.mxu0 0.0
        %v7533 = vand.u32 %v2995, 4294901760
        %v7534 = vsub.f32 %v2995, %v7533
        %v7535 = vand.u32 %v7534, 4294901760
        %v7536 = vsub.f32 %v7534, %v7535
        %v7537 = vand.u32 %v7536, 4294901760
        %7538 = vmatpush1.msra.mxu0 %v7537
        %7539 = vmatprep.subr.mxu0 0.0
        %v7540 = vand.u32 %v2996, 4294901760
        %v7541 = vsub.f32 %v2996, %v7540
        %v7542 = vand.u32 %v7541, 4294901760
        %v7543 = vsub.f32 %v7541, %v7542
        %v7544 = vand.u32 %v7543, 4294901760
        %7545 = vmatpush1.msra.mxu0 %v7544
        %7546 = vmatprep.subr.mxu0 0.0
        %v7547 = vand.u32 %v2997, 4294901760
        %v7548 = vsub.f32 %v2997, %v7547
        %v7549 = vand.u32 %v7548, 4294901760
        %v7550 = vsub.f32 %v7548, %v7549
        %v7551 = vand.u32 %v7550, 4294901760
        %7552 = vmatpush1.msra.mxu0 %v7551
        %7553 = vmatprep.subr.mxu0 0.0
        %v7554 = vand.u32 %v2998, 4294901760
        %v7555 = vsub.f32 %v2998, %v7554
        %v7556 = vand.u32 %v7555, 4294901760
        %v7557 = vsub.f32 %v7555, %v7556
        %v7558 = vand.u32 %v7557, 4294901760
        %7559 = vmatpush1.msra.mxu0 %v7558
        %7560 = vmatprep.subr.mxu0 0.0
        %v7561 = vand.u32 %v2999, 4294901760
        %v7562 = vsub.f32 %v2999, %v7561
        %v7563 = vand.u32 %v7562, 4294901760
        %v7564 = vsub.f32 %v7562, %v7563
        %v7565 = vand.u32 %v7564, 4294901760
        %7566 = vmatpush1.msra.mxu0 %v7565
        %7567 = vmatprep.subr.mxu0 0.0
        %v7568 = vand.u32 %v3000, 4294901760
        %v7569 = vsub.f32 %v3000, %v7568
        %v7570 = vand.u32 %v7569, 4294901760
        %v7571 = vsub.f32 %v7569, %v7570
        %v7572 = vand.u32 %v7571, 4294901760
        %7573 = vmatpush1.msra.mxu0 %v7572
        %7574 = vmatprep.subr.mxu0 0.0
        %v7575 = vand.u32 %v3001, 4294901760
        %v7576 = vsub.f32 %v3001, %v7575
        %v7577 = vand.u32 %v7576, 4294901760
        %v7578 = vsub.f32 %v7576, %v7577
        %v7579 = vand.u32 %v7578, 4294901760
        %7580 = vmatpush1.msra.mxu0 %v7579
        %7581 = vmatprep.subr.mxu0 0.0
        %v7582 = vand.u32 %v3002, 4294901760
        %v7583 = vsub.f32 %v3002, %v7582
        %v7584 = vand.u32 %v7583, 4294901760
        %v7585 = vsub.f32 %v7583, %v7584
        %v7586 = vand.u32 %v7585, 4294901760
        %7587 = vmatpush1.msra.mxu0 %v7586
        %7588 = vmatprep.subr.mxu0 0.0
        %v7589 = vand.u32 %v3003, 4294901760
        %v7590 = vsub.f32 %v3003, %v7589
        %v7591 = vand.u32 %v7590, 4294901760
        %v7592 = vsub.f32 %v7590, %v7591
        %v7593 = vand.u32 %v7592, 4294901760
        %7594 = vmatpush1.msra.mxu0 %v7593
        %7595 = vmatprep.subr.mxu0 0.0
        %v7596 = vand.u32 %v3004, 4294901760
        %v7597 = vsub.f32 %v3004, %v7596
        %v7598 = vand.u32 %v7597, 4294901760
        %v7599 = vsub.f32 %v7597, %v7598
        %v7600 = vand.u32 %v7599, 4294901760
        %7601 = vmatpush1.msra.mxu0 %v7600
        %7602 = vmatprep.subr.mxu0 0.0
        %v7603 = vand.u32 %v3005, 4294901760
        %v7604 = vsub.f32 %v3005, %v7603
        %v7605 = vand.u32 %v7604, 4294901760
        %v7606 = vsub.f32 %v7604, %v7605
        %v7607 = vand.u32 %v7606, 4294901760
        %7608 = vmatpush1.msra.mxu0 %v7607
        %7609 = vmatprep.subr.mxu0 0.0
        %v7610 = vand.u32 %v3006, 4294901760
        %v7611 = vsub.f32 %v3006, %v7610
        %v7612 = vand.u32 %v7611, 4294901760
        %v7613 = vsub.f32 %v7611, %v7612
        %v7614 = vand.u32 %v7613, 4294901760
        %7615 = vmatpush1.msra.mxu0 %v7614
        %7616 = vmatprep.subr.mxu0 0.0
        %v7617 = vand.u32 %v3007, 4294901760
        %v7618 = vsub.f32 %v3007, %v7617
        %v7619 = vand.u32 %v7618, 4294901760
        %v7620 = vsub.f32 %v7618, %v7619
        %v7621 = vand.u32 %v7620, 4294901760
        %7622 = vmatpush1.msra.mxu0 %v7621
        %7623 = vmatprep.subr.mxu0 0.0
        %v7624 = vand.u32 %v3008, 4294901760
        %v7625 = vsub.f32 %v3008, %v7624
        %v7626 = vand.u32 %v7625, 4294901760
        %v7627 = vsub.f32 %v7625, %v7626
        %v7628 = vand.u32 %v7627, 4294901760
        %7629 = vmatpush1.msra.mxu0 %v7628
        %7630 = vmatprep.subr.mxu0 0.0
        %v7631 = vand.u32 %v3009, 4294901760
        %v7632 = vsub.f32 %v3009, %v7631
        %v7633 = vand.u32 %v7632, 4294901760
        %v7634 = vsub.f32 %v7632, %v7633
        %v7635 = vand.u32 %v7634, 4294901760
        %7636 = vmatpush1.msra.mxu0 %v7635
        %7637 = vmatprep.subr.mxu0 0.0
        %v7638 = vand.u32 %v3010, 4294901760
        %v7639 = vsub.f32 %v3010, %v7638
        %v7640 = vand.u32 %v7639, 4294901760
        %v7641 = vsub.f32 %v7639, %v7640
        %v7642 = vand.u32 %v7641, 4294901760
        %7643 = vmatpush1.msra.mxu0 %v7642
        %7644 = vmatprep.subr.mxu0 0.0
        %v7645 = vand.u32 %v3011, 4294901760
        %v7646 = vsub.f32 %v3011, %v7645
        %v7647 = vand.u32 %v7646, 4294901760
        %v7648 = vsub.f32 %v7646, %v7647
        %v7649 = vand.u32 %v7648, 4294901760
        %7650 = vmatpush1.msra.mxu0 %v7649
        %7651 = vmatprep.subr.mxu0 0.0
        %v7652 = vand.u32 %v3012, 4294901760
        %v7653 = vsub.f32 %v3012, %v7652
        %v7654 = vand.u32 %v7653, 4294901760
        %v7655 = vsub.f32 %v7653, %v7654
        %v7656 = vand.u32 %v7655, 4294901760
        %7657 = vmatpush1.msra.mxu0 %v7656
        %7658 = vmatprep.subr.mxu0 0.0
        %v7659 = vand.u32 %v3013, 4294901760
        %v7660 = vsub.f32 %v3013, %v7659
        %v7661 = vand.u32 %v7660, 4294901760
        %v7662 = vsub.f32 %v7660, %v7661
        %v7663 = vand.u32 %v7662, 4294901760
        %7664 = vmatpush1.msra.mxu0 %v7663
        %7665 = vmatprep.subr.mxu0 0.0
        %v7666 = vand.u32 %v3014, 4294901760
        %v7667 = vsub.f32 %v3014, %v7666
        %v7668 = vand.u32 %v7667, 4294901760
        %v7669 = vsub.f32 %v7667, %v7668
        %v7670 = vand.u32 %v7669, 4294901760
        %7671 = vmatpush1.msra.mxu0 %v7670
        %v7672 = vand.u32 %v415, 4294901760
        %7673 = vmatprep.mubr.f32.mxu0 %v7672
        %v7674 = vand.u32 %v414, 4294901760
        %7675 = vmatmul.mubr.f32.gmra.mrb[0].mxu0 %v7674
        %v7676 = vpop.f32.mrb[0].mxu0
        %v7677 = vadd.f32 %v7445, %v7676
        %v7678 = vpop.f32.mrb[0].mxu0
        %7679 = vdwg.mxu0
        %7680 = vmatprep.subr.mxu0 0.0
        %v7681 = vand.u32 %v2983, 4294901760
        %v7682 = vsub.f32 %v2983, %v7681
        %7683 = vmatpush1.msra.mxu0 %v7682
        %7684 = vmatprep.subr.mxu0 0.0
        %v7685 = vand.u32 %v2984, 4294901760
        %v7686 = vsub.f32 %v2984, %v7685
        %7687 = vmatpush1.msra.mxu0 %v7686
        %7688 = vmatprep.subr.mxu0 0.0
        %v7689 = vand.u32 %v2985, 4294901760
        %v7690 = vsub.f32 %v2985, %v7689
        %7691 = vmatpush1.msra.mxu0 %v7690
        %7692 = vmatprep.subr.mxu0 0.0
        %v7693 = vand.u32 %v2986, 4294901760
        %v7694 = vsub.f32 %v2986, %v7693
        %7695 = vmatpush1.msra.mxu0 %v7694
        %7696 = vmatprep.subr.mxu0 0.0
        %v7697 = vand.u32 %v2987, 4294901760
        %v7698 = vsub.f32 %v2987, %v7697
        %7699 = vmatpush1.msra.mxu0 %v7698
        %7700 = vmatprep.subr.mxu0 0.0
        %v7701 = vand.u32 %v2988, 4294901760
        %v7702 = vsub.f32 %v2988, %v7701
        %7703 = vmatpush1.msra.mxu0 %v7702
        %7704 = vmatprep.subr.mxu0 0.0
        %v7705 = vand.u32 %v2989, 4294901760
        %v7706 = vsub.f32 %v2989, %v7705
        %7707 = vmatpush1.msra.mxu0 %v7706
        %7708 = vmatprep.subr.mxu0 0.0
        %v7709 = vand.u32 %v2990, 4294901760
        %v7710 = vsub.f32 %v2990, %v7709
        %7711 = vmatpush1.msra.mxu0 %v7710
        %7712 = vmatprep.subr.mxu0 0.0
        %v7713 = vand.u32 %v2991, 4294901760
        %v7714 = vsub.f32 %v2991, %v7713
        %7715 = vmatpush1.msra.mxu0 %v7714
        %7716 = vmatprep.subr.mxu0 0.0
        %v7717 = vand.u32 %v2992, 4294901760
        %v7718 = vsub.f32 %v2992, %v7717
        %7719 = vmatpush1.msra.mxu0 %v7718
        %7720 = vmatprep.subr.mxu0 0.0
        %v7721 = vand.u32 %v2993, 4294901760
        %v7722 = vsub.f32 %v2993, %v7721
        %7723 = vmatpush1.msra.mxu0 %v7722
        %7724 = vmatprep.subr.mxu0 0.0
        %v7725 = vand.u32 %v2994, 4294901760
        %v7726 = vsub.f32 %v2994, %v7725
        %7727 = vmatpush1.msra.mxu0 %v7726
        %7728 = vmatprep.subr.mxu0 0.0
        %v7729 = vand.u32 %v2995, 4294901760
        %v7730 = vsub.f32 %v2995, %v7729
        %7731 = vmatpush1.msra.mxu0 %v7730
        %7732 = vmatprep.subr.mxu0 0.0
        %v7733 = vand.u32 %v2996, 4294901760
        %v7734 = vsub.f32 %v2996, %v7733
        %7735 = vmatpush1.msra.mxu0 %v7734
        %7736 = vmatprep.subr.mxu0 0.0
        %v7737 = vand.u32 %v2997, 4294901760
        %v7738 = vsub.f32 %v2997, %v7737
        %7739 = vmatpush1.msra.mxu0 %v7738
        %7740 = vmatprep.subr.mxu0 0.0
        %v7741 = vand.u32 %v2998, 4294901760
        %v7742 = vsub.f32 %v2998, %v7741
        %7743 = vmatpush1.msra.mxu0 %v7742
        %7744 = vmatprep.subr.mxu0 0.0
        %v7745 = vand.u32 %v2999, 4294901760
        %v7746 = vsub.f32 %v2999, %v7745
        %7747 = vmatpush1.msra.mxu0 %v7746
        %7748 = vmatprep.subr.mxu0 0.0
        %v7749 = vand.u32 %v3000, 4294901760
        %v7750 = vsub.f32 %v3000, %v7749
        %7751 = vmatpush1.msra.mxu0 %v7750
        %7752 = vmatprep.subr.mxu0 0.0
        %v7753 = vand.u32 %v3001, 4294901760
        %v7754 = vsub.f32 %v3001, %v7753
        %7755 = vmatpush1.msra.mxu0 %v7754
        %7756 = vmatprep.subr.mxu0 0.0
        %v7757 = vand.u32 %v3002, 4294901760
        %v7758 = vsub.f32 %v3002, %v7757
        %7759 = vmatpush1.msra.mxu0 %v7758
        %7760 = vmatprep.subr.mxu0 0.0
        %v7761 = vand.u32 %v3003, 4294901760
        %v7762 = vsub.f32 %v3003, %v7761
        %7763 = vmatpush1.msra.mxu0 %v7762
        %7764 = vmatprep.subr.mxu0 0.0
        %v7765 = vand.u32 %v3004, 4294901760
        %v7766 = vsub.f32 %v3004, %v7765
        %7767 = vmatpush1.msra.mxu0 %v7766
        %7768 = vmatprep.subr.mxu0 0.0
        %v7769 = vand.u32 %v3005, 4294901760
        %v7770 = vsub.f32 %v3005, %v7769
        %7771 = vmatpush1.msra.mxu0 %v7770
        %7772 = vmatprep.subr.mxu0 0.0
        %v7773 = vand.u32 %v3006, 4294901760
        %v7774 = vsub.f32 %v3006, %v7773
        %7775 = vmatpush1.msra.mxu0 %v7774
        %7776 = vmatprep.subr.mxu0 0.0
        %v7777 = vand.u32 %v3007, 4294901760
        %v7778 = vsub.f32 %v3007, %v7777
        %7779 = vmatpush1.msra.mxu0 %v7778
        %7780 = vmatprep.subr.mxu0 0.0
        %v7781 = vand.u32 %v3008, 4294901760
        %v7782 = vsub.f32 %v3008, %v7781
        %7783 = vmatpush1.msra.mxu0 %v7782
        %7784 = vmatprep.subr.mxu0 0.0
        %v7785 = vand.u32 %v3009, 4294901760
        %v7786 = vsub.f32 %v3009, %v7785
        %7787 = vmatpush1.msra.mxu0 %v7786
        %7788 = vmatprep.subr.mxu0 0.0
        %v7789 = vand.u32 %v3010, 4294901760
        %v7790 = vsub.f32 %v3010, %v7789
        %7791 = vmatpush1.msra.mxu0 %v7790
        %7792 = vmatprep.subr.mxu0 0.0
        %v7793 = vand.u32 %v3011, 4294901760
        %v7794 = vsub.f32 %v3011, %v7793
        %7795 = vmatpush1.msra.mxu0 %v7794
        %7796 = vmatprep.subr.mxu0 0.0
        %v7797 = vand.u32 %v3012, 4294901760
        %v7798 = vsub.f32 %v3012, %v7797
        %7799 = vmatpush1.msra.mxu0 %v7798
        %7800 = vmatprep.subr.mxu0 0.0
        %v7801 = vand.u32 %v3013, 4294901760
        %v7802 = vsub.f32 %v3013, %v7801
        %7803 = vmatpush1.msra.mxu0 %v7802
        %7804 = vmatprep.subr.mxu0 0.0
        %v7805 = vand.u32 %v3014, 4294901760
        %v7806 = vsub.f32 %v3014, %v7805
        %7807 = vmatpush1.msra.mxu0 %v7806
        %v7808 = vand.u32 %v415, 4294901760
        %v7809 = vsub.f32 %v415, %v7808
        %7810 = vmatprep.mubr.f32.mxu0 %v7809
        %v7811 = vand.u32 %v414, 4294901760
        %v7812 = vsub.f32 %v414, %v7811
        %7813 = vmatmul.mubr.f32.gmra.mrb[0].mxu0 %v7812
        %v7814 = vpop.f32.mrb[0].mxu0
        %v7815 = vadd.f32 %v7677, %v7814
        %v7816 = vpop.f32.mrb[0].mxu0
        %7817 = vdwg.mxu0
        %7818 = vmatprep.subr.mxu0 0.0
        %v7819 = vand.u32 %v2983, 4294901760
        %7820 = vmatpush1.msra.mxu0 %v7819
        %7821 = vmatprep.subr.mxu0 0.0
        %v7822 = vand.u32 %v2984, 4294901760
        %7823 = vmatpush1.msra.mxu0 %v7822
        %7824 = vmatprep.subr.mxu0 0.0
        %v7825 = vand.u32 %v2985, 4294901760
        %7826 = vmatpush1.msra.mxu0 %v7825
        %7827 = vmatprep.subr.mxu0 0.0
        %v7828 = vand.u32 %v2986, 4294901760
        %7829 = vmatpush1.msra.mxu0 %v7828
        %7830 = vmatprep.subr.mxu0 0.0
        %v7831 = vand.u32 %v2987, 4294901760
        %7832 = vmatpush1.msra.mxu0 %v7831
        %7833 = vmatprep.subr.mxu0 0.0
        %v7834 = vand.u32 %v2988, 4294901760
        %7835 = vmatpush1.msra.mxu0 %v7834
        %7836 = vmatprep.subr.mxu0 0.0
        %v7837 = vand.u32 %v2989, 4294901760
        %7838 = vmatpush1.msra.mxu0 %v7837
        %7839 = vmatprep.subr.mxu0 0.0
        %v7840 = vand.u32 %v2990, 4294901760
        %7841 = vmatpush1.msra.mxu0 %v7840
        %7842 = vmatprep.subr.mxu0 0.0
        %v7843 = vand.u32 %v2991, 4294901760
        %7844 = vmatpush1.msra.mxu0 %v7843
        %7845 = vmatprep.subr.mxu0 0.0
        %v7846 = vand.u32 %v2992, 4294901760
        %7847 = vmatpush1.msra.mxu0 %v7846
        %7848 = vmatprep.subr.mxu0 0.0
        %v7849 = vand.u32 %v2993, 4294901760
        %7850 = vmatpush1.msra.mxu0 %v7849
        %7851 = vmatprep.subr.mxu0 0.0
        %v7852 = vand.u32 %v2994, 4294901760
        %7853 = vmatpush1.msra.mxu0 %v7852
        %7854 = vmatprep.subr.mxu0 0.0
        %v7855 = vand.u32 %v2995, 4294901760
        %7856 = vmatpush1.msra.mxu0 %v7855
        %7857 = vmatprep.subr.mxu0 0.0
        %v7858 = vand.u32 %v2996, 4294901760
        %7859 = vmatpush1.msra.mxu0 %v7858
        %7860 = vmatprep.subr.mxu0 0.0
        %v7861 = vand.u32 %v2997, 4294901760
        %7862 = vmatpush1.msra.mxu0 %v7861
        %7863 = vmatprep.subr.mxu0 0.0
        %v7864 = vand.u32 %v2998, 4294901760
        %7865 = vmatpush1.msra.mxu0 %v7864
        %7866 = vmatprep.subr.mxu0 0.0
        %v7867 = vand.u32 %v2999, 4294901760
        %7868 = vmatpush1.msra.mxu0 %v7867
        %7869 = vmatprep.subr.mxu0 0.0
        %v7870 = vand.u32 %v3000, 4294901760
        %7871 = vmatpush1.msra.mxu0 %v7870
        %7872 = vmatprep.subr.mxu0 0.0
        %v7873 = vand.u32 %v3001, 4294901760
        %7874 = vmatpush1.msra.mxu0 %v7873
        %7875 = vmatprep.subr.mxu0 0.0
        %v7876 = vand.u32 %v3002, 4294901760
        %7877 = vmatpush1.msra.mxu0 %v7876
        %7878 = vmatprep.subr.mxu0 0.0
        %v7879 = vand.u32 %v3003, 4294901760
        %7880 = vmatpush1.msra.mxu0 %v7879
        %7881 = vmatprep.subr.mxu0 0.0
        %v7882 = vand.u32 %v3004, 4294901760
        %7883 = vmatpush1.msra.mxu0 %v7882
        %7884 = vmatprep.subr.mxu0 0.0
        %v7885 = vand.u32 %v3005, 4294901760
        %7886 = vmatpush1.msra.mxu0 %v7885
        %7887 = vmatprep.subr.mxu0 0.0
        %v7888 = vand.u32 %v3006, 4294901760
        %7889 = vmatpush1.msra.mxu0 %v7888
        %7890 = vmatprep.subr.mxu0 0.0
        %v7891 = vand.u32 %v3007, 4294901760
        %7892 = vmatpush1.msra.mxu0 %v7891
        %7893 = vmatprep.subr.mxu0 0.0
        %v7894 = vand.u32 %v3008, 4294901760
        %7895 = vmatpush1.msra.mxu0 %v7894
        %7896 = vmatprep.subr.mxu0 0.0
        %v7897 = vand.u32 %v3009, 4294901760
        %7898 = vmatpush1.msra.mxu0 %v7897
        %7899 = vmatprep.subr.mxu0 0.0
        %v7900 = vand.u32 %v3010, 4294901760
        %7901 = vmatpush1.msra.mxu0 %v7900
        %7902 = vmatprep.subr.mxu0 0.0
        %v7903 = vand.u32 %v3011, 4294901760
        %7904 = vmatpush1.msra.mxu0 %v7903
        %7905 = vmatprep.subr.mxu0 0.0
        %v7906 = vand.u32 %v3012, 4294901760
        %7907 = vmatpush1.msra.mxu0 %v7906
        %7908 = vmatprep.subr.mxu0 0.0
        %v7909 = vand.u32 %v3013, 4294901760
        %7910 = vmatpush1.msra.mxu0 %v7909
        %7911 = vmatprep.subr.mxu0 0.0
        %v7912 = vand.u32 %v3014, 4294901760
        %7913 = vmatpush1.msra.mxu0 %v7912
        %v7914 = vand.u32 %v415, 4294901760
        %v7915 = vsub.f32 %v415, %v7914
        %v7916 = vand.u32 %v7915, 4294901760
        %7917 = vmatprep.mubr.f32.mxu0 %v7916
        %v7918 = vand.u32 %v414, 4294901760
        %v7919 = vsub.f32 %v414, %v7918
        %v7920 = vand.u32 %v7919, 4294901760
        %7921 = vmatmul.mubr.f32.gmra.mrb[0].mxu0 %v7920
        %v7922 = vpop.f32.mrb[0].mxu0
        %v7923 = vadd.f32 %v7815, %v7922
        %v7924 = vpop.f32.mrb[0].mxu0
        %7925 = vdwg.mxu0
        %7926 = vmatprep.subr.mxu0 0.0
        %v7927 = vand.u32 %v2983, 4294901760
        %v7928 = vsub.f32 %v2983, %v7927
        %v7929 = vand.u32 %v7928, 4294901760
        %7930 = vmatpush1.msra.mxu0 %v7929
        %7931 = vmatprep.subr.mxu0 0.0
        %v7932 = vand.u32 %v2984, 4294901760
        %v7933 = vsub.f32 %v2984, %v7932
        %v7934 = vand.u32 %v7933, 4294901760
        %7935 = vmatpush1.msra.mxu0 %v7934
        %7936 = vmatprep.subr.mxu0 0.0
        %v7937 = vand.u32 %v2985, 4294901760
        %v7938 = vsub.f32 %v2985, %v7937
        %v7939 = vand.u32 %v7938, 4294901760
        %7940 = vmatpush1.msra.mxu0 %v7939
        %7941 = vmatprep.subr.mxu0 0.0
        %v7942 = vand.u32 %v2986, 4294901760
        %v7943 = vsub.f32 %v2986, %v7942
        %v7944 = vand.u32 %v7943, 4294901760
        %7945 = vmatpush1.msra.mxu0 %v7944
        %7946 = vmatprep.subr.mxu0 0.0
        %v7947 = vand.u32 %v2987, 4294901760
        %v7948 = vsub.f32 %v2987, %v7947
        %v7949 = vand.u32 %v7948, 4294901760
        %7950 = vmatpush1.msra.mxu0 %v7949
        %7951 = vmatprep.subr.mxu0 0.0
        %v7952 = vand.u32 %v2988, 4294901760
        %v7953 = vsub.f32 %v2988, %v7952
        %v7954 = vand.u32 %v7953, 4294901760
        %7955 = vmatpush1.msra.mxu0 %v7954
        %7956 = vmatprep.subr.mxu0 0.0
        %v7957 = vand.u32 %v2989, 4294901760
        %v7958 = vsub.f32 %v2989, %v7957
        %v7959 = vand.u32 %v7958, 4294901760
        %7960 = vmatpush1.msra.mxu0 %v7959
        %7961 = vmatprep.subr.mxu0 0.0
        %v7962 = vand.u32 %v2990, 4294901760
        %v7963 = vsub.f32 %v2990, %v7962
        %v7964 = vand.u32 %v7963, 4294901760
        %7965 = vmatpush1.msra.mxu0 %v7964
        %7966 = vmatprep.subr.mxu0 0.0
        %v7967 = vand.u32 %v2991, 4294901760
        %v7968 = vsub.f32 %v2991, %v7967
        %v7969 = vand.u32 %v7968, 4294901760
        %7970 = vmatpush1.msra.mxu0 %v7969
        %7971 = vmatprep.subr.mxu0 0.0
        %v7972 = vand.u32 %v2992, 4294901760
        %v7973 = vsub.f32 %v2992, %v7972
        %v7974 = vand.u32 %v7973, 4294901760
        %7975 = vmatpush1.msra.mxu0 %v7974
        %7976 = vmatprep.subr.mxu0 0.0
        %v7977 = vand.u32 %v2993, 4294901760
        %v7978 = vsub.f32 %v2993, %v7977
        %v7979 = vand.u32 %v7978, 4294901760
        %7980 = vmatpush1.msra.mxu0 %v7979
        %7981 = vmatprep.subr.mxu0 0.0
        %v7982 = vand.u32 %v2994, 4294901760
        %v7983 = vsub.f32 %v2994, %v7982
        %v7984 = vand.u32 %v7983, 4294901760
        %7985 = vmatpush1.msra.mxu0 %v7984
        %7986 = vmatprep.subr.mxu0 0.0
        %v7987 = vand.u32 %v2995, 4294901760
        %v7988 = vsub.f32 %v2995, %v7987
        %v7989 = vand.u32 %v7988, 4294901760
        %7990 = vmatpush1.msra.mxu0 %v7989
        %7991 = vmatprep.subr.mxu0 0.0
        %v7992 = vand.u32 %v2996, 4294901760
        %v7993 = vsub.f32 %v2996, %v7992
        %v7994 = vand.u32 %v7993, 4294901760
        %7995 = vmatpush1.msra.mxu0 %v7994
        %7996 = vmatprep.subr.mxu0 0.0
        %v7997 = vand.u32 %v2997, 4294901760
        %v7998 = vsub.f32 %v2997, %v7997
        %v7999 = vand.u32 %v7998, 4294901760
        %8000 = vmatpush1.msra.mxu0 %v7999
        %8001 = vmatprep.subr.mxu0 0.0
        %v8002 = vand.u32 %v2998, 4294901760
        %v8003 = vsub.f32 %v2998, %v8002
        %v8004 = vand.u32 %v8003, 4294901760
        %8005 = vmatpush1.msra.mxu0 %v8004
        %8006 = vmatprep.subr.mxu0 0.0
        %v8007 = vand.u32 %v2999, 4294901760
        %v8008 = vsub.f32 %v2999, %v8007
        %v8009 = vand.u32 %v8008, 4294901760
        %8010 = vmatpush1.msra.mxu0 %v8009
        %8011 = vmatprep.subr.mxu0 0.0
        %v8012 = vand.u32 %v3000, 4294901760
        %v8013 = vsub.f32 %v3000, %v8012
        %v8014 = vand.u32 %v8013, 4294901760
        %8015 = vmatpush1.msra.mxu0 %v8014
        %8016 = vmatprep.subr.mxu0 0.0
        %v8017 = vand.u32 %v3001, 4294901760
        %v8018 = vsub.f32 %v3001, %v8017
        %v8019 = vand.u32 %v8018, 4294901760
        %8020 = vmatpush1.msra.mxu0 %v8019
        %8021 = vmatprep.subr.mxu0 0.0
        %v8022 = vand.u32 %v3002, 4294901760
        %v8023 = vsub.f32 %v3002, %v8022
        %v8024 = vand.u32 %v8023, 4294901760
        %8025 = vmatpush1.msra.mxu0 %v8024
        %8026 = vmatprep.subr.mxu0 0.0
        %v8027 = vand.u32 %v3003, 4294901760
        %v8028 = vsub.f32 %v3003, %v8027
        %v8029 = vand.u32 %v8028, 4294901760
        %8030 = vmatpush1.msra.mxu0 %v8029
        %8031 = vmatprep.subr.mxu0 0.0
        %v8032 = vand.u32 %v3004, 4294901760
        %v8033 = vsub.f32 %v3004, %v8032
        %v8034 = vand.u32 %v8033, 4294901760
        %8035 = vmatpush1.msra.mxu0 %v8034
        %8036 = vmatprep.subr.mxu0 0.0
        %v8037 = vand.u32 %v3005, 4294901760
        %v8038 = vsub.f32 %v3005, %v8037
        %v8039 = vand.u32 %v8038, 4294901760
        %8040 = vmatpush1.msra.mxu0 %v8039
        %8041 = vmatprep.subr.mxu0 0.0
        %v8042 = vand.u32 %v3006, 4294901760
        %v8043 = vsub.f32 %v3006, %v8042
        %v8044 = vand.u32 %v8043, 4294901760
        %8045 = vmatpush1.msra.mxu0 %v8044
        %8046 = vmatprep.subr.mxu0 0.0
        %v8047 = vand.u32 %v3007, 4294901760
        %v8048 = vsub.f32 %v3007, %v8047
        %v8049 = vand.u32 %v8048, 4294901760
        %8050 = vmatpush1.msra.mxu0 %v8049
        %8051 = vmatprep.subr.mxu0 0.0
        %v8052 = vand.u32 %v3008, 4294901760
        %v8053 = vsub.f32 %v3008, %v8052
        %v8054 = vand.u32 %v8053, 4294901760
        %8055 = vmatpush1.msra.mxu0 %v8054
        %8056 = vmatprep.subr.mxu0 0.0
        %v8057 = vand.u32 %v3009, 4294901760
        %v8058 = vsub.f32 %v3009, %v8057
        %v8059 = vand.u32 %v8058, 4294901760
        %8060 = vmatpush1.msra.mxu0 %v8059
        %8061 = vmatprep.subr.mxu0 0.0
        %v8062 = vand.u32 %v3010, 4294901760
        %v8063 = vsub.f32 %v3010, %v8062
        %v8064 = vand.u32 %v8063, 4294901760
        %8065 = vmatpush1.msra.mxu0 %v8064
        %8066 = vmatprep.subr.mxu0 0.0
        %v8067 = vand.u32 %v3011, 4294901760
        %v8068 = vsub.f32 %v3011, %v8067
        %v8069 = vand.u32 %v8068, 4294901760
        %8070 = vmatpush1.msra.mxu0 %v8069
        %8071 = vmatprep.subr.mxu0 0.0
        %v8072 = vand.u32 %v3012, 4294901760
        %v8073 = vsub.f32 %v3012, %v8072
        %v8074 = vand.u32 %v8073, 4294901760
        %8075 = vmatpush1.msra.mxu0 %v8074
        %8076 = vmatprep.subr.mxu0 0.0
        %v8077 = vand.u32 %v3013, 4294901760
        %v8078 = vsub.f32 %v3013, %v8077
        %v8079 = vand.u32 %v8078, 4294901760
        %8080 = vmatpush1.msra.mxu0 %v8079
        %8081 = vmatprep.subr.mxu0 0.0
        %v8082 = vand.u32 %v3014, 4294901760
        %v8083 = vsub.f32 %v3014, %v8082
        %v8084 = vand.u32 %v8083, 4294901760
        %8085 = vmatpush1.msra.mxu0 %v8084
        %v8086 = vand.u32 %v415, 4294901760
        %8087 = vmatprep.mubr.f32.mxu0 %v8086
        %v8088 = vand.u32 %v414, 4294901760
        %8089 = vmatmul.mubr.f32.gmra.mrb[0].mxu0 %v8088
        %v8090 = vpop.f32.mrb[0].mxu0
        %v8091 = vadd.f32 %v7923, %v8090
        %v8092 = vpop.f32.mrb[0].mxu0
        %8093 = vdwg.mxu0
        %8094 = vmatprep.subr.mxu0 0.0
        %v8095 = vand.u32 %v2983, 4294901760
        %8096 = vmatpush1.msra.mxu0 %v8095
        %8097 = vmatprep.subr.mxu0 0.0
        %v8098 = vand.u32 %v2984, 4294901760
        %8099 = vmatpush1.msra.mxu0 %v8098
        %8100 = vmatprep.subr.mxu0 0.0
        %v8101 = vand.u32 %v2985, 4294901760
        %8102 = vmatpush1.msra.mxu0 %v8101
        %8103 = vmatprep.subr.mxu0 0.0
        %v8104 = vand.u32 %v2986, 4294901760
        %8105 = vmatpush1.msra.mxu0 %v8104
        %8106 = vmatprep.subr.mxu0 0.0
        %v8107 = vand.u32 %v2987, 4294901760
        %8108 = vmatpush1.msra.mxu0 %v8107
        %8109 = vmatprep.subr.mxu0 0.0
        %v8110 = vand.u32 %v2988, 4294901760
        %8111 = vmatpush1.msra.mxu0 %v8110
        %8112 = vmatprep.subr.mxu0 0.0
        %v8113 = vand.u32 %v2989, 4294901760
        %8114 = vmatpush1.msra.mxu0 %v8113
        %8115 = vmatprep.subr.mxu0 0.0
        %v8116 = vand.u32 %v2990, 4294901760
        %8117 = vmatpush1.msra.mxu0 %v8116
        %8118 = vmatprep.subr.mxu0 0.0
        %v8119 = vand.u32 %v2991, 4294901760
        %8120 = vmatpush1.msra.mxu0 %v8119
        %8121 = vmatprep.subr.mxu0 0.0
        %v8122 = vand.u32 %v2992, 4294901760
        %8123 = vmatpush1.msra.mxu0 %v8122
        %8124 = vmatprep.subr.mxu0 0.0
        %v8125 = vand.u32 %v2993, 4294901760
        %8126 = vmatpush1.msra.mxu0 %v8125
        %8127 = vmatprep.subr.mxu0 0.0
        %v8128 = vand.u32 %v2994, 4294901760
        %8129 = vmatpush1.msra.mxu0 %v8128
        %8130 = vmatprep.subr.mxu0 0.0
        %v8131 = vand.u32 %v2995, 4294901760
        %8132 = vmatpush1.msra.mxu0 %v8131
        %8133 = vmatprep.subr.mxu0 0.0
        %v8134 = vand.u32 %v2996, 4294901760
        %8135 = vmatpush1.msra.mxu0 %v8134
        %8136 = vmatprep.subr.mxu0 0.0
        %v8137 = vand.u32 %v2997, 4294901760
        %8138 = vmatpush1.msra.mxu0 %v8137
        %8139 = vmatprep.subr.mxu0 0.0
        %v8140 = vand.u32 %v2998, 4294901760
        %8141 = vmatpush1.msra.mxu0 %v8140
        %8142 = vmatprep.subr.mxu0 0.0
        %v8143 = vand.u32 %v2999, 4294901760
        %8144 = vmatpush1.msra.mxu0 %v8143
        %8145 = vmatprep.subr.mxu0 0.0
        %v8146 = vand.u32 %v3000, 4294901760
        %8147 = vmatpush1.msra.mxu0 %v8146
        %8148 = vmatprep.subr.mxu0 0.0
        %v8149 = vand.u32 %v3001, 4294901760
        %8150 = vmatpush1.msra.mxu0 %v8149
        %8151 = vmatprep.subr.mxu0 0.0
        %v8152 = vand.u32 %v3002, 4294901760
        %8153 = vmatpush1.msra.mxu0 %v8152
        %8154 = vmatprep.subr.mxu0 0.0
        %v8155 = vand.u32 %v3003, 4294901760
        %8156 = vmatpush1.msra.mxu0 %v8155
        %8157 = vmatprep.subr.mxu0 0.0
        %v8158 = vand.u32 %v3004, 4294901760
        %8159 = vmatpush1.msra.mxu0 %v8158
        %8160 = vmatprep.subr.mxu0 0.0
        %v8161 = vand.u32 %v3005, 4294901760
        %8162 = vmatpush1.msra.mxu0 %v8161
        %8163 = vmatprep.subr.mxu0 0.0
        %v8164 = vand.u32 %v3006, 4294901760
        %8165 = vmatpush1.msra.mxu0 %v8164
        %8166 = vmatprep.subr.mxu0 0.0
        %v8167 = vand.u32 %v3007, 4294901760
        %8168 = vmatpush1.msra.mxu0 %v8167
        %8169 = vmatprep.subr.mxu0 0.0
        %v8170 = vand.u32 %v3008, 4294901760
        %8171 = vmatpush1.msra.mxu0 %v8170
        %8172 = vmatprep.subr.mxu0 0.0
        %v8173 = vand.u32 %v3009, 4294901760
        %8174 = vmatpush1.msra.mxu0 %v8173
        %8175 = vmatprep.subr.mxu0 0.0
        %v8176 = vand.u32 %v3010, 4294901760
        %8177 = vmatpush1.msra.mxu0 %v8176
        %8178 = vmatprep.subr.mxu0 0.0
        %v8179 = vand.u32 %v3011, 4294901760
        %8180 = vmatpush1.msra.mxu0 %v8179
        %8181 = vmatprep.subr.mxu0 0.0
        %v8182 = vand.u32 %v3012, 4294901760
        %8183 = vmatpush1.msra.mxu0 %v8182
        %8184 = vmatprep.subr.mxu0 0.0
        %v8185 = vand.u32 %v3013, 4294901760
        %8186 = vmatpush1.msra.mxu0 %v8185
        %8187 = vmatprep.subr.mxu0 0.0
        %v8188 = vand.u32 %v3014, 4294901760
        %8189 = vmatpush1.msra.mxu0 %v8188
        %v8190 = vand.u32 %v415, 4294901760
        %8191 = vmatprep.mubr.f32.mxu0 %v8190
        %v8192 = vand.u32 %v414, 4294901760
        %8193 = vmatmul.mubr.f32.gmra.mrb[0].mxu0 %v8192
        %v8194 = vpop.f32.mrb[0].mxu0
        %v8195 = vadd.f32 %v8091, %v8194
        %v8196 = vpop.f32.mrb[0].mxu0
        %8197 = vdwg.mxu0
        %8198 = vmatprep.subr.mxu0 0.0
        %v8199 = vand.u32 %v3015, 4294901760
        %8200 = vmatpush1.msra.mxu0 %v8199
        %8201 = vmatprep.subr.mxu0 0.0
        %v8202 = vand.u32 %v3016, 4294901760
        %8203 = vmatpush1.msra.mxu0 %v8202
        %8204 = vmatprep.subr.mxu0 0.0
        %v8205 = vand.u32 %v3017, 4294901760
        %8206 = vmatpush1.msra.mxu0 %v8205
        %8207 = vmatprep.subr.mxu0 0.0
        %v8208 = vand.u32 %v3018, 4294901760
        %8209 = vmatpush1.msra.mxu0 %v8208
        %8210 = vmatprep.subr.mxu0 0.0
        %v8211 = vand.u32 %v3019, 4294901760
        %8212 = vmatpush1.msra.mxu0 %v8211
        %8213 = vmatprep.subr.mxu0 0.0
        %v8214 = vand.u32 %v3020, 4294901760
        %8215 = vmatpush1.msra.mxu0 %v8214
        %8216 = vmatprep.subr.mxu0 0.0
        %v8217 = vand.u32 %v3021, 4294901760
        %8218 = vmatpush1.msra.mxu0 %v8217
        %8219 = vmatprep.subr.mxu0 0.0
        %v8220 = vand.u32 %v3022, 4294901760
        %8221 = vmatpush1.msra.mxu0 %v8220
        %8222 = vmatprep.subr.mxu0 0.0
        %8223 = vmatpush1.msra.mxu0 0.0
        %8224 = vmatprep.subr.mxu0 0.0
        %8225 = vmatpush1.msra.mxu0 0.0
        %8226 = vmatprep.subr.mxu0 0.0
        %8227 = vmatpush1.msra.mxu0 0.0
        %8228 = vmatprep.subr.mxu0 0.0
        %8229 = vmatpush1.msra.mxu0 0.0
        %8230 = vmatprep.subr.mxu0 0.0
        %8231 = vmatpush1.msra.mxu0 0.0
        %8232 = vmatprep.subr.mxu0 0.0
        %8233 = vmatpush1.msra.mxu0 0.0
        %8234 = vmatprep.subr.mxu0 0.0
        %8235 = vmatpush1.msra.mxu0 0.0
        %8236 = vmatprep.subr.mxu0 0.0
        %8237 = vmatpush1.msra.mxu0 0.0
        %8238 = vmatprep.subr.mxu0 0.0
        %8239 = vmatpush1.msra.mxu0 0.0
        %8240 = vmatprep.subr.mxu0 0.0
        %8241 = vmatpush1.msra.mxu0 0.0
        %8242 = vmatprep.subr.mxu0 0.0
        %8243 = vmatpush1.msra.mxu0 0.0
        %8244 = vmatprep.subr.mxu0 0.0
        %8245 = vmatpush1.msra.mxu0 0.0
        %8246 = vmatprep.subr.mxu0 0.0
        %8247 = vmatpush1.msra.mxu0 0.0
        %8248 = vmatprep.subr.mxu0 0.0
        %8249 = vmatpush1.msra.mxu0 0.0
        %8250 = vmatprep.subr.mxu0 0.0
        %8251 = vmatpush1.msra.mxu0 0.0
        %8252 = vmatprep.subr.mxu0 0.0
        %8253 = vmatpush1.msra.mxu0 0.0
        %8254 = vmatprep.subr.mxu0 0.0
        %8255 = vmatpush1.msra.mxu0 0.0
        %8256 = vmatprep.subr.mxu0 0.0
        %8257 = vmatpush1.msra.mxu0 0.0
        %8258 = vmatprep.subr.mxu0 0.0
        %8259 = vmatpush1.msra.mxu0 0.0
        %8260 = vmatprep.subr.mxu0 0.0
        %8261 = vmatpush1.msra.mxu0 0.0
        %8262 = vmatprep.subr.mxu0 0.0
        %8263 = vmatpush1.msra.mxu0 0.0
        %8264 = vmatprep.subr.mxu0 0.0
        %8265 = vmatpush1.msra.mxu0 0.0
        %8266 = vmatprep.subr.mxu0 0.0
        %8267 = vmatpush1.msra.mxu0 0.0
        %8268 = vmatprep.subr.mxu0 0.0
        %8269 = vmatpush1.msra.mxu0 0.0
        %8270 = vmatprep.mubr.f32.mxu0 0.0
        %v8271 = vand.u32 %v3024, 4294901760
        %v8272 = vsub.f32 %v3024, %v8271
        %v8273 = vand.u32 %v8272, 4294901760
        %v8274 = vsub.f32 %v8272, %v8273
        %v8275 = vand.u32 %v8274, 4294901760
        %8276 = vmatmul.mubr.f32.gmra.mrb[0].mxu0 %v8275
        %v8277 = vpop.f32.mrb[0].mxu0
        %v8278 = vadd.f32 %v8195, %v8277
        %v8279 = vpop.f32.mrb[0].mxu0
        %8280 = vdwg.mxu0
        %8281 = vmatprep.subr.mxu0 0.0
        %v8282 = vand.u32 %v3015, 4294901760
        %v8283 = vsub.f32 %v3015, %v8282
        %v8284 = vand.u32 %v8283, 4294901760
        %v8285 = vsub.f32 %v8283, %v8284
        %v8286 = vand.u32 %v8285, 4294901760
        %8287 = vmatpush1.msra.mxu0 %v8286
        %8288 = vmatprep.subr.mxu0 0.0
        %v8289 = vand.u32 %v3016, 4294901760
        %v8290 = vsub.f32 %v3016, %v8289
        %v8291 = vand.u32 %v8290, 4294901760
        %v8292 = vsub.f32 %v8290, %v8291
        %v8293 = vand.u32 %v8292, 4294901760
        %8294 = vmatpush1.msra.mxu0 %v8293
        %8295 = vmatprep.subr.mxu0 0.0
        %v8296 = vand.u32 %v3017, 4294901760
        %v8297 = vsub.f32 %v3017, %v8296
        %v8298 = vand.u32 %v8297, 4294901760
        %v8299 = vsub.f32 %v8297, %v8298
        %v8300 = vand.u32 %v8299, 4294901760
        %8301 = vmatpush1.msra.mxu0 %v8300
        %8302 = vmatprep.subr.mxu0 0.0
        %v8303 = vand.u32 %v3018, 4294901760
        %v8304 = vsub.f32 %v3018, %v8303
        %v8305 = vand.u32 %v8304, 4294901760
        %v8306 = vsub.f32 %v8304, %v8305
        %v8307 = vand.u32 %v8306, 4294901760
        %8308 = vmatpush1.msra.mxu0 %v8307
        %8309 = vmatprep.subr.mxu0 0.0
        %v8310 = vand.u32 %v3019, 4294901760
        %v8311 = vsub.f32 %v3019, %v8310
        %v8312 = vand.u32 %v8311, 4294901760
        %v8313 = vsub.f32 %v8311, %v8312
        %v8314 = vand.u32 %v8313, 4294901760
        %8315 = vmatpush1.msra.mxu0 %v8314
        %8316 = vmatprep.subr.mxu0 0.0
        %v8317 = vand.u32 %v3020, 4294901760
        %v8318 = vsub.f32 %v3020, %v8317
        %v8319 = vand.u32 %v8318, 4294901760
        %v8320 = vsub.f32 %v8318, %v8319
        %v8321 = vand.u32 %v8320, 4294901760
        %8322 = vmatpush1.msra.mxu0 %v8321
        %8323 = vmatprep.subr.mxu0 0.0
        %v8324 = vand.u32 %v3021, 4294901760
        %v8325 = vsub.f32 %v3021, %v8324
        %v8326 = vand.u32 %v8325, 4294901760
        %v8327 = vsub.f32 %v8325, %v8326
        %v8328 = vand.u32 %v8327, 4294901760
        %8329 = vmatpush1.msra.mxu0 %v8328
        %8330 = vmatprep.subr.mxu0 0.0
        %v8331 = vand.u32 %v3022, 4294901760
        %v8332 = vsub.f32 %v3022, %v8331
        %v8333 = vand.u32 %v8332, 4294901760
        %v8334 = vsub.f32 %v8332, %v8333
        %v8335 = vand.u32 %v8334, 4294901760
        %8336 = vmatpush1.msra.mxu0 %v8335
        %8337 = vmatprep.subr.mxu0 0.0
        %8338 = vmatpush1.msra.mxu0 0.0
        %8339 = vmatprep.subr.mxu0 0.0
        %8340 = vmatpush1.msra.mxu0 0.0
        %8341 = vmatprep.subr.mxu0 0.0
        %8342 = vmatpush1.msra.mxu0 0.0
        %8343 = vmatprep.subr.mxu0 0.0
        %8344 = vmatpush1.msra.mxu0 0.0
        %8345 = vmatprep.subr.mxu0 0.0
        %8346 = vmatpush1.msra.mxu0 0.0
        %8347 = vmatprep.subr.mxu0 0.0
        %8348 = vmatpush1.msra.mxu0 0.0
        %8349 = vmatprep.subr.mxu0 0.0
        %8350 = vmatpush1.msra.mxu0 0.0
        %8351 = vmatprep.subr.mxu0 0.0
        %8352 = vmatpush1.msra.mxu0 0.0
        %8353 = vmatprep.subr.mxu0 0.0
        %8354 = vmatpush1.msra.mxu0 0.0
        %8355 = vmatprep.subr.mxu0 0.0
        %8356 = vmatpush1.msra.mxu0 0.0
        %8357 = vmatprep.subr.mxu0 0.0
        %8358 = vmatpush1.msra.mxu0 0.0
        %8359 = vmatprep.subr.mxu0 0.0
        %8360 = vmatpush1.msra.mxu0 0.0
        %8361 = vmatprep.subr.mxu0 0.0
        %8362 = vmatpush1.msra.mxu0 0.0
        %8363 = vmatprep.subr.mxu0 0.0
        %8364 = vmatpush1.msra.mxu0 0.0
        %8365 = vmatprep.subr.mxu0 0.0
        %8366 = vmatpush1.msra.mxu0 0.0
        %8367 = vmatprep.subr.mxu0 0.0
        %8368 = vmatpush1.msra.mxu0 0.0
        %8369 = vmatprep.subr.mxu0 0.0
        %8370 = vmatpush1.msra.mxu0 0.0
        %8371 = vmatprep.subr.mxu0 0.0
        %8372 = vmatpush1.msra.mxu0 0.0
        %8373 = vmatprep.subr.mxu0 0.0
        %8374 = vmatpush1.msra.mxu0 0.0
        %8375 = vmatprep.subr.mxu0 0.0
        %8376 = vmatpush1.msra.mxu0 0.0
        %8377 = vmatprep.subr.mxu0 0.0
        %8378 = vmatpush1.msra.mxu0 0.0
        %8379 = vmatprep.subr.mxu0 0.0
        %8380 = vmatpush1.msra.mxu0 0.0
        %8381 = vmatprep.subr.mxu0 0.0
        %8382 = vmatpush1.msra.mxu0 0.0
        %8383 = vmatprep.subr.mxu0 0.0
        %8384 = vmatpush1.msra.mxu0 0.0
        %8385 = vmatprep.mubr.f32.mxu0 0.0
        %v8386 = vand.u32 %v3024, 4294901760
        %8387 = vmatmul.mubr.f32.gmra.mrb[0].mxu0 %v8386
        %v8388 = vpop.f32.mrb[0].mxu0
        %v8389 = vadd.f32 %v8278, %v8388
        %v8390 = vpop.f32.mrb[0].mxu0
        %8391 = vdwg.mxu0
        %8392 = vmatprep.subr.mxu0 0.0
        %v8393 = vand.u32 %v3015, 4294901760
        %v8394 = vsub.f32 %v3015, %v8393
        %8395 = vmatpush1.msra.mxu0 %v8394
        %8396 = vmatprep.subr.mxu0 0.0
        %v8397 = vand.u32 %v3016, 4294901760
        %v8398 = vsub.f32 %v3016, %v8397
        %8399 = vmatpush1.msra.mxu0 %v8398
        %8400 = vmatprep.subr.mxu0 0.0
        %v8401 = vand.u32 %v3017, 4294901760
        %v8402 = vsub.f32 %v3017, %v8401
        %8403 = vmatpush1.msra.mxu0 %v8402
        %8404 = vmatprep.subr.mxu0 0.0
        %v8405 = vand.u32 %v3018, 4294901760
        %v8406 = vsub.f32 %v3018, %v8405
        %8407 = vmatpush1.msra.mxu0 %v8406
        %8408 = vmatprep.subr.mxu0 0.0
        %v8409 = vand.u32 %v3019, 4294901760
        %v8410 = vsub.f32 %v3019, %v8409
        %8411 = vmatpush1.msra.mxu0 %v8410
        %8412 = vmatprep.subr.mxu0 0.0
        %v8413 = vand.u32 %v3020, 4294901760
        %v8414 = vsub.f32 %v3020, %v8413
        %8415 = vmatpush1.msra.mxu0 %v8414
        %8416 = vmatprep.subr.mxu0 0.0
        %v8417 = vand.u32 %v3021, 4294901760
        %v8418 = vsub.f32 %v3021, %v8417
        %8419 = vmatpush1.msra.mxu0 %v8418
        %8420 = vmatprep.subr.mxu0 0.0
        %v8421 = vand.u32 %v3022, 4294901760
        %v8422 = vsub.f32 %v3022, %v8421
        %8423 = vmatpush1.msra.mxu0 %v8422
        %8424 = vmatprep.subr.mxu0 0.0
        %8425 = vmatpush1.msra.mxu0 0.0
        %8426 = vmatprep.subr.mxu0 0.0
        %8427 = vmatpush1.msra.mxu0 0.0
        %8428 = vmatprep.subr.mxu0 0.0
        %8429 = vmatpush1.msra.mxu0 0.0
        %8430 = vmatprep.subr.mxu0 0.0
        %8431 = vmatpush1.msra.mxu0 0.0
        %8432 = vmatprep.subr.mxu0 0.0
        %8433 = vmatpush1.msra.mxu0 0.0
        %8434 = vmatprep.subr.mxu0 0.0
        %8435 = vmatpush1.msra.mxu0 0.0
        %8436 = vmatprep.subr.mxu0 0.0
        %8437 = vmatpush1.msra.mxu0 0.0
        %8438 = vmatprep.subr.mxu0 0.0
        %8439 = vmatpush1.msra.mxu0 0.0
        %8440 = vmatprep.subr.mxu0 0.0
        %8441 = vmatpush1.msra.mxu0 0.0
        %8442 = vmatprep.subr.mxu0 0.0
        %8443 = vmatpush1.msra.mxu0 0.0
        %8444 = vmatprep.subr.mxu0 0.0
        %8445 = vmatpush1.msra.mxu0 0.0
        %8446 = vmatprep.subr.mxu0 0.0
        %8447 = vmatpush1.msra.mxu0 0.0
        %8448 = vmatprep.subr.mxu0 0.0
        %8449 = vmatpush1.msra.mxu0 0.0
        %8450 = vmatprep.subr.mxu0 0.0
        %8451 = vmatpush1.msra.mxu0 0.0
        %8452 = vmatprep.subr.mxu0 0.0
        %8453 = vmatpush1.msra.mxu0 0.0
        %8454 = vmatprep.subr.mxu0 0.0
        %8455 = vmatpush1.msra.mxu0 0.0
        %8456 = vmatprep.subr.mxu0 0.0
        %8457 = vmatpush1.msra.mxu0 0.0
        %8458 = vmatprep.subr.mxu0 0.0
        %8459 = vmatpush1.msra.mxu0 0.0
        %8460 = vmatprep.subr.mxu0 0.0
        %8461 = vmatpush1.msra.mxu0 0.0
        %8462 = vmatprep.subr.mxu0 0.0
        %8463 = vmatpush1.msra.mxu0 0.0
        %8464 = vmatprep.subr.mxu0 0.0
        %8465 = vmatpush1.msra.mxu0 0.0
        %8466 = vmatprep.subr.mxu0 0.0
        %8467 = vmatpush1.msra.mxu0 0.0
        %8468 = vmatprep.subr.mxu0 0.0
        %8469 = vmatpush1.msra.mxu0 0.0
        %8470 = vmatprep.subr.mxu0 0.0
        %8471 = vmatpush1.msra.mxu0 0.0
        %8472 = vmatprep.mubr.f32.mxu0 0.0
        %v8473 = vand.u32 %v3024, 4294901760
        %v8474 = vsub.f32 %v3024, %v8473
        %8475 = vmatmul.mubr.f32.gmra.mrb[0].mxu0 %v8474
        %v8476 = vpop.f32.mrb[0].mxu0
        %v8477 = vadd.f32 %v8389, %v8476
        %v8478 = vpop.f32.mrb[0].mxu0
        %8479 = vdwg.mxu0
        %8480 = vmatprep.subr.mxu0 0.0
        %v8481 = vand.u32 %v3015, 4294901760
        %8482 = vmatpush1.msra.mxu0 %v8481
        %8483 = vmatprep.subr.mxu0 0.0
        %v8484 = vand.u32 %v3016, 4294901760
        %8485 = vmatpush1.msra.mxu0 %v8484
        %8486 = vmatprep.subr.mxu0 0.0
        %v8487 = vand.u32 %v3017, 4294901760
        %8488 = vmatpush1.msra.mxu0 %v8487
        %8489 = vmatprep.subr.mxu0 0.0
        %v8490 = vand.u32 %v3018, 4294901760
        %8491 = vmatpush1.msra.mxu0 %v8490
        %8492 = vmatprep.subr.mxu0 0.0
        %v8493 = vand.u32 %v3019, 4294901760
        %8494 = vmatpush1.msra.mxu0 %v8493
        %8495 = vmatprep.subr.mxu0 0.0
        %v8496 = vand.u32 %v3020, 4294901760
        %8497 = vmatpush1.msra.mxu0 %v8496
        %8498 = vmatprep.subr.mxu0 0.0
        %v8499 = vand.u32 %v3021, 4294901760
        %8500 = vmatpush1.msra.mxu0 %v8499
        %8501 = vmatprep.subr.mxu0 0.0
        %v8502 = vand.u32 %v3022, 4294901760
        %8503 = vmatpush1.msra.mxu0 %v8502
        %8504 = vmatprep.subr.mxu0 0.0
        %8505 = vmatpush1.msra.mxu0 0.0
        %8506 = vmatprep.subr.mxu0 0.0
        %8507 = vmatpush1.msra.mxu0 0.0
        %8508 = vmatprep.subr.mxu0 0.0
        %8509 = vmatpush1.msra.mxu0 0.0
        %8510 = vmatprep.subr.mxu0 0.0
        %8511 = vmatpush1.msra.mxu0 0.0
        %8512 = vmatprep.subr.mxu0 0.0
        %8513 = vmatpush1.msra.mxu0 0.0
        %8514 = vmatprep.subr.mxu0 0.0
        %8515 = vmatpush1.msra.mxu0 0.0
        %8516 = vmatprep.subr.mxu0 0.0
        %8517 = vmatpush1.msra.mxu0 0.0
        %8518 = vmatprep.subr.mxu0 0.0
        %8519 = vmatpush1.msra.mxu0 0.0
        %8520 = vmatprep.subr.mxu0 0.0
        %8521 = vmatpush1.msra.mxu0 0.0
        %8522 = vmatprep.subr.mxu0 0.0
        %8523 = vmatpush1.msra.mxu0 0.0
        %8524 = vmatprep.subr.mxu0 0.0
        %8525 = vmatpush1.msra.mxu0 0.0
        %8526 = vmatprep.subr.mxu0 0.0
        %8527 = vmatpush1.msra.mxu0 0.0
        %8528 = vmatprep.subr.mxu0 0.0
        %8529 = vmatpush1.msra.mxu0 0.0
        %8530 = vmatprep.subr.mxu0 0.0
        %8531 = vmatpush1.msra.mxu0 0.0
        %8532 = vmatprep.subr.mxu0 0.0
        %8533 = vmatpush1.msra.mxu0 0.0
        %8534 = vmatprep.subr.mxu0 0.0
        %8535 = vmatpush1.msra.mxu0 0.0
        %8536 = vmatprep.subr.mxu0 0.0
        %8537 = vmatpush1.msra.mxu0 0.0
        %8538 = vmatprep.subr.mxu0 0.0
        %8539 = vmatpush1.msra.mxu0 0.0
        %8540 = vmatprep.subr.mxu0 0.0
        %8541 = vmatpush1.msra.mxu0 0.0
        %8542 = vmatprep.subr.mxu0 0.0
        %8543 = vmatpush1.msra.mxu0 0.0
        %8544 = vmatprep.subr.mxu0 0.0
        %8545 = vmatpush1.msra.mxu0 0.0
        %8546 = vmatprep.subr.mxu0 0.0
        %8547 = vmatpush1.msra.mxu0 0.0
        %8548 = vmatprep.subr.mxu0 0.0
        %8549 = vmatpush1.msra.mxu0 0.0
        %8550 = vmatprep.subr.mxu0 0.0
        %8551 = vmatpush1.msra.mxu0 0.0
        %8552 = vmatprep.mubr.f32.mxu0 0.0
        %v8553 = vand.u32 %v3024, 4294901760
        %v8554 = vsub.f32 %v3024, %v8553
        %v8555 = vand.u32 %v8554, 4294901760
        %8556 = vmatmul.mubr.f32.gmra.mrb[0].mxu0 %v8555
        %v8557 = vpop.f32.mrb[0].mxu0
        %v8558 = vadd.f32 %v8477, %v8557
        %v8559 = vpop.f32.mrb[0].mxu0
        %8560 = vdwg.mxu0
        %8561 = vmatprep.subr.mxu0 0.0
        %v8562 = vand.u32 %v3015, 4294901760
        %v8563 = vsub.f32 %v3015, %v8562
        %v8564 = vand.u32 %v8563, 4294901760
        %8565 = vmatpush1.msra.mxu0 %v8564
        %8566 = vmatprep.subr.mxu0 0.0
        %v8567 = vand.u32 %v3016, 4294901760
        %v8568 = vsub.f32 %v3016, %v8567
        %v8569 = vand.u32 %v8568, 4294901760
        %8570 = vmatpush1.msra.mxu0 %v8569
        %8571 = vmatprep.subr.mxu0 0.0
        %v8572 = vand.u32 %v3017, 4294901760
        %v8573 = vsub.f32 %v3017, %v8572
        %v8574 = vand.u32 %v8573, 4294901760
        %8575 = vmatpush1.msra.mxu0 %v8574
        %8576 = vmatprep.subr.mxu0 0.0
        %v8577 = vand.u32 %v3018, 4294901760
        %v8578 = vsub.f32 %v3018, %v8577
        %v8579 = vand.u32 %v8578, 4294901760
        %8580 = vmatpush1.msra.mxu0 %v8579
        %8581 = vmatprep.subr.mxu0 0.0
        %v8582 = vand.u32 %v3019, 4294901760
        %v8583 = vsub.f32 %v3019, %v8582
        %v8584 = vand.u32 %v8583, 4294901760
        %8585 = vmatpush1.msra.mxu0 %v8584
        %8586 = vmatprep.subr.mxu0 0.0
        %v8587 = vand.u32 %v3020, 4294901760
        %v8588 = vsub.f32 %v3020, %v8587
        %v8589 = vand.u32 %v8588, 4294901760
        %8590 = vmatpush1.msra.mxu0 %v8589
        %8591 = vmatprep.subr.mxu0 0.0
        %v8592 = vand.u32 %v3021, 4294901760
        %v8593 = vsub.f32 %v3021, %v8592
        %v8594 = vand.u32 %v8593, 4294901760
        %8595 = vmatpush1.msra.mxu0 %v8594
        %8596 = vmatprep.subr.mxu0 0.0
        %v8597 = vand.u32 %v3022, 4294901760
        %v8598 = vsub.f32 %v3022, %v8597
        %v8599 = vand.u32 %v8598, 4294901760
        %8600 = vmatpush1.msra.mxu0 %v8599
        %8601 = vmatprep.subr.mxu0 0.0
        %8602 = vmatpush1.msra.mxu0 0.0
        %8603 = vmatprep.subr.mxu0 0.0
        %8604 = vmatpush1.msra.mxu0 0.0
        %8605 = vmatprep.subr.mxu0 0.0
        %8606 = vmatpush1.msra.mxu0 0.0
        %8607 = vmatprep.subr.mxu0 0.0
        %8608 = vmatpush1.msra.mxu0 0.0
        %8609 = vmatprep.subr.mxu0 0.0
        %8610 = vmatpush1.msra.mxu0 0.0
        %8611 = vmatprep.subr.mxu0 0.0
        %8612 = vmatpush1.msra.mxu0 0.0
        %8613 = vmatprep.subr.mxu0 0.0
        %8614 = vmatpush1.msra.mxu0 0.0
        %8615 = vmatprep.subr.mxu0 0.0
        %8616 = vmatpush1.msra.mxu0 0.0
        %8617 = vmatprep.subr.mxu0 0.0
        %8618 = vmatpush1.msra.mxu0 0.0
        %8619 = vmatprep.subr.mxu0 0.0
        %8620 = vmatpush1.msra.mxu0 0.0
        %8621 = vmatprep.subr.mxu0 0.0
        %8622 = vmatpush1.msra.mxu0 0.0
        %8623 = vmatprep.subr.mxu0 0.0
        %8624 = vmatpush1.msra.mxu0 0.0
        %8625 = vmatprep.subr.mxu0 0.0
        %8626 = vmatpush1.msra.mxu0 0.0
        %8627 = vmatprep.subr.mxu0 0.0
        %8628 = vmatpush1.msra.mxu0 0.0
        %8629 = vmatprep.subr.mxu0 0.0
        %8630 = vmatpush1.msra.mxu0 0.0
        %8631 = vmatprep.subr.mxu0 0.0
        %8632 = vmatpush1.msra.mxu0 0.0
        %8633 = vmatprep.subr.mxu0 0.0
        %8634 = vmatpush1.msra.mxu0 0.0
        %8635 = vmatprep.subr.mxu0 0.0
        %8636 = vmatpush1.msra.mxu0 0.0
        %8637 = vmatprep.subr.mxu0 0.0
        %8638 = vmatpush1.msra.mxu0 0.0
        %8639 = vmatprep.subr.mxu0 0.0
        %8640 = vmatpush1.msra.mxu0 0.0
        %8641 = vmatprep.subr.mxu0 0.0
        %8642 = vmatpush1.msra.mxu0 0.0
        %8643 = vmatprep.subr.mxu0 0.0
        %8644 = vmatpush1.msra.mxu0 0.0
        %8645 = vmatprep.subr.mxu0 0.0
        %8646 = vmatpush1.msra.mxu0 0.0
        %8647 = vmatprep.subr.mxu0 0.0
        %8648 = vmatpush1.msra.mxu0 0.0
        %8649 = vmatprep.mubr.f32.mxu0 0.0
        %v8650 = vand.u32 %v3024, 4294901760
        %8651 = vmatmul.mubr.f32.gmra.mrb[0].mxu0 %v8650
        %v8652 = vpop.f32.mrb[0].mxu0
        %v8653 = vadd.f32 %v8558, %v8652
        %v8654 = vpop.f32.mrb[0].mxu0
        %8655 = vdwg.mxu0
        %8656 = vmatprep.subr.mxu0 0.0
        %v8657 = vand.u32 %v3015, 4294901760
        %8658 = vmatpush1.msra.mxu0 %v8657
        %8659 = vmatprep.subr.mxu0 0.0
        %v8660 = vand.u32 %v3016, 4294901760
        %8661 = vmatpush1.msra.mxu0 %v8660
        %8662 = vmatprep.subr.mxu0 0.0
        %v8663 = vand.u32 %v3017, 4294901760
        %8664 = vmatpush1.msra.mxu0 %v8663
        %8665 = vmatprep.subr.mxu0 0.0
        %v8666 = vand.u32 %v3018, 4294901760
        %8667 = vmatpush1.msra.mxu0 %v8666
        %8668 = vmatprep.subr.mxu0 0.0
        %v8669 = vand.u32 %v3019, 4294901760
        %8670 = vmatpush1.msra.mxu0 %v8669
        %8671 = vmatprep.subr.mxu0 0.0
        %v8672 = vand.u32 %v3020, 4294901760
        %8673 = vmatpush1.msra.mxu0 %v8672
        %8674 = vmatprep.subr.mxu0 0.0
        %v8675 = vand.u32 %v3021, 4294901760
        %8676 = vmatpush1.msra.mxu0 %v8675
        %8677 = vmatprep.subr.mxu0 0.0
        %v8678 = vand.u32 %v3022, 4294901760
        %8679 = vmatpush1.msra.mxu0 %v8678
        %8680 = vmatprep.subr.mxu0 0.0
        %8681 = vmatpush1.msra.mxu0 0.0
        %8682 = vmatprep.subr.mxu0 0.0
        %8683 = vmatpush1.msra.mxu0 0.0
        %8684 = vmatprep.subr.mxu0 0.0
        %8685 = vmatpush1.msra.mxu0 0.0
        %8686 = vmatprep.subr.mxu0 0.0
        %8687 = vmatpush1.msra.mxu0 0.0
        %8688 = vmatprep.subr.mxu0 0.0
        %8689 = vmatpush1.msra.mxu0 0.0
        %8690 = vmatprep.subr.mxu0 0.0
        %8691 = vmatpush1.msra.mxu0 0.0
        %8692 = vmatprep.subr.mxu0 0.0
        %8693 = vmatpush1.msra.mxu0 0.0
        %8694 = vmatprep.subr.mxu0 0.0
        %8695 = vmatpush1.msra.mxu0 0.0
        %8696 = vmatprep.subr.mxu0 0.0
        %8697 = vmatpush1.msra.mxu0 0.0
        %8698 = vmatprep.subr.mxu0 0.0
        %8699 = vmatpush1.msra.mxu0 0.0
        %8700 = vmatprep.subr.mxu0 0.0
        %8701 = vmatpush1.msra.mxu0 0.0
        %8702 = vmatprep.subr.mxu0 0.0
        %8703 = vmatpush1.msra.mxu0 0.0
        %8704 = vmatprep.subr.mxu0 0.0
        %8705 = vmatpush1.msra.mxu0 0.0
        %8706 = vmatprep.subr.mxu0 0.0
        %8707 = vmatpush1.msra.mxu0 0.0
        %8708 = vmatprep.subr.mxu0 0.0
        %8709 = vmatpush1.msra.mxu0 0.0
        %8710 = vmatprep.subr.mxu0 0.0
        %8711 = vmatpush1.msra.mxu0 0.0
        %8712 = vmatprep.subr.mxu0 0.0
        %8713 = vmatpush1.msra.mxu0 0.0
        %8714 = vmatprep.subr.mxu0 0.0
        %8715 = vmatpush1.msra.mxu0 0.0
        %8716 = vmatprep.subr.mxu0 0.0
        %8717 = vmatpush1.msra.mxu0 0.0
        %8718 = vmatprep.subr.mxu0 0.0
        %8719 = vmatpush1.msra.mxu0 0.0
        %8720 = vmatprep.subr.mxu0 0.0
        %8721 = vmatpush1.msra.mxu0 0.0
        %8722 = vmatprep.subr.mxu0 0.0
        %8723 = vmatpush1.msra.mxu0 0.0
        %8724 = vmatprep.subr.mxu0 0.0
        %8725 = vmatpush1.msra.mxu0 0.0
        %8726 = vmatprep.subr.mxu0 0.0
        %8727 = vmatpush1.msra.mxu0 0.0
        %8728 = vmatprep.mubr.f32.mxu0 0.0
        %v8729 = vand.u32 %v3024, 4294901760
        %8730 = vmatmul.mubr.f32.gmra.mrb[0].mxu0 %v8729
        %v8731 = vpop.f32.mrb[0].mxu0
        %v8732 = vadd.f32 %v8653, %v8731
        %v8733 = vpop.f32.mrb[0].mxu0
        %8734 = vdwg.mxu0
        %v8735 = vsub.f32 0.0, %v2060
        %v8736 = vmax.f32 %v8735, 0.0
        %v8737 = vand.u32 2147483647, %v8735
        %v8738 = vsub.f32 0.0, %v8737
        %v8739 = vmul.f32 %v8738, 1.442695
        %v8740 = vpow.pop %v8739
        %v8741 = vadd.f32 %v8740, 1.0
        %v8742 = vlog2.pop %v8741
        %v8743 = vmul.f32 %v8742, 0.6931472
        %v8744 = vadd.f32 %v8736, %v8743
        %v8745 = vsel %vm367, 1, 0
        %vm8746 = vcmp.eq.s32.totalorder %v8745, 1
        %v8747 = vsel %vm8746, %v8744, 0.0
        %vm8748 = vcmask 80896
        %v8749 = vsel %vm8748, %v8747, 0.0
        %8750 = vadd.xlane.f32.xlu0 %v8749
        %v8751 = vpop.xlane.xlu0 %8750
        %v8752 = vrot.slane %v8751, 4
        %v8753 = vadd.f32 %v8751, %v8752
        %v8754 = vrot.slane %v8753, 2
        %v8755 = vadd.f32 %v8753, %v8754
        %v8756 = vrot.slane %v8755, 1
        %v8757 = vadd.f32 %v8755, %v8756
        %s8758 = vtos %v8757
        %v8759 = vmax.f32 %v8732, 0.0
        %v8760 = vand.u32 2147483647, %v8732
        %v8761 = vsub.f32 0.0, %v8760
        %v8762 = vmul.f32 %v8761, 1.442695
        %v8763 = vpow.pop %v8762
        %v8764 = vadd.f32 %v8763, 1.0
        %v8765 = vlog2.pop %v8764
        %v8766 = vmul.f32 %v8765, 0.6931472
        %v8767 = vadd.f32 %v8759, %v8766
        %v8768 = vsel %vm8746, %v8767, 0.0
        %vm8769 = vcmask 408576
        %v8770 = vsel %vm8769, %v8768, 0.0
        %8771 = vadd.xlane.f32.xlu0 %v8770
        %v8772 = vpop.xlane.xlu0 %8771
        %v8773 = vrot.slane %v8772, 4
        %v8774 = vadd.f32 %v8772, %v8773
        %v8775 = vrot.slane %v8774, 2
        %v8776 = vadd.f32 %v8774, %v8775
        %v8777 = vrot.slane %v8776, 1
        %v8778 = vadd.f32 %v8776, %v8777
        %s8779 = vtos %v8778
        %v8780 = vld [vmem:[%s349] sm:$0x1]
        %v8781 = vstv %s8758
        %v8782 = vadd.f32 %v8780, %v8781
        %vm8783 = vcmask 0
        %8784 = vst.msk [vmem:[%s349] sm:$0x1] %vm8783, %v8782
        %v8785 = vld [vmem:[%s352] sm:$0x1]
        %v8786 = vstv %s8779
        %v8787 = vadd.f32 %v8785, %v8786
        %8788 = vst.msk [vmem:[%s352] sm:$0x1] %vm8783, %v8787
        %p8789 = scmp.lt.s32.totalorder %s26, 1
        %s8790 = scalar_select %p8789, %s26, 1
        %s8791 = scalar_lea.vmem %s3, %s8790
        %p8792 = scmp.lt.s32.totalorder %s26, 1
        %s8793 = scalar_select %p8792, %s26, 1
        %s8794 = scalar_lea.vmem %s4, %s8793
        // Predicated region
        $region49: #{tpu_custom_call.1} parent=31 // pred_check
          %p8795 = pneg %p154
        $region50: #{tpu_custom_call.1} parent=31 // pred_check_branch
          %8797 = sbr.rel (%p8795) target = $region52
        $region51: #{tpu_custom_call.1} parent=31 // pred_region
          _
        $region52: #{tpu_custom_call.1} parent=31 // pred_fallthru
          _
        // Predicated region
        $region53: #{tpu_custom_call.1} parent=31 // pred_check
          %p8798 = pneg %p180
        $region54: #{tpu_custom_call.1} parent=31 // pred_check_branch
          %8800 = sbr.rel (%p8798) target = $region56
        $region55: #{tpu_custom_call.1} parent=31 // pred_region
          _
        $region56: #{tpu_custom_call.1} parent=31 // pred_fallthru
          _
      $region32: #{tpu_custom_call.1} parent=5 // pred_fallthru
        _
      %p8801 = scmp.le.s32.totalorder 2, %s17
      // Predicated region
      $region57: #{tpu_custom_call.1} parent=5 // pred_check
        %p8802 = pneg %p8801
      $region58: #{tpu_custom_call.1} parent=5 // pred_check_branch
        %8804 = sbr.rel (%p8802) target = $region60
      $region59: #{tpu_custom_call.1} parent=5 // pred_region
        %s8805 = ssub.s32 %s17, 2
        // Predicated region
        $region61: #{tpu_custom_call.1} parent=59 // pred_check
          %p8806 = pneg %p160
        $region62: #{tpu_custom_call.1} parent=59 // pred_check_branch
          %8808 = sbr.rel (%p8806) target = $region64
        $region63: #{tpu_custom_call.1} parent=59 // pred_region
          %p8809 = scmp.lt.s32.totalorder %s28, 1
          %s8810 = scalar_select %p8809, %s28, 1
          %s8811 = scalar_lea.vmem %s3, %s8810
        $region64: #{tpu_custom_call.1} parent=59 // pred_fallthru
          _
        // Predicated region
        $region65: #{tpu_custom_call.1} parent=59 // pred_check
          %p8812 = pneg %p186
        $region66: #{tpu_custom_call.1} parent=59 // pred_check_branch
          %8814 = sbr.rel (%p8812) target = $region68
        $region67: #{tpu_custom_call.1} parent=59 // pred_region
          %p8815 = scmp.lt.s32.totalorder %s28, 1
          %s8816 = scalar_select %p8815, %s28, 1
          %s8817 = scalar_lea.vmem %s4, %s8816
        $region68: #{tpu_custom_call.1} parent=59 // pred_fallthru
          _
      $region60: #{tpu_custom_call.1} parent=5 // pred_fallthru
        _
    $region6: #{tpu_custom_call.1} parent=1 // loop_footer
      %s21 = sadd.s32 1, %s17
    $region7: #{tpu_custom_call.1} parent=1 // loop_footer_branch
      %16 = sbr.rel target = $region3
    $region8: #{tpu_custom_call.1} parent=1 // loop_exit
      _
    %8818 = vsyncpa [#allocation3], 1
    %s8819 = scalar_lea.sflag [#allocation3], 1
    %8820 = vsyncpa %s8819, 1
    %8821 = vsyncpa [#allocation5], 1
    %s8822 = scalar_lea.sflag [#allocation5], 1
    %8823 = vsyncpa %s8822, 1

</llo_original>
